<compile_context>
chip_gen: v5e
topology: v5e:2x2
jax: 0.10.0
libtpu: 0.0.40
codegen_flags: <defaults>
</compile_context>

<pallas_src>
import numpy as np
import jax
import jax.numpy as jnp
from jax import lax
from jax.experimental import pallas as pl
from jax.experimental.pallas import tpu as pltpu

# ---- small, CapsNet-consistent hyperparameters --------------------------------
BATCH = 2
IN_CH = 4
IMG = 16
CONV_OUT = 16          # ConvLayer out channels
K1, S1 = 3, 1
NUM_PRIM_CAPS = 8      # primary capsule dimension (number of parallel capsule convs)
PRIM_CH = 4            # out channels of each primary capsule conv
K2, S2 = 3, 2
NUM_CLASSES = 10       # digit capsules
DIGIT_DIM = 16         # digit capsule vector length
ROUTING_ITERS = 3

OH1 = (IMG - K1) // S1 + 1            # 14
OH2 = (OH1 - K2) // S2 + 1            # 6
NUM_ROUTES = PRIM_CH * OH2 * OH2      # 144
PRIM_MAPS = NUM_PRIM_CAPS * PRIM_CH   # 32


# ---- kernel 1: conv1 + primary-caps conv, fused, per-batch --------------------
def _conv_caps_kernel(x_ref, g1_ref, w1_ref, b1_ref, g2_ref, w2_ref, b2_ref, o_ref):
    # x_ref : (1, C, IMG*IMG)      flattened input image
    # g1_ref: (9, IMG*IMG, OH1*OH1)  constant one-hot im2col gather (per kernel offset)
    # w1_ref: (9, CONV_OUT, C)       conv1 weight, kernel-offset major
    # g2_ref: (9, OH1*OH1, OH2*OH2)  constant one-hot im2col gather for stride-2 conv
    # w2_ref: (9, 32, CONV_OUT)      primary-caps conv weight (rows = cap*PRIM_CH + ch)
    # o_ref : (1, 32, OH2*OH2)       primary-caps conv output (pre-squash)
    x = x_ref[0]                                                     # (4, 256)

    h1 = jnp.zeros((CONV_OUT, OH1 * OH1), jnp.float32)               # (16, 196)
    for ij in range(K1 * K1):                                        # in-kernel im2col
        patch = jnp.dot(x, g1_ref[ij], preferred_element_type=jnp.float32)        # (4, 196)
        h1 = h1 + jnp.dot(w1_ref[ij], patch, preferred_element_type=jnp.float32)  # (16, 196)
    h1 = jnp.maximum(h1 + b1_ref[...], 0.0)                          # bias + ReLU

    h2 = jnp.zeros((PRIM_MAPS, OH2 * OH2), jnp.float32)              # (32, 36)
    for ij in range(K2 * K2):
        patch = jnp.dot(h1, g2_ref[ij], preferred_element_type=jnp.float32)       # (16, 36)
        h2 = h2 + jnp.dot(w2_ref[ij], patch, preferred_element_type=jnp.float32)  # (32, 36)
    o_ref[0] = (h2 + b2_ref[...]).astype(o_ref.dtype)


def conv_caps(x_flat, g1, w1, b1, g2, w2, b2):
    B = x_flat.shape[0]
    return pl.pallas_call(
        _conv_caps_kernel,
        out_shape=jax.ShapeDtypeStruct((B, PRIM_MAPS, OH2 * OH2), jnp.float32),
        grid=(B,),
        in_specs=[
            pl.BlockSpec((1, IN_CH, IMG * IMG), lambda b: (b, 0, 0)),
            pl.BlockSpec(g1.shape, lambda b: (0, 0, 0)),   # constant -> resident
            pl.BlockSpec(w1.shape, lambda b: (0, 0, 0)),
            pl.BlockSpec(b1.shape, lambda b: (0, 0)),
            pl.BlockSpec(g2.shape, lambda b: (0, 0, 0)),
            pl.BlockSpec(w2.shape, lambda b: (0, 0, 0)),
            pl.BlockSpec(b2.shape, lambda b: (0, 0)),
        ],
        out_specs=pl.BlockSpec((1, PRIM_MAPS, OH2 * OH2), lambda b: (b, 0, 0)),
        compiler_params=pltpu.CompilerParams(dimension_semantics=("parallel",)),
    )(x_flat, g1, w1, b1, g2, w2, b2)


# ---- kernel 2: squash + u_hat + dynamic routing, fused, per-batch ------------
def _caps_routing_kernel(u_ref, wd_ref, o_ref, uhat_ref):
    # u_ref  : (1, 8, 144)  primary capsules, lane-dense [caps_dim k, route r]
    # wd_ref : (10, 16, 8, 144) routing transform W[j, d, k, r]
    # o_ref  : (1, 10, 16)  digit capsule vectors
    # uhat_ref: VMEM scratch (10, 16, 144)
    u = u_ref[0]                                                      # (8, 144)

    # squash primary capsules over the capsule axis k (sublane reduce, lane-dense)
    sq = jnp.sum(u * u, axis=0, keepdims=True)                        # (1, 144)
    scale = sq * pl.reciprocal(1.0 + sq, approx=True) * lax.rsqrt(sq + 1e-9)
    u_sq = u * scale                                                  # (8, 144)

    # u_hat[j, d, r] = sum_k W[j, d, k, r] * u_sq[k, r]; built per digit capsule j
    # so only a (16, 8, 144) slab is live at a time (bounded vreg pressure).
    for j in range(NUM_CLASSES):
        uhat_ref[j] = jnp.sum(wd_ref[j] * u_sq[None, :, :], axis=1)   # (16, 144)
    u_hat = uhat_ref[...]                                             # (10, 16, 144)

    b_ij = jnp.zeros((NUM_CLASSES, NUM_ROUTES), jnp.float32)
    v = jnp.zeros((NUM_CLASSES, DIGIT_DIM), jnp.float32)
    for it in range(ROUTING_ITERS):
        # softmax over the digit-capsule axis j (same convention as validated version)
        m = jnp.max(b_ij, axis=0, keepdims=True)
        e = jnp.exp(b_ij - m)
        c = e * pl.reciprocal(jnp.sum(e, axis=0, keepdims=True), approx=True)   # (10, 144)
        s = jnp.sum(c[:, None, :] * u_hat, axis=2)                               # (10, 16)
        sq2 = jnp.sum(s * s, axis=1, keepdims=True)                               # (10, 1)
        v = s * sq2 * pl.reciprocal(1.0 + sq2, approx=True) * lax.rsqrt(sq2 + 1e-9)
        if it < ROUTING_ITERS - 1:
            a = jnp.sum(u_hat * v[:, :, None], axis=1)                            # (10, 144)
            b_ij = b_ij + a
    o_ref[0] = v.astype(o_ref.dtype)


def caps_routing(u_t, w_digit):
    B = u_t.shape[0]
    return pl.pallas_call(
        _caps_routing_kernel,
        out_shape=jax.ShapeDtypeStruct((B, NUM_CLASSES, DIGIT_DIM), jnp.float32),
        grid=(B,),
        in_specs=[
            pl.BlockSpec((1, NUM_PRIM_CAPS, NUM_ROUTES), lambda b: (b, 0, 0)),
            pl.BlockSpec(w_digit.shape, lambda b: (0, 0, 0, 0)),   # resident weight
        ],
        out_specs=pl.BlockSpec((1, NUM_CLASSES, DIGIT_DIM), lambda b: (b, 0, 0)),
        scratch_shapes=[pltpu.VMEM((NUM_CLASSES, DIGIT_DIM, NUM_ROUTES), jnp.float32)],
        compiler_params=pltpu.CompilerParams(dimension_semantics=("parallel",)),
    )(u_t, w_digit)


# ---- parameters & constant gather matrices -------------------------------------
def build_gather_constants():
    # g1[ij, f, q] = 1 iff input flat pixel f is the (i,j) tap of conv1 output pixel q
    g1 = np.zeros((K1 * K1, IMG * IMG, OH1 * OH1), np.float32)
    for i in range(K1):
        for j in range(K1):
            ij = i * K1 + j
            for q in range(OH1 * OH1):
                oh, ow = divmod(q, OH1)
                g1[ij, (oh * S1 + i) * IMG + (ow * S1 + j), q] = 1.0
    # g2[ij, f, q] = 1 iff conv1 flat pixel f is the (i,j) tap of the stride-2 caps conv
    g2 = np.zeros((K2 * K2, OH1 * OH1, OH2 * OH2), np.float32)
    for i in range(K2):
        for j in range(K2):
            ij = i * K2 + j
            for q in range(OH2 * OH2):
                oh, ow = divmod(q, OH2)
                g2[ij, (oh * S2 + i) * OH1 + (ow * S2 + j), q] = 1.0
    return {"g1": jnp.asarray(g1), "g2": jnp.asarray(g2)}


def init_params(key):
    k1, k2, k3, k4, k5 = jax.random.split(key, 5)
    return {
        # ConvLayer: Conv2d(IN_CH -> CONV_OUT, k=3, s=1) + ReLU; weight stored as
        # (k*k, out, in) so per-kernel-offset slabs are free leading-dim slices.
        "w1": 0.1 * jax.random.normal(k1, (K1 * K1, CONV_OUT, IN_CH), jnp.float32),
        "b1": 0.1 * jax.random.normal(k2, (CONV_OUT, 1), jnp.float32),
        # PrimaryCapsLayer: 8 parallel Conv2d(CONV_OUT -> PRIM_CH, k=3, s=2), fused as
        # one conv with 32 output maps ordered (cap, ch) -> row p = cap*PRIM_CH + ch.
        "w2": 0.1 * jax.random.normal(k3, (K2 * K2, PRIM_MAPS, CONV_OUT), jnp.float32),
        "b2": 0.1 * jax.random.normal(k4, (PRIM_MAPS, 1), jnp.float32),
        # DigitCapsLayer routing transform W[j, d, k, r] (torch layout (1, R, NC, D, I)).
        "w_digit": 0.05 * jax.random.normal(
            k5, (NUM_CLASSES, DIGIT_DIM, NUM_PRIM_CAPS, NUM_ROUTES), jnp.float32),
    }


@jax.jit
def capsnet_forward(params, consts, x):
    B = x.shape[0]
    x_flat = x.reshape(B, IN_CH, IMG * IMG)

    # ConvLayer + PrimaryCapsLayer convolutions (one fused kernel, all VMEM resident)
    h2 = conv_caps(x_flat, consts["g1"], params["w1"], params["b1"],
                   consts["g2"], params["w2"], params["b2"])          # (B, 32, 36)

    # torch .view row-major interleave of (cap, ch, oh, ow) into (routes, caps_dim),
    # then caps_dim-major so routes sit on the lane axis inside the routing kernel.
    u_t = h2.reshape(B, NUM_ROUTES, NUM_PRIM_CAPS).transpose(0, 2, 1)  # (B, 8, 144)

    # squash + u_hat + 3 dynamic-routing iterations (one fused kernel)
    v = caps_routing(u_t, params["w_digit"])                           # (B, 10, 16)

    # TODO(synk): Decoder / helper.mask_caps branch not exercised (args['use_decoder']=False path).
    return v, None


if __name__ == "__main__":
    key = jax.random.PRNGKey(0)
    kp, kx = jax.random.split(key)
    params = init_params(kp)
    consts = build_gather_constants()
    x = jax.random.normal(kx, (BATCH, IN_CH, IMG, IMG), jnp.float32)

    outdigi, outdeco = capsnet_forward(params, consts, x)
    outdigi = jax.block_until_ready(outdigi)

    assert outdigi.shape == (BATCH, NUM_CLASSES, DIGIT_DIM)
    assert bool(jnp.all(jnp.isfinite(outdigi)))
    assert outdeco is None
    print("KERNEL_OK")
</pallas_src>

<mosaic_0001>
module attributes {stable_mosaic.version = 11 : i64} {
  func.func @_conv_caps_kernel(%arg0: i32, %arg1: memref<1x4x256xf32, #tpu.memory_space<vmem>>, %arg2: memref<9x256x196xf32, #tpu.memory_space<vmem>>, %arg3: memref<9x16x4xf32, #tpu.memory_space<vmem>>, %arg4: memref<16x1xf32, #tpu.memory_space<vmem>>, %arg5: memref<9x196x36xf32, #tpu.memory_space<vmem>>, %arg6: memref<9x32x16xf32, #tpu.memory_space<vmem>>, %arg7: memref<32x1xf32, #tpu.memory_space<vmem>>, %arg8: memref<1x32x36xf32, #tpu.memory_space<vmem>>) attributes {dimension_semantics = [#tpu.dimension_semantics<parallel>], iteration_bounds = array<i64: 2>, scalar_prefetch = 0 : i64, scratch_operands = 0 : i64, tpu.core_type = #tpu.core_type<tc>, window_params = [{transform_indices = @transform_0, window_bounds = array<i64: 1, 4, 256>}, {pipeline_mode = #tpu.pipeline_mode<synchronous>, transform_indices = @transform_1, window_bounds = array<i64: 9, 256, 196>}, {pipeline_mode = #tpu.pipeline_mode<synchronous>, transform_indices = @transform_2, window_bounds = array<i64: 9, 16, 4>}, {pipeline_mode = #tpu.pipeline_mode<synchronous>, transform_indices = @transform_3, window_bounds = array<i64: 16, 1>}, {pipeline_mode = #tpu.pipeline_mode<synchronous>, transform_indices = @transform_4, window_bounds = array<i64: 9, 196, 36>}, {pipeline_mode = #tpu.pipeline_mode<synchronous>, transform_indices = @transform_5, window_bounds = array<i64: 9, 32, 16>}, {pipeline_mode = #tpu.pipeline_mode<synchronous>, transform_indices = @transform_6, window_bounds = array<i64: 32, 1>}, {transform_indices = @transform_7, window_bounds = array<i64: 1, 32, 36>}]} {
    %c0 = arith.constant 0 : index
    %c0_0 = arith.constant 0 : index
    %c0_1 = arith.constant 0 : index
    %0 = vector.load %arg1[%c0, %c0_0, %c0_1] : memref<1x4x256xf32, #tpu.memory_space<vmem>>, vector<1x4x256xf32>
    %1 = vector.shape_cast %0 : vector<1x4x256xf32> to vector<4x256xf32>
    %cst = arith.constant 0.000000e+00 : f32
    %2 = vector.broadcast %cst : f32 to vector<16x196xf32>
    %c0_2 = arith.constant 0 : index
    %c0_3 = arith.constant 0 : index
    %c0_4 = arith.constant 0 : index
    %3 = vector.load %arg2[%c0_2, %c0_3, %c0_4] : memref<9x256x196xf32, #tpu.memory_space<vmem>>, vector<1x256x196xf32>
    %4 = vector.shape_cast %3 : vector<1x256x196xf32> to vector<256x196xf32>
    %cst_5 = arith.constant dense<0.000000e+00> : vector<4x196xf32>
    %5 = tpu.matmul %1, %4, %cst_5 {dimension_numbers = #tpu.dot_dimension_numbers<[1], [0], [0], [1], [0, 0, 1, 1], [], []>} : vector<4x256xf32>, vector<256x196xf32>, vector<4x196xf32> -> vector<4x196xf32>
    %c0_6 = arith.constant 0 : index
    %c0_7 = arith.constant 0 : index
    %c0_8 = arith.constant 0 : index
    %6 = vector.load %arg3[%c0_6, %c0_7, %c0_8] : memref<9x16x4xf32, #tpu.memory_space<vmem>>, vector<1x16x4xf32>
    %7 = vector.shape_cast %6 : vector<1x16x4xf32> to vector<16x4xf32>
    %cst_9 = arith.constant dense<0.000000e+00> : vector<16x196xf32>
    %8 = tpu.matmul %7, %5, %cst_9 {dimension_numbers = #tpu.dot_dimension_numbers<[1], [0], [0], [1], [0, 0, 1, 1], [], []>} : vector<16x4xf32>, vector<4x196xf32>, vector<16x196xf32> -> vector<16x196xf32>
    %9 = arith.addf %2, %8 : vector<16x196xf32>
    %c1 = arith.constant 1 : index
    %c0_10 = arith.constant 0 : index
    %c0_11 = arith.constant 0 : index
    %10 = vector.load %arg2[%c1, %c0_10, %c0_11] : memref<9x256x196xf32, #tpu.memory_space<vmem>>, vector<1x256x196xf32>
    %11 = vector.shape_cast %10 : vector<1x256x196xf32> to vector<256x196xf32>
    %cst_12 = arith.constant dense<0.000000e+00> : vector<4x196xf32>
    %12 = tpu.matmul %1, %11, %cst_12 {dimension_numbers = #tpu.dot_dimension_numbers<[1], [0], [0], [1], [0, 0, 1, 1], [], []>} : vector<4x256xf32>, vector<256x196xf32>, vector<4x196xf32> -> vector<4x196xf32>
    %c1_13 = arith.constant 1 : index
    %c0_14 = arith.constant 0 : index
    %c0_15 = arith.constant 0 : index
    %13 = vector.load %arg3[%c1_13, %c0_14, %c0_15] : memref<9x16x4xf32, #tpu.memory_space<vmem>>, vector<1x16x4xf32>
    %14 = vector.shape_cast %13 : vector<1x16x4xf32> to vector<16x4xf32>
    %cst_16 = arith.constant dense<0.000000e+00> : vector<16x196xf32>
    %15 = tpu.matmul %14, %12, %cst_16 {dimension_numbers = #tpu.dot_dimension_numbers<[1], [0], [0], [1], [0, 0, 1, 1], [], []>} : vector<16x4xf32>, vector<4x196xf32>, vector<16x196xf32> -> vector<16x196xf32>
    %16 = arith.addf %9, %15 : vector<16x196xf32>
    %c2 = arith.constant 2 : index
    %c0_17 = arith.constant 0 : index
    %c0_18 = arith.constant 0 : index
    %17 = vector.load %arg2[%c2, %c0_17, %c0_18] : memref<9x256x196xf32, #tpu.memory_space<vmem>>, vector<1x256x196xf32>
    %18 = vector.shape_cast %17 : vector<1x256x196xf32> to vector<256x196xf32>
    %cst_19 = arith.constant dense<0.000000e+00> : vector<4x196xf32>
    %19 = tpu.matmul %1, %18, %cst_19 {dimension_numbers = #tpu.dot_dimension_numbers<[1], [0], [0], [1], [0, 0, 1, 1], [], []>} : vector<4x256xf32>, vector<256x196xf32>, vector<4x196xf32> -> vector<4x196xf32>
    %c2_20 = arith.constant 2 : index
    %c0_21 = arith.constant 0 : index
    %c0_22 = arith.constant 0 : index
    %20 = vector.load %arg3[%c2_20, %c0_21, %c0_22] : memref<9x16x4xf32, #tpu.memory_space<vmem>>, vector<1x16x4xf32>
    %21 = vector.shape_cast %20 : vector<1x16x4xf32> to vector<16x4xf32>
    %cst_23 = arith.constant dense<0.000000e+00> : vector<16x196xf32>
    %22 = tpu.matmul %21, %19, %cst_23 {dimension_numbers = #tpu.dot_dimension_numbers<[1], [0], [0], [1], [0, 0, 1, 1], [], []>} : vector<16x4xf32>, vector<4x196xf32>, vector<16x196xf32> -> vector<16x196xf32>
    %23 = arith.addf %16, %22 : vector<16x196xf32>
    %c3 = arith.constant 3 : index
    %c0_24 = arith.constant 0 : index
    %c0_25 = arith.constant 0 : index
    %24 = vector.load %arg2[%c3, %c0_24, %c0_25] : memref<9x256x196xf32, #tpu.memory_space<vmem>>, vector<1x256x196xf32>
    %25 = vector.shape_cast %24 : vector<1x256x196xf32> to vector<256x196xf32>
    %cst_26 = arith.constant dense<0.000000e+00> : vector<4x196xf32>
    %26 = tpu.matmul %1, %25, %cst_26 {dimension_numbers = #tpu.dot_dimension_numbers<[1], [0], [0], [1], [0, 0, 1, 1], [], []>} : vector<4x256xf32>, vector<256x196xf32>, vector<4x196xf32> -> vector<4x196xf32>
    %c3_27 = arith.constant 3 : index
    %c0_28 = arith.constant 0 : index
    %c0_29 = arith.constant 0 : index
    %27 = vector.load %arg3[%c3_27, %c0_28, %c0_29] : memref<9x16x4xf32, #tpu.memory_space<vmem>>, vector<1x16x4xf32>
    %28 = vector.shape_cast %27 : vector<1x16x4xf32> to vector<16x4xf32>
    %cst_30 = arith.constant dense<0.000000e+00> : vector<16x196xf32>
    %29 = tpu.matmul %28, %26, %cst_30 {dimension_numbers = #tpu.dot_dimension_numbers<[1], [0], [0], [1], [0, 0, 1, 1], [], []>} : vector<16x4xf32>, vector<4x196xf32>, vector<16x196xf32> -> vector<16x196xf32>
    %30 = arith.addf %23, %29 : vector<16x196xf32>
    %c4 = arith.constant 4 : index
    %c0_31 = arith.constant 0 : index
    %c0_32 = arith.constant 0 : index
    %31 = vector.load %arg2[%c4, %c0_31, %c0_32] : memref<9x256x196xf32, #tpu.memory_space<vmem>>, vector<1x256x196xf32>
    %32 = vector.shape_cast %31 : vector<1x256x196xf32> to vector<256x196xf32>
    %cst_33 = arith.constant dense<0.000000e+00> : vector<4x196xf32>
    %33 = tpu.matmul %1, %32, %cst_33 {dimension_numbers = #tpu.dot_dimension_numbers<[1], [0], [0], [1], [0, 0, 1, 1], [], []>} : vector<4x256xf32>, vector<256x196xf32>, vector<4x196xf32> -> vector<4x196xf32>
    %c4_34 = arith.constant 4 : index
    %c0_35 = arith.constant 0 : index
    %c0_36 = arith.constant 0 : index
    %34 = vector.load %arg3[%c4_34, %c0_35, %c0_36] : memref<9x16x4xf32, #tpu.memory_space<vmem>>, vector<1x16x4xf32>
    %35 = vector.shape_cast %34 : vector<1x16x4xf32> to vector<16x4xf32>
    %cst_37 = arith.constant dense<0.000000e+00> : vector<16x196xf32>
    %36 = tpu.matmul %35, %33, %cst_37 {dimension_numbers = #tpu.dot_dimension_numbers<[1], [0], [0], [1], [0, 0, 1, 1], [], []>} : vector<16x4xf32>, vector<4x196xf32>, vector<16x196xf32> -> vector<16x196xf32>
    %37 = arith.addf %30, %36 : vector<16x196xf32>
    %c5 = arith.constant 5 : index
    %c0_38 = arith.constant 0 : index
    %c0_39 = arith.constant 0 : index
    %38 = vector.load %arg2[%c5, %c0_38, %c0_39] : memref<9x256x196xf32, #tpu.memory_space<vmem>>, vector<1x256x196xf32>
    %39 = vector.shape_cast %38 : vector<1x256x196xf32> to vector<256x196xf32>
    %cst_40 = arith.constant dense<0.000000e+00> : vector<4x196xf32>
    %40 = tpu.matmul %1, %39, %cst_40 {dimension_numbers = #tpu.dot_dimension_numbers<[1], [0], [0], [1], [0, 0, 1, 1], [], []>} : vector<4x256xf32>, vector<256x196xf32>, vector<4x196xf32> -> vector<4x196xf32>
    %c5_41 = arith.constant 5 : index
    %c0_42 = arith.constant 0 : index
    %c0_43 = arith.constant 0 : index
    %41 = vector.load %arg3[%c5_41, %c0_42, %c0_43] : memref<9x16x4xf32, #tpu.memory_space<vmem>>, vector<1x16x4xf32>
    %42 = vector.shape_cast %41 : vector<1x16x4xf32> to vector<16x4xf32>
    %cst_44 = arith.constant dense<0.000000e+00> : vector<16x196xf32>
    %43 = tpu.matmul %42, %40, %cst_44 {dimension_numbers = #tpu.dot_dimension_numbers<[1], [0], [0], [1], [0, 0, 1, 1], [], []>} : vector<16x4xf32>, vector<4x196xf32>, vector<16x196xf32> -> vector<16x196xf32>
    %44 = arith.addf %37, %43 : vector<16x196xf32>
    %c6 = arith.constant 6 : index
    %c0_45 = arith.constant 0 : index
    %c0_46 = arith.constant 0 : index
    %45 = vector.load %arg2[%c6, %c0_45, %c0_46] : memref<9x256x196xf32, #tpu.memory_space<vmem>>, vector<1x256x196xf32>
    %46 = vector.shape_cast %45 : vector<1x256x196xf32> to vector<256x196xf32>
    %cst_47 = arith.constant dense<0.000000e+00> : vector<4x196xf32>
    %47 = tpu.matmul %1, %46, %cst_47 {dimension_numbers = #tpu.dot_dimension_numbers<[1], [0], [0], [1], [0, 0, 1, 1], [], []>} : vector<4x256xf32>, vector<256x196xf32>, vector<4x196xf32> -> vector<4x196xf32>
    %c6_48 = arith.constant 6 : index
    %c0_49 = arith.constant 0 : index
    %c0_50 = arith.constant 0 : index
    %48 = vector.load %arg3[%c6_48, %c0_49, %c0_50] : memref<9x16x4xf32, #tpu.memory_space<vmem>>, vector<1x16x4xf32>
    %49 = vector.shape_cast %48 : vector<1x16x4xf32> to vector<16x4xf32>
    %cst_51 = arith.constant dense<0.000000e+00> : vector<16x196xf32>
    %50 = tpu.matmul %49, %47, %cst_51 {dimension_numbers = #tpu.dot_dimension_numbers<[1], [0], [0], [1], [0, 0, 1, 1], [], []>} : vector<16x4xf32>, vector<4x196xf32>, vector<16x196xf32> -> vector<16x196xf32>
    %51 = arith.addf %44, %50 : vector<16x196xf32>
    %c7 = arith.constant 7 : index
    %c0_52 = arith.constant 0 : index
    %c0_53 = arith.constant 0 : index
    %52 = vector.load %arg2[%c7, %c0_52, %c0_53] : memref<9x256x196xf32, #tpu.memory_space<vmem>>, vector<1x256x196xf32>
    %53 = vector.shape_cast %52 : vector<1x256x196xf32> to vector<256x196xf32>
    %cst_54 = arith.constant dense<0.000000e+00> : vector<4x196xf32>
    %54 = tpu.matmul %1, %53, %cst_54 {dimension_numbers = #tpu.dot_dimension_numbers<[1], [0], [0], [1], [0, 0, 1, 1], [], []>} : vector<4x256xf32>, vector<256x196xf32>, vector<4x196xf32> -> vector<4x196xf32>
    %c7_55 = arith.constant 7 : index
    %c0_56 = arith.constant 0 : index
    %c0_57 = arith.constant 0 : index
    %55 = vector.load %arg3[%c7_55, %c0_56, %c0_57] : memref<9x16x4xf32, #tpu.memory_space<vmem>>, vector<1x16x4xf32>
    %56 = vector.shape_cast %55 : vector<1x16x4xf32> to vector<16x4xf32>
    %cst_58 = arith.constant dense<0.000000e+00> : vector<16x196xf32>
    %57 = tpu.matmul %56, %54, %cst_58 {dimension_numbers = #tpu.dot_dimension_numbers<[1], [0], [0], [1], [0, 0, 1, 1], [], []>} : vector<16x4xf32>, vector<4x196xf32>, vector<16x196xf32> -> vector<16x196xf32>
    %58 = arith.addf %51, %57 : vector<16x196xf32>
    %c8 = arith.constant 8 : index
    %c0_59 = arith.constant 0 : index
    %c0_60 = arith.constant 0 : index
    %59 = vector.load %arg2[%c8, %c0_59, %c0_60] : memref<9x256x196xf32, #tpu.memory_space<vmem>>, vector<1x256x196xf32>
    %60 = vector.shape_cast %59 : vector<1x256x196xf32> to vector<256x196xf32>
    %cst_61 = arith.constant dense<0.000000e+00> : vector<4x196xf32>
    %61 = tpu.matmul %1, %60, %cst_61 {dimension_numbers = #tpu.dot_dimension_numbers<[1], [0], [0], [1], [0, 0, 1, 1], [], []>} : vector<4x256xf32>, vector<256x196xf32>, vector<4x196xf32> -> vector<4x196xf32>
    %c8_62 = arith.constant 8 : index
    %c0_63 = arith.constant 0 : index
    %c0_64 = arith.constant 0 : index
    %62 = vector.load %arg3[%c8_62, %c0_63, %c0_64] : memref<9x16x4xf32, #tpu.memory_space<vmem>>, vector<1x16x4xf32>
    %63 = vector.shape_cast %62 : vector<1x16x4xf32> to vector<16x4xf32>
    %cst_65 = arith.constant dense<0.000000e+00> : vector<16x196xf32>
    %64 = tpu.matmul %63, %61, %cst_65 {dimension_numbers = #tpu.dot_dimension_numbers<[1], [0], [0], [1], [0, 0, 1, 1], [], []>} : vector<16x4xf32>, vector<4x196xf32>, vector<16x196xf32> -> vector<16x196xf32>
    %65 = arith.addf %58, %64 : vector<16x196xf32>
    %c0_66 = arith.constant 0 : index
    %c0_67 = arith.constant 0 : index
    %66 = vector.load %arg4[%c0_66, %c0_67] : memref<16x1xf32, #tpu.memory_space<vmem>>, vector<16x1xf32>
    %67 = vector.broadcast %66 : vector<16x1xf32> to vector<16x196xf32>
    %68 = arith.addf %65, %67 : vector<16x196xf32>
    %cst_68 = arith.constant 0.000000e+00 : f32
    %69 = vector.broadcast %cst_68 : f32 to vector<16x196xf32>
    %70 = arith.maximumf %68, %69 : vector<16x196xf32>
    %cst_69 = arith.constant 0.000000e+00 : f32
    %71 = vector.broadcast %cst_69 : f32 to vector<32x36xf32>
    %c0_70 = arith.constant 0 : index
    %c0_71 = arith.constant 0 : index
    %c0_72 = arith.constant 0 : index
    %72 = vector.load %arg5[%c0_70, %c0_71, %c0_72] : memref<9x196x36xf32, #tpu.memory_space<vmem>>, vector<1x196x36xf32>
    %73 = vector.shape_cast %72 : vector<1x196x36xf32> to vector<196x36xf32>
    %cst_73 = arith.constant dense<0.000000e+00> : vector<16x36xf32>
    %74 = tpu.matmul %70, %73, %cst_73 {dimension_numbers = #tpu.dot_dimension_numbers<[1], [0], [0], [1], [0, 0, 1, 1], [], []>} : vector<16x196xf32>, vector<196x36xf32>, vector<16x36xf32> -> vector<16x36xf32>
    %c0_74 = arith.constant 0 : index
    %c0_75 = arith.constant 0 : index
    %c0_76 = arith.constant 0 : index
    %75 = vector.load %arg6[%c0_74, %c0_75, %c0_76] : memref<9x32x16xf32, #tpu.memory_space<vmem>>, vector<1x32x16xf32>
    %76 = vector.shape_cast %75 : vector<1x32x16xf32> to vector<32x16xf32>
    %cst_77 = arith.constant dense<0.000000e+00> : vector<32x36xf32>
    %77 = tpu.matmul %76, %74, %cst_77 {dimension_numbers = #tpu.dot_dimension_numbers<[1], [0], [0], [1], [0, 0, 1, 1], [], []>} : vector<32x16xf32>, vector<16x36xf32>, vector<32x36xf32> -> vector<32x36xf32>
    %78 = arith.addf %71, %77 : vector<32x36xf32>
    %c1_78 = arith.constant 1 : index
    %c0_79 = arith.constant 0 : index
    %c0_80 = arith.constant 0 : index
    %79 = vector.load %arg5[%c1_78, %c0_79, %c0_80] : memref<9x196x36xf32, #tpu.memory_space<vmem>>, vector<1x196x36xf32>
    %80 = vector.shape_cast %79 : vector<1x196x36xf32> to vector<196x36xf32>
    %cst_81 = arith.constant dense<0.000000e+00> : vector<16x36xf32>
    %81 = tpu.matmul %70, %80, %cst_81 {dimension_numbers = #tpu.dot_dimension_numbers<[1], [0], [0], [1], [0, 0, 1, 1], [], []>} : vector<16x196xf32>, vector<196x36xf32>, vector<16x36xf32> -> vector<16x36xf32>
    %c1_82 = arith.constant 1 : index
    %c0_83 = arith.constant 0 : index
    %c0_84 = arith.constant 0 : index
    %82 = vector.load %arg6[%c1_82, %c0_83, %c0_84] : memref<9x32x16xf32, #tpu.memory_space<vmem>>, vector<1x32x16xf32>
    %83 = vector.shape_cast %82 : vector<1x32x16xf32> to vector<32x16xf32>
    %cst_85 = arith.constant dense<0.000000e+00> : vector<32x36xf32>
    %84 = tpu.matmul %83, %81, %cst_85 {dimension_numbers = #tpu.dot_dimension_numbers<[1], [0], [0], [1], [0, 0, 1, 1], [], []>} : vector<32x16xf32>, vector<16x36xf32>, vector<32x36xf32> -> vector<32x36xf32>
    %85 = arith.addf %78, %84 : vector<32x36xf32>
    %c2_86 = arith.constant 2 : index
    %c0_87 = arith.constant 0 : index
    %c0_88 = arith.constant 0 : index
    %86 = vector.load %arg5[%c2_86, %c0_87, %c0_88] : memref<9x196x36xf32, #tpu.memory_space<vmem>>, vector<1x196x36xf32>
    %87 = vector.shape_cast %86 : vector<1x196x36xf32> to vector<196x36xf32>
    %cst_89 = arith.constant dense<0.000000e+00> : vector<16x36xf32>
    %88 = tpu.matmul %70, %87, %cst_89 {dimension_numbers = #tpu.dot_dimension_numbers<[1], [0], [0], [1], [0, 0, 1, 1], [], []>} : vector<16x196xf32>, vector<196x36xf32>, vector<16x36xf32> -> vector<16x36xf32>
    %c2_90 = arith.constant 2 : index
    %c0_91 = arith.constant 0 : index
    %c0_92 = arith.constant 0 : index
    %89 = vector.load %arg6[%c2_90, %c0_91, %c0_92] : memref<9x32x16xf32, #tpu.memory_space<vmem>>, vector<1x32x16xf32>
    %90 = vector.shape_cast %89 : vector<1x32x16xf32> to vector<32x16xf32>
    %cst_93 = arith.constant dense<0.000000e+00> : vector<32x36xf32>
    %91 = tpu.matmul %90, %88, %cst_93 {dimension_numbers = #tpu.dot_dimension_numbers<[1], [0], [0], [1], [0, 0, 1, 1], [], []>} : vector<32x16xf32>, vector<16x36xf32>, vector<32x36xf32> -> vector<32x36xf32>
    %92 = arith.addf %85, %91 : vector<32x36xf32>
    %c3_94 = arith.constant 3 : index
    %c0_95 = arith.constant 0 : index
    %c0_96 = arith.constant 0 : index
    %93 = vector.load %arg5[%c3_94, %c0_95, %c0_96] : memref<9x196x36xf32, #tpu.memory_space<vmem>>, vector<1x196x36xf32>
    %94 = vector.shape_cast %93 : vector<1x196x36xf32> to vector<196x36xf32>
    %cst_97 = arith.constant dense<0.000000e+00> : vector<16x36xf32>
    %95 = tpu.matmul %70, %94, %cst_97 {dimension_numbers = #tpu.dot_dimension_numbers<[1], [0], [0], [1], [0, 0, 1, 1], [], []>} : vector<16x196xf32>, vector<196x36xf32>, vector<16x36xf32> -> vector<16x36xf32>
    %c3_98 = arith.constant 3 : index
    %c0_99 = arith.constant 0 : index
    %c0_100 = arith.constant 0 : index
    %96 = vector.load %arg6[%c3_98, %c0_99, %c0_100] : memref<9x32x16xf32, #tpu.memory_space<vmem>>, vector<1x32x16xf32>
    %97 = vector.shape_cast %96 : vector<1x32x16xf32> to vector<32x16xf32>
    %cst_101 = arith.constant dense<0.000000e+00> : vector<32x36xf32>
    %98 = tpu.matmul %97, %95, %cst_101 {dimension_numbers = #tpu.dot_dimension_numbers<[1], [0], [0], [1], [0, 0, 1, 1], [], []>} : vector<32x16xf32>, vector<16x36xf32>, vector<32x36xf32> -> vector<32x36xf32>
    %99 = arith.addf %92, %98 : vector<32x36xf32>
    %c4_102 = arith.constant 4 : index
    %c0_103 = arith.constant 0 : index
    %c0_104 = arith.constant 0 : index
    %100 = vector.load %arg5[%c4_102, %c0_103, %c0_104] : memref<9x196x36xf32, #tpu.memory_space<vmem>>, vector<1x196x36xf32>
    %101 = vector.shape_cast %100 : vector<1x196x36xf32> to vector<196x36xf32>
    %cst_105 = arith.constant dense<0.000000e+00> : vector<16x36xf32>
    %102 = tpu.matmul %70, %101, %cst_105 {dimension_numbers = #tpu.dot_dimension_numbers<[1], [0], [0], [1], [0, 0, 1, 1], [], []>} : vector<16x196xf32>, vector<196x36xf32>, vector<16x36xf32> -> vector<16x36xf32>
    %c4_106 = arith.constant 4 : index
    %c0_107 = arith.constant 0 : index
    %c0_108 = arith.constant 0 : index
    %103 = vector.load %arg6[%c4_106, %c0_107, %c0_108] : memref<9x32x16xf32, #tpu.memory_space<vmem>>, vector<1x32x16xf32>
    %104 = vector.shape_cast %103 : vector<1x32x16xf32> to vector<32x16xf32>
    %cst_109 = arith.constant dense<0.000000e+00> : vector<32x36xf32>
    %105 = tpu.matmul %104, %102, %cst_109 {dimension_numbers = #tpu.dot_dimension_numbers<[1], [0], [0], [1], [0, 0, 1, 1], [], []>} : vector<32x16xf32>, vector<16x36xf32>, vector<32x36xf32> -> vector<32x36xf32>
    %106 = arith.addf %99, %105 : vector<32x36xf32>
    %c5_110 = arith.constant 5 : index
    %c0_111 = arith.constant 0 : index
    %c0_112 = arith.constant 0 : index
    %107 = vector.load %arg5[%c5_110, %c0_111, %c0_112] : memref<9x196x36xf32, #tpu.memory_space<vmem>>, vector<1x196x36xf32>
    %108 = vector.shape_cast %107 : vector<1x196x36xf32> to vector<196x36xf32>
    %cst_113 = arith.constant dense<0.000000e+00> : vector<16x36xf32>
    %109 = tpu.matmul %70, %108, %cst_113 {dimension_numbers = #tpu.dot_dimension_numbers<[1], [0], [0], [1], [0, 0, 1, 1], [], []>} : vector<16x196xf32>, vector<196x36xf32>, vector<16x36xf32> -> vector<16x36xf32>
    %c5_114 = arith.constant 5 : index
    %c0_115 = arith.constant 0 : index
    %c0_116 = arith.constant 0 : index
    %110 = vector.load %arg6[%c5_114, %c0_115, %c0_116] : memref<9x32x16xf32, #tpu.memory_space<vmem>>, vector<1x32x16xf32>
    %111 = vector.shape_cast %110 : vector<1x32x16xf32> to vector<32x16xf32>
    %cst_117 = arith.constant dense<0.000000e+00> : vector<32x36xf32>
    %112 = tpu.matmul %111, %109, %cst_117 {dimension_numbers = #tpu.dot_dimension_numbers<[1], [0], [0], [1], [0, 0, 1, 1], [], []>} : vector<32x16xf32>, vector<16x36xf32>, vector<32x36xf32> -> vector<32x36xf32>
    %113 = arith.addf %106, %112 : vector<32x36xf32>
    %c6_118 = arith.constant 6 : index
    %c0_119 = arith.constant 0 : index
    %c0_120 = arith.constant 0 : index
    %114 = vector.load %arg5[%c6_118, %c0_119, %c0_120] : memref<9x196x36xf32, #tpu.memory_space<vmem>>, vector<1x196x36xf32>
    %115 = vector.shape_cast %114 : vector<1x196x36xf32> to vector<196x36xf32>
    %cst_121 = arith.constant dense<0.000000e+00> : vector<16x36xf32>
    %116 = tpu.matmul %70, %115, %cst_121 {dimension_numbers = #tpu.dot_dimension_numbers<[1], [0], [0], [1], [0, 0, 1, 1], [], []>} : vector<16x196xf32>, vector<196x36xf32>, vector<16x36xf32> -> vector<16x36xf32>
    %c6_122 = arith.constant 6 : index
    %c0_123 = arith.constant 0 : index
    %c0_124 = arith.constant 0 : index
    %117 = vector.load %arg6[%c6_122, %c0_123, %c0_124] : memref<9x32x16xf32, #tpu.memory_space<vmem>>, vector<1x32x16xf32>
    %118 = vector.shape_cast %117 : vector<1x32x16xf32> to vector<32x16xf32>
    %cst_125 = arith.constant dense<0.000000e+00> : vector<32x36xf32>
    %119 = tpu.matmul %118, %116, %cst_125 {dimension_numbers = #tpu.dot_dimension_numbers<[1], [0], [0], [1], [0, 0, 1, 1], [], []>} : vector<32x16xf32>, vector<16x36xf32>, vector<32x36xf32> -> vector<32x36xf32>
    %120 = arith.addf %113, %119 : vector<32x36xf32>
    %c7_126 = arith.constant 7 : index
    %c0_127 = arith.constant 0 : index
    %c0_128 = arith.constant 0 : index
    %121 = vector.load %arg5[%c7_126, %c0_127, %c0_128] : memref<9x196x36xf32, #tpu.memory_space<vmem>>, vector<1x196x36xf32>
    %122 = vector.shape_cast %121 : vector<1x196x36xf32> to vector<196x36xf32>
    %cst_129 = arith.constant dense<0.000000e+00> : vector<16x36xf32>
    %123 = tpu.matmul %70, %122, %cst_129 {dimension_numbers = #tpu.dot_dimension_numbers<[1], [0], [0], [1], [0, 0, 1, 1], [], []>} : vector<16x196xf32>, vector<196x36xf32>, vector<16x36xf32> -> vector<16x36xf32>
    %c7_130 = arith.constant 7 : index
    %c0_131 = arith.constant 0 : index
    %c0_132 = arith.constant 0 : index
    %124 = vector.load %arg6[%c7_130, %c0_131, %c0_132] : memref<9x32x16xf32, #tpu.memory_space<vmem>>, vector<1x32x16xf32>
    %125 = vector.shape_cast %124 : vector<1x32x16xf32> to vector<32x16xf32>
    %cst_133 = arith.constant dense<0.000000e+00> : vector<32x36xf32>
    %126 = tpu.matmul %125, %123, %cst_133 {dimension_numbers = #tpu.dot_dimension_numbers<[1], [0], [0], [1], [0, 0, 1, 1], [], []>} : vector<32x16xf32>, vector<16x36xf32>, vector<32x36xf32> -> vector<32x36xf32>
    %127 = arith.addf %120, %126 : vector<32x36xf32>
    %c8_134 = arith.constant 8 : index
    %c0_135 = arith.constant 0 : index
    %c0_136 = arith.constant 0 : index
    %128 = vector.load %arg5[%c8_134, %c0_135, %c0_136] : memref<9x196x36xf32, #tpu.memory_space<vmem>>, vector<1x196x36xf32>
    %129 = vector.shape_cast %128 : vector<1x196x36xf32> to vector<196x36xf32>
    %cst_137 = arith.constant dense<0.000000e+00> : vector<16x36xf32>
    %130 = tpu.matmul %70, %129, %cst_137 {dimension_numbers = #tpu.dot_dimension_numbers<[1], [0], [0], [1], [0, 0, 1, 1], [], []>} : vector<16x196xf32>, vector<196x36xf32>, vector<16x36xf32> -> vector<16x36xf32>
    %c8_138 = arith.constant 8 : index
    %c0_139 = arith.constant 0 : index
    %c0_140 = arith.constant 0 : index
    %131 = vector.load %arg6[%c8_138, %c0_139, %c0_140] : memref<9x32x16xf32, #tpu.memory_space<vmem>>, vector<1x32x16xf32>
    %132 = vector.shape_cast %131 : vector<1x32x16xf32> to vector<32x16xf32>
    %cst_141 = arith.constant dense<0.000000e+00> : vector<32x36xf32>
    %133 = tpu.matmul %132, %130, %cst_141 {dimension_numbers = #tpu.dot_dimension_numbers<[1], [0], [0], [1], [0, 0, 1, 1], [], []>} : vector<32x16xf32>, vector<16x36xf32>, vector<32x36xf32> -> vector<32x36xf32>
    %134 = arith.addf %127, %133 : vector<32x36xf32>
    %c0_142 = arith.constant 0 : index
    %c0_143 = arith.constant 0 : index
    %135 = vector.load %arg7[%c0_142, %c0_143] : memref<32x1xf32, #tpu.memory_space<vmem>>, vector<32x1xf32>
    %136 = vector.broadcast %135 : vector<32x1xf32> to vector<32x36xf32>
    %137 = arith.addf %134, %136 : vector<32x36xf32>
    %c0_144 = arith.constant 0 : index
    %c0_145 = arith.constant 0 : index
    %c0_146 = arith.constant 0 : index
    %138 = vector.load %arg8[%c0_144, %c0_145, %c0_146] : memref<1x32x36xf32, #tpu.memory_space<vmem>>, vector<1x32x36xf32>
    %139 = vector.shape_cast %138 : vector<1x32x36xf32> to vector<32x36xf32>
    %140 = vector.shape_cast %137 : vector<32x36xf32> to vector<1x32x36xf32>
    tpu.vector_store %arg8[%c0_144, %c0_145, %c0_146], %140 {strides = array<i32>} : memref<1x32x36xf32, #tpu.memory_space<vmem>>, vector<1x32x36xf32>,
    return
  }
  func.func @transform_0(%arg0: i32) -> (i32, i32, i32) {
    %c0_i32 = arith.constant 0 : i32
    %c0_i32_0 = arith.constant 0 : i32
    %c0_i32_1 = arith.constant 0 : i32
    return %arg0, %c0_i32, %c0_i32_0 : i32, i32, i32
  }
  func.func @transform_1(%arg0: i32) -> (i32, i32, i32) {
    %c0_i32 = arith.constant 0 : i32
    %c0_i32_0 = arith.constant 0 : i32
    %c0_i32_1 = arith.constant 0 : i32
    %c0_i32_2 = arith.constant 0 : i32
    return %c0_i32, %c0_i32_0, %c0_i32_1 : i32, i32, i32
  }
  func.func @transform_2(%arg0: i32) -> (i32, i32, i32) {
    %c0_i32 = arith.constant 0 : i32
    %c0_i32_0 = arith.constant 0 : i32
    %c0_i32_1 = arith.constant 0 : i32
    %c0_i32_2 = arith.constant 0 : i32
    return %c0_i32, %c0_i32_0, %c0_i32_1 : i32, i32, i32
  }
  func.func @transform_3(%arg0: i32) -> (i32, i32) {
    %c0_i32 = arith.constant 0 : i32
    %c0_i32_0 = arith.constant 0 : i32
    %c0_i32_1 = arith.constant 0 : i32
    return %c0_i32, %c0_i32_0 : i32, i32
  }
  func.func @transform_4(%arg0: i32) -> (i32, i32, i32) {
    %c0_i32 = arith.constant 0 : i32
    %c0_i32_0 = arith.constant 0 : i32
    %c0_i32_1 = arith.constant 0 : i32
    %c0_i32_2 = arith.constant 0 : i32
    return %c0_i32, %c0_i32_0, %c0_i32_1 : i32, i32, i32
  }
  func.func @transform_5(%arg0: i32) -> (i32, i32, i32) {
    %c0_i32 = arith.constant 0 : i32
    %c0_i32_0 = arith.constant 0 : i32
    %c0_i32_1 = arith.constant 0 : i32
    %c0_i32_2 = arith.constant 0 : i32
    return %c0_i32, %c0_i32_0, %c0_i32_1 : i32, i32, i32
  }
  func.func @transform_6(%arg0: i32) -> (i32, i32) {
    %c0_i32 = arith.constant 0 : i32
    %c0_i32_0 = arith.constant 0 : i32
    %c0_i32_1 = arith.constant 0 : i32
    return %c0_i32, %c0_i32_0 : i32, i32
  }
  func.func @transform_7(%arg0: i32) -> (i32, i32, i32) {
    %c0_i32 = arith.constant 0 : i32
    %c0_i32_0 = arith.constant 0 : i32
    %c0_i32_1 = arith.constant 0 : i32
    return %arg0, %c0_i32, %c0_i32_0 : i32, i32, i32
  }
}

module attributes {stable_mosaic.version = 11 : i64} {
  func.func @_caps_routing_kernel(%arg0: i32, %arg1: memref<1x8x144xf32, #tpu.memory_space<vmem>>, %arg2: memref<10x16x8x144xf32, #tpu.memory_space<vmem>>, %arg3: memref<1x10x16xf32, #tpu.memory_space<vmem>>, %arg4: memref<10x16x144xf32, #tpu.memory_space<vmem>>) attributes {dimension_semantics = [#tpu.dimension_semantics<parallel>], iteration_bounds = array<i64: 2>, scalar_prefetch = 0 : i64, scratch_operands = 1 : i64, tpu.core_type = #tpu.core_type<tc>, window_params = [{transform_indices = @transform_0, window_bounds = array<i64: 1, 8, 144>}, {pipeline_mode = #tpu.pipeline_mode<synchronous>, transform_indices = @transform_1, window_bounds = array<i64: 10, 16, 8, 144>}, {transform_indices = @transform_2, window_bounds = array<i64: 1, 10, 16>}]} {
    %c0 = arith.constant 0 : index
    %c0_0 = arith.constant 0 : index
    %c0_1 = arith.constant 0 : index
    %0 = vector.load %arg1[%c0, %c0_0, %c0_1] : memref<1x8x144xf32, #tpu.memory_space<vmem>>, vector<1x8x144xf32>
    %1 = vector.shape_cast %0 : vector<1x8x144xf32> to vector<8x144xf32>
    %2 = arith.mulf %1, %1 : vector<8x144xf32>
    %cst = arith.constant dense<0.000000e+00> : vector<144xf32>
    %3 = vector.multi_reduction <add>, %2, %cst [0] : vector<8x144xf32> to vector<144xf32>
    %4 = vector.shape_cast %3 : vector<144xf32> to vector<1x144xf32>
    %cst_2 = arith.constant 1.000000e+00 : f32
    %5 = vector.broadcast %cst_2 : f32 to vector<1x144xf32>
    %6 = arith.addf %5, %4 : vector<1x144xf32>
    %7 = tpu.reciprocal %6 {approx = true} : vector<1x144xf32> -> vector<1x144xf32>
    %8 = arith.mulf %4, %7 : vector<1x144xf32>
    %cst_3 = arith.constant 9.99999971E-10 : f32
    %9 = vector.broadcast %cst_3 : f32 to vector<1x144xf32>
    %10 = arith.addf %4, %9 : vector<1x144xf32>
    %11 = math.rsqrt %10 : vector<1x144xf32>
    %12 = arith.mulf %8, %11 : vector<1x144xf32>
    %13 = vector.broadcast %12 : vector<1x144xf32> to vector<8x144xf32>
    %14 = arith.mulf %1, %13 : vector<8x144xf32>
    %c0_4 = arith.constant 0 : index
    %c0_5 = arith.constant 0 : index
    %c0_6 = arith.constant 0 : index
    %c0_7 = arith.constant 0 : index
    %15 = vector.load %arg2[%c0_4, %c0_5, %c0_6, %c0_7] : memref<10x16x8x144xf32, #tpu.memory_space<vmem>>, vector<1x16x8x144xf32>
    %16 = vector.shape_cast %15 : vector<1x16x8x144xf32> to vector<16x8x144xf32>
    %17 = vector.shape_cast %14 : vector<8x144xf32> to vector<1x8x144xf32>
    %18 = vector.broadcast %17 : vector<1x8x144xf32> to vector<16x8x144xf32>
    %19 = arith.mulf %16, %18 : vector<16x8x144xf32>
    %cst_8 = arith.constant dense<0.000000e+00> : vector<16x144xf32>
    %20 = vector.multi_reduction <add>, %19, %cst_8 [1] : vector<16x8x144xf32> to vector<16x144xf32>
    %c0_9 = arith.constant 0 : index
    %c0_10 = arith.constant 0 : index
    %c0_11 = arith.constant 0 : index
    %21 = vector.load %arg4[%c0_9, %c0_10, %c0_11] : memref<10x16x144xf32, #tpu.memory_space<vmem>>, vector<1x16x144xf32>
    %22 = vector.shape_cast %21 : vector<1x16x144xf32> to vector<16x144xf32>
    %23 = vector.shape_cast %20 : vector<16x144xf32> to vector<1x16x144xf32>
    tpu.vector_store %arg4[%c0_9, %c0_10, %c0_11], %23 {strides = array<i32>} : memref<10x16x144xf32, #tpu.memory_space<vmem>>, vector<1x16x144xf32>,
    %c1 = arith.constant 1 : index
    %c0_12 = arith.constant 0 : index
    %c0_13 = arith.constant 0 : index
    %c0_14 = arith.constant 0 : index
    %24 = vector.load %arg2[%c1, %c0_12, %c0_13, %c0_14] : memref<10x16x8x144xf32, #tpu.memory_space<vmem>>, vector<1x16x8x144xf32>
    %25 = vector.shape_cast %24 : vector<1x16x8x144xf32> to vector<16x8x144xf32>
    %26 = vector.shape_cast %14 : vector<8x144xf32> to vector<1x8x144xf32>
    %27 = vector.broadcast %26 : vector<1x8x144xf32> to vector<16x8x144xf32>
    %28 = arith.mulf %25, %27 : vector<16x8x144xf32>
    %cst_15 = arith.constant dense<0.000000e+00> : vector<16x144xf32>
    %29 = vector.multi_reduction <add>, %28, %cst_15 [1] : vector<16x8x144xf32> to vector<16x144xf32>
    %c1_16 = arith.constant 1 : index
    %c0_17 = arith.constant 0 : index
    %c0_18 = arith.constant 0 : index
    %30 = vector.load %arg4[%c1_16, %c0_17, %c0_18] : memref<10x16x144xf32, #tpu.memory_space<vmem>>, vector<1x16x144xf32>
    %31 = vector.shape_cast %30 : vector<1x16x144xf32> to vector<16x144xf32>
    %32 = vector.shape_cast %29 : vector<16x144xf32> to vector<1x16x144xf32>
    tpu.vector_store %arg4[%c1_16, %c0_17, %c0_18], %32 {strides = array<i32>} : memref<10x16x144xf32, #tpu.memory_space<vmem>>, vector<1x16x144xf32>,
    %c2 = arith.constant 2 : index
    %c0_19 = arith.constant 0 : index
    %c0_20 = arith.constant 0 : index
    %c0_21 = arith.constant 0 : index
    %33 = vector.load %arg2[%c2, %c0_19, %c0_20, %c0_21] : memref<10x16x8x144xf32, #tpu.memory_space<vmem>>, vector<1x16x8x144xf32>
    %34 = vector.shape_cast %33 : vector<1x16x8x144xf32> to vector<16x8x144xf32>
    %35 = vector.shape_cast %14 : vector<8x144xf32> to vector<1x8x144xf32>
    %36 = vector.broadcast %35 : vector<1x8x144xf32> to vector<16x8x144xf32>
    %37 = arith.mulf %34, %36 : vector<16x8x144xf32>
    %cst_22 = arith.constant dense<0.000000e+00> : vector<16x144xf32>
    %38 = vector.multi_reduction <add>, %37, %cst_22 [1] : vector<16x8x144xf32> to vector<16x144xf32>
    %c2_23 = arith.constant 2 : index
    %c0_24 = arith.constant 0 : index
    %c0_25 = arith.constant 0 : index
    %39 = vector.load %arg4[%c2_23, %c0_24, %c0_25] : memref<10x16x144xf32, #tpu.memory_space<vmem>>, vector<1x16x144xf32>
    %40 = vector.shape_cast %39 : vector<1x16x144xf32> to vector<16x144xf32>
    %41 = vector.shape_cast %38 : vector<16x144xf32> to vector<1x16x144xf32>
    tpu.vector_store %arg4[%c2_23, %c0_24, %c0_25], %41 {strides = array<i32>} : memref<10x16x144xf32, #tpu.memory_space<vmem>>, vector<1x16x144xf32>,
    %c3 = arith.constant 3 : index
    %c0_26 = arith.constant 0 : index
    %c0_27 = arith.constant 0 : index
    %c0_28 = arith.constant 0 : index
    %42 = vector.load %arg2[%c3, %c0_26, %c0_27, %c0_28] : memref<10x16x8x144xf32, #tpu.memory_space<vmem>>, vector<1x16x8x144xf32>
    %43 = vector.shape_cast %42 : vector<1x16x8x144xf32> to vector<16x8x144xf32>
    %44 = vector.shape_cast %14 : vector<8x144xf32> to vector<1x8x144xf32>
    %45 = vector.broadcast %44 : vector<1x8x144xf32> to vector<16x8x144xf32>
    %46 = arith.mulf %43, %45 : vector<16x8x144xf32>
    %cst_29 = arith.constant dense<0.000000e+00> : vector<16x144xf32>
    %47 = vector.multi_reduction <add>, %46, %cst_29 [1] : vector<16x8x144xf32> to vector<16x144xf32>
    %c3_30 = arith.constant 3 : index
    %c0_31 = arith.constant 0 : index
    %c0_32 = arith.constant 0 : index
    %48 = vector.load %arg4[%c3_30, %c0_31, %c0_32] : memref<10x16x144xf32, #tpu.memory_space<vmem>>, vector<1x16x144xf32>
    %49 = vector.shape_cast %48 : vector<1x16x144xf32> to vector<16x144xf32>
    %50 = vector.shape_cast %47 : vector<16x144xf32> to vector<1x16x144xf32>
    tpu.vector_store %arg4[%c3_30, %c0_31, %c0_32], %50 {strides = array<i32>} : memref<10x16x144xf32, #tpu.memory_space<vmem>>, vector<1x16x144xf32>,
    %c4 = arith.constant 4 : index
    %c0_33 = arith.constant 0 : index
    %c0_34 = arith.constant 0 : index
    %c0_35 = arith.constant 0 : index
    %51 = vector.load %arg2[%c4, %c0_33, %c0_34, %c0_35] : memref<10x16x8x144xf32, #tpu.memory_space<vmem>>, vector<1x16x8x144xf32>
    %52 = vector.shape_cast %51 : vector<1x16x8x144xf32> to vector<16x8x144xf32>
    %53 = vector.shape_cast %14 : vector<8x144xf32> to vector<1x8x144xf32>
    %54 = vector.broadcast %53 : vector<1x8x144xf32> to vector<16x8x144xf32>
    %55 = arith.mulf %52, %54 : vector<16x8x144xf32>
    %cst_36 = arith.constant dense<0.000000e+00> : vector<16x144xf32>
    %56 = vector.multi_reduction <add>, %55, %cst_36 [1] : vector<16x8x144xf32> to vector<16x144xf32>
    %c4_37 = arith.constant 4 : index
    %c0_38 = arith.constant 0 : index
    %c0_39 = arith.constant 0 : index
    %57 = vector.load %arg4[%c4_37, %c0_38, %c0_39] : memref<10x16x144xf32, #tpu.memory_space<vmem>>, vector<1x16x144xf32>
    %58 = vector.shape_cast %57 : vector<1x16x144xf32> to vector<16x144xf32>
    %59 = vector.shape_cast %56 : vector<16x144xf32> to vector<1x16x144xf32>
    tpu.vector_store %arg4[%c4_37, %c0_38, %c0_39], %59 {strides = array<i32>} : memref<10x16x144xf32, #tpu.memory_space<vmem>>, vector<1x16x144xf32>,
    %c5 = arith.constant 5 : index
    %c0_40 = arith.constant 0 : index
    %c0_41 = arith.constant 0 : index
    %c0_42 = arith.constant 0 : index
    %60 = vector.load %arg2[%c5, %c0_40, %c0_41, %c0_42] : memref<10x16x8x144xf32, #tpu.memory_space<vmem>>, vector<1x16x8x144xf32>
    %61 = vector.shape_cast %60 : vector<1x16x8x144xf32> to vector<16x8x144xf32>
    %62 = vector.shape_cast %14 : vector<8x144xf32> to vector<1x8x144xf32>
    %63 = vector.broadcast %62 : vector<1x8x144xf32> to vector<16x8x144xf32>
    %64 = arith.mulf %61, %63 : vector<16x8x144xf32>
    %cst_43 = arith.constant dense<0.000000e+00> : vector<16x144xf32>
    %65 = vector.multi_reduction <add>, %64, %cst_43 [1] : vector<16x8x144xf32> to vector<16x144xf32>
    %c5_44 = arith.constant 5 : index
    %c0_45 = arith.constant 0 : index
    %c0_46 = arith.constant 0 : index
    %66 = vector.load %arg4[%c5_44, %c0_45, %c0_46] : memref<10x16x144xf32, #tpu.memory_space<vmem>>, vector<1x16x144xf32>
    %67 = vector.shape_cast %66 : vector<1x16x144xf32> to vector<16x144xf32>
    %68 = vector.shape_cast %65 : vector<16x144xf32> to vector<1x16x144xf32>
    tpu.vector_store %arg4[%c5_44, %c0_45, %c0_46], %68 {strides = array<i32>} : memref<10x16x144xf32, #tpu.memory_space<vmem>>, vector<1x16x144xf32>,
    %c6 = arith.constant 6 : index
    %c0_47 = arith.constant 0 : index
    %c0_48 = arith.constant 0 : index
    %c0_49 = arith.constant 0 : index
    %69 = vector.load %arg2[%c6, %c0_47, %c0_48, %c0_49] : memref<10x16x8x144xf32, #tpu.memory_space<vmem>>, vector<1x16x8x144xf32>
    %70 = vector.shape_cast %69 : vector<1x16x8x144xf32> to vector<16x8x144xf32>
    %71 = vector.shape_cast %14 : vector<8x144xf32> to vector<1x8x144xf32>
    %72 = vector.broadcast %71 : vector<1x8x144xf32> to vector<16x8x144xf32>
    %73 = arith.mulf %70, %72 : vector<16x8x144xf32>
    %cst_50 = arith.constant dense<0.000000e+00> : vector<16x144xf32>
    %74 = vector.multi_reduction <add>, %73, %cst_50 [1] : vector<16x8x144xf32> to vector<16x144xf32>
    %c6_51 = arith.constant 6 : index
    %c0_52 = arith.constant 0 : index
    %c0_53 = arith.constant 0 : index
    %75 = vector.load %arg4[%c6_51, %c0_52, %c0_53] : memref<10x16x144xf32, #tpu.memory_space<vmem>>, vector<1x16x144xf32>
    %76 = vector.shape_cast %75 : vector<1x16x144xf32> to vector<16x144xf32>
    %77 = vector.shape_cast %74 : vector<16x144xf32> to vector<1x16x144xf32>
    tpu.vector_store %arg4[%c6_51, %c0_52, %c0_53], %77 {strides = array<i32>} : memref<10x16x144xf32, #tpu.memory_space<vmem>>, vector<1x16x144xf32>,
    %c7 = arith.constant 7 : index
    %c0_54 = arith.constant 0 : index
    %c0_55 = arith.constant 0 : index
    %c0_56 = arith.constant 0 : index
    %78 = vector.load %arg2[%c7, %c0_54, %c0_55, %c0_56] : memref<10x16x8x144xf32, #tpu.memory_space<vmem>>, vector<1x16x8x144xf32>
    %79 = vector.shape_cast %78 : vector<1x16x8x144xf32> to vector<16x8x144xf32>
    %80 = vector.shape_cast %14 : vector<8x144xf32> to vector<1x8x144xf32>
    %81 = vector.broadcast %80 : vector<1x8x144xf32> to vector<16x8x144xf32>
    %82 = arith.mulf %79, %81 : vector<16x8x144xf32>
    %cst_57 = arith.constant dense<0.000000e+00> : vector<16x144xf32>
    %83 = vector.multi_reduction <add>, %82, %cst_57 [1] : vector<16x8x144xf32> to vector<16x144xf32>
    %c7_58 = arith.constant 7 : index
    %c0_59 = arith.constant 0 : index
    %c0_60 = arith.constant 0 : index
    %84 = vector.load %arg4[%c7_58, %c0_59, %c0_60] : memref<10x16x144xf32, #tpu.memory_space<vmem>>, vector<1x16x144xf32>
    %85 = vector.shape_cast %84 : vector<1x16x144xf32> to vector<16x144xf32>
    %86 = vector.shape_cast %83 : vector<16x144xf32> to vector<1x16x144xf32>
    tpu.vector_store %arg4[%c7_58, %c0_59, %c0_60], %86 {strides = array<i32>} : memref<10x16x144xf32, #tpu.memory_space<vmem>>, vector<1x16x144xf32>,
    %c8 = arith.constant 8 : index
    %c0_61 = arith.constant 0 : index
    %c0_62 = arith.constant 0 : index
    %c0_63 = arith.constant 0 : index
    %87 = vector.load %arg2[%c8, %c0_61, %c0_62, %c0_63] : memref<10x16x8x144xf32, #tpu.memory_space<vmem>>, vector<1x16x8x144xf32>
    %88 = vector.shape_cast %87 : vector<1x16x8x144xf32> to vector<16x8x144xf32>
    %89 = vector.shape_cast %14 : vector<8x144xf32> to vector<1x8x144xf32>
    %90 = vector.broadcast %89 : vector<1x8x144xf32> to vector<16x8x144xf32>
    %91 = arith.mulf %88, %90 : vector<16x8x144xf32>
    %cst_64 = arith.constant dense<0.000000e+00> : vector<16x144xf32>
    %92 = vector.multi_reduction <add>, %91, %cst_64 [1] : vector<16x8x144xf32> to vector<16x144xf32>
    %c8_65 = arith.constant 8 : index
    %c0_66 = arith.constant 0 : index
    %c0_67 = arith.constant 0 : index
    %93 = vector.load %arg4[%c8_65, %c0_66, %c0_67] : memref<10x16x144xf32, #tpu.memory_space<vmem>>, vector<1x16x144xf32>
    %94 = vector.shape_cast %93 : vector<1x16x144xf32> to vector<16x144xf32>
    %95 = vector.shape_cast %92 : vector<16x144xf32> to vector<1x16x144xf32>
    tpu.vector_store %arg4[%c8_65, %c0_66, %c0_67], %95 {strides = array<i32>} : memref<10x16x144xf32, #tpu.memory_space<vmem>>, vector<1x16x144xf32>,
    %c9 = arith.constant 9 : index
    %c0_68 = arith.constant 0 : index
    %c0_69 = arith.constant 0 : index
    %c0_70 = arith.constant 0 : index
    %96 = vector.load %arg2[%c9, %c0_68, %c0_69, %c0_70] : memref<10x16x8x144xf32, #tpu.memory_space<vmem>>, vector<1x16x8x144xf32>
    %97 = vector.shape_cast %96 : vector<1x16x8x144xf32> to vector<16x8x144xf32>
    %98 = vector.shape_cast %14 : vector<8x144xf32> to vector<1x8x144xf32>
    %99 = vector.broadcast %98 : vector<1x8x144xf32> to vector<16x8x144xf32>
    %100 = arith.mulf %97, %99 : vector<16x8x144xf32>
    %cst_71 = arith.constant dense<0.000000e+00> : vector<16x144xf32>
    %101 = vector.multi_reduction <add>, %100, %cst_71 [1] : vector<16x8x144xf32> to vector<16x144xf32>
    %c9_72 = arith.constant 9 : index
    %c0_73 = arith.constant 0 : index
    %c0_74 = arith.constant 0 : index
    %102 = vector.load %arg4[%c9_72, %c0_73, %c0_74] : memref<10x16x144xf32, #tpu.memory_space<vmem>>, vector<1x16x144xf32>
    %103 = vector.shape_cast %102 : vector<1x16x144xf32> to vector<16x144xf32>
    %104 = vector.shape_cast %101 : vector<16x144xf32> to vector<1x16x144xf32>
    tpu.vector_store %arg4[%c9_72, %c0_73, %c0_74], %104 {strides = array<i32>} : memref<10x16x144xf32, #tpu.memory_space<vmem>>, vector<1x16x144xf32>,
    %c0_75 = arith.constant 0 : index
    %c0_76 = arith.constant 0 : index
    %c0_77 = arith.constant 0 : index
    %105 = vector.load %arg4[%c0_75, %c0_76, %c0_77] : memref<10x16x144xf32, #tpu.memory_space<vmem>>, vector<10x16x144xf32>
    %cst_78 = arith.constant 0.000000e+00 : f32
    %106 = vector.broadcast %cst_78 : f32 to vector<10x144xf32>
    %cst_79 = arith.constant dense<0xFF800000> : vector<144xf32>
    %107 = vector.multi_reduction <maximumf>, %106, %cst_79 [0] : vector<10x144xf32> to vector<144xf32>
    %108 = vector.shape_cast %107 : vector<144xf32> to vector<1x144xf32>
    %109 = vector.broadcast %108 : vector<1x144xf32> to vector<10x144xf32>
    %110 = arith.subf %106, %109 : vector<10x144xf32>
    %111 = math.exp %110 : vector<10x144xf32>
    %cst_80 = arith.constant dense<0.000000e+00> : vector<144xf32>
    %112 = vector.multi_reduction <add>, %111, %cst_80 [0] : vector<10x144xf32> to vector<144xf32>
    %113 = vector.shape_cast %112 : vector<144xf32> to vector<1x144xf32>
    %114 = tpu.reciprocal %113 {approx = true} : vector<1x144xf32> -> vector<1x144xf32>
    %115 = vector.broadcast %114 : vector<1x144xf32> to vector<10x144xf32>
    %116 = arith.mulf %111, %115 : vector<10x144xf32>
    %117 = vector.shape_cast %116 : vector<10x144xf32> to vector<10x1x144xf32>
    %118 = vector.broadcast %117 : vector<10x1x144xf32> to vector<10x16x144xf32>
    %119 = arith.mulf %118, %105 : vector<10x16x144xf32>
    %cst_81 = arith.constant dense<0.000000e+00> : vector<10x16xf32>
    %120 = vector.multi_reduction <add>, %119, %cst_81 [2] : vector<10x16x144xf32> to vector<10x16xf32>
    %121 = arith.mulf %120, %120 : vector<10x16xf32>
    %cst_82 = arith.constant dense<0.000000e+00> : vector<10xf32>
    %122 = vector.multi_reduction <add>, %121, %cst_82 [1] : vector<10x16xf32> to vector<10xf32>
    %123 = vector.shape_cast %122 : vector<10xf32> to vector<10x1xf32>
    %124 = vector.broadcast %123 : vector<10x1xf32> to vector<10x16xf32>
    %125 = arith.mulf %120, %124 : vector<10x16xf32>
    %cst_83 = arith.constant 1.000000e+00 : f32
    %126 = vector.broadcast %cst_83 : f32 to vector<10x1xf32>
    %127 = arith.addf %126, %123 : vector<10x1xf32>
    %128 = tpu.reciprocal %127 {approx = true} : vector<10x1xf32> -> vector<10x1xf32>
    %129 = vector.broadcast %128 : vector<10x1xf32> to vector<10x16xf32>
    %130 = arith.mulf %125, %129 : vector<10x16xf32>
    %cst_84 = arith.constant 9.99999971E-10 : f32
    %131 = vector.broadcast %cst_84 : f32 to vector<10x1xf32>
    %132 = arith.addf %123, %131 : vector<10x1xf32>
    %133 = math.rsqrt %132 : vector<10x1xf32>
    %134 = vector.broadcast %133 : vector<10x1xf32> to vector<10x16xf32>
    %135 = arith.mulf %130, %134 : vector<10x16xf32>
    %136 = vector.shape_cast %135 : vector<10x16xf32> to vector<10x16x1xf32>
    %137 = vector.broadcast %136 : vector<10x16x1xf32> to vector<10x16x144xf32>
    %138 = arith.mulf %105, %137 : vector<10x16x144xf32>
    %cst_85 = arith.constant dense<0.000000e+00> : vector<10x144xf32>
    %139 = vector.multi_reduction <add>, %138, %cst_85 [1] : vector<10x16x144xf32> to vector<10x144xf32>
    %140 = arith.addf %106, %139 : vector<10x144xf32>
    %cst_86 = arith.constant dense<0xFF800000> : vector<144xf32>
    %141 = vector.multi_reduction <maximumf>, %140, %cst_86 [0] : vector<10x144xf32> to vector<144xf32>
    %142 = vector.shape_cast %141 : vector<144xf32> to vector<1x144xf32>
    %143 = vector.broadcast %142 : vector<1x144xf32> to vector<10x144xf32>
    %144 = arith.subf %140, %143 : vector<10x144xf32>
    %145 = math.exp %144 : vector<10x144xf32>
    %cst_87 = arith.constant dense<0.000000e+00> : vector<144xf32>
    %146 = vector.multi_reduction <add>, %145, %cst_87 [0] : vector<10x144xf32> to vector<144xf32>
    %147 = vector.shape_cast %146 : vector<144xf32> to vector<1x144xf32>
    %148 = tpu.reciprocal %147 {approx = true} : vector<1x144xf32> -> vector<1x144xf32>
    %149 = vector.broadcast %148 : vector<1x144xf32> to vector<10x144xf32>
    %150 = arith.mulf %145, %149 : vector<10x144xf32>
    %151 = vector.shape_cast %150 : vector<10x144xf32> to vector<10x1x144xf32>
    %152 = vector.broadcast %151 : vector<10x1x144xf32> to vector<10x16x144xf32>
    %153 = arith.mulf %152, %105 : vector<10x16x144xf32>
    %cst_88 = arith.constant dense<0.000000e+00> : vector<10x16xf32>
    %154 = vector.multi_reduction <add>, %153, %cst_88 [2] : vector<10x16x144xf32> to vector<10x16xf32>
    %155 = arith.mulf %154, %154 : vector<10x16xf32>
    %cst_89 = arith.constant dense<0.000000e+00> : vector<10xf32>
    %156 = vector.multi_reduction <add>, %155, %cst_89 [1] : vector<10x16xf32> to vector<10xf32>
    %157 = vector.shape_cast %156 : vector<10xf32> to vector<10x1xf32>
    %158 = vector.broadcast %157 : vector<10x1xf32> to vector<10x16xf32>
    %159 = arith.mulf %154, %158 : vector<10x16xf32>
    %cst_90 = arith.constant 1.000000e+00 : f32
    %160 = vector.broadcast %cst_90 : f32 to vector<10x1xf32>
    %161 = arith.addf %160, %157 : vector<10x1xf32>
    %162 = tpu.reciprocal %161 {approx = true} : vector<10x1xf32> -> vector<10x1xf32>
    %163 = vector.broadcast %162 : vector<10x1xf32> to vector<10x16xf32>
    %164 = arith.mulf %159, %163 : vector<10x16xf32>
    %cst_91 = arith.constant 9.99999971E-10 : f32
    %165 = vector.broadcast %cst_91 : f32 to vector<10x1xf32>
    %166 = arith.addf %157, %165 : vector<10x1xf32>
    %167 = math.rsqrt %166 : vector<10x1xf32>
    %168 = vector.broadcast %167 : vector<10x1xf32> to vector<10x16xf32>
    %169 = arith.mulf %164, %168 : vector<10x16xf32>
    %170 = vector.shape_cast %169 : vector<10x16xf32> to vector<10x16x1xf32>
    %171 = vector.broadcast %170 : vector<10x16x1xf32> to vector<10x16x144xf32>
    %172 = arith.mulf %105, %171 : vector<10x16x144xf32>
    %cst_92 = arith.constant dense<0.000000e+00> : vector<10x144xf32>
    %173 = vector.multi_reduction <add>, %172, %cst_92 [1] : vector<10x16x144xf32> to vector<10x144xf32>
    %174 = arith.addf %140, %173 : vector<10x144xf32>
    %cst_93 = arith.constant dense<0xFF800000> : vector<144xf32>
    %175 = vector.multi_reduction <maximumf>, %174, %cst_93 [0] : vector<10x144xf32> to vector<144xf32>
    %176 = vector.shape_cast %175 : vector<144xf32> to vector<1x144xf32>
    %177 = vector.broadcast %176 : vector<1x144xf32> to vector<10x144xf32>
    %178 = arith.subf %174, %177 : vector<10x144xf32>
    %179 = math.exp %178 : vector<10x144xf32>
    %cst_94 = arith.constant dense<0.000000e+00> : vector<144xf32>
    %180 = vector.multi_reduction <add>, %179, %cst_94 [0] : vector<10x144xf32> to vector<144xf32>
    %181 = vector.shape_cast %180 : vector<144xf32> to vector<1x144xf32>
    %182 = tpu.reciprocal %181 {approx = true} : vector<1x144xf32> -> vector<1x144xf32>
    %183 = vector.broadcast %182 : vector<1x144xf32> to vector<10x144xf32>
    %184 = arith.mulf %179, %183 : vector<10x144xf32>
    %185 = vector.shape_cast %184 : vector<10x144xf32> to vector<10x1x144xf32>
    %186 = vector.broadcast %185 : vector<10x1x144xf32> to vector<10x16x144xf32>
    %187 = arith.mulf %186, %105 : vector<10x16x144xf32>
    %cst_95 = arith.constant dense<0.000000e+00> : vector<10x16xf32>
    %188 = vector.multi_reduction <add>, %187, %cst_95 [2] : vector<10x16x144xf32> to vector<10x16xf32>
    %189 = arith.mulf %188, %188 : vector<10x16xf32>
    %cst_96 = arith.constant dense<0.000000e+00> : vector<10xf32>
    %190 = vector.multi_reduction <add>, %189, %cst_96 [1] : vector<10x16xf32> to vector<10xf32>
    %191 = vector.shape_cast %190 : vector<10xf32> to vector<10x1xf32>
    %192 = vector.broadcast %191 : vector<10x1xf32> to vector<10x16xf32>
    %193 = arith.mulf %188, %192 : vector<10x16xf32>
    %cst_97 = arith.constant 1.000000e+00 : f32
    %194 = vector.broadcast %cst_97 : f32 to vector<10x1xf32>
    %195 = arith.addf %194, %191 : vector<10x1xf32>
    %196 = tpu.reciprocal %195 {approx = true} : vector<10x1xf32> -> vector<10x1xf32>
    %197 = vector.broadcast %196 : vector<10x1xf32> to vector<10x16xf32>
    %198 = arith.mulf %193, %197 : vector<10x16xf32>
    %cst_98 = arith.constant 9.99999971E-10 : f32
    %199 = vector.broadcast %cst_98 : f32 to vector<10x1xf32>
    %200 = arith.addf %191, %199 : vector<10x1xf32>
    %201 = math.rsqrt %200 : vector<10x1xf32>
    %202 = vector.broadcast %201 : vector<10x1xf32> to vector<10x16xf32>
    %203 = arith.mulf %198, %202 : vector<10x16xf32>
    %c0_99 = arith.constant 0 : index
    %c0_100 = arith.constant 0 : index
    %c0_101 = arith.constant 0 : index
    %204 = vector.load %arg3[%c0_99, %c0_100, %c0_101] : memref<1x10x16xf32, #tpu.memory_space<vmem>>, vector<1x10x16xf32>
    %205 = vector.shape_cast %204 : vector<1x10x16xf32> to vector<10x16xf32>
    %206 = vector.shape_cast %203 : vector<10x16xf32> to vector<1x10x16xf32>
    tpu.vector_store %arg3[%c0_99, %c0_100, %c0_101], %206 {strides = array<i32>} : memref<1x10x16xf32, #tpu.memory_space<vmem>>, vector<1x10x16xf32>,
    return
  }
  func.func @transform_0(%arg0: i32) -> (i32, i32, i32) {
    %c0_i32 = arith.constant 0 : i32
    %c0_i32_0 = arith.constant 0 : i32
    %c0_i32_1 = arith.constant 0 : i32
    return %arg0, %c0_i32, %c0_i32_0 : i32, i32, i32
  }
  func.func @transform_1(%arg0: i32) -> (i32, i32, i32, i32) {
    %c0_i32 = arith.constant 0 : i32
    %c0_i32_0 = arith.constant 0 : i32
    %c0_i32_1 = arith.constant 0 : i32
    %c0_i32_2 = arith.constant 0 : i32
    %c0_i32_3 = arith.constant 0 : i32
    return %c0_i32, %c0_i32_0, %c0_i32_1, %c0_i32_2 : i32, i32, i32, i32
  }
  func.func @transform_2(%arg0: i32) -> (i32, i32, i32) {
    %c0_i32 = arith.constant 0 : i32
    %c0_i32_0 = arith.constant 0 : i32
    %c0_i32_1 = arith.constant 0 : i32
    return %arg0, %c0_i32, %c0_i32_0 : i32, i32, i32
  }
}

</mosaic_0001>

<llo_original>
// kernel: capsnet_forward.2
$region0: #{capsnet_forward.2}
  #allocation0 [shape = 'u32[]', space=smem, size = 0x4, offset = 0x4, fixed_abs, tag = 'smem constant byte address 0x4 - core index']
  #allocation1 [shape = 'u32[72,128]{1,0:T(1,128)}', space=vmem, size = 0x9000, scoped, tag = 'internal scratch']
  %s0 = inlined_call_operand.vmem [shape: f32[2,4,256], index: 0, kind: input, shape index: {}]
  %s1 = inlined_call_operand.vmem [shape: f32[9,256,196], index: 1, kind: input, shape index: {}]
  %s2 = inlined_call_operand.vmem [shape: f32[9,16,4], index: 2, kind: input, shape index: {}]
  %s3 = inlined_call_operand.vmem [shape: f32[16,1], index: 3, kind: input, shape index: {}]
  %s4 = inlined_call_operand.vmem [shape: f32[9,196,36], index: 4, kind: input, shape index: {}]
  %s5 = inlined_call_operand.vmem [shape: f32[9,32,16], index: 5, kind: input, shape index: {}]
  %s6 = inlined_call_operand.vmem [shape: f32[32,1], index: 6, kind: input, shape index: {}]
  %s7 = inlined_call_operand.vmem [shape: f32[2,32,36], index: 7, kind: output, shape index: {}]
  %s8 = sld [smem:[#allocation0]]
  $region61: #{capsnet_forward.2} parent=0
    _
  %s10 = ssub.s32 1, %s8
  %s11 = scalar_select 0, %s10, %s8
  loop: start=0, step=1, limit=4
  $region2: #{capsnet_forward.2} parent=0 // loop_pre_header
    _
  $region3: #{capsnet_forward.2} parent=0 // loop_header
    %s13 = sphi 0, %s17
    %p14 = scmp.ge.s32.totalorder %s13, 4
    %s23 = sphi 0, %s25
    %s26 = sphi 0, %s23
    %s27 = sphi 0, %s26
    %s43 = sphi 0, %s27
    %s47 = sphi 0, %s47
    %s49 = sphi 0, %s47
    %s50 = sphi 0, %s49
    %s64 = sphi 0, %s50
    %s68 = sphi 0, %s68
    %s70 = sphi 0, %s68
    %s71 = sphi 0, %s70
    %s85 = sphi 0, %s71
    %s89 = sphi 0, %s89
    %s91 = sphi 0, %s89
    %s92 = sphi 0, %s91
    %s106 = sphi 0, %s92
    %s110 = sphi 0, %s110
    %s112 = sphi 0, %s110
    %s113 = sphi 0, %s112
    %s127 = sphi 0, %s113
    %s131 = sphi 0, %s131
    %s133 = sphi 0, %s131
    %s134 = sphi 0, %s133
    %s148 = sphi 0, %s134
    %s152 = sphi 0, %s152
    %s154 = sphi 0, %s152
    %s155 = sphi 0, %s154
    %s169 = sphi 0, %s155
    %s175 = sphi 0, %s177
    %s178 = sphi 0, %s175
    %s179 = sphi 0, %s178
    %s195 = sphi 0, %s179
  $region4: #{capsnet_forward.2} parent=0 // loop_header_branch
    %16 = sbr.rel (%p14) target = $region8
  $region5: #{capsnet_forward.2} parent=0 // loop_body
    %s18 = ssub.s32 %s13, 1
    %s19 = ssub.s32 %s13, 2
    %s20 = sadd.s32 %s13, 1
    %s21 = ssub.s32 %s13, %s20
    %p22 = scmp.eq.s32.totalorder %s21, 0
    %s24 = sadd.s32 %s23, 1
    %s25 = scalar_select %p22, %s23, %s24
    %p28 = pneg %p22
    %p29 = scmp.eq.s32.totalorder %s13, 1
    %p30 = por %p28, %p29
    %p31 = scmp.ne.s32.totalorder %s23, %s26
    %p32 = scmp.eq.s32.totalorder %s13, 0
    %p33 = por %p31, %p32
    %p34 = scmp.ne.s32.totalorder %s23, %s26
    %p35 = scmp.eq.s32.totalorder %s18, 1
    %p36 = por %p34, %p35
    %p37 = scmp.ne.s32.totalorder %s26, %s27
    %p38 = scmp.eq.s32.totalorder %s18, 0
    %p39 = por %p37, %p38
    %p40 = scmp.ne.s32.totalorder %s26, %s27
    %p41 = scmp.eq.s32.totalorder %s19, 1
    %p42 = por %p40, %p41
    %p44 = scmp.ne.s32.totalorder %s27, %s43
    %p45 = scmp.eq.s32.totalorder %s19, 0
    %p46 = por %p44, %p45
    %s48 = sadd.s32 %s47, 1
    %p51 = scmp.eq.s32.totalorder %s13, 1
    %p52 = scmp.ne.s32.totalorder %s47, %s49
    %p53 = scmp.eq.s32.totalorder %s13, 0
    %p54 = por %p52, %p53
    %p55 = scmp.ne.s32.totalorder %s47, %s49
    %p56 = scmp.eq.s32.totalorder %s18, 1
    %p57 = por %p55, %p56
    %p58 = scmp.ne.s32.totalorder %s49, %s50
    %p59 = scmp.eq.s32.totalorder %s18, 0
    %p60 = por %p58, %p59
    %p61 = scmp.ne.s32.totalorder %s49, %s50
    %p62 = scmp.eq.s32.totalorder %s19, 1
    %p63 = por %p61, %p62
    %p65 = scmp.ne.s32.totalorder %s50, %s64
    %p66 = scmp.eq.s32.totalorder %s19, 0
    %p67 = por %p65, %p66
    %s69 = sadd.s32 %s68, 1
    %p72 = scmp.eq.s32.totalorder %s13, 1
    %p73 = scmp.ne.s32.totalorder %s68, %s70
    %p74 = scmp.eq.s32.totalorder %s13, 0
    %p75 = por %p73, %p74
    %p76 = scmp.ne.s32.totalorder %s68, %s70
    %p77 = scmp.eq.s32.totalorder %s18, 1
    %p78 = por %p76, %p77
    %p79 = scmp.ne.s32.totalorder %s70, %s71
    %p80 = scmp.eq.s32.totalorder %s18, 0
    %p81 = por %p79, %p80
    %p82 = scmp.ne.s32.totalorder %s70, %s71
    %p83 = scmp.eq.s32.totalorder %s19, 1
    %p84 = por %p82, %p83
    %p86 = scmp.ne.s32.totalorder %s71, %s85
    %p87 = scmp.eq.s32.totalorder %s19, 0
    %p88 = por %p86, %p87
    %s90 = sadd.s32 %s89, 1
    %p93 = scmp.eq.s32.totalorder %s13, 1
    %p94 = scmp.ne.s32.totalorder %s89, %s91
    %p95 = scmp.eq.s32.totalorder %s13, 0
    %p96 = por %p94, %p95
    %p97 = scmp.ne.s32.totalorder %s89, %s91
    %p98 = scmp.eq.s32.totalorder %s18, 1
    %p99 = por %p97, %p98
    %p100 = scmp.ne.s32.totalorder %s91, %s92
    %p101 = scmp.eq.s32.totalorder %s18, 0
    %p102 = por %p100, %p101
    %p103 = scmp.ne.s32.totalorder %s91, %s92
    %p104 = scmp.eq.s32.totalorder %s19, 1
    %p105 = por %p103, %p104
    %p107 = scmp.ne.s32.totalorder %s92, %s106
    %p108 = scmp.eq.s32.totalorder %s19, 0
    %p109 = por %p107, %p108
    %s111 = sadd.s32 %s110, 1
    %p114 = scmp.eq.s32.totalorder %s13, 1
    %p115 = scmp.ne.s32.totalorder %s110, %s112
    %p116 = scmp.eq.s32.totalorder %s13, 0
    %p117 = por %p115, %p116
    %p118 = scmp.ne.s32.totalorder %s110, %s112
    %p119 = scmp.eq.s32.totalorder %s18, 1
    %p120 = por %p118, %p119
    %p121 = scmp.ne.s32.totalorder %s112, %s113
    %p122 = scmp.eq.s32.totalorder %s18, 0
    %p123 = por %p121, %p122
    %p124 = scmp.ne.s32.totalorder %s112, %s113
    %p125 = scmp.eq.s32.totalorder %s19, 1
    %p126 = por %p124, %p125
    %p128 = scmp.ne.s32.totalorder %s113, %s127
    %p129 = scmp.eq.s32.totalorder %s19, 0
    %p130 = por %p128, %p129
    %s132 = sadd.s32 %s131, 1
    %p135 = scmp.eq.s32.totalorder %s13, 1
    %p136 = scmp.ne.s32.totalorder %s131, %s133
    %p137 = scmp.eq.s32.totalorder %s13, 0
    %p138 = por %p136, %p137
    %p139 = scmp.ne.s32.totalorder %s131, %s133
    %p140 = scmp.eq.s32.totalorder %s18, 1
    %p141 = por %p139, %p140
    %p142 = scmp.ne.s32.totalorder %s133, %s134
    %p143 = scmp.eq.s32.totalorder %s18, 0
    %p144 = por %p142, %p143
    %p145 = scmp.ne.s32.totalorder %s133, %s134
    %p146 = scmp.eq.s32.totalorder %s19, 1
    %p147 = por %p145, %p146
    %p149 = scmp.ne.s32.totalorder %s134, %s148
    %p150 = scmp.eq.s32.totalorder %s19, 0
    %p151 = por %p149, %p150
    %s153 = sadd.s32 %s152, 1
    %p156 = scmp.eq.s32.totalorder %s13, 1
    %p157 = scmp.ne.s32.totalorder %s152, %s154
    %p158 = scmp.eq.s32.totalorder %s13, 0
    %p159 = por %p157, %p158
    %p160 = scmp.ne.s32.totalorder %s152, %s154
    %p161 = scmp.eq.s32.totalorder %s18, 1
    %p162 = por %p160, %p161
    %p163 = scmp.ne.s32.totalorder %s154, %s155
    %p164 = scmp.eq.s32.totalorder %s18, 0
    %p165 = por %p163, %p164
    %p166 = scmp.ne.s32.totalorder %s154, %s155
    %p167 = scmp.eq.s32.totalorder %s19, 1
    %p168 = por %p166, %p167
    %p170 = scmp.ne.s32.totalorder %s155, %s169
    %p171 = scmp.eq.s32.totalorder %s19, 0
    %p172 = por %p170, %p171
    %s173 = ssub.s32 %s13, %s20
    %p174 = scmp.eq.s32.totalorder %s173, 0
    %s176 = sadd.s32 %s175, 1
    %s177 = scalar_select %p174, %s175, %s176
    %p180 = pneg %p174
    %p181 = scmp.eq.s32.totalorder %s13, 1
    %p182 = por %p180, %p181
    %p183 = scmp.ne.s32.totalorder %s175, %s178
    %p184 = scmp.eq.s32.totalorder %s13, 0
    %p185 = por %p183, %p184
    %p186 = scmp.ne.s32.totalorder %s175, %s178
    %p187 = scmp.eq.s32.totalorder %s18, 1
    %p188 = por %p186, %p187
    %p189 = scmp.ne.s32.totalorder %s178, %s179
    %p190 = scmp.eq.s32.totalorder %s18, 0
    %p191 = por %p189, %p190
    %p192 = scmp.ne.s32.totalorder %s178, %s179
    %p193 = scmp.eq.s32.totalorder %s19, 1
    %p194 = por %p192, %p193
    %p196 = scmp.ne.s32.totalorder %s179, %s195
    %p197 = scmp.eq.s32.totalorder %s19, 0
    %p198 = por %p196, %p197
    %p199 = scmp.le.s32.totalorder 1, %s13
    %p200 = scmp.lt.s32.totalorder %s13, 3
    %p201 = pnand %p199, %p200
    %p202 = pneg %p201
    // Predicated region
    $region9: #{capsnet_forward.2} parent=5 // pred_check
      _
    $region10: #{capsnet_forward.2} parent=5 // pred_check_branch
      %204 = sbr.rel (%p201) target = $region12
    $region11: #{capsnet_forward.2} parent=5 // pred_region
      %s205 = ssub.s32 %s13, 1
      // Predicated region
      $region13: #{capsnet_forward.2} parent=11 // pred_check
        %p206 = pneg %p60
      $region14: #{capsnet_forward.2} parent=11 // pred_check_branch
        %208 = sbr.rel (%p206) target = $region16
      $region15: #{capsnet_forward.2} parent=11 // pred_region
        _
      $region16: #{capsnet_forward.2} parent=11 // pred_fallthru
        _
      // Predicated region
      $region17: #{capsnet_forward.2} parent=11 // pred_check
        %p209 = pneg %p81
      $region18: #{capsnet_forward.2} parent=11 // pred_check_branch
        %211 = sbr.rel (%p209) target = $region20
      $region19: #{capsnet_forward.2} parent=11 // pred_region
        _
      $region20: #{capsnet_forward.2} parent=11 // pred_fallthru
        _
      // Predicated region
      $region21: #{capsnet_forward.2} parent=11 // pred_check
        %p212 = pneg %p102
      $region22: #{capsnet_forward.2} parent=11 // pred_check_branch
        %214 = sbr.rel (%p212) target = $region24
      $region23: #{capsnet_forward.2} parent=11 // pred_region
        _
      $region24: #{capsnet_forward.2} parent=11 // pred_fallthru
        _
      // Predicated region
      $region25: #{capsnet_forward.2} parent=11 // pred_check
        %p215 = pneg %p123
      $region26: #{capsnet_forward.2} parent=11 // pred_check_branch
        %217 = sbr.rel (%p215) target = $region28
      $region27: #{capsnet_forward.2} parent=11 // pred_region
        _
      $region28: #{capsnet_forward.2} parent=11 // pred_fallthru
        _
      // Predicated region
      $region29: #{capsnet_forward.2} parent=11 // pred_check
        %p218 = pneg %p144
      $region30: #{capsnet_forward.2} parent=11 // pred_check_branch
        %220 = sbr.rel (%p218) target = $region32
      $region31: #{capsnet_forward.2} parent=11 // pred_region
        _
      $region32: #{capsnet_forward.2} parent=11 // pred_fallthru
        _
      // Predicated region
      $region33: #{capsnet_forward.2} parent=11 // pred_check
        %p221 = pneg %p165
      $region34: #{capsnet_forward.2} parent=11 // pred_check_branch
        %223 = sbr.rel (%p221) target = $region36
      $region35: #{capsnet_forward.2} parent=11 // pred_region
        _
      $region36: #{capsnet_forward.2} parent=11 // pred_fallthru
        _
    $region12: #{capsnet_forward.2} parent=5 // pred_fallthru
      _
    %p224 = scmp.lt.s32.totalorder %s13, 2
    // Predicated region
    $region37: #{capsnet_forward.2} parent=5 // pred_check
      %p225 = pneg %p224
    $region38: #{capsnet_forward.2} parent=5 // pred_check_branch
      %227 = sbr.rel (%p225) target = $region40
    $region39: #{capsnet_forward.2} parent=5 // pred_region
      // Predicated region
      $region41: #{capsnet_forward.2} parent=39 // pred_check
        %p228 = pneg %p33
      $region42: #{capsnet_forward.2} parent=39 // pred_check_branch
        %230 = sbr.rel (%p228) target = $region44
      $region43: #{capsnet_forward.2} parent=39 // pred_region
        %p231 = scmp.lt.s32.totalorder %s13, 1
        %s232 = scalar_select %p231, %s13, 1
        %s233 = smul.addr %s232, 2
        %s234 = smul.addr %s233, 4
        %s235 = scalar_lea.vmem %s0, %s234
      $region44: #{capsnet_forward.2} parent=39 // pred_fallthru
        _
    $region40: #{capsnet_forward.2} parent=5 // pred_fallthru
      _
    %p236 = scmp.le.s32.totalorder 1, %s13
    %p237 = scmp.lt.s32.totalorder %s13, 3
    %p238 = pnand %p236, %p237
    %p239 = pneg %p238
    // Predicated region
    $region45: #{capsnet_forward.2} parent=5 // pred_check
      _
    $region46: #{capsnet_forward.2} parent=5 // pred_check_branch
      %241 = sbr.rel (%p238) target = $region48
    $region47: #{capsnet_forward.2} parent=5 // pred_region
      %s242 = ssub.s32 %s13, 1
      %p243 = scmp.lt.s32.totalorder %s18, 1
      %s244 = scalar_select %p243, %s18, 1
      %s245 = smul.addr %s244, 2
      %s246 = smul.addr %s245, 4
      %s247 = scalar_lea.vmem %s0, %s246
      %p248 = pneg %p39
      %p249 = pneg %p36
      %p250 = pneg %p60
      %p251 = pneg %p57
      %p252 = pneg %p81
      %p253 = pneg %p78
      %p254 = pneg %p102
      %p255 = pneg %p99
      %p256 = pneg %p123
      %p257 = pneg %p120
      %p258 = pneg %p144
      %p259 = pneg %p141
      %p260 = pneg %p165
      %p261 = pneg %p162
      %p262 = pneg %p191
      %p263 = pneg %p188
      %p264 = scmp.lt.s32.totalorder %s18, 1
      %s265 = scalar_select %p264, %s18, 1
      %s266 = smul.addr %s265, 4
      %s267 = smul.addr %s266, 8
      %s268 = scalar_lea.vmem %s7, %s267
      %p269 = scmp.lt.s32.totalorder %s18, 1
      %s270 = scalar_select %p269, %s18, 1
      %s271 = smul.addr %s270, 2
      %s272 = smul.addr %s271, 4
      %s273 = scalar_lea.vmem %s0, %s272
      %p274 = scmp.lt.s32.totalorder %s18, 1
      %s275 = scalar_select %p274, %s18, 1
      %s276 = smul.addr %s275, 4
      %s277 = smul.addr %s276, 8
      %s278 = scalar_lea.vmem %s7, %s277
      %v279 = vld [vmem:[%s273] sm:$0xff]
      %v280 = vld [vmem:[%s1] sm:$0xff]
      %v281 = vld [vmem:[%s1 + $0x8] sm:$0xff]
      %v282 = vld [vmem:[%s1 + $0x10] sm:$0xff]
      %v283 = vld [vmem:[%s1 + $0x18] sm:$0xff]
      %v284 = vld [vmem:[%s1 + $0x20] sm:$0xff]
      %v285 = vld [vmem:[%s1 + $0x28] sm:$0xff]
      %v286 = vld [vmem:[%s1 + $0x30] sm:$0xff]
      %v287 = vld [vmem:[%s1 + $0x38] sm:$0xff]
      %v288 = vld [vmem:[%s1 + $0x40] sm:$0xff]
      %v289 = vld [vmem:[%s1 + $0x48] sm:$0xff]
      %v290 = vld [vmem:[%s1 + $0x50] sm:$0xff]
      %v291 = vld [vmem:[%s1 + $0x58] sm:$0xff]
      %v292 = vld [vmem:[%s1 + $0x60] sm:$0xff]
      %v293 = vld [vmem:[%s1 + $0x68] sm:$0xff]
      %v294 = vld [vmem:[%s1 + $0x70] sm:$0xff]
      %v295 = vld [vmem:[%s1 + $0x78] sm:$0xff]
      %v296 = vld [vmem:[%s1 + $0x80] sm:$0xff]
      %v297 = vld [vmem:[%s1 + $0x88] sm:$0xff]
      %v298 = vld [vmem:[%s1 + $0x90] sm:$0xff]
      %v299 = vld [vmem:[%s1 + $0x98] sm:$0xff]
      %v300 = vld [vmem:[%s1 + $0xa0] sm:$0xff]
      %v301 = vld [vmem:[%s1 + $0xa8] sm:$0xff]
      %v302 = vld [vmem:[%s1 + $0xb0] sm:$0xff]
      %v303 = vld [vmem:[%s1 + $0xb8] sm:$0xff]
      %v304 = vld [vmem:[%s1 + $0xc0] sm:$0xff]
      %v305 = vld [vmem:[%s1 + $0xc8] sm:$0xff]
      %v306 = vld [vmem:[%s1 + $0xd0] sm:$0xff]
      %v307 = vld [vmem:[%s1 + $0xd8] sm:$0xff]
      %v308 = vld [vmem:[%s1 + $0xe0] sm:$0xff]
      %v309 = vld [vmem:[%s1 + $0xe8] sm:$0xff]
      %v310 = vld [vmem:[%s1 + $0xf0] sm:$0xff]
      %v311 = vld [vmem:[%s1 + $0xf8] sm:$0xff]
      %v312 = vld [vmem:[%s1 + $0x100] sm:$0xff]
      %v313 = vld [vmem:[%s1 + $0x108] sm:$0xff]
      %v314 = vld [vmem:[%s1 + $0x110] sm:$0xff]
      %v315 = vld [vmem:[%s1 + $0x118] sm:$0xff]
      %v316 = vld [vmem:[%s1 + $0x120] sm:$0xff]
      %v317 = vld [vmem:[%s1 + $0x128] sm:$0xff]
      %v318 = vld [vmem:[%s1 + $0x130] sm:$0xff]
      %v319 = vld [vmem:[%s1 + $0x138] sm:$0xff]
      %v320 = vld [vmem:[%s1 + $0x140] sm:$0xff]
      %v321 = vld [vmem:[%s1 + $0x148] sm:$0xff]
      %v322 = vld [vmem:[%s1 + $0x150] sm:$0xff]
      %v323 = vld [vmem:[%s1 + $0x158] sm:$0xff]
      %v324 = vld [vmem:[%s1 + $0x160] sm:$0xff]
      %v325 = vld [vmem:[%s1 + $0x168] sm:$0xff]
      %v326 = vld [vmem:[%s1 + $0x170] sm:$0xff]
      %v327 = vld [vmem:[%s1 + $0x178] sm:$0xff]
      %v328 = vld [vmem:[%s1 + $0x180] sm:$0xff]
      %v329 = vld [vmem:[%s1 + $0x188] sm:$0xff]
      %v330 = vld [vmem:[%s1 + $0x190] sm:$0xff]
      %v331 = vld [vmem:[%s1 + $0x198] sm:$0xff]
      %v332 = vld [vmem:[%s1 + $0x1a0] sm:$0xff]
      %v333 = vld [vmem:[%s1 + $0x1a8] sm:$0xff]
      %v334 = vld [vmem:[%s1 + $0x1b0] sm:$0xff]
      %v335 = vld [vmem:[%s1 + $0x1b8] sm:$0xff]
      %v336 = vld [vmem:[%s1 + $0x1c0] sm:$0xff]
      %v337 = vld [vmem:[%s1 + $0x1c8] sm:$0xff]
      %v338 = vld [vmem:[%s1 + $0x1d0] sm:$0xff]
      %v339 = vld [vmem:[%s1 + $0x1d8] sm:$0xff]
      %v340 = vld [vmem:[%s1 + $0x1e0] sm:$0xff]
      %v341 = vld [vmem:[%s1 + $0x1e8] sm:$0xff]
      %v342 = vld [vmem:[%s1 + $0x1f0] sm:$0xff]
      %v343 = vld [vmem:[%s1 + $0x1f8] sm:$0xff]
      %345 = vst [vmem:[#allocation1] ss:$2 sm:$0xff] %v279
      %v346 = vld.sshfl [vmem:[#allocation1] sm:$0xff pattern:$0x75316420]
      %v347 = vld.sshfl [vmem:[#allocation1 + $0x8] sm:$0xff pattern:$0x75316420]
      %350 = vmatpush.msra.mxu0 %v310
      %351 = vmatpush.msra.mxu0 %v308
      %352 = vmatpush.msra.mxu0 %v306
      %353 = vmatpush.msra.mxu0 %v304
      %354 = vmatpush.msra.mxu0 %v302
      %355 = vmatpush.msra.mxu0 %v300
      %356 = vmatpush.msra.mxu0 %v298
      %357 = vmatpush.msra.mxu0 %v296
      %358 = vmatpush.msra.mxu0 %v294
      %359 = vmatpush.msra.mxu0 %v292
      %360 = vmatpush.msra.mxu0 %v290
      %361 = vmatpush.msra.mxu0 %v288
      %362 = vmatpush.msra.mxu0 %v286
      %363 = vmatpush.msra.mxu0 %v284
      %364 = vmatpush.msra.mxu0 %v282
      %365 = vmatpush.msra.mxu0 %v280
      %366 = vmatmul.f32.gmra.mxu0 %v346
      %v367 = vpop.f32.mrf.mxu0
      %v368 = vadd.f32 0.0, %v367
      %369 = vdwg.mxu0
      %370 = vmatpush.msra.mxu0 %v342
      %371 = vmatpush.msra.mxu0 %v340
      %372 = vmatpush.msra.mxu0 %v338
      %373 = vmatpush.msra.mxu0 %v336
      %374 = vmatpush.msra.mxu0 %v334
      %375 = vmatpush.msra.mxu0 %v332
      %376 = vmatpush.msra.mxu0 %v330
      %377 = vmatpush.msra.mxu0 %v328
      %378 = vmatpush.msra.mxu0 %v326
      %379 = vmatpush.msra.mxu0 %v324
      %380 = vmatpush.msra.mxu0 %v322
      %381 = vmatpush.msra.mxu0 %v320
      %382 = vmatpush.msra.mxu0 %v318
      %383 = vmatpush.msra.mxu0 %v316
      %384 = vmatpush.msra.mxu0 %v314
      %385 = vmatpush.msra.mxu0 %v312
      %386 = vmatmul.f32.gmra.mxu0 %v347
      %v387 = vpop.f32.mrf.mxu0
      %v388 = vadd.f32 %v368, %v387
      %389 = vdwg.mxu0
      %390 = vmatpush.msra.mxu0 %v311
      %391 = vmatpush.msra.mxu0 %v309
      %392 = vmatpush.msra.mxu0 %v307
      %393 = vmatpush.msra.mxu0 %v305
      %394 = vmatpush.msra.mxu0 %v303
      %395 = vmatpush.msra.mxu0 %v301
      %396 = vmatpush.msra.mxu0 %v299
      %397 = vmatpush.msra.mxu0 %v297
      %398 = vmatpush.msra.mxu0 %v295
      %399 = vmatpush.msra.mxu0 %v293
      %400 = vmatpush.msra.mxu0 %v291
      %401 = vmatpush.msra.mxu0 %v289
      %402 = vmatpush.msra.mxu0 %v287
      %403 = vmatpush.msra.mxu0 %v285
      %404 = vmatpush.msra.mxu0 %v283
      %405 = vmatpush.msra.mxu0 %v281
      %406 = vmatmul.f32.gmra.mxu0 %v346
      %v407 = vpop.f32.mrf.mxu0
      %v408 = vadd.f32 0.0, %v407
      %409 = vdwg.mxu0
      %410 = vmatpush.msra.mxu0 %v343
      %411 = vmatpush.msra.mxu0 %v341
      %412 = vmatpush.msra.mxu0 %v339
      %413 = vmatpush.msra.mxu0 %v337
      %414 = vmatpush.msra.mxu0 %v335
      %415 = vmatpush.msra.mxu0 %v333
      %416 = vmatpush.msra.mxu0 %v331
      %417 = vmatpush.msra.mxu0 %v329
      %418 = vmatpush.msra.mxu0 %v327
      %419 = vmatpush.msra.mxu0 %v325
      %420 = vmatpush.msra.mxu0 %v323
      %421 = vmatpush.msra.mxu0 %v321
      %422 = vmatpush.msra.mxu0 %v319
      %423 = vmatpush.msra.mxu0 %v317
      %424 = vmatpush.msra.mxu0 %v315
      %425 = vmatpush.msra.mxu0 %v313
      %426 = vmatmul.f32.gmra.mxu0 %v347
      %v427 = vpop.f32.mrf.mxu0
      %v428 = vadd.f32 %v408, %v427
      %429 = vdwg.mxu0
      %v430 = vld [vmem:[%s2] sm:$0xff]
      %v431 = vld [vmem:[%s2 + $0x8] sm:$0xff]
      %s432 = scalar_lea.vmem %s1, 512
      %v433 = vld [vmem:[%s432] sm:$0xff]
      %v434 = vld [vmem:[%s432 + $0x8] sm:$0xff]
      %v435 = vld [vmem:[%s432 + $0x10] sm:$0xff]
      %v436 = vld [vmem:[%s432 + $0x18] sm:$0xff]
      %v437 = vld [vmem:[%s432 + $0x20] sm:$0xff]
      %v438 = vld [vmem:[%s432 + $0x28] sm:$0xff]
      %v439 = vld [vmem:[%s432 + $0x30] sm:$0xff]
      %v440 = vld [vmem:[%s432 + $0x38] sm:$0xff]
      %v441 = vld [vmem:[%s432 + $0x40] sm:$0xff]
      %v442 = vld [vmem:[%s432 + $0x48] sm:$0xff]
      %v443 = vld [vmem:[%s432 + $0x50] sm:$0xff]
      %v444 = vld [vmem:[%s432 + $0x58] sm:$0xff]
      %v445 = vld [vmem:[%s432 + $0x60] sm:$0xff]
      %v446 = vld [vmem:[%s432 + $0x68] sm:$0xff]
      %v447 = vld [vmem:[%s432 + $0x70] sm:$0xff]
      %v448 = vld [vmem:[%s432 + $0x78] sm:$0xff]
      %v449 = vld [vmem:[%s432 + $0x80] sm:$0xff]
      %v450 = vld [vmem:[%s432 + $0x88] sm:$0xff]
      %v451 = vld [vmem:[%s432 + $0x90] sm:$0xff]
      %v452 = vld [vmem:[%s432 + $0x98] sm:$0xff]
      %v453 = vld [vmem:[%s432 + $0xa0] sm:$0xff]
      %v454 = vld [vmem:[%s432 + $0xa8] sm:$0xff]
      %v455 = vld [vmem:[%s432 + $0xb0] sm:$0xff]
      %v456 = vld [vmem:[%s432 + $0xb8] sm:$0xff]
      %v457 = vld [vmem:[%s432 + $0xc0] sm:$0xff]
      %v458 = vld [vmem:[%s432 + $0xc8] sm:$0xff]
      %v459 = vld [vmem:[%s432 + $0xd0] sm:$0xff]
      %v460 = vld [vmem:[%s432 + $0xd8] sm:$0xff]
      %v461 = vld [vmem:[%s432 + $0xe0] sm:$0xff]
      %v462 = vld [vmem:[%s432 + $0xe8] sm:$0xff]
      %v463 = vld [vmem:[%s432 + $0xf0] sm:$0xff]
      %v464 = vld [vmem:[%s432 + $0xf8] sm:$0xff]
      %v465 = vld [vmem:[%s432 + $0x100] sm:$0xff]
      %v466 = vld [vmem:[%s432 + $0x108] sm:$0xff]
      %v467 = vld [vmem:[%s432 + $0x110] sm:$0xff]
      %v468 = vld [vmem:[%s432 + $0x118] sm:$0xff]
      %v469 = vld [vmem:[%s432 + $0x120] sm:$0xff]
      %v470 = vld [vmem:[%s432 + $0x128] sm:$0xff]
      %v471 = vld [vmem:[%s432 + $0x130] sm:$0xff]
      %v472 = vld [vmem:[%s432 + $0x138] sm:$0xff]
      %v473 = vld [vmem:[%s432 + $0x140] sm:$0xff]
      %v474 = vld [vmem:[%s432 + $0x148] sm:$0xff]
      %v475 = vld [vmem:[%s432 + $0x150] sm:$0xff]
      %v476 = vld [vmem:[%s432 + $0x158] sm:$0xff]
      %v477 = vld [vmem:[%s432 + $0x160] sm:$0xff]
      %v478 = vld [vmem:[%s432 + $0x168] sm:$0xff]
      %v479 = vld [vmem:[%s432 + $0x170] sm:$0xff]
      %v480 = vld [vmem:[%s432 + $0x178] sm:$0xff]
      %v481 = vld [vmem:[%s432 + $0x180] sm:$0xff]
      %v482 = vld [vmem:[%s432 + $0x188] sm:$0xff]
      %v483 = vld [vmem:[%s432 + $0x190] sm:$0xff]
      %v484 = vld [vmem:[%s432 + $0x198] sm:$0xff]
      %v485 = vld [vmem:[%s432 + $0x1a0] sm:$0xff]
      %v486 = vld [vmem:[%s432 + $0x1a8] sm:$0xff]
      %v487 = vld [vmem:[%s432 + $0x1b0] sm:$0xff]
      %v488 = vld [vmem:[%s432 + $0x1b8] sm:$0xff]
      %v489 = vld [vmem:[%s432 + $0x1c0] sm:$0xff]
      %v490 = vld [vmem:[%s432 + $0x1c8] sm:$0xff]
      %v491 = vld [vmem:[%s432 + $0x1d0] sm:$0xff]
      %v492 = vld [vmem:[%s432 + $0x1d8] sm:$0xff]
      %v493 = vld [vmem:[%s432 + $0x1e0] sm:$0xff]
      %v494 = vld [vmem:[%s432 + $0x1e8] sm:$0xff]
      %v495 = vld [vmem:[%s432 + $0x1f0] sm:$0xff]
      %v496 = vld [vmem:[%s432 + $0x1f8] sm:$0xff]
      %497 = vst [vmem:[#allocation1] ss:$2 sm:$0xff] %v279
      %v498 = vld.sshfl [vmem:[#allocation1] sm:$0xff pattern:$0x75316420]
      %v499 = vld.sshfl [vmem:[#allocation1 + $0x8] sm:$0xff pattern:$0x75316420]
      %502 = vmatpush.msra.mxu0 %v463
      %503 = vmatpush.msra.mxu0 %v461
      %504 = vmatpush.msra.mxu0 %v459
      %505 = vmatpush.msra.mxu0 %v457
      %506 = vmatpush.msra.mxu0 %v455
      %507 = vmatpush.msra.mxu0 %v453
      %508 = vmatpush.msra.mxu0 %v451
      %509 = vmatpush.msra.mxu0 %v449
      %510 = vmatpush.msra.mxu0 %v447
      %511 = vmatpush.msra.mxu0 %v445
      %512 = vmatpush.msra.mxu0 %v443
      %513 = vmatpush.msra.mxu0 %v441
      %514 = vmatpush.msra.mxu0 %v439
      %515 = vmatpush.msra.mxu0 %v437
      %516 = vmatpush.msra.mxu0 %v435
      %517 = vmatpush.msra.mxu0 %v433
      %518 = vmatmul.f32.gmra.mxu0 %v498
      %v519 = vpop.f32.mrf.mxu0
      %v520 = vadd.f32 0.0, %v519
      %521 = vdwg.mxu0
      %522 = vmatpush.msra.mxu0 %v495
      %523 = vmatpush.msra.mxu0 %v493
      %524 = vmatpush.msra.mxu0 %v491
      %525 = vmatpush.msra.mxu0 %v489
      %526 = vmatpush.msra.mxu0 %v487
      %527 = vmatpush.msra.mxu0 %v485
      %528 = vmatpush.msra.mxu0 %v483
      %529 = vmatpush.msra.mxu0 %v481
      %530 = vmatpush.msra.mxu0 %v479
      %531 = vmatpush.msra.mxu0 %v477
      %532 = vmatpush.msra.mxu0 %v475
      %533 = vmatpush.msra.mxu0 %v473
      %534 = vmatpush.msra.mxu0 %v471
      %535 = vmatpush.msra.mxu0 %v469
      %536 = vmatpush.msra.mxu0 %v467
      %537 = vmatpush.msra.mxu0 %v465
      %538 = vmatmul.f32.gmra.mxu0 %v499
      %v539 = vpop.f32.mrf.mxu0
      %v540 = vadd.f32 %v520, %v539
      %541 = vdwg.mxu0
      %542 = vmatpush.msra.mxu0 %v464
      %543 = vmatpush.msra.mxu0 %v462
      %544 = vmatpush.msra.mxu0 %v460
      %545 = vmatpush.msra.mxu0 %v458
      %546 = vmatpush.msra.mxu0 %v456
      %547 = vmatpush.msra.mxu0 %v454
      %548 = vmatpush.msra.mxu0 %v452
      %549 = vmatpush.msra.mxu0 %v450
      %550 = vmatpush.msra.mxu0 %v448
      %551 = vmatpush.msra.mxu0 %v446
      %552 = vmatpush.msra.mxu0 %v444
      %553 = vmatpush.msra.mxu0 %v442
      %554 = vmatpush.msra.mxu0 %v440
      %555 = vmatpush.msra.mxu0 %v438
      %556 = vmatpush.msra.mxu0 %v436
      %557 = vmatpush.msra.mxu0 %v434
      %558 = vmatmul.f32.gmra.mxu0 %v498
      %v559 = vpop.f32.mrf.mxu0
      %v560 = vadd.f32 0.0, %v559
      %561 = vdwg.mxu0
      %562 = vmatpush.msra.mxu0 %v496
      %563 = vmatpush.msra.mxu0 %v494
      %564 = vmatpush.msra.mxu0 %v492
      %565 = vmatpush.msra.mxu0 %v490
      %566 = vmatpush.msra.mxu0 %v488
      %567 = vmatpush.msra.mxu0 %v486
      %568 = vmatpush.msra.mxu0 %v484
      %569 = vmatpush.msra.mxu0 %v482
      %570 = vmatpush.msra.mxu0 %v480
      %571 = vmatpush.msra.mxu0 %v478
      %572 = vmatpush.msra.mxu0 %v476
      %573 = vmatpush.msra.mxu0 %v474
      %574 = vmatpush.msra.mxu0 %v472
      %575 = vmatpush.msra.mxu0 %v470
      %576 = vmatpush.msra.mxu0 %v468
      %577 = vmatpush.msra.mxu0 %v466
      %578 = vmatmul.f32.gmra.mxu0 %v499
      %v579 = vpop.f32.mrf.mxu0
      %v580 = vadd.f32 %v560, %v579
      %581 = vdwg.mxu0
      %s582 = scalar_lea.vmem %s2, 16
      %v583 = vld [vmem:[%s582] sm:$0xff]
      %v584 = vld [vmem:[%s582 + $0x8] sm:$0xff]
      %vm585 = vcmask 31744
      %v587 = vsel %vm585, %v583, 0
      %v590 = vsel %vm585, %v584, 0
      %vm592 = vcmask 1043456
      %v594 = vsel %vm592, %v540, 0
      %v597 = vsel %vm592, %v580, 0
      %599 = vmatpush.msra.mxu0 0.0
      %600 = vmatpush.msra.mxu0 0.0
      %601 = vmatpush.msra.mxu0 0.0
      %602 = vmatpush.msra.mxu0 0.0
      %603 = vmatpush.msra.mxu0 0.0
      %604 = vmatpush.msra.mxu0 0.0
      %605 = vmatpush.msra.mxu0 0.0
      %606 = vmatpush.msra.mxu0 0.0
      %607 = vmatpush.msra.mxu0 0.0
      %608 = vmatpush.msra.mxu0 0.0
      %609 = vmatpush.msra.mxu0 0.0
      %610 = vmatpush.msra.mxu0 0.0
      %611 = vmatpush.msra.mxu0 0.0
      %612 = vmatpush.msra.mxu0 0.0
      %613 = vmatpush.msra.mxu0 0.0
      %614 = vmatpush.msra.mxu0 %v594
      %615 = vmatmul.f32.gmra.mxu0 %v587
      %v616 = vpop.f32.mrf.mxu0
      %v617 = vadd.f32 0.0, %v616
      %618 = vmatmul.f32.gmra.mxu0 %v590
      %v619 = vpop.f32.mrf.mxu0
      %v620 = vadd.f32 0.0, %v619
      %621 = vdwg.mxu0
      %622 = vmatpush.msra.mxu0 0.0
      %623 = vmatpush.msra.mxu0 0.0
      %624 = vmatpush.msra.mxu0 0.0
      %625 = vmatpush.msra.mxu0 0.0
      %626 = vmatpush.msra.mxu0 0.0
      %627 = vmatpush.msra.mxu0 0.0
      %628 = vmatpush.msra.mxu0 0.0
      %629 = vmatpush.msra.mxu0 0.0
      %630 = vmatpush.msra.mxu0 0.0
      %631 = vmatpush.msra.mxu0 0.0
      %632 = vmatpush.msra.mxu0 0.0
      %633 = vmatpush.msra.mxu0 0.0
      %634 = vmatpush.msra.mxu0 0.0
      %635 = vmatpush.msra.mxu0 0.0
      %636 = vmatpush.msra.mxu0 0.0
      %637 = vmatpush.msra.mxu0 %v597
      %638 = vmatmul.f32.gmra.mxu0 %v587
      %v639 = vpop.f32.mrf.mxu0
      %v640 = vadd.f32 0.0, %v639
      %641 = vmatmul.f32.gmra.mxu0 %v590
      %v642 = vpop.f32.mrf.mxu0
      %v643 = vadd.f32 0.0, %v642
      %644 = vdwg.mxu0
      %v646 = vsel %vm585, %v430, 0
      %v649 = vsel %vm585, %v431, 0
      %v652 = vsel %vm592, %v388, 0
      %v655 = vsel %vm592, %v428, 0
      %657 = vmatpush.msra.mxu0 0.0
      %658 = vmatpush.msra.mxu0 0.0
      %659 = vmatpush.msra.mxu0 0.0
      %660 = vmatpush.msra.mxu0 0.0
      %661 = vmatpush.msra.mxu0 0.0
      %662 = vmatpush.msra.mxu0 0.0
      %663 = vmatpush.msra.mxu0 0.0
      %664 = vmatpush.msra.mxu0 0.0
      %665 = vmatpush.msra.mxu0 0.0
      %666 = vmatpush.msra.mxu0 0.0
      %667 = vmatpush.msra.mxu0 0.0
      %668 = vmatpush.msra.mxu0 0.0
      %669 = vmatpush.msra.mxu0 0.0
      %670 = vmatpush.msra.mxu0 0.0
      %671 = vmatpush.msra.mxu0 0.0
      %672 = vmatpush.msra.mxu0 %v652
      %673 = vmatmul.f32.gmra.mxu0 %v646
      %v674 = vpop.f32.mrf.mxu0
      %v675 = vadd.f32 %v617, %v674
      %676 = vmatmul.f32.gmra.mxu0 %v649
      %v677 = vpop.f32.mrf.mxu0
      %v678 = vadd.f32 %v620, %v677
      %679 = vdwg.mxu0
      %680 = vmatpush.msra.mxu0 0.0
      %681 = vmatpush.msra.mxu0 0.0
      %682 = vmatpush.msra.mxu0 0.0
      %683 = vmatpush.msra.mxu0 0.0
      %684 = vmatpush.msra.mxu0 0.0
      %685 = vmatpush.msra.mxu0 0.0
      %686 = vmatpush.msra.mxu0 0.0
      %687 = vmatpush.msra.mxu0 0.0
      %688 = vmatpush.msra.mxu0 0.0
      %689 = vmatpush.msra.mxu0 0.0
      %690 = vmatpush.msra.mxu0 0.0
      %691 = vmatpush.msra.mxu0 0.0
      %692 = vmatpush.msra.mxu0 0.0
      %693 = vmatpush.msra.mxu0 0.0
      %694 = vmatpush.msra.mxu0 0.0
      %695 = vmatpush.msra.mxu0 %v655
      %696 = vmatmul.f32.gmra.mxu0 %v646
      %v697 = vpop.f32.mrf.mxu0
      %v698 = vadd.f32 %v640, %v697
      %699 = vmatmul.f32.gmra.mxu0 %v649
      %v700 = vpop.f32.mrf.mxu0
      %v701 = vadd.f32 %v643, %v700
      %702 = vdwg.mxu0
      %s703 = scalar_lea.vmem %s1, 1024
      %v704 = vld [vmem:[%s703] sm:$0xff]
      %v705 = vld [vmem:[%s703 + $0x8] sm:$0xff]
      %v706 = vld [vmem:[%s703 + $0x10] sm:$0xff]
      %v707 = vld [vmem:[%s703 + $0x18] sm:$0xff]
      %v708 = vld [vmem:[%s703 + $0x20] sm:$0xff]
      %v709 = vld [vmem:[%s703 + $0x28] sm:$0xff]
      %v710 = vld [vmem:[%s703 + $0x30] sm:$0xff]
      %v711 = vld [vmem:[%s703 + $0x38] sm:$0xff]
      %v712 = vld [vmem:[%s703 + $0x40] sm:$0xff]
      %v713 = vld [vmem:[%s703 + $0x48] sm:$0xff]
      %v714 = vld [vmem:[%s703 + $0x50] sm:$0xff]
      %v715 = vld [vmem:[%s703 + $0x58] sm:$0xff]
      %v716 = vld [vmem:[%s703 + $0x60] sm:$0xff]
      %v717 = vld [vmem:[%s703 + $0x68] sm:$0xff]
      %v718 = vld [vmem:[%s703 + $0x70] sm:$0xff]
      %v719 = vld [vmem:[%s703 + $0x78] sm:$0xff]
      %v720 = vld [vmem:[%s703 + $0x80] sm:$0xff]
      %v721 = vld [vmem:[%s703 + $0x88] sm:$0xff]
      %v722 = vld [vmem:[%s703 + $0x90] sm:$0xff]
      %v723 = vld [vmem:[%s703 + $0x98] sm:$0xff]
      %v724 = vld [vmem:[%s703 + $0xa0] sm:$0xff]
      %v725 = vld [vmem:[%s703 + $0xa8] sm:$0xff]
      %v726 = vld [vmem:[%s703 + $0xb0] sm:$0xff]
      %v727 = vld [vmem:[%s703 + $0xb8] sm:$0xff]
      %v728 = vld [vmem:[%s703 + $0xc0] sm:$0xff]
      %v729 = vld [vmem:[%s703 + $0xc8] sm:$0xff]
      %v730 = vld [vmem:[%s703 + $0xd0] sm:$0xff]
      %v731 = vld [vmem:[%s703 + $0xd8] sm:$0xff]
      %v732 = vld [vmem:[%s703 + $0xe0] sm:$0xff]
      %v733 = vld [vmem:[%s703 + $0xe8] sm:$0xff]
      %v734 = vld [vmem:[%s703 + $0xf0] sm:$0xff]
      %v735 = vld [vmem:[%s703 + $0xf8] sm:$0xff]
      %v736 = vld [vmem:[%s703 + $0x100] sm:$0xff]
      %v737 = vld [vmem:[%s703 + $0x108] sm:$0xff]
      %v738 = vld [vmem:[%s703 + $0x110] sm:$0xff]
      %v739 = vld [vmem:[%s703 + $0x118] sm:$0xff]
      %v740 = vld [vmem:[%s703 + $0x120] sm:$0xff]
      %v741 = vld [vmem:[%s703 + $0x128] sm:$0xff]
      %v742 = vld [vmem:[%s703 + $0x130] sm:$0xff]
      %v743 = vld [vmem:[%s703 + $0x138] sm:$0xff]
      %v744 = vld [vmem:[%s703 + $0x140] sm:$0xff]
      %v745 = vld [vmem:[%s703 + $0x148] sm:$0xff]
      %v746 = vld [vmem:[%s703 + $0x150] sm:$0xff]
      %v747 = vld [vmem:[%s703 + $0x158] sm:$0xff]
      %v748 = vld [vmem:[%s703 + $0x160] sm:$0xff]
      %v749 = vld [vmem:[%s703 + $0x168] sm:$0xff]
      %v750 = vld [vmem:[%s703 + $0x170] sm:$0xff]
      %v751 = vld [vmem:[%s703 + $0x178] sm:$0xff]
      %v752 = vld [vmem:[%s703 + $0x180] sm:$0xff]
      %v753 = vld [vmem:[%s703 + $0x188] sm:$0xff]
      %v754 = vld [vmem:[%s703 + $0x190] sm:$0xff]
      %v755 = vld [vmem:[%s703 + $0x198] sm:$0xff]
      %v756 = vld [vmem:[%s703 + $0x1a0] sm:$0xff]
      %v757 = vld [vmem:[%s703 + $0x1a8] sm:$0xff]
      %v758 = vld [vmem:[%s703 + $0x1b0] sm:$0xff]
      %v759 = vld [vmem:[%s703 + $0x1b8] sm:$0xff]
      %v760 = vld [vmem:[%s703 + $0x1c0] sm:$0xff]
      %v761 = vld [vmem:[%s703 + $0x1c8] sm:$0xff]
      %v762 = vld [vmem:[%s703 + $0x1d0] sm:$0xff]
      %v763 = vld [vmem:[%s703 + $0x1d8] sm:$0xff]
      %v764 = vld [vmem:[%s703 + $0x1e0] sm:$0xff]
      %v765 = vld [vmem:[%s703 + $0x1e8] sm:$0xff]
      %v766 = vld [vmem:[%s703 + $0x1f0] sm:$0xff]
      %v767 = vld [vmem:[%s703 + $0x1f8] sm:$0xff]
      %768 = vst [vmem:[#allocation1] ss:$2 sm:$0xff] %v279
      %v769 = vld.sshfl [vmem:[#allocation1] sm:$0xff pattern:$0x75316420]
      %v770 = vld.sshfl [vmem:[#allocation1 + $0x8] sm:$0xff pattern:$0x75316420]
      %773 = vmatpush.msra.mxu0 %v734
      %774 = vmatpush.msra.mxu0 %v732
      %775 = vmatpush.msra.mxu0 %v730
      %776 = vmatpush.msra.mxu0 %v728
      %777 = vmatpush.msra.mxu0 %v726
      %778 = vmatpush.msra.mxu0 %v724
      %779 = vmatpush.msra.mxu0 %v722
      %780 = vmatpush.msra.mxu0 %v720
      %781 = vmatpush.msra.mxu0 %v718
      %782 = vmatpush.msra.mxu0 %v716
      %783 = vmatpush.msra.mxu0 %v714
      %784 = vmatpush.msra.mxu0 %v712
      %785 = vmatpush.msra.mxu0 %v710
      %786 = vmatpush.msra.mxu0 %v708
      %787 = vmatpush.msra.mxu0 %v706
      %788 = vmatpush.msra.mxu0 %v704
      %789 = vmatmul.f32.gmra.mxu0 %v769
      %v790 = vpop.f32.mrf.mxu0
      %v791 = vadd.f32 0.0, %v790
      %792 = vdwg.mxu0
      %793 = vmatpush.msra.mxu0 %v766
      %794 = vmatpush.msra.mxu0 %v764
      %795 = vmatpush.msra.mxu0 %v762
      %796 = vmatpush.msra.mxu0 %v760
      %797 = vmatpush.msra.mxu0 %v758
      %798 = vmatpush.msra.mxu0 %v756
      %799 = vmatpush.msra.mxu0 %v754
      %800 = vmatpush.msra.mxu0 %v752
      %801 = vmatpush.msra.mxu0 %v750
      %802 = vmatpush.msra.mxu0 %v748
      %803 = vmatpush.msra.mxu0 %v746
      %804 = vmatpush.msra.mxu0 %v744
      %805 = vmatpush.msra.mxu0 %v742
      %806 = vmatpush.msra.mxu0 %v740
      %807 = vmatpush.msra.mxu0 %v738
      %808 = vmatpush.msra.mxu0 %v736
      %809 = vmatmul.f32.gmra.mxu0 %v770
      %v810 = vpop.f32.mrf.mxu0
      %v811 = vadd.f32 %v791, %v810
      %812 = vdwg.mxu0
      %813 = vmatpush.msra.mxu0 %v735
      %814 = vmatpush.msra.mxu0 %v733
      %815 = vmatpush.msra.mxu0 %v731
      %816 = vmatpush.msra.mxu0 %v729
      %817 = vmatpush.msra.mxu0 %v727
      %818 = vmatpush.msra.mxu0 %v725
      %819 = vmatpush.msra.mxu0 %v723
      %820 = vmatpush.msra.mxu0 %v721
      %821 = vmatpush.msra.mxu0 %v719
      %822 = vmatpush.msra.mxu0 %v717
      %823 = vmatpush.msra.mxu0 %v715
      %824 = vmatpush.msra.mxu0 %v713
      %825 = vmatpush.msra.mxu0 %v711
      %826 = vmatpush.msra.mxu0 %v709
      %827 = vmatpush.msra.mxu0 %v707
      %828 = vmatpush.msra.mxu0 %v705
      %829 = vmatmul.f32.gmra.mxu0 %v769
      %v830 = vpop.f32.mrf.mxu0
      %v831 = vadd.f32 0.0, %v830
      %832 = vdwg.mxu0
      %833 = vmatpush.msra.mxu0 %v767
      %834 = vmatpush.msra.mxu0 %v765
      %835 = vmatpush.msra.mxu0 %v763
      %836 = vmatpush.msra.mxu0 %v761
      %837 = vmatpush.msra.mxu0 %v759
      %838 = vmatpush.msra.mxu0 %v757
      %839 = vmatpush.msra.mxu0 %v755
      %840 = vmatpush.msra.mxu0 %v753
      %841 = vmatpush.msra.mxu0 %v751
      %842 = vmatpush.msra.mxu0 %v749
      %843 = vmatpush.msra.mxu0 %v747
      %844 = vmatpush.msra.mxu0 %v745
      %845 = vmatpush.msra.mxu0 %v743
      %846 = vmatpush.msra.mxu0 %v741
      %847 = vmatpush.msra.mxu0 %v739
      %848 = vmatpush.msra.mxu0 %v737
      %849 = vmatmul.f32.gmra.mxu0 %v770
      %v850 = vpop.f32.mrf.mxu0
      %v851 = vadd.f32 %v831, %v850
      %852 = vdwg.mxu0
      %s853 = scalar_lea.vmem %s2, 32
      %v854 = vld [vmem:[%s853] sm:$0xff]
      %v855 = vld [vmem:[%s853 + $0x8] sm:$0xff]
      %v857 = vsel %vm585, %v854, 0
      %v860 = vsel %vm585, %v855, 0
      %v863 = vsel %vm592, %v811, 0
      %v866 = vsel %vm592, %v851, 0
      %868 = vmatpush.msra.mxu0 0.0
      %869 = vmatpush.msra.mxu0 0.0
      %870 = vmatpush.msra.mxu0 0.0
      %871 = vmatpush.msra.mxu0 0.0
      %872 = vmatpush.msra.mxu0 0.0
      %873 = vmatpush.msra.mxu0 0.0
      %874 = vmatpush.msra.mxu0 0.0
      %875 = vmatpush.msra.mxu0 0.0
      %876 = vmatpush.msra.mxu0 0.0
      %877 = vmatpush.msra.mxu0 0.0
      %878 = vmatpush.msra.mxu0 0.0
      %879 = vmatpush.msra.mxu0 0.0
      %880 = vmatpush.msra.mxu0 0.0
      %881 = vmatpush.msra.mxu0 0.0
      %882 = vmatpush.msra.mxu0 0.0
      %883 = vmatpush.msra.mxu0 %v863
      %884 = vmatmul.f32.gmra.mxu0 %v857
      %v885 = vpop.f32.mrf.mxu0
      %v886 = vadd.f32 0.0, %v885
      %887 = vmatmul.f32.gmra.mxu0 %v860
      %v888 = vpop.f32.mrf.mxu0
      %v889 = vadd.f32 0.0, %v888
      %890 = vdwg.mxu0
      %891 = vmatpush.msra.mxu0 0.0
      %892 = vmatpush.msra.mxu0 0.0
      %893 = vmatpush.msra.mxu0 0.0
      %894 = vmatpush.msra.mxu0 0.0
      %895 = vmatpush.msra.mxu0 0.0
      %896 = vmatpush.msra.mxu0 0.0
      %897 = vmatpush.msra.mxu0 0.0
      %898 = vmatpush.msra.mxu0 0.0
      %899 = vmatpush.msra.mxu0 0.0
      %900 = vmatpush.msra.mxu0 0.0
      %901 = vmatpush.msra.mxu0 0.0
      %902 = vmatpush.msra.mxu0 0.0
      %903 = vmatpush.msra.mxu0 0.0
      %904 = vmatpush.msra.mxu0 0.0
      %905 = vmatpush.msra.mxu0 0.0
      %906 = vmatpush.msra.mxu0 %v866
      %907 = vmatmul.f32.gmra.mxu0 %v857
      %v908 = vpop.f32.mrf.mxu0
      %v909 = vadd.f32 0.0, %v908
      %910 = vmatmul.f32.gmra.mxu0 %v860
      %v911 = vpop.f32.mrf.mxu0
      %v912 = vadd.f32 0.0, %v911
      %913 = vdwg.mxu0
      %v914 = vadd.f32 %v675, %v886
      %v915 = vadd.f32 %v698, %v909
      %v916 = vadd.f32 %v678, %v889
      %v917 = vadd.f32 %v701, %v912
      %s918 = scalar_lea.vmem %s1, 1536
      %v919 = vld [vmem:[%s918] sm:$0xff]
      %v920 = vld [vmem:[%s918 + $0x8] sm:$0xff]
      %v921 = vld [vmem:[%s918 + $0x10] sm:$0xff]
      %v922 = vld [vmem:[%s918 + $0x18] sm:$0xff]
      %v923 = vld [vmem:[%s918 + $0x20] sm:$0xff]
      %v924 = vld [vmem:[%s918 + $0x28] sm:$0xff]
      %v925 = vld [vmem:[%s918 + $0x30] sm:$0xff]
      %v926 = vld [vmem:[%s918 + $0x38] sm:$0xff]
      %v927 = vld [vmem:[%s918 + $0x40] sm:$0xff]
      %v928 = vld [vmem:[%s918 + $0x48] sm:$0xff]
      %v929 = vld [vmem:[%s918 + $0x50] sm:$0xff]
      %v930 = vld [vmem:[%s918 + $0x58] sm:$0xff]
      %v931 = vld [vmem:[%s918 + $0x60] sm:$0xff]
      %v932 = vld [vmem:[%s918 + $0x68] sm:$0xff]
      %v933 = vld [vmem:[%s918 + $0x70] sm:$0xff]
      %v934 = vld [vmem:[%s918 + $0x78] sm:$0xff]
      %v935 = vld [vmem:[%s918 + $0x80] sm:$0xff]
      %v936 = vld [vmem:[%s918 + $0x88] sm:$0xff]
      %v937 = vld [vmem:[%s918 + $0x90] sm:$0xff]
      %v938 = vld [vmem:[%s918 + $0x98] sm:$0xff]
      %v939 = vld [vmem:[%s918 + $0xa0] sm:$0xff]
      %v940 = vld [vmem:[%s918 + $0xa8] sm:$0xff]
      %v941 = vld [vmem:[%s918 + $0xb0] sm:$0xff]
      %v942 = vld [vmem:[%s918 + $0xb8] sm:$0xff]
      %v943 = vld [vmem:[%s918 + $0xc0] sm:$0xff]
      %v944 = vld [vmem:[%s918 + $0xc8] sm:$0xff]
      %v945 = vld [vmem:[%s918 + $0xd0] sm:$0xff]
      %v946 = vld [vmem:[%s918 + $0xd8] sm:$0xff]
      %v947 = vld [vmem:[%s918 + $0xe0] sm:$0xff]
      %v948 = vld [vmem:[%s918 + $0xe8] sm:$0xff]
      %v949 = vld [vmem:[%s918 + $0xf0] sm:$0xff]
      %v950 = vld [vmem:[%s918 + $0xf8] sm:$0xff]
      %v951 = vld [vmem:[%s918 + $0x100] sm:$0xff]
      %v952 = vld [vmem:[%s918 + $0x108] sm:$0xff]
      %v953 = vld [vmem:[%s918 + $0x110] sm:$0xff]
      %v954 = vld [vmem:[%s918 + $0x118] sm:$0xff]
      %v955 = vld [vmem:[%s918 + $0x120] sm:$0xff]
      %v956 = vld [vmem:[%s918 + $0x128] sm:$0xff]
      %v957 = vld [vmem:[%s918 + $0x130] sm:$0xff]
      %v958 = vld [vmem:[%s918 + $0x138] sm:$0xff]
      %v959 = vld [vmem:[%s918 + $0x140] sm:$0xff]
      %v960 = vld [vmem:[%s918 + $0x148] sm:$0xff]
      %v961 = vld [vmem:[%s918 + $0x150] sm:$0xff]
      %v962 = vld [vmem:[%s918 + $0x158] sm:$0xff]
      %v963 = vld [vmem:[%s918 + $0x160] sm:$0xff]
      %v964 = vld [vmem:[%s918 + $0x168] sm:$0xff]
      %v965 = vld [vmem:[%s918 + $0x170] sm:$0xff]
      %v966 = vld [vmem:[%s918 + $0x178] sm:$0xff]
      %v967 = vld [vmem:[%s918 + $0x180] sm:$0xff]
      %v968 = vld [vmem:[%s918 + $0x188] sm:$0xff]
      %v969 = vld [vmem:[%s918 + $0x190] sm:$0xff]
      %v970 = vld [vmem:[%s918 + $0x198] sm:$0xff]
      %v971 = vld [vmem:[%s918 + $0x1a0] sm:$0xff]
      %v972 = vld [vmem:[%s918 + $0x1a8] sm:$0xff]
      %v973 = vld [vmem:[%s918 + $0x1b0] sm:$0xff]
      %v974 = vld [vmem:[%s918 + $0x1b8] sm:$0xff]
      %v975 = vld [vmem:[%s918 + $0x1c0] sm:$0xff]
      %v976 = vld [vmem:[%s918 + $0x1c8] sm:$0xff]
      %v977 = vld [vmem:[%s918 + $0x1d0] sm:$0xff]
      %v978 = vld [vmem:[%s918 + $0x1d8] sm:$0xff]
      %v979 = vld [vmem:[%s918 + $0x1e0] sm:$0xff]
      %v980 = vld [vmem:[%s918 + $0x1e8] sm:$0xff]
      %v981 = vld [vmem:[%s918 + $0x1f0] sm:$0xff]
      %v982 = vld [vmem:[%s918 + $0x1f8] sm:$0xff]
      %983 = vst [vmem:[#allocation1] ss:$2 sm:$0xff] %v279
      %v984 = vld.sshfl [vmem:[#allocation1] sm:$0xff pattern:$0x75316420]
      %v985 = vld.sshfl [vmem:[#allocation1 + $0x8] sm:$0xff pattern:$0x75316420]
      %988 = vmatpush.msra.mxu0 %v949
      %989 = vmatpush.msra.mxu0 %v947
      %990 = vmatpush.msra.mxu0 %v945
      %991 = vmatpush.msra.mxu0 %v943
      %992 = vmatpush.msra.mxu0 %v941
      %993 = vmatpush.msra.mxu0 %v939
      %994 = vmatpush.msra.mxu0 %v937
      %995 = vmatpush.msra.mxu0 %v935
      %996 = vmatpush.msra.mxu0 %v933
      %997 = vmatpush.msra.mxu0 %v931
      %998 = vmatpush.msra.mxu0 %v929
      %999 = vmatpush.msra.mxu0 %v927
      %1000 = vmatpush.msra.mxu0 %v925
      %1001 = vmatpush.msra.mxu0 %v923
      %1002 = vmatpush.msra.mxu0 %v921
      %1003 = vmatpush.msra.mxu0 %v919
      %1004 = vmatmul.f32.gmra.mxu0 %v984
      %v1005 = vpop.f32.mrf.mxu0
      %v1006 = vadd.f32 0.0, %v1005
      %1007 = vdwg.mxu0
      %1008 = vmatpush.msra.mxu0 %v981
      %1009 = vmatpush.msra.mxu0 %v979
      %1010 = vmatpush.msra.mxu0 %v977
      %1011 = vmatpush.msra.mxu0 %v975
      %1012 = vmatpush.msra.mxu0 %v973
      %1013 = vmatpush.msra.mxu0 %v971
      %1014 = vmatpush.msra.mxu0 %v969
      %1015 = vmatpush.msra.mxu0 %v967
      %1016 = vmatpush.msra.mxu0 %v965
      %1017 = vmatpush.msra.mxu0 %v963
      %1018 = vmatpush.msra.mxu0 %v961
      %1019 = vmatpush.msra.mxu0 %v959
      %1020 = vmatpush.msra.mxu0 %v957
      %1021 = vmatpush.msra.mxu0 %v955
      %1022 = vmatpush.msra.mxu0 %v953
      %1023 = vmatpush.msra.mxu0 %v951
      %1024 = vmatmul.f32.gmra.mxu0 %v985
      %v1025 = vpop.f32.mrf.mxu0
      %v1026 = vadd.f32 %v1006, %v1025
      %1027 = vdwg.mxu0
      %1028 = vmatpush.msra.mxu0 %v950
      %1029 = vmatpush.msra.mxu0 %v948
      %1030 = vmatpush.msra.mxu0 %v946
      %1031 = vmatpush.msra.mxu0 %v944
      %1032 = vmatpush.msra.mxu0 %v942
      %1033 = vmatpush.msra.mxu0 %v940
      %1034 = vmatpush.msra.mxu0 %v938
      %1035 = vmatpush.msra.mxu0 %v936
      %1036 = vmatpush.msra.mxu0 %v934
      %1037 = vmatpush.msra.mxu0 %v932
      %1038 = vmatpush.msra.mxu0 %v930
      %1039 = vmatpush.msra.mxu0 %v928
      %1040 = vmatpush.msra.mxu0 %v926
      %1041 = vmatpush.msra.mxu0 %v924
      %1042 = vmatpush.msra.mxu0 %v922
      %1043 = vmatpush.msra.mxu0 %v920
      %1044 = vmatmul.f32.gmra.mxu0 %v984
      %v1045 = vpop.f32.mrf.mxu0
      %v1046 = vadd.f32 0.0, %v1045
      %1047 = vdwg.mxu0
      %1048 = vmatpush.msra.mxu0 %v982
      %1049 = vmatpush.msra.mxu0 %v980
      %1050 = vmatpush.msra.mxu0 %v978
      %1051 = vmatpush.msra.mxu0 %v976
      %1052 = vmatpush.msra.mxu0 %v974
      %1053 = vmatpush.msra.mxu0 %v972
      %1054 = vmatpush.msra.mxu0 %v970
      %1055 = vmatpush.msra.mxu0 %v968
      %1056 = vmatpush.msra.mxu0 %v966
      %1057 = vmatpush.msra.mxu0 %v964
      %1058 = vmatpush.msra.mxu0 %v962
      %1059 = vmatpush.msra.mxu0 %v960
      %1060 = vmatpush.msra.mxu0 %v958
      %1061 = vmatpush.msra.mxu0 %v956
      %1062 = vmatpush.msra.mxu0 %v954
      %1063 = vmatpush.msra.mxu0 %v952
      %1064 = vmatmul.f32.gmra.mxu0 %v985
      %v1065 = vpop.f32.mrf.mxu0
      %v1066 = vadd.f32 %v1046, %v1065
      %1067 = vdwg.mxu0
      %s1068 = scalar_lea.vmem %s2, 48
      %v1069 = vld [vmem:[%s1068] sm:$0xff]
      %v1070 = vld [vmem:[%s1068 + $0x8] sm:$0xff]
      %v1072 = vsel %vm585, %v1069, 0
      %v1075 = vsel %vm585, %v1070, 0
      %v1078 = vsel %vm592, %v1026, 0
      %v1081 = vsel %vm592, %v1066, 0
      %1083 = vmatpush.msra.mxu0 0.0
      %1084 = vmatpush.msra.mxu0 0.0
      %1085 = vmatpush.msra.mxu0 0.0
      %1086 = vmatpush.msra.mxu0 0.0
      %1087 = vmatpush.msra.mxu0 0.0
      %1088 = vmatpush.msra.mxu0 0.0
      %1089 = vmatpush.msra.mxu0 0.0
      %1090 = vmatpush.msra.mxu0 0.0
      %1091 = vmatpush.msra.mxu0 0.0
      %1092 = vmatpush.msra.mxu0 0.0
      %1093 = vmatpush.msra.mxu0 0.0
      %1094 = vmatpush.msra.mxu0 0.0
      %1095 = vmatpush.msra.mxu0 0.0
      %1096 = vmatpush.msra.mxu0 0.0
      %1097 = vmatpush.msra.mxu0 0.0
      %1098 = vmatpush.msra.mxu0 %v1078
      %1099 = vmatmul.f32.gmra.mxu0 %v1072
      %v1100 = vpop.f32.mrf.mxu0
      %v1101 = vadd.f32 0.0, %v1100
      %1102 = vmatmul.f32.gmra.mxu0 %v1075
      %v1103 = vpop.f32.mrf.mxu0
      %v1104 = vadd.f32 0.0, %v1103
      %1105 = vdwg.mxu0
      %1106 = vmatpush.msra.mxu0 0.0
      %1107 = vmatpush.msra.mxu0 0.0
      %1108 = vmatpush.msra.mxu0 0.0
      %1109 = vmatpush.msra.mxu0 0.0
      %1110 = vmatpush.msra.mxu0 0.0
      %1111 = vmatpush.msra.mxu0 0.0
      %1112 = vmatpush.msra.mxu0 0.0
      %1113 = vmatpush.msra.mxu0 0.0
      %1114 = vmatpush.msra.mxu0 0.0
      %1115 = vmatpush.msra.mxu0 0.0
      %1116 = vmatpush.msra.mxu0 0.0
      %1117 = vmatpush.msra.mxu0 0.0
      %1118 = vmatpush.msra.mxu0 0.0
      %1119 = vmatpush.msra.mxu0 0.0
      %1120 = vmatpush.msra.mxu0 0.0
      %1121 = vmatpush.msra.mxu0 %v1081
      %1122 = vmatmul.f32.gmra.mxu0 %v1072
      %v1123 = vpop.f32.mrf.mxu0
      %v1124 = vadd.f32 0.0, %v1123
      %1125 = vmatmul.f32.gmra.mxu0 %v1075
      %v1126 = vpop.f32.mrf.mxu0
      %v1127 = vadd.f32 0.0, %v1126
      %1128 = vdwg.mxu0
      %v1129 = vadd.f32 %v914, %v1101
      %v1130 = vadd.f32 %v915, %v1124
      %v1131 = vadd.f32 %v916, %v1104
      %v1132 = vadd.f32 %v917, %v1127
      %s1133 = scalar_lea.vmem %s1, 2048
      %v1134 = vld [vmem:[%s1133] sm:$0xff]
      %v1135 = vld [vmem:[%s1133 + $0x8] sm:$0xff]
      %v1136 = vld [vmem:[%s1133 + $0x10] sm:$0xff]
      %v1137 = vld [vmem:[%s1133 + $0x18] sm:$0xff]
      %v1138 = vld [vmem:[%s1133 + $0x20] sm:$0xff]
      %v1139 = vld [vmem:[%s1133 + $0x28] sm:$0xff]
      %v1140 = vld [vmem:[%s1133 + $0x30] sm:$0xff]
      %v1141 = vld [vmem:[%s1133 + $0x38] sm:$0xff]
      %v1142 = vld [vmem:[%s1133 + $0x40] sm:$0xff]
      %v1143 = vld [vmem:[%s1133 + $0x48] sm:$0xff]
      %v1144 = vld [vmem:[%s1133 + $0x50] sm:$0xff]
      %v1145 = vld [vmem:[%s1133 + $0x58] sm:$0xff]
      %v1146 = vld [vmem:[%s1133 + $0x60] sm:$0xff]
      %v1147 = vld [vmem:[%s1133 + $0x68] sm:$0xff]
      %v1148 = vld [vmem:[%s1133 + $0x70] sm:$0xff]
      %v1149 = vld [vmem:[%s1133 + $0x78] sm:$0xff]
      %v1150 = vld [vmem:[%s1133 + $0x80] sm:$0xff]
      %v1151 = vld [vmem:[%s1133 + $0x88] sm:$0xff]
      %v1152 = vld [vmem:[%s1133 + $0x90] sm:$0xff]
      %v1153 = vld [vmem:[%s1133 + $0x98] sm:$0xff]
      %v1154 = vld [vmem:[%s1133 + $0xa0] sm:$0xff]
      %v1155 = vld [vmem:[%s1133 + $0xa8] sm:$0xff]
      %v1156 = vld [vmem:[%s1133 + $0xb0] sm:$0xff]
      %v1157 = vld [vmem:[%s1133 + $0xb8] sm:$0xff]
      %v1158 = vld [vmem:[%s1133 + $0xc0] sm:$0xff]
      %v1159 = vld [vmem:[%s1133 + $0xc8] sm:$0xff]
      %v1160 = vld [vmem:[%s1133 + $0xd0] sm:$0xff]
      %v1161 = vld [vmem:[%s1133 + $0xd8] sm:$0xff]
      %v1162 = vld [vmem:[%s1133 + $0xe0] sm:$0xff]
      %v1163 = vld [vmem:[%s1133 + $0xe8] sm:$0xff]
      %v1164 = vld [vmem:[%s1133 + $0xf0] sm:$0xff]
      %v1165 = vld [vmem:[%s1133 + $0xf8] sm:$0xff]
      %v1166 = vld [vmem:[%s1133 + $0x100] sm:$0xff]
      %v1167 = vld [vmem:[%s1133 + $0x108] sm:$0xff]
      %v1168 = vld [vmem:[%s1133 + $0x110] sm:$0xff]
      %v1169 = vld [vmem:[%s1133 + $0x118] sm:$0xff]
      %v1170 = vld [vmem:[%s1133 + $0x120] sm:$0xff]
      %v1171 = vld [vmem:[%s1133 + $0x128] sm:$0xff]
      %v1172 = vld [vmem:[%s1133 + $0x130] sm:$0xff]
      %v1173 = vld [vmem:[%s1133 + $0x138] sm:$0xff]
      %v1174 = vld [vmem:[%s1133 + $0x140] sm:$0xff]
      %v1175 = vld [vmem:[%s1133 + $0x148] sm:$0xff]
      %v1176 = vld [vmem:[%s1133 + $0x150] sm:$0xff]
      %v1177 = vld [vmem:[%s1133 + $0x158] sm:$0xff]
      %v1178 = vld [vmem:[%s1133 + $0x160] sm:$0xff]
      %v1179 = vld [vmem:[%s1133 + $0x168] sm:$0xff]
      %v1180 = vld [vmem:[%s1133 + $0x170] sm:$0xff]
      %v1181 = vld [vmem:[%s1133 + $0x178] sm:$0xff]
      %v1182 = vld [vmem:[%s1133 + $0x180] sm:$0xff]
      %v1183 = vld [vmem:[%s1133 + $0x188] sm:$0xff]
      %v1184 = vld [vmem:[%s1133 + $0x190] sm:$0xff]
      %v1185 = vld [vmem:[%s1133 + $0x198] sm:$0xff]
      %v1186 = vld [vmem:[%s1133 + $0x1a0] sm:$0xff]
      %v1187 = vld [vmem:[%s1133 + $0x1a8] sm:$0xff]
      %v1188 = vld [vmem:[%s1133 + $0x1b0] sm:$0xff]
      %v1189 = vld [vmem:[%s1133 + $0x1b8] sm:$0xff]
      %v1190 = vld [vmem:[%s1133 + $0x1c0] sm:$0xff]
      %v1191 = vld [vmem:[%s1133 + $0x1c8] sm:$0xff]
      %v1192 = vld [vmem:[%s1133 + $0x1d0] sm:$0xff]
      %v1193 = vld [vmem:[%s1133 + $0x1d8] sm:$0xff]
      %v1194 = vld [vmem:[%s1133 + $0x1e0] sm:$0xff]
      %v1195 = vld [vmem:[%s1133 + $0x1e8] sm:$0xff]
      %v1196 = vld [vmem:[%s1133 + $0x1f0] sm:$0xff]
      %v1197 = vld [vmem:[%s1133 + $0x1f8] sm:$0xff]
      %1198 = vst [vmem:[#allocation1] ss:$2 sm:$0xff] %v279
      %v1199 = vld.sshfl [vmem:[#allocation1] sm:$0xff pattern:$0x75316420]
      %v1200 = vld.sshfl [vmem:[#allocation1 + $0x8] sm:$0xff pattern:$0x75316420]
      %1203 = vmatpush.msra.mxu0 %v1164
      %1204 = vmatpush.msra.mxu0 %v1162
      %1205 = vmatpush.msra.mxu0 %v1160
      %1206 = vmatpush.msra.mxu0 %v1158
      %1207 = vmatpush.msra.mxu0 %v1156
      %1208 = vmatpush.msra.mxu0 %v1154
      %1209 = vmatpush.msra.mxu0 %v1152
      %1210 = vmatpush.msra.mxu0 %v1150
      %1211 = vmatpush.msra.mxu0 %v1148
      %1212 = vmatpush.msra.mxu0 %v1146
      %1213 = vmatpush.msra.mxu0 %v1144
      %1214 = vmatpush.msra.mxu0 %v1142
      %1215 = vmatpush.msra.mxu0 %v1140
      %1216 = vmatpush.msra.mxu0 %v1138
      %1217 = vmatpush.msra.mxu0 %v1136
      %1218 = vmatpush.msra.mxu0 %v1134
      %1219 = vmatmul.f32.gmra.mxu0 %v1199
      %v1220 = vpop.f32.mrf.mxu0
      %v1221 = vadd.f32 0.0, %v1220
      %1222 = vdwg.mxu0
      %1223 = vmatpush.msra.mxu0 %v1196
      %1224 = vmatpush.msra.mxu0 %v1194
      %1225 = vmatpush.msra.mxu0 %v1192
      %1226 = vmatpush.msra.mxu0 %v1190
      %1227 = vmatpush.msra.mxu0 %v1188
      %1228 = vmatpush.msra.mxu0 %v1186
      %1229 = vmatpush.msra.mxu0 %v1184
      %1230 = vmatpush.msra.mxu0 %v1182
      %1231 = vmatpush.msra.mxu0 %v1180
      %1232 = vmatpush.msra.mxu0 %v1178
      %1233 = vmatpush.msra.mxu0 %v1176
      %1234 = vmatpush.msra.mxu0 %v1174
      %1235 = vmatpush.msra.mxu0 %v1172
      %1236 = vmatpush.msra.mxu0 %v1170
      %1237 = vmatpush.msra.mxu0 %v1168
      %1238 = vmatpush.msra.mxu0 %v1166
      %1239 = vmatmul.f32.gmra.mxu0 %v1200
      %v1240 = vpop.f32.mrf.mxu0
      %v1241 = vadd.f32 %v1221, %v1240
      %1242 = vdwg.mxu0
      %1243 = vmatpush.msra.mxu0 %v1165
      %1244 = vmatpush.msra.mxu0 %v1163
      %1245 = vmatpush.msra.mxu0 %v1161
      %1246 = vmatpush.msra.mxu0 %v1159
      %1247 = vmatpush.msra.mxu0 %v1157
      %1248 = vmatpush.msra.mxu0 %v1155
      %1249 = vmatpush.msra.mxu0 %v1153
      %1250 = vmatpush.msra.mxu0 %v1151
      %1251 = vmatpush.msra.mxu0 %v1149
      %1252 = vmatpush.msra.mxu0 %v1147
      %1253 = vmatpush.msra.mxu0 %v1145
      %1254 = vmatpush.msra.mxu0 %v1143
      %1255 = vmatpush.msra.mxu0 %v1141
      %1256 = vmatpush.msra.mxu0 %v1139
      %1257 = vmatpush.msra.mxu0 %v1137
      %1258 = vmatpush.msra.mxu0 %v1135
      %1259 = vmatmul.f32.gmra.mxu0 %v1199
      %v1260 = vpop.f32.mrf.mxu0
      %v1261 = vadd.f32 0.0, %v1260
      %1262 = vdwg.mxu0
      %1263 = vmatpush.msra.mxu0 %v1197
      %1264 = vmatpush.msra.mxu0 %v1195
      %1265 = vmatpush.msra.mxu0 %v1193
      %1266 = vmatpush.msra.mxu0 %v1191
      %1267 = vmatpush.msra.mxu0 %v1189
      %1268 = vmatpush.msra.mxu0 %v1187
      %1269 = vmatpush.msra.mxu0 %v1185
      %1270 = vmatpush.msra.mxu0 %v1183
      %1271 = vmatpush.msra.mxu0 %v1181
      %1272 = vmatpush.msra.mxu0 %v1179
      %1273 = vmatpush.msra.mxu0 %v1177
      %1274 = vmatpush.msra.mxu0 %v1175
      %1275 = vmatpush.msra.mxu0 %v1173
      %1276 = vmatpush.msra.mxu0 %v1171
      %1277 = vmatpush.msra.mxu0 %v1169
      %1278 = vmatpush.msra.mxu0 %v1167
      %1279 = vmatmul.f32.gmra.mxu0 %v1200
      %v1280 = vpop.f32.mrf.mxu0
      %v1281 = vadd.f32 %v1261, %v1280
      %1282 = vdwg.mxu0
      %s1283 = scalar_lea.vmem %s2, 64
      %v1284 = vld [vmem:[%s1283] sm:$0xff]
      %v1285 = vld [vmem:[%s1283 + $0x8] sm:$0xff]
      %v1287 = vsel %vm585, %v1284, 0
      %v1290 = vsel %vm585, %v1285, 0
      %v1293 = vsel %vm592, %v1241, 0
      %v1296 = vsel %vm592, %v1281, 0
      %1298 = vmatpush.msra.mxu0 0.0
      %1299 = vmatpush.msra.mxu0 0.0
      %1300 = vmatpush.msra.mxu0 0.0
      %1301 = vmatpush.msra.mxu0 0.0
      %1302 = vmatpush.msra.mxu0 0.0
      %1303 = vmatpush.msra.mxu0 0.0
      %1304 = vmatpush.msra.mxu0 0.0
      %1305 = vmatpush.msra.mxu0 0.0
      %1306 = vmatpush.msra.mxu0 0.0
      %1307 = vmatpush.msra.mxu0 0.0
      %1308 = vmatpush.msra.mxu0 0.0
      %1309 = vmatpush.msra.mxu0 0.0
      %1310 = vmatpush.msra.mxu0 0.0
      %1311 = vmatpush.msra.mxu0 0.0
      %1312 = vmatpush.msra.mxu0 0.0
      %1313 = vmatpush.msra.mxu0 %v1293
      %1314 = vmatmul.f32.gmra.mxu0 %v1287
      %v1315 = vpop.f32.mrf.mxu0
      %v1316 = vadd.f32 0.0, %v1315
      %1317 = vmatmul.f32.gmra.mxu0 %v1290
      %v1318 = vpop.f32.mrf.mxu0
      %v1319 = vadd.f32 0.0, %v1318
      %1320 = vdwg.mxu0
      %1321 = vmatpush.msra.mxu0 0.0
      %1322 = vmatpush.msra.mxu0 0.0
      %1323 = vmatpush.msra.mxu0 0.0
      %1324 = vmatpush.msra.mxu0 0.0
      %1325 = vmatpush.msra.mxu0 0.0
      %1326 = vmatpush.msra.mxu0 0.0
      %1327 = vmatpush.msra.mxu0 0.0
      %1328 = vmatpush.msra.mxu0 0.0
      %1329 = vmatpush.msra.mxu0 0.0
      %1330 = vmatpush.msra.mxu0 0.0
      %1331 = vmatpush.msra.mxu0 0.0
      %1332 = vmatpush.msra.mxu0 0.0
      %1333 = vmatpush.msra.mxu0 0.0
      %1334 = vmatpush.msra.mxu0 0.0
      %1335 = vmatpush.msra.mxu0 0.0
      %1336 = vmatpush.msra.mxu0 %v1296
      %1337 = vmatmul.f32.gmra.mxu0 %v1287
      %v1338 = vpop.f32.mrf.mxu0
      %v1339 = vadd.f32 0.0, %v1338
      %1340 = vmatmul.f32.gmra.mxu0 %v1290
      %v1341 = vpop.f32.mrf.mxu0
      %v1342 = vadd.f32 0.0, %v1341
      %1343 = vdwg.mxu0
      %v1344 = vadd.f32 %v1129, %v1316
      %v1345 = vadd.f32 %v1130, %v1339
      %v1346 = vadd.f32 %v1131, %v1319
      %v1347 = vadd.f32 %v1132, %v1342
      %s1348 = scalar_lea.vmem %s1, 2560
      %v1349 = vld [vmem:[%s1348] sm:$0xff]
      %v1350 = vld [vmem:[%s1348 + $0x8] sm:$0xff]
      %v1351 = vld [vmem:[%s1348 + $0x10] sm:$0xff]
      %v1352 = vld [vmem:[%s1348 + $0x18] sm:$0xff]
      %v1353 = vld [vmem:[%s1348 + $0x20] sm:$0xff]
      %v1354 = vld [vmem:[%s1348 + $0x28] sm:$0xff]
      %v1355 = vld [vmem:[%s1348 + $0x30] sm:$0xff]
      %v1356 = vld [vmem:[%s1348 + $0x38] sm:$0xff]
      %v1357 = vld [vmem:[%s1348 + $0x40] sm:$0xff]
      %v1358 = vld [vmem:[%s1348 + $0x48] sm:$0xff]
      %v1359 = vld [vmem:[%s1348 + $0x50] sm:$0xff]
      %v1360 = vld [vmem:[%s1348 + $0x58] sm:$0xff]
      %v1361 = vld [vmem:[%s1348 + $0x60] sm:$0xff]
      %v1362 = vld [vmem:[%s1348 + $0x68] sm:$0xff]
      %v1363 = vld [vmem:[%s1348 + $0x70] sm:$0xff]
      %v1364 = vld [vmem:[%s1348 + $0x78] sm:$0xff]
      %v1365 = vld [vmem:[%s1348 + $0x80] sm:$0xff]
      %v1366 = vld [vmem:[%s1348 + $0x88] sm:$0xff]
      %v1367 = vld [vmem:[%s1348 + $0x90] sm:$0xff]
      %v1368 = vld [vmem:[%s1348 + $0x98] sm:$0xff]
      %v1369 = vld [vmem:[%s1348 + $0xa0] sm:$0xff]
      %v1370 = vld [vmem:[%s1348 + $0xa8] sm:$0xff]
      %v1371 = vld [vmem:[%s1348 + $0xb0] sm:$0xff]
      %v1372 = vld [vmem:[%s1348 + $0xb8] sm:$0xff]
      %v1373 = vld [vmem:[%s1348 + $0xc0] sm:$0xff]
      %v1374 = vld [vmem:[%s1348 + $0xc8] sm:$0xff]
      %v1375 = vld [vmem:[%s1348 + $0xd0] sm:$0xff]
      %v1376 = vld [vmem:[%s1348 + $0xd8] sm:$0xff]
      %v1377 = vld [vmem:[%s1348 + $0xe0] sm:$0xff]
      %v1378 = vld [vmem:[%s1348 + $0xe8] sm:$0xff]
      %v1379 = vld [vmem:[%s1348 + $0xf0] sm:$0xff]
      %v1380 = vld [vmem:[%s1348 + $0xf8] sm:$0xff]
      %v1381 = vld [vmem:[%s1348 + $0x100] sm:$0xff]
      %v1382 = vld [vmem:[%s1348 + $0x108] sm:$0xff]
      %v1383 = vld [vmem:[%s1348 + $0x110] sm:$0xff]
      %v1384 = vld [vmem:[%s1348 + $0x118] sm:$0xff]
      %v1385 = vld [vmem:[%s1348 + $0x120] sm:$0xff]
      %v1386 = vld [vmem:[%s1348 + $0x128] sm:$0xff]
      %v1387 = vld [vmem:[%s1348 + $0x130] sm:$0xff]
      %v1388 = vld [vmem:[%s1348 + $0x138] sm:$0xff]
      %v1389 = vld [vmem:[%s1348 + $0x140] sm:$0xff]
      %v1390 = vld [vmem:[%s1348 + $0x148] sm:$0xff]
      %v1391 = vld [vmem:[%s1348 + $0x150] sm:$0xff]
      %v1392 = vld [vmem:[%s1348 + $0x158] sm:$0xff]
      %v1393 = vld [vmem:[%s1348 + $0x160] sm:$0xff]
      %v1394 = vld [vmem:[%s1348 + $0x168] sm:$0xff]
      %v1395 = vld [vmem:[%s1348 + $0x170] sm:$0xff]
      %v1396 = vld [vmem:[%s1348 + $0x178] sm:$0xff]
      %v1397 = vld [vmem:[%s1348 + $0x180] sm:$0xff]
      %v1398 = vld [vmem:[%s1348 + $0x188] sm:$0xff]
      %v1399 = vld [vmem:[%s1348 + $0x190] sm:$0xff]
      %v1400 = vld [vmem:[%s1348 + $0x198] sm:$0xff]
      %v1401 = vld [vmem:[%s1348 + $0x1a0] sm:$0xff]
      %v1402 = vld [vmem:[%s1348 + $0x1a8] sm:$0xff]
      %v1403 = vld [vmem:[%s1348 + $0x1b0] sm:$0xff]
      %v1404 = vld [vmem:[%s1348 + $0x1b8] sm:$0xff]
      %v1405 = vld [vmem:[%s1348 + $0x1c0] sm:$0xff]
      %v1406 = vld [vmem:[%s1348 + $0x1c8] sm:$0xff]
      %v1407 = vld [vmem:[%s1348 + $0x1d0] sm:$0xff]
      %v1408 = vld [vmem:[%s1348 + $0x1d8] sm:$0xff]
      %v1409 = vld [vmem:[%s1348 + $0x1e0] sm:$0xff]
      %v1410 = vld [vmem:[%s1348 + $0x1e8] sm:$0xff]
      %v1411 = vld [vmem:[%s1348 + $0x1f0] sm:$0xff]
      %v1412 = vld [vmem:[%s1348 + $0x1f8] sm:$0xff]
      %1413 = vst [vmem:[#allocation1] ss:$2 sm:$0xff] %v279
      %v1414 = vld.sshfl [vmem:[#allocation1] sm:$0xff pattern:$0x75316420]
      %v1415 = vld.sshfl [vmem:[#allocation1 + $0x8] sm:$0xff pattern:$0x75316420]
      %1418 = vmatpush.msra.mxu0 %v1379
      %1419 = vmatpush.msra.mxu0 %v1377
      %1420 = vmatpush.msra.mxu0 %v1375
      %1421 = vmatpush.msra.mxu0 %v1373
      %1422 = vmatpush.msra.mxu0 %v1371
      %1423 = vmatpush.msra.mxu0 %v1369
      %1424 = vmatpush.msra.mxu0 %v1367
      %1425 = vmatpush.msra.mxu0 %v1365
      %1426 = vmatpush.msra.mxu0 %v1363
      %1427 = vmatpush.msra.mxu0 %v1361
      %1428 = vmatpush.msra.mxu0 %v1359
      %1429 = vmatpush.msra.mxu0 %v1357
      %1430 = vmatpush.msra.mxu0 %v1355
      %1431 = vmatpush.msra.mxu0 %v1353
      %1432 = vmatpush.msra.mxu0 %v1351
      %1433 = vmatpush.msra.mxu0 %v1349
      %1434 = vmatmul.f32.gmra.mxu0 %v1414
      %v1435 = vpop.f32.mrf.mxu0
      %v1436 = vadd.f32 0.0, %v1435
      %1437 = vdwg.mxu0
      %1438 = vmatpush.msra.mxu0 %v1411
      %1439 = vmatpush.msra.mxu0 %v1409
      %1440 = vmatpush.msra.mxu0 %v1407
      %1441 = vmatpush.msra.mxu0 %v1405
      %1442 = vmatpush.msra.mxu0 %v1403
      %1443 = vmatpush.msra.mxu0 %v1401
      %1444 = vmatpush.msra.mxu0 %v1399
      %1445 = vmatpush.msra.mxu0 %v1397
      %1446 = vmatpush.msra.mxu0 %v1395
      %1447 = vmatpush.msra.mxu0 %v1393
      %1448 = vmatpush.msra.mxu0 %v1391
      %1449 = vmatpush.msra.mxu0 %v1389
      %1450 = vmatpush.msra.mxu0 %v1387
      %1451 = vmatpush.msra.mxu0 %v1385
      %1452 = vmatpush.msra.mxu0 %v1383
      %1453 = vmatpush.msra.mxu0 %v1381
      %1454 = vmatmul.f32.gmra.mxu0 %v1415
      %v1455 = vpop.f32.mrf.mxu0
      %v1456 = vadd.f32 %v1436, %v1455
      %1457 = vdwg.mxu0
      %1458 = vmatpush.msra.mxu0 %v1380
      %1459 = vmatpush.msra.mxu0 %v1378
      %1460 = vmatpush.msra.mxu0 %v1376
      %1461 = vmatpush.msra.mxu0 %v1374
      %1462 = vmatpush.msra.mxu0 %v1372
      %1463 = vmatpush.msra.mxu0 %v1370
      %1464 = vmatpush.msra.mxu0 %v1368
      %1465 = vmatpush.msra.mxu0 %v1366
      %1466 = vmatpush.msra.mxu0 %v1364
      %1467 = vmatpush.msra.mxu0 %v1362
      %1468 = vmatpush.msra.mxu0 %v1360
      %1469 = vmatpush.msra.mxu0 %v1358
      %1470 = vmatpush.msra.mxu0 %v1356
      %1471 = vmatpush.msra.mxu0 %v1354
      %1472 = vmatpush.msra.mxu0 %v1352
      %1473 = vmatpush.msra.mxu0 %v1350
      %1474 = vmatmul.f32.gmra.mxu0 %v1414
      %v1475 = vpop.f32.mrf.mxu0
      %v1476 = vadd.f32 0.0, %v1475
      %1477 = vdwg.mxu0
      %1478 = vmatpush.msra.mxu0 %v1412
      %1479 = vmatpush.msra.mxu0 %v1410
      %1480 = vmatpush.msra.mxu0 %v1408
      %1481 = vmatpush.msra.mxu0 %v1406
      %1482 = vmatpush.msra.mxu0 %v1404
      %1483 = vmatpush.msra.mxu0 %v1402
      %1484 = vmatpush.msra.mxu0 %v1400
      %1485 = vmatpush.msra.mxu0 %v1398
      %1486 = vmatpush.msra.mxu0 %v1396
      %1487 = vmatpush.msra.mxu0 %v1394
      %1488 = vmatpush.msra.mxu0 %v1392
      %1489 = vmatpush.msra.mxu0 %v1390
      %1490 = vmatpush.msra.mxu0 %v1388
      %1491 = vmatpush.msra.mxu0 %v1386
      %1492 = vmatpush.msra.mxu0 %v1384
      %1493 = vmatpush.msra.mxu0 %v1382
      %1494 = vmatmul.f32.gmra.mxu0 %v1415
      %v1495 = vpop.f32.mrf.mxu0
      %v1496 = vadd.f32 %v1476, %v1495
      %1497 = vdwg.mxu0
      %s1498 = scalar_lea.vmem %s2, 80
      %v1499 = vld [vmem:[%s1498] sm:$0xff]
      %v1500 = vld [vmem:[%s1498 + $0x8] sm:$0xff]
      %v1502 = vsel %vm585, %v1499, 0
      %v1505 = vsel %vm585, %v1500, 0
      %v1508 = vsel %vm592, %v1456, 0
      %v1511 = vsel %vm592, %v1496, 0
      %1513 = vmatpush.msra.mxu0 0.0
      %1514 = vmatpush.msra.mxu0 0.0
      %1515 = vmatpush.msra.mxu0 0.0
      %1516 = vmatpush.msra.mxu0 0.0
      %1517 = vmatpush.msra.mxu0 0.0
      %1518 = vmatpush.msra.mxu0 0.0
      %1519 = vmatpush.msra.mxu0 0.0
      %1520 = vmatpush.msra.mxu0 0.0
      %1521 = vmatpush.msra.mxu0 0.0
      %1522 = vmatpush.msra.mxu0 0.0
      %1523 = vmatpush.msra.mxu0 0.0
      %1524 = vmatpush.msra.mxu0 0.0
      %1525 = vmatpush.msra.mxu0 0.0
      %1526 = vmatpush.msra.mxu0 0.0
      %1527 = vmatpush.msra.mxu0 0.0
      %1528 = vmatpush.msra.mxu0 %v1508
      %1529 = vmatmul.f32.gmra.mxu0 %v1502
      %v1530 = vpop.f32.mrf.mxu0
      %v1531 = vadd.f32 0.0, %v1530
      %1532 = vmatmul.f32.gmra.mxu0 %v1505
      %v1533 = vpop.f32.mrf.mxu0
      %v1534 = vadd.f32 0.0, %v1533
      %1535 = vdwg.mxu0
      %1536 = vmatpush.msra.mxu0 0.0
      %1537 = vmatpush.msra.mxu0 0.0
      %1538 = vmatpush.msra.mxu0 0.0
      %1539 = vmatpush.msra.mxu0 0.0
      %1540 = vmatpush.msra.mxu0 0.0
      %1541 = vmatpush.msra.mxu0 0.0
      %1542 = vmatpush.msra.mxu0 0.0
      %1543 = vmatpush.msra.mxu0 0.0
      %1544 = vmatpush.msra.mxu0 0.0
      %1545 = vmatpush.msra.mxu0 0.0
      %1546 = vmatpush.msra.mxu0 0.0
      %1547 = vmatpush.msra.mxu0 0.0
      %1548 = vmatpush.msra.mxu0 0.0
      %1549 = vmatpush.msra.mxu0 0.0
      %1550 = vmatpush.msra.mxu0 0.0
      %1551 = vmatpush.msra.mxu0 %v1511
      %1552 = vmatmul.f32.gmra.mxu0 %v1502
      %v1553 = vpop.f32.mrf.mxu0
      %v1554 = vadd.f32 0.0, %v1553
      %1555 = vmatmul.f32.gmra.mxu0 %v1505
      %v1556 = vpop.f32.mrf.mxu0
      %v1557 = vadd.f32 0.0, %v1556
      %1558 = vdwg.mxu0
      %v1559 = vadd.f32 %v1344, %v1531
      %v1560 = vadd.f32 %v1345, %v1554
      %v1561 = vadd.f32 %v1346, %v1534
      %v1562 = vadd.f32 %v1347, %v1557
      %s1563 = scalar_lea.vmem %s1, 3072
      %v1564 = vld [vmem:[%s1563] sm:$0xff]
      %v1565 = vld [vmem:[%s1563 + $0x8] sm:$0xff]
      %v1566 = vld [vmem:[%s1563 + $0x10] sm:$0xff]
      %v1567 = vld [vmem:[%s1563 + $0x18] sm:$0xff]
      %v1568 = vld [vmem:[%s1563 + $0x20] sm:$0xff]
      %v1569 = vld [vmem:[%s1563 + $0x28] sm:$0xff]
      %v1570 = vld [vmem:[%s1563 + $0x30] sm:$0xff]
      %v1571 = vld [vmem:[%s1563 + $0x38] sm:$0xff]
      %v1572 = vld [vmem:[%s1563 + $0x40] sm:$0xff]
      %v1573 = vld [vmem:[%s1563 + $0x48] sm:$0xff]
      %v1574 = vld [vmem:[%s1563 + $0x50] sm:$0xff]
      %v1575 = vld [vmem:[%s1563 + $0x58] sm:$0xff]
      %v1576 = vld [vmem:[%s1563 + $0x60] sm:$0xff]
      %v1577 = vld [vmem:[%s1563 + $0x68] sm:$0xff]
      %v1578 = vld [vmem:[%s1563 + $0x70] sm:$0xff]
      %v1579 = vld [vmem:[%s1563 + $0x78] sm:$0xff]
      %v1580 = vld [vmem:[%s1563 + $0x80] sm:$0xff]
      %v1581 = vld [vmem:[%s1563 + $0x88] sm:$0xff]
      %v1582 = vld [vmem:[%s1563 + $0x90] sm:$0xff]
      %v1583 = vld [vmem:[%s1563 + $0x98] sm:$0xff]
      %v1584 = vld [vmem:[%s1563 + $0xa0] sm:$0xff]
      %v1585 = vld [vmem:[%s1563 + $0xa8] sm:$0xff]
      %v1586 = vld [vmem:[%s1563 + $0xb0] sm:$0xff]
      %v1587 = vld [vmem:[%s1563 + $0xb8] sm:$0xff]
      %v1588 = vld [vmem:[%s1563 + $0xc0] sm:$0xff]
      %v1589 = vld [vmem:[%s1563 + $0xc8] sm:$0xff]
      %v1590 = vld [vmem:[%s1563 + $0xd0] sm:$0xff]
      %v1591 = vld [vmem:[%s1563 + $0xd8] sm:$0xff]
      %v1592 = vld [vmem:[%s1563 + $0xe0] sm:$0xff]
      %v1593 = vld [vmem:[%s1563 + $0xe8] sm:$0xff]
      %v1594 = vld [vmem:[%s1563 + $0xf0] sm:$0xff]
      %v1595 = vld [vmem:[%s1563 + $0xf8] sm:$0xff]
      %v1596 = vld [vmem:[%s1563 + $0x100] sm:$0xff]
      %v1597 = vld [vmem:[%s1563 + $0x108] sm:$0xff]
      %v1598 = vld [vmem:[%s1563 + $0x110] sm:$0xff]
      %v1599 = vld [vmem:[%s1563 + $0x118] sm:$0xff]
      %v1600 = vld [vmem:[%s1563 + $0x120] sm:$0xff]
      %v1601 = vld [vmem:[%s1563 + $0x128] sm:$0xff]
      %v1602 = vld [vmem:[%s1563 + $0x130] sm:$0xff]
      %v1603 = vld [vmem:[%s1563 + $0x138] sm:$0xff]
      %v1604 = vld [vmem:[%s1563 + $0x140] sm:$0xff]
      %v1605 = vld [vmem:[%s1563 + $0x148] sm:$0xff]
      %v1606 = vld [vmem:[%s1563 + $0x150] sm:$0xff]
      %v1607 = vld [vmem:[%s1563 + $0x158] sm:$0xff]
      %v1608 = vld [vmem:[%s1563 + $0x160] sm:$0xff]
      %v1609 = vld [vmem:[%s1563 + $0x168] sm:$0xff]
      %v1610 = vld [vmem:[%s1563 + $0x170] sm:$0xff]
      %v1611 = vld [vmem:[%s1563 + $0x178] sm:$0xff]
      %v1612 = vld [vmem:[%s1563 + $0x180] sm:$0xff]
      %v1613 = vld [vmem:[%s1563 + $0x188] sm:$0xff]
      %v1614 = vld [vmem:[%s1563 + $0x190] sm:$0xff]
      %v1615 = vld [vmem:[%s1563 + $0x198] sm:$0xff]
      %v1616 = vld [vmem:[%s1563 + $0x1a0] sm:$0xff]
      %v1617 = vld [vmem:[%s1563 + $0x1a8] sm:$0xff]
      %v1618 = vld [vmem:[%s1563 + $0x1b0] sm:$0xff]
      %v1619 = vld [vmem:[%s1563 + $0x1b8] sm:$0xff]
      %v1620 = vld [vmem:[%s1563 + $0x1c0] sm:$0xff]
      %v1621 = vld [vmem:[%s1563 + $0x1c8] sm:$0xff]
      %v1622 = vld [vmem:[%s1563 + $0x1d0] sm:$0xff]
      %v1623 = vld [vmem:[%s1563 + $0x1d8] sm:$0xff]
      %v1624 = vld [vmem:[%s1563 + $0x1e0] sm:$0xff]
      %v1625 = vld [vmem:[%s1563 + $0x1e8] sm:$0xff]
      %v1626 = vld [vmem:[%s1563 + $0x1f0] sm:$0xff]
      %v1627 = vld [vmem:[%s1563 + $0x1f8] sm:$0xff]
      %1628 = vst [vmem:[#allocation1] ss:$2 sm:$0xff] %v279
      %v1629 = vld.sshfl [vmem:[#allocation1] sm:$0xff pattern:$0x75316420]
      %v1630 = vld.sshfl [vmem:[#allocation1 + $0x8] sm:$0xff pattern:$0x75316420]
      %1633 = vmatpush.msra.mxu0 %v1594
      %1634 = vmatpush.msra.mxu0 %v1592
      %1635 = vmatpush.msra.mxu0 %v1590
      %1636 = vmatpush.msra.mxu0 %v1588
      %1637 = vmatpush.msra.mxu0 %v1586
      %1638 = vmatpush.msra.mxu0 %v1584
      %1639 = vmatpush.msra.mxu0 %v1582
      %1640 = vmatpush.msra.mxu0 %v1580
      %1641 = vmatpush.msra.mxu0 %v1578
      %1642 = vmatpush.msra.mxu0 %v1576
      %1643 = vmatpush.msra.mxu0 %v1574
      %1644 = vmatpush.msra.mxu0 %v1572
      %1645 = vmatpush.msra.mxu0 %v1570
      %1646 = vmatpush.msra.mxu0 %v1568
      %1647 = vmatpush.msra.mxu0 %v1566
      %1648 = vmatpush.msra.mxu0 %v1564
      %1649 = vmatmul.f32.gmra.mxu0 %v1629
      %v1650 = vpop.f32.mrf.mxu0
      %v1651 = vadd.f32 0.0, %v1650
      %1652 = vdwg.mxu0
      %1653 = vmatpush.msra.mxu0 %v1626
      %1654 = vmatpush.msra.mxu0 %v1624
      %1655 = vmatpush.msra.mxu0 %v1622
      %1656 = vmatpush.msra.mxu0 %v1620
      %1657 = vmatpush.msra.mxu0 %v1618
      %1658 = vmatpush.msra.mxu0 %v1616
      %1659 = vmatpush.msra.mxu0 %v1614
      %1660 = vmatpush.msra.mxu0 %v1612
      %1661 = vmatpush.msra.mxu0 %v1610
      %1662 = vmatpush.msra.mxu0 %v1608
      %1663 = vmatpush.msra.mxu0 %v1606
      %1664 = vmatpush.msra.mxu0 %v1604
      %1665 = vmatpush.msra.mxu0 %v1602
      %1666 = vmatpush.msra.mxu0 %v1600
      %1667 = vmatpush.msra.mxu0 %v1598
      %1668 = vmatpush.msra.mxu0 %v1596
      %1669 = vmatmul.f32.gmra.mxu0 %v1630
      %v1670 = vpop.f32.mrf.mxu0
      %v1671 = vadd.f32 %v1651, %v1670
      %1672 = vdwg.mxu0
      %1673 = vmatpush.msra.mxu0 %v1595
      %1674 = vmatpush.msra.mxu0 %v1593
      %1675 = vmatpush.msra.mxu0 %v1591
      %1676 = vmatpush.msra.mxu0 %v1589
      %1677 = vmatpush.msra.mxu0 %v1587
      %1678 = vmatpush.msra.mxu0 %v1585
      %1679 = vmatpush.msra.mxu0 %v1583
      %1680 = vmatpush.msra.mxu0 %v1581
      %1681 = vmatpush.msra.mxu0 %v1579
      %1682 = vmatpush.msra.mxu0 %v1577
      %1683 = vmatpush.msra.mxu0 %v1575
      %1684 = vmatpush.msra.mxu0 %v1573
      %1685 = vmatpush.msra.mxu0 %v1571
      %1686 = vmatpush.msra.mxu0 %v1569
      %1687 = vmatpush.msra.mxu0 %v1567
      %1688 = vmatpush.msra.mxu0 %v1565
      %1689 = vmatmul.f32.gmra.mxu0 %v1629
      %v1690 = vpop.f32.mrf.mxu0
      %v1691 = vadd.f32 0.0, %v1690
      %1692 = vdwg.mxu0
      %1693 = vmatpush.msra.mxu0 %v1627
      %1694 = vmatpush.msra.mxu0 %v1625
      %1695 = vmatpush.msra.mxu0 %v1623
      %1696 = vmatpush.msra.mxu0 %v1621
      %1697 = vmatpush.msra.mxu0 %v1619
      %1698 = vmatpush.msra.mxu0 %v1617
      %1699 = vmatpush.msra.mxu0 %v1615
      %1700 = vmatpush.msra.mxu0 %v1613
      %1701 = vmatpush.msra.mxu0 %v1611
      %1702 = vmatpush.msra.mxu0 %v1609
      %1703 = vmatpush.msra.mxu0 %v1607
      %1704 = vmatpush.msra.mxu0 %v1605
      %1705 = vmatpush.msra.mxu0 %v1603
      %1706 = vmatpush.msra.mxu0 %v1601
      %1707 = vmatpush.msra.mxu0 %v1599
      %1708 = vmatpush.msra.mxu0 %v1597
      %1709 = vmatmul.f32.gmra.mxu0 %v1630
      %v1710 = vpop.f32.mrf.mxu0
      %v1711 = vadd.f32 %v1691, %v1710
      %1712 = vdwg.mxu0
      %s1713 = scalar_lea.vmem %s2, 96
      %v1714 = vld [vmem:[%s1713] sm:$0xff]
      %v1715 = vld [vmem:[%s1713 + $0x8] sm:$0xff]
      %v1717 = vsel %vm585, %v1714, 0
      %v1720 = vsel %vm585, %v1715, 0
      %v1723 = vsel %vm592, %v1671, 0
      %v1726 = vsel %vm592, %v1711, 0
      %1728 = vmatpush.msra.mxu0 0.0
      %1729 = vmatpush.msra.mxu0 0.0
      %1730 = vmatpush.msra.mxu0 0.0
      %1731 = vmatpush.msra.mxu0 0.0
      %1732 = vmatpush.msra.mxu0 0.0
      %1733 = vmatpush.msra.mxu0 0.0
      %1734 = vmatpush.msra.mxu0 0.0
      %1735 = vmatpush.msra.mxu0 0.0
      %1736 = vmatpush.msra.mxu0 0.0
      %1737 = vmatpush.msra.mxu0 0.0
      %1738 = vmatpush.msra.mxu0 0.0
      %1739 = vmatpush.msra.mxu0 0.0
      %1740 = vmatpush.msra.mxu0 0.0
      %1741 = vmatpush.msra.mxu0 0.0
      %1742 = vmatpush.msra.mxu0 0.0
      %1743 = vmatpush.msra.mxu0 %v1723
      %1744 = vmatmul.f32.gmra.mxu0 %v1717
      %v1745 = vpop.f32.mrf.mxu0
      %v1746 = vadd.f32 0.0, %v1745
      %1747 = vmatmul.f32.gmra.mxu0 %v1720
      %v1748 = vpop.f32.mrf.mxu0
      %v1749 = vadd.f32 0.0, %v1748
      %1750 = vdwg.mxu0
      %1751 = vmatpush.msra.mxu0 0.0
      %1752 = vmatpush.msra.mxu0 0.0
      %1753 = vmatpush.msra.mxu0 0.0
      %1754 = vmatpush.msra.mxu0 0.0
      %1755 = vmatpush.msra.mxu0 0.0
      %1756 = vmatpush.msra.mxu0 0.0
      %1757 = vmatpush.msra.mxu0 0.0
      %1758 = vmatpush.msra.mxu0 0.0
      %1759 = vmatpush.msra.mxu0 0.0
      %1760 = vmatpush.msra.mxu0 0.0
      %1761 = vmatpush.msra.mxu0 0.0
      %1762 = vmatpush.msra.mxu0 0.0
      %1763 = vmatpush.msra.mxu0 0.0
      %1764 = vmatpush.msra.mxu0 0.0
      %1765 = vmatpush.msra.mxu0 0.0
      %1766 = vmatpush.msra.mxu0 %v1726
      %1767 = vmatmul.f32.gmra.mxu0 %v1717
      %v1768 = vpop.f32.mrf.mxu0
      %v1769 = vadd.f32 0.0, %v1768
      %1770 = vmatmul.f32.gmra.mxu0 %v1720
      %v1771 = vpop.f32.mrf.mxu0
      %v1772 = vadd.f32 0.0, %v1771
      %1773 = vdwg.mxu0
      %v1774 = vadd.f32 %v1559, %v1746
      %v1775 = vadd.f32 %v1560, %v1769
      %v1776 = vadd.f32 %v1561, %v1749
      %v1777 = vadd.f32 %v1562, %v1772
      %s1778 = scalar_lea.vmem %s1, 3584
      %v1779 = vld [vmem:[%s1778] sm:$0xff]
      %v1780 = vld [vmem:[%s1778 + $0x8] sm:$0xff]
      %v1781 = vld [vmem:[%s1778 + $0x10] sm:$0xff]
      %v1782 = vld [vmem:[%s1778 + $0x18] sm:$0xff]
      %v1783 = vld [vmem:[%s1778 + $0x20] sm:$0xff]
      %v1784 = vld [vmem:[%s1778 + $0x28] sm:$0xff]
      %v1785 = vld [vmem:[%s1778 + $0x30] sm:$0xff]
      %v1786 = vld [vmem:[%s1778 + $0x38] sm:$0xff]
      %v1787 = vld [vmem:[%s1778 + $0x40] sm:$0xff]
      %v1788 = vld [vmem:[%s1778 + $0x48] sm:$0xff]
      %v1789 = vld [vmem:[%s1778 + $0x50] sm:$0xff]
      %v1790 = vld [vmem:[%s1778 + $0x58] sm:$0xff]
      %v1791 = vld [vmem:[%s1778 + $0x60] sm:$0xff]
      %v1792 = vld [vmem:[%s1778 + $0x68] sm:$0xff]
      %v1793 = vld [vmem:[%s1778 + $0x70] sm:$0xff]
      %v1794 = vld [vmem:[%s1778 + $0x78] sm:$0xff]
      %v1795 = vld [vmem:[%s1778 + $0x80] sm:$0xff]
      %v1796 = vld [vmem:[%s1778 + $0x88] sm:$0xff]
      %v1797 = vld [vmem:[%s1778 + $0x90] sm:$0xff]
      %v1798 = vld [vmem:[%s1778 + $0x98] sm:$0xff]
      %v1799 = vld [vmem:[%s1778 + $0xa0] sm:$0xff]
      %v1800 = vld [vmem:[%s1778 + $0xa8] sm:$0xff]
      %v1801 = vld [vmem:[%s1778 + $0xb0] sm:$0xff]
      %v1802 = vld [vmem:[%s1778 + $0xb8] sm:$0xff]
      %v1803 = vld [vmem:[%s1778 + $0xc0] sm:$0xff]
      %v1804 = vld [vmem:[%s1778 + $0xc8] sm:$0xff]
      %v1805 = vld [vmem:[%s1778 + $0xd0] sm:$0xff]
      %v1806 = vld [vmem:[%s1778 + $0xd8] sm:$0xff]
      %v1807 = vld [vmem:[%s1778 + $0xe0] sm:$0xff]
      %v1808 = vld [vmem:[%s1778 + $0xe8] sm:$0xff]
      %v1809 = vld [vmem:[%s1778 + $0xf0] sm:$0xff]
      %v1810 = vld [vmem:[%s1778 + $0xf8] sm:$0xff]
      %v1811 = vld [vmem:[%s1778 + $0x100] sm:$0xff]
      %v1812 = vld [vmem:[%s1778 + $0x108] sm:$0xff]
      %v1813 = vld [vmem:[%s1778 + $0x110] sm:$0xff]
      %v1814 = vld [vmem:[%s1778 + $0x118] sm:$0xff]
      %v1815 = vld [vmem:[%s1778 + $0x120] sm:$0xff]
      %v1816 = vld [vmem:[%s1778 + $0x128] sm:$0xff]
      %v1817 = vld [vmem:[%s1778 + $0x130] sm:$0xff]
      %v1818 = vld [vmem:[%s1778 + $0x138] sm:$0xff]
      %v1819 = vld [vmem:[%s1778 + $0x140] sm:$0xff]
      %v1820 = vld [vmem:[%s1778 + $0x148] sm:$0xff]
      %v1821 = vld [vmem:[%s1778 + $0x150] sm:$0xff]
      %v1822 = vld [vmem:[%s1778 + $0x158] sm:$0xff]
      %v1823 = vld [vmem:[%s1778 + $0x160] sm:$0xff]
      %v1824 = vld [vmem:[%s1778 + $0x168] sm:$0xff]
      %v1825 = vld [vmem:[%s1778 + $0x170] sm:$0xff]
      %v1826 = vld [vmem:[%s1778 + $0x178] sm:$0xff]
      %v1827 = vld [vmem:[%s1778 + $0x180] sm:$0xff]
      %v1828 = vld [vmem:[%s1778 + $0x188] sm:$0xff]
      %v1829 = vld [vmem:[%s1778 + $0x190] sm:$0xff]
      %v1830 = vld [vmem:[%s1778 + $0x198] sm:$0xff]
      %v1831 = vld [vmem:[%s1778 + $0x1a0] sm:$0xff]
      %v1832 = vld [vmem:[%s1778 + $0x1a8] sm:$0xff]
      %v1833 = vld [vmem:[%s1778 + $0x1b0] sm:$0xff]
      %v1834 = vld [vmem:[%s1778 + $0x1b8] sm:$0xff]
      %v1835 = vld [vmem:[%s1778 + $0x1c0] sm:$0xff]
      %v1836 = vld [vmem:[%s1778 + $0x1c8] sm:$0xff]
      %v1837 = vld [vmem:[%s1778 + $0x1d0] sm:$0xff]
      %v1838 = vld [vmem:[%s1778 + $0x1d8] sm:$0xff]
      %v1839 = vld [vmem:[%s1778 + $0x1e0] sm:$0xff]
      %v1840 = vld [vmem:[%s1778 + $0x1e8] sm:$0xff]
      %v1841 = vld [vmem:[%s1778 + $0x1f0] sm:$0xff]
      %v1842 = vld [vmem:[%s1778 + $0x1f8] sm:$0xff]
      %1843 = vst [vmem:[#allocation1] ss:$2 sm:$0xff] %v279
      %v1844 = vld.sshfl [vmem:[#allocation1] sm:$0xff pattern:$0x75316420]
      %v1845 = vld.sshfl [vmem:[#allocation1 + $0x8] sm:$0xff pattern:$0x75316420]
      %1848 = vmatpush.msra.mxu0 %v1809
      %1849 = vmatpush.msra.mxu0 %v1807
      %1850 = vmatpush.msra.mxu0 %v1805
      %1851 = vmatpush.msra.mxu0 %v1803
      %1852 = vmatpush.msra.mxu0 %v1801
      %1853 = vmatpush.msra.mxu0 %v1799
      %1854 = vmatpush.msra.mxu0 %v1797
      %1855 = vmatpush.msra.mxu0 %v1795
      %1856 = vmatpush.msra.mxu0 %v1793
      %1857 = vmatpush.msra.mxu0 %v1791
      %1858 = vmatpush.msra.mxu0 %v1789
      %1859 = vmatpush.msra.mxu0 %v1787
      %1860 = vmatpush.msra.mxu0 %v1785
      %1861 = vmatpush.msra.mxu0 %v1783
      %1862 = vmatpush.msra.mxu0 %v1781
      %1863 = vmatpush.msra.mxu0 %v1779
      %1864 = vmatmul.f32.gmra.mxu0 %v1844
      %v1865 = vpop.f32.mrf.mxu0
      %v1866 = vadd.f32 0.0, %v1865
      %1867 = vdwg.mxu0
      %1868 = vmatpush.msra.mxu0 %v1841
      %1869 = vmatpush.msra.mxu0 %v1839
      %1870 = vmatpush.msra.mxu0 %v1837
      %1871 = vmatpush.msra.mxu0 %v1835
      %1872 = vmatpush.msra.mxu0 %v1833
      %1873 = vmatpush.msra.mxu0 %v1831
      %1874 = vmatpush.msra.mxu0 %v1829
      %1875 = vmatpush.msra.mxu0 %v1827
      %1876 = vmatpush.msra.mxu0 %v1825
      %1877 = vmatpush.msra.mxu0 %v1823
      %1878 = vmatpush.msra.mxu0 %v1821
      %1879 = vmatpush.msra.mxu0 %v1819
      %1880 = vmatpush.msra.mxu0 %v1817
      %1881 = vmatpush.msra.mxu0 %v1815
      %1882 = vmatpush.msra.mxu0 %v1813
      %1883 = vmatpush.msra.mxu0 %v1811
      %1884 = vmatmul.f32.gmra.mxu0 %v1845
      %v1885 = vpop.f32.mrf.mxu0
      %v1886 = vadd.f32 %v1866, %v1885
      %1887 = vdwg.mxu0
      %1888 = vmatpush.msra.mxu0 %v1810
      %1889 = vmatpush.msra.mxu0 %v1808
      %1890 = vmatpush.msra.mxu0 %v1806
      %1891 = vmatpush.msra.mxu0 %v1804
      %1892 = vmatpush.msra.mxu0 %v1802
      %1893 = vmatpush.msra.mxu0 %v1800
      %1894 = vmatpush.msra.mxu0 %v1798
      %1895 = vmatpush.msra.mxu0 %v1796
      %1896 = vmatpush.msra.mxu0 %v1794
      %1897 = vmatpush.msra.mxu0 %v1792
      %1898 = vmatpush.msra.mxu0 %v1790
      %1899 = vmatpush.msra.mxu0 %v1788
      %1900 = vmatpush.msra.mxu0 %v1786
      %1901 = vmatpush.msra.mxu0 %v1784
      %1902 = vmatpush.msra.mxu0 %v1782
      %1903 = vmatpush.msra.mxu0 %v1780
      %1904 = vmatmul.f32.gmra.mxu0 %v1844
      %v1905 = vpop.f32.mrf.mxu0
      %v1906 = vadd.f32 0.0, %v1905
      %1907 = vdwg.mxu0
      %1908 = vmatpush.msra.mxu0 %v1842
      %1909 = vmatpush.msra.mxu0 %v1840
      %1910 = vmatpush.msra.mxu0 %v1838
      %1911 = vmatpush.msra.mxu0 %v1836
      %1912 = vmatpush.msra.mxu0 %v1834
      %1913 = vmatpush.msra.mxu0 %v1832
      %1914 = vmatpush.msra.mxu0 %v1830
      %1915 = vmatpush.msra.mxu0 %v1828
      %1916 = vmatpush.msra.mxu0 %v1826
      %1917 = vmatpush.msra.mxu0 %v1824
      %1918 = vmatpush.msra.mxu0 %v1822
      %1919 = vmatpush.msra.mxu0 %v1820
      %1920 = vmatpush.msra.mxu0 %v1818
      %1921 = vmatpush.msra.mxu0 %v1816
      %1922 = vmatpush.msra.mxu0 %v1814
      %1923 = vmatpush.msra.mxu0 %v1812
      %1924 = vmatmul.f32.gmra.mxu0 %v1845
      %v1925 = vpop.f32.mrf.mxu0
      %v1926 = vadd.f32 %v1906, %v1925
      %1927 = vdwg.mxu0
      %s1928 = scalar_lea.vmem %s2, 112
      %v1929 = vld [vmem:[%s1928] sm:$0xff]
      %v1930 = vld [vmem:[%s1928 + $0x8] sm:$0xff]
      %v1932 = vsel %vm585, %v1929, 0
      %v1935 = vsel %vm585, %v1930, 0
      %v1938 = vsel %vm592, %v1886, 0
      %v1941 = vsel %vm592, %v1926, 0
      %1943 = vmatpush.msra.mxu0 0.0
      %1944 = vmatpush.msra.mxu0 0.0
      %1945 = vmatpush.msra.mxu0 0.0
      %1946 = vmatpush.msra.mxu0 0.0
      %1947 = vmatpush.msra.mxu0 0.0
      %1948 = vmatpush.msra.mxu0 0.0
      %1949 = vmatpush.msra.mxu0 0.0
      %1950 = vmatpush.msra.mxu0 0.0
      %1951 = vmatpush.msra.mxu0 0.0
      %1952 = vmatpush.msra.mxu0 0.0
      %1953 = vmatpush.msra.mxu0 0.0
      %1954 = vmatpush.msra.mxu0 0.0
      %1955 = vmatpush.msra.mxu0 0.0
      %1956 = vmatpush.msra.mxu0 0.0
      %1957 = vmatpush.msra.mxu0 0.0
      %1958 = vmatpush.msra.mxu0 %v1938
      %1959 = vmatmul.f32.gmra.mxu0 %v1932
      %v1960 = vpop.f32.mrf.mxu0
      %v1961 = vadd.f32 0.0, %v1960
      %1962 = vmatmul.f32.gmra.mxu0 %v1935
      %v1963 = vpop.f32.mrf.mxu0
      %v1964 = vadd.f32 0.0, %v1963
      %1965 = vdwg.mxu0
      %1966 = vmatpush.msra.mxu0 0.0
      %1967 = vmatpush.msra.mxu0 0.0
      %1968 = vmatpush.msra.mxu0 0.0
      %1969 = vmatpush.msra.mxu0 0.0
      %1970 = vmatpush.msra.mxu0 0.0
      %1971 = vmatpush.msra.mxu0 0.0
      %1972 = vmatpush.msra.mxu0 0.0
      %1973 = vmatpush.msra.mxu0 0.0
      %1974 = vmatpush.msra.mxu0 0.0
      %1975 = vmatpush.msra.mxu0 0.0
      %1976 = vmatpush.msra.mxu0 0.0
      %1977 = vmatpush.msra.mxu0 0.0
      %1978 = vmatpush.msra.mxu0 0.0
      %1979 = vmatpush.msra.mxu0 0.0
      %1980 = vmatpush.msra.mxu0 0.0
      %1981 = vmatpush.msra.mxu0 %v1941
      %1982 = vmatmul.f32.gmra.mxu0 %v1932
      %v1983 = vpop.f32.mrf.mxu0
      %v1984 = vadd.f32 0.0, %v1983
      %1985 = vmatmul.f32.gmra.mxu0 %v1935
      %v1986 = vpop.f32.mrf.mxu0
      %v1987 = vadd.f32 0.0, %v1986
      %1988 = vdwg.mxu0
      %v1989 = vadd.f32 %v1774, %v1961
      %v1990 = vadd.f32 %v1775, %v1984
      %v1991 = vadd.f32 %v1776, %v1964
      %v1992 = vadd.f32 %v1777, %v1987
      %s1993 = scalar_lea.vmem %s1, 4096
      %v1994 = vld [vmem:[%s1993] sm:$0xff]
      %v1995 = vld [vmem:[%s1993 + $0x8] sm:$0xff]
      %v1996 = vld [vmem:[%s1993 + $0x10] sm:$0xff]
      %v1997 = vld [vmem:[%s1993 + $0x18] sm:$0xff]
      %v1998 = vld [vmem:[%s1993 + $0x20] sm:$0xff]
      %v1999 = vld [vmem:[%s1993 + $0x28] sm:$0xff]
      %v2000 = vld [vmem:[%s1993 + $0x30] sm:$0xff]
      %v2001 = vld [vmem:[%s1993 + $0x38] sm:$0xff]
      %v2002 = vld [vmem:[%s1993 + $0x40] sm:$0xff]
      %v2003 = vld [vmem:[%s1993 + $0x48] sm:$0xff]
      %v2004 = vld [vmem:[%s1993 + $0x50] sm:$0xff]
      %v2005 = vld [vmem:[%s1993 + $0x58] sm:$0xff]
      %v2006 = vld [vmem:[%s1993 + $0x60] sm:$0xff]
      %v2007 = vld [vmem:[%s1993 + $0x68] sm:$0xff]
      %v2008 = vld [vmem:[%s1993 + $0x70] sm:$0xff]
      %v2009 = vld [vmem:[%s1993 + $0x78] sm:$0xff]
      %v2010 = vld [vmem:[%s1993 + $0x80] sm:$0xff]
      %v2011 = vld [vmem:[%s1993 + $0x88] sm:$0xff]
      %v2012 = vld [vmem:[%s1993 + $0x90] sm:$0xff]
      %v2013 = vld [vmem:[%s1993 + $0x98] sm:$0xff]
      %v2014 = vld [vmem:[%s1993 + $0xa0] sm:$0xff]
      %v2015 = vld [vmem:[%s1993 + $0xa8] sm:$0xff]
      %v2016 = vld [vmem:[%s1993 + $0xb0] sm:$0xff]
      %v2017 = vld [vmem:[%s1993 + $0xb8] sm:$0xff]
      %v2018 = vld [vmem:[%s1993 + $0xc0] sm:$0xff]
      %v2019 = vld [vmem:[%s1993 + $0xc8] sm:$0xff]
      %v2020 = vld [vmem:[%s1993 + $0xd0] sm:$0xff]
      %v2021 = vld [vmem:[%s1993 + $0xd8] sm:$0xff]
      %v2022 = vld [vmem:[%s1993 + $0xe0] sm:$0xff]
      %v2023 = vld [vmem:[%s1993 + $0xe8] sm:$0xff]
      %v2024 = vld [vmem:[%s1993 + $0xf0] sm:$0xff]
      %v2025 = vld [vmem:[%s1993 + $0xf8] sm:$0xff]
      %v2026 = vld [vmem:[%s1993 + $0x100] sm:$0xff]
      %v2027 = vld [vmem:[%s1993 + $0x108] sm:$0xff]
      %v2028 = vld [vmem:[%s1993 + $0x110] sm:$0xff]
      %v2029 = vld [vmem:[%s1993 + $0x118] sm:$0xff]
      %v2030 = vld [vmem:[%s1993 + $0x120] sm:$0xff]
      %v2031 = vld [vmem:[%s1993 + $0x128] sm:$0xff]
      %v2032 = vld [vmem:[%s1993 + $0x130] sm:$0xff]
      %v2033 = vld [vmem:[%s1993 + $0x138] sm:$0xff]
      %v2034 = vld [vmem:[%s1993 + $0x140] sm:$0xff]
      %v2035 = vld [vmem:[%s1993 + $0x148] sm:$0xff]
      %v2036 = vld [vmem:[%s1993 + $0x150] sm:$0xff]
      %v2037 = vld [vmem:[%s1993 + $0x158] sm:$0xff]
      %v2038 = vld [vmem:[%s1993 + $0x160] sm:$0xff]
      %v2039 = vld [vmem:[%s1993 + $0x168] sm:$0xff]
      %v2040 = vld [vmem:[%s1993 + $0x170] sm:$0xff]
      %v2041 = vld [vmem:[%s1993 + $0x178] sm:$0xff]
      %v2042 = vld [vmem:[%s1993 + $0x180] sm:$0xff]
      %v2043 = vld [vmem:[%s1993 + $0x188] sm:$0xff]
      %v2044 = vld [vmem:[%s1993 + $0x190] sm:$0xff]
      %v2045 = vld [vmem:[%s1993 + $0x198] sm:$0xff]
      %v2046 = vld [vmem:[%s1993 + $0x1a0] sm:$0xff]
      %v2047 = vld [vmem:[%s1993 + $0x1a8] sm:$0xff]
      %v2048 = vld [vmem:[%s1993 + $0x1b0] sm:$0xff]
      %v2049 = vld [vmem:[%s1993 + $0x1b8] sm:$0xff]
      %v2050 = vld [vmem:[%s1993 + $0x1c0] sm:$0xff]
      %v2051 = vld [vmem:[%s1993 + $0x1c8] sm:$0xff]
      %v2052 = vld [vmem:[%s1993 + $0x1d0] sm:$0xff]
      %v2053 = vld [vmem:[%s1993 + $0x1d8] sm:$0xff]
      %v2054 = vld [vmem:[%s1993 + $0x1e0] sm:$0xff]
      %v2055 = vld [vmem:[%s1993 + $0x1e8] sm:$0xff]
      %v2056 = vld [vmem:[%s1993 + $0x1f0] sm:$0xff]
      %v2057 = vld [vmem:[%s1993 + $0x1f8] sm:$0xff]
      %2058 = vst [vmem:[#allocation1] ss:$2 sm:$0xff] %v279
      %v2059 = vld.sshfl [vmem:[#allocation1] sm:$0xff pattern:$0x75316420]
      %v2060 = vld.sshfl [vmem:[#allocation1 + $0x8] sm:$0xff pattern:$0x75316420]
      %2063 = vmatpush.msra.mxu0 %v2024
      %2064 = vmatpush.msra.mxu0 %v2022
      %2065 = vmatpush.msra.mxu0 %v2020
      %2066 = vmatpush.msra.mxu0 %v2018
      %2067 = vmatpush.msra.mxu0 %v2016
      %2068 = vmatpush.msra.mxu0 %v2014
      %2069 = vmatpush.msra.mxu0 %v2012
      %2070 = vmatpush.msra.mxu0 %v2010
      %2071 = vmatpush.msra.mxu0 %v2008
      %2072 = vmatpush.msra.mxu0 %v2006
      %2073 = vmatpush.msra.mxu0 %v2004
      %2074 = vmatpush.msra.mxu0 %v2002
      %2075 = vmatpush.msra.mxu0 %v2000
      %2076 = vmatpush.msra.mxu0 %v1998
      %2077 = vmatpush.msra.mxu0 %v1996
      %2078 = vmatpush.msra.mxu0 %v1994
      %2079 = vmatmul.f32.gmra.mxu0 %v2059
      %v2080 = vpop.f32.mrf.mxu0
      %v2081 = vadd.f32 0.0, %v2080
      %2082 = vdwg.mxu0
      %2083 = vmatpush.msra.mxu0 %v2056
      %2084 = vmatpush.msra.mxu0 %v2054
      %2085 = vmatpush.msra.mxu0 %v2052
      %2086 = vmatpush.msra.mxu0 %v2050
      %2087 = vmatpush.msra.mxu0 %v2048
      %2088 = vmatpush.msra.mxu0 %v2046
      %2089 = vmatpush.msra.mxu0 %v2044
      %2090 = vmatpush.msra.mxu0 %v2042
      %2091 = vmatpush.msra.mxu0 %v2040
      %2092 = vmatpush.msra.mxu0 %v2038
      %2093 = vmatpush.msra.mxu0 %v2036
      %2094 = vmatpush.msra.mxu0 %v2034
      %2095 = vmatpush.msra.mxu0 %v2032
      %2096 = vmatpush.msra.mxu0 %v2030
      %2097 = vmatpush.msra.mxu0 %v2028
      %2098 = vmatpush.msra.mxu0 %v2026
      %2099 = vmatmul.f32.gmra.mxu0 %v2060
      %v2100 = vpop.f32.mrf.mxu0
      %v2101 = vadd.f32 %v2081, %v2100
      %2102 = vdwg.mxu0
      %2103 = vmatpush.msra.mxu0 %v2025
      %2104 = vmatpush.msra.mxu0 %v2023
      %2105 = vmatpush.msra.mxu0 %v2021
      %2106 = vmatpush.msra.mxu0 %v2019
      %2107 = vmatpush.msra.mxu0 %v2017
      %2108 = vmatpush.msra.mxu0 %v2015
      %2109 = vmatpush.msra.mxu0 %v2013
      %2110 = vmatpush.msra.mxu0 %v2011
      %2111 = vmatpush.msra.mxu0 %v2009
      %2112 = vmatpush.msra.mxu0 %v2007
      %2113 = vmatpush.msra.mxu0 %v2005
      %2114 = vmatpush.msra.mxu0 %v2003
      %2115 = vmatpush.msra.mxu0 %v2001
      %2116 = vmatpush.msra.mxu0 %v1999
      %2117 = vmatpush.msra.mxu0 %v1997
      %2118 = vmatpush.msra.mxu0 %v1995
      %2119 = vmatmul.f32.gmra.mxu0 %v2059
      %v2120 = vpop.f32.mrf.mxu0
      %v2121 = vadd.f32 0.0, %v2120
      %2122 = vdwg.mxu0
      %2123 = vmatpush.msra.mxu0 %v2057
      %2124 = vmatpush.msra.mxu0 %v2055
      %2125 = vmatpush.msra.mxu0 %v2053
      %2126 = vmatpush.msra.mxu0 %v2051
      %2127 = vmatpush.msra.mxu0 %v2049
      %2128 = vmatpush.msra.mxu0 %v2047
      %2129 = vmatpush.msra.mxu0 %v2045
      %2130 = vmatpush.msra.mxu0 %v2043
      %2131 = vmatpush.msra.mxu0 %v2041
      %2132 = vmatpush.msra.mxu0 %v2039
      %2133 = vmatpush.msra.mxu0 %v2037
      %2134 = vmatpush.msra.mxu0 %v2035
      %2135 = vmatpush.msra.mxu0 %v2033
      %2136 = vmatpush.msra.mxu0 %v2031
      %2137 = vmatpush.msra.mxu0 %v2029
      %2138 = vmatpush.msra.mxu0 %v2027
      %2139 = vmatmul.f32.gmra.mxu0 %v2060
      %v2140 = vpop.f32.mrf.mxu0
      %v2141 = vadd.f32 %v2121, %v2140
      %2142 = vdwg.mxu0
      %s2143 = scalar_lea.vmem %s2, 128
      %v2144 = vld [vmem:[%s2143] sm:$0xff]
      %v2145 = vld [vmem:[%s2143 + $0x8] sm:$0xff]
      %v2147 = vsel %vm585, %v2144, 0
      %v2150 = vsel %vm585, %v2145, 0
      %v2153 = vsel %vm592, %v2101, 0
      %v2156 = vsel %vm592, %v2141, 0
      %2158 = vmatpush.msra.mxu0 0.0
      %2159 = vmatpush.msra.mxu0 0.0
      %2160 = vmatpush.msra.mxu0 0.0
      %2161 = vmatpush.msra.mxu0 0.0
      %2162 = vmatpush.msra.mxu0 0.0
      %2163 = vmatpush.msra.mxu0 0.0
      %2164 = vmatpush.msra.mxu0 0.0
      %2165 = vmatpush.msra.mxu0 0.0
      %2166 = vmatpush.msra.mxu0 0.0
      %2167 = vmatpush.msra.mxu0 0.0
      %2168 = vmatpush.msra.mxu0 0.0
      %2169 = vmatpush.msra.mxu0 0.0
      %2170 = vmatpush.msra.mxu0 0.0
      %2171 = vmatpush.msra.mxu0 0.0
      %2172 = vmatpush.msra.mxu0 0.0
      %2173 = vmatpush.msra.mxu0 %v2153
      %2174 = vmatmul.f32.gmra.mxu0 %v2147
      %v2175 = vpop.f32.mrf.mxu0
      %v2176 = vadd.f32 0.0, %v2175
      %2177 = vmatmul.f32.gmra.mxu0 %v2150
      %v2178 = vpop.f32.mrf.mxu0
      %v2179 = vadd.f32 0.0, %v2178
      %2180 = vdwg.mxu0
      %2181 = vmatpush.msra.mxu0 0.0
      %2182 = vmatpush.msra.mxu0 0.0
      %2183 = vmatpush.msra.mxu0 0.0
      %2184 = vmatpush.msra.mxu0 0.0
      %2185 = vmatpush.msra.mxu0 0.0
      %2186 = vmatpush.msra.mxu0 0.0
      %2187 = vmatpush.msra.mxu0 0.0
      %2188 = vmatpush.msra.mxu0 0.0
      %2189 = vmatpush.msra.mxu0 0.0
      %2190 = vmatpush.msra.mxu0 0.0
      %2191 = vmatpush.msra.mxu0 0.0
      %2192 = vmatpush.msra.mxu0 0.0
      %2193 = vmatpush.msra.mxu0 0.0
      %2194 = vmatpush.msra.mxu0 0.0
      %2195 = vmatpush.msra.mxu0 0.0
      %2196 = vmatpush.msra.mxu0 %v2156
      %2197 = vmatmul.f32.gmra.mxu0 %v2147
      %v2198 = vpop.f32.mrf.mxu0
      %v2199 = vadd.f32 0.0, %v2198
      %2200 = vmatmul.f32.gmra.mxu0 %v2150
      %v2201 = vpop.f32.mrf.mxu0
      %v2202 = vadd.f32 0.0, %v2201
      %2203 = vdwg.mxu0
      %v2204 = vadd.f32 %v1989, %v2176
      %v2205 = vadd.f32 %v1990, %v2199
      %v2206 = vadd.f32 %v1991, %v2179
      %v2207 = vadd.f32 %v1992, %v2202
      %v2208 = vld [vmem:[%s3] sm:$0xff]
      %v2209 = vld [vmem:[%s3 + $0x8] sm:$0xff]
      %2211 = vset.pattern.permute.xlu0 0
      %2212 = vperm.xlu0 %2211, %v2208
      %v2213 = vpop.permute.xlu0 %2212
      %2216 = vset.pattern.permute.xlu0 0
      %2217 = vperm.xlu0 %2216, %v2209
      %v2218 = vpop.permute.xlu0 %2217
      %v2220 = vadd.f32 %v2204, %v2213
      %v2221 = vadd.f32 %v2205, %v2213
      %v2222 = vadd.f32 %v2206, %v2218
      %v2223 = vadd.f32 %v2207, %v2218
      %v2224 = vmax.f32 %v2220, 0.0
      %v2225 = vmax.f32 %v2221, 0.0
      %v2226 = vmax.f32 %v2222, 0.0
      %v2227 = vmax.f32 %v2223, 0.0
      %v2228 = vld [vmem:[%s4] sm:$0xff]
      %v2229 = vld [vmem:[%s4 + $0x8] sm:$0xff]
      %v2230 = vld [vmem:[%s4 + $0x10] sm:$0xff]
      %v2231 = vld [vmem:[%s4 + $0x18] sm:$0xff]
      %v2232 = vld [vmem:[%s4 + $0x20] sm:$0xff]
      %v2233 = vld [vmem:[%s4 + $0x28] sm:$0xff]
      %v2234 = vld [vmem:[%s4 + $0x30] sm:$0xff]
      %v2235 = vld [vmem:[%s4 + $0x38] sm:$0xff]
      %v2236 = vld [vmem:[%s4 + $0x40] sm:$0xff]
      %v2237 = vld [vmem:[%s4 + $0x48] sm:$0xff]
      %v2238 = vld [vmem:[%s4 + $0x50] sm:$0xff]
      %v2239 = vld [vmem:[%s4 + $0x58] sm:$0xff]
      %v2240 = vld [vmem:[%s4 + $0x60] sm:$0xff]
      %v2241 = vld [vmem:[%s4 + $0x68] sm:$0xff]
      %v2242 = vld [vmem:[%s4 + $0x70] sm:$0xff]
      %v2243 = vld [vmem:[%s4 + $0x78] sm:$0xff]
      %v2244 = vld [vmem:[%s4 + $0x80] sm:$0xff]
      %v2245 = vld [vmem:[%s4 + $0x88] sm:$0xff]
      %v2246 = vld [vmem:[%s4 + $0x90] sm:$0xff]
      %v2247 = vld [vmem:[%s4 + $0x98] sm:$0xff]
      %v2248 = vld [vmem:[%s4 + $0xa0] sm:$0xff]
      %v2249 = vld [vmem:[%s4 + $0xa8] sm:$0xff]
      %v2250 = vld [vmem:[%s4 + $0xb0] sm:$0xff]
      %v2251 = vld [vmem:[%s4 + $0xb8] sm:$0xff]
      %v2252 = vld [vmem:[%s4 + $0xc0] sm:$0xf]
      %vm2253 = vcmask 556032
      %v2255 = vsel %vm2253, %v2225, 0
      %v2258 = vsel %vm2253, %v2227, 0
      %v2261 = vsel %vm592, %v2252, 0
      %2263 = vmatpush.msra.mxu0 %v2243
      %2264 = vmatpush.msra.mxu0 %v2242
      %2265 = vmatpush.msra.mxu0 %v2241
      %2266 = vmatpush.msra.mxu0 %v2240
      %2267 = vmatpush.msra.mxu0 %v2239
      %2268 = vmatpush.msra.mxu0 %v2238
      %2269 = vmatpush.msra.mxu0 %v2237
      %2270 = vmatpush.msra.mxu0 %v2236
      %2271 = vmatpush.msra.mxu0 %v2235
      %2272 = vmatpush.msra.mxu0 %v2234
      %2273 = vmatpush.msra.mxu0 %v2233
      %2274 = vmatpush.msra.mxu0 %v2232
      %2275 = vmatpush.msra.mxu0 %v2231
      %2276 = vmatpush.msra.mxu0 %v2230
      %2277 = vmatpush.msra.mxu0 %v2229
      %2278 = vmatpush.msra.mxu0 %v2228
      %2279 = vmatmul.f32.gmra.mxu0 %v2224
      %v2280 = vpop.f32.mrf.mxu0
      %v2281 = vadd.f32 0.0, %v2280
      %2282 = vmatmul.f32.gmra.mxu0 %v2226
      %v2283 = vpop.f32.mrf.mxu0
      %v2284 = vadd.f32 0.0, %v2283
      %2285 = vdwg.mxu0
      %2286 = vmatpush.msra.mxu0 0.0
      %2287 = vmatpush.msra.mxu0 0.0
      %2288 = vmatpush.msra.mxu0 0.0
      %2289 = vmatpush.msra.mxu0 0.0
      %2290 = vmatpush.msra.mxu0 0.0
      %2291 = vmatpush.msra.mxu0 0.0
      %2292 = vmatpush.msra.mxu0 0.0
      %2293 = vmatpush.msra.mxu0 %v2261
      %2294 = vmatpush.msra.mxu0 %v2251
      %2295 = vmatpush.msra.mxu0 %v2250
      %2296 = vmatpush.msra.mxu0 %v2249
      %2297 = vmatpush.msra.mxu0 %v2248
      %2298 = vmatpush.msra.mxu0 %v2247
      %2299 = vmatpush.msra.mxu0 %v2246
      %2300 = vmatpush.msra.mxu0 %v2245
      %2301 = vmatpush.msra.mxu0 %v2244
      %2302 = vmatmul.f32.gmra.mxu0 %v2255
      %v2303 = vpop.f32.mrf.mxu0
      %v2304 = vadd.f32 %v2281, %v2303
      %2305 = vmatmul.f32.gmra.mxu0 %v2258
      %v2306 = vpop.f32.mrf.mxu0
      %v2307 = vadd.f32 %v2284, %v2306
      %2308 = vdwg.mxu0
      %v2309 = vld [vmem:[%s5] sm:$0xff]
      %v2310 = vld [vmem:[%s5 + $0x8] sm:$0xff]
      %v2311 = vld [vmem:[%s5 + $0x10] sm:$0xff]
      %v2312 = vld [vmem:[%s5 + $0x18] sm:$0xff]
      %s2313 = scalar_lea.vmem %s4, 200
      %v2314 = vld [vmem:[%s2313] sm:$0xff]
      %v2315 = vld [vmem:[%s2313 + $0x8] sm:$0xff]
      %v2316 = vld [vmem:[%s2313 + $0x10] sm:$0xff]
      %v2317 = vld [vmem:[%s2313 + $0x18] sm:$0xff]
      %v2318 = vld [vmem:[%s2313 + $0x20] sm:$0xff]
      %v2319 = vld [vmem:[%s2313 + $0x28] sm:$0xff]
      %v2320 = vld [vmem:[%s2313 + $0x30] sm:$0xff]
      %v2321 = vld [vmem:[%s2313 + $0x38] sm:$0xff]
      %v2322 = vld [vmem:[%s2313 + $0x40] sm:$0xff]
      %v2323 = vld [vmem:[%s2313 + $0x48] sm:$0xff]
      %v2324 = vld [vmem:[%s2313 + $0x50] sm:$0xff]
      %v2325 = vld [vmem:[%s2313 + $0x58] sm:$0xff]
      %v2326 = vld [vmem:[%s2313 + $0x60] sm:$0xff]
      %v2327 = vld [vmem:[%s2313 + $0x68] sm:$0xff]
      %v2328 = vld [vmem:[%s2313 + $0x70] sm:$0xff]
      %v2329 = vld [vmem:[%s2313 + $0x78] sm:$0xff]
      %v2330 = vld [vmem:[%s2313 + $0x80] sm:$0xff]
      %v2331 = vld [vmem:[%s2313 + $0x88] sm:$0xff]
      %v2332 = vld [vmem:[%s2313 + $0x90] sm:$0xff]
      %v2333 = vld [vmem:[%s2313 + $0x98] sm:$0xff]
      %v2334 = vld [vmem:[%s2313 + $0xa0] sm:$0xff]
      %v2335 = vld [vmem:[%s2313 + $0xa8] sm:$0xff]
      %v2336 = vld [vmem:[%s2313 + $0xb0] sm:$0xff]
      %v2337 = vld [vmem:[%s2313 + $0xb8] sm:$0xff]
      %v2338 = vld [vmem:[%s2313 + $0xc0] sm:$0xf]
      %v2340 = vsel %vm592, %v2338, 0
      %2342 = vmatpush.msra.mxu0 %v2329
      %2343 = vmatpush.msra.mxu0 %v2328
      %2344 = vmatpush.msra.mxu0 %v2327
      %2345 = vmatpush.msra.mxu0 %v2326
      %2346 = vmatpush.msra.mxu0 %v2325
      %2347 = vmatpush.msra.mxu0 %v2324
      %2348 = vmatpush.msra.mxu0 %v2323
      %2349 = vmatpush.msra.mxu0 %v2322
      %2350 = vmatpush.msra.mxu0 %v2321
      %2351 = vmatpush.msra.mxu0 %v2320
      %2352 = vmatpush.msra.mxu0 %v2319
      %2353 = vmatpush.msra.mxu0 %v2318
      %2354 = vmatpush.msra.mxu0 %v2317
      %2355 = vmatpush.msra.mxu0 %v2316
      %2356 = vmatpush.msra.mxu0 %v2315
      %2357 = vmatpush.msra.mxu0 %v2314
      %2358 = vmatmul.f32.gmra.mxu0 %v2224
      %v2359 = vpop.f32.mrf.mxu0
      %v2360 = vadd.f32 0.0, %v2359
      %2361 = vmatmul.f32.gmra.mxu0 %v2226
      %v2362 = vpop.f32.mrf.mxu0
      %v2363 = vadd.f32 0.0, %v2362
      %2364 = vdwg.mxu0
      %2365 = vmatpush.msra.mxu0 0.0
      %2366 = vmatpush.msra.mxu0 0.0
      %2367 = vmatpush.msra.mxu0 0.0
      %2368 = vmatpush.msra.mxu0 0.0
      %2369 = vmatpush.msra.mxu0 0.0
      %2370 = vmatpush.msra.mxu0 0.0
      %2371 = vmatpush.msra.mxu0 0.0
      %2372 = vmatpush.msra.mxu0 %v2340
      %2373 = vmatpush.msra.mxu0 %v2337
      %2374 = vmatpush.msra.mxu0 %v2336
      %2375 = vmatpush.msra.mxu0 %v2335
      %2376 = vmatpush.msra.mxu0 %v2334
      %2377 = vmatpush.msra.mxu0 %v2333
      %2378 = vmatpush.msra.mxu0 %v2332
      %2379 = vmatpush.msra.mxu0 %v2331
      %2380 = vmatpush.msra.mxu0 %v2330
      %2381 = vmatmul.f32.gmra.mxu0 %v2255
      %v2382 = vpop.f32.mrf.mxu0
      %v2383 = vadd.f32 %v2360, %v2382
      %2384 = vmatmul.f32.gmra.mxu0 %v2258
      %v2385 = vpop.f32.mrf.mxu0
      %v2386 = vadd.f32 %v2363, %v2385
      %2387 = vdwg.mxu0
      %s2388 = scalar_lea.vmem %s5, 32
      %v2389 = vld [vmem:[%s2388] sm:$0xff]
      %v2390 = vld [vmem:[%s2388 + $0x8] sm:$0xff]
      %v2391 = vld [vmem:[%s2388 + $0x10] sm:$0xff]
      %v2392 = vld [vmem:[%s2388 + $0x18] sm:$0xff]
      %vm2393 = vcmask 130048
      %v2395 = vsel %vm2393, %v2389, 0
      %v2398 = vsel %vm2393, %v2390, 0
      %v2401 = vsel %vm2393, %v2391, 0
      %v2404 = vsel %vm2393, %v2392, 0
      %2406 = vmatpush.msra.mxu0 0.0
      %2407 = vmatpush.msra.mxu0 0.0
      %2408 = vmatpush.msra.mxu0 0.0
      %2409 = vmatpush.msra.mxu0 0.0
      %2410 = vmatpush.msra.mxu0 0.0
      %2411 = vmatpush.msra.mxu0 0.0
      %2412 = vmatpush.msra.mxu0 0.0
      %2413 = vmatpush.msra.mxu0 0.0
      %2414 = vmatpush.msra.mxu0 0.0
      %2415 = vmatpush.msra.mxu0 0.0
      %2416 = vmatpush.msra.mxu0 0.0
      %2417 = vmatpush.msra.mxu0 0.0
      %2418 = vmatpush.msra.mxu0 0.0
      %2419 = vmatpush.msra.mxu0 0.0
      %2420 = vmatpush.msra.mxu0 %v2386
      %2421 = vmatpush.msra.mxu0 %v2383
      %2422 = vmatmul.f32.gmra.mxu0 %v2395
      %v2423 = vpop.f32.mrf.mxu0
      %v2424 = vadd.f32 0.0, %v2423
      %2425 = vmatmul.f32.gmra.mxu0 %v2398
      %v2426 = vpop.f32.mrf.mxu0
      %v2427 = vadd.f32 0.0, %v2426
      %2428 = vmatmul.f32.gmra.mxu0 %v2401
      %v2429 = vpop.f32.mrf.mxu0
      %v2430 = vadd.f32 0.0, %v2429
      %2431 = vmatmul.f32.gmra.mxu0 %v2404
      %v2432 = vpop.f32.mrf.mxu0
      %v2433 = vadd.f32 0.0, %v2432
      %2434 = vdwg.mxu0
      %v2436 = vsel %vm2393, %v2309, 0
      %v2439 = vsel %vm2393, %v2310, 0
      %v2442 = vsel %vm2393, %v2311, 0
      %v2445 = vsel %vm2393, %v2312, 0
      %2447 = vmatpush.msra.mxu0 0.0
      %2448 = vmatpush.msra.mxu0 0.0
      %2449 = vmatpush.msra.mxu0 0.0
      %2450 = vmatpush.msra.mxu0 0.0
      %2451 = vmatpush.msra.mxu0 0.0
      %2452 = vmatpush.msra.mxu0 0.0
      %2453 = vmatpush.msra.mxu0 0.0
      %2454 = vmatpush.msra.mxu0 0.0
      %2455 = vmatpush.msra.mxu0 0.0
      %2456 = vmatpush.msra.mxu0 0.0
      %2457 = vmatpush.msra.mxu0 0.0
      %2458 = vmatpush.msra.mxu0 0.0
      %2459 = vmatpush.msra.mxu0 0.0
      %2460 = vmatpush.msra.mxu0 0.0
      %2461 = vmatpush.msra.mxu0 %v2307
      %2462 = vmatpush.msra.mxu0 %v2304
      %2463 = vmatmul.f32.gmra.mxu0 %v2436
      %v2464 = vpop.f32.mrf.mxu0
      %v2465 = vadd.f32 %v2424, %v2464
      %2466 = vmatmul.f32.gmra.mxu0 %v2439
      %v2467 = vpop.f32.mrf.mxu0
      %v2468 = vadd.f32 %v2427, %v2467
      %2469 = vmatmul.f32.gmra.mxu0 %v2442
      %v2470 = vpop.f32.mrf.mxu0
      %v2471 = vadd.f32 %v2430, %v2470
      %2472 = vmatmul.f32.gmra.mxu0 %v2445
      %v2473 = vpop.f32.mrf.mxu0
      %v2474 = vadd.f32 %v2433, %v2473
      %2475 = vdwg.mxu0
      %s2476 = scalar_lea.vmem %s4, 400
      %v2477 = vld [vmem:[%s2476] sm:$0xff]
      %v2478 = vld [vmem:[%s2476 + $0x8] sm:$0xff]
      %v2479 = vld [vmem:[%s2476 + $0x10] sm:$0xff]
      %v2480 = vld [vmem:[%s2476 + $0x18] sm:$0xff]
      %v2481 = vld [vmem:[%s2476 + $0x20] sm:$0xff]
      %v2482 = vld [vmem:[%s2476 + $0x28] sm:$0xff]
      %v2483 = vld [vmem:[%s2476 + $0x30] sm:$0xff]
      %v2484 = vld [vmem:[%s2476 + $0x38] sm:$0xff]
      %v2485 = vld [vmem:[%s2476 + $0x40] sm:$0xff]
      %v2486 = vld [vmem:[%s2476 + $0x48] sm:$0xff]
      %v2487 = vld [vmem:[%s2476 + $0x50] sm:$0xff]
      %v2488 = vld [vmem:[%s2476 + $0x58] sm:$0xff]
      %v2489 = vld [vmem:[%s2476 + $0x60] sm:$0xff]
      %v2490 = vld [vmem:[%s2476 + $0x68] sm:$0xff]
      %v2491 = vld [vmem:[%s2476 + $0x70] sm:$0xff]
      %v2492 = vld [vmem:[%s2476 + $0x78] sm:$0xff]
      %v2493 = vld [vmem:[%s2476 + $0x80] sm:$0xff]
      %v2494 = vld [vmem:[%s2476 + $0x88] sm:$0xff]
      %v2495 = vld [vmem:[%s2476 + $0x90] sm:$0xff]
      %v2496 = vld [vmem:[%s2476 + $0x98] sm:$0xff]
      %v2497 = vld [vmem:[%s2476 + $0xa0] sm:$0xff]
      %v2498 = vld [vmem:[%s2476 + $0xa8] sm:$0xff]
      %v2499 = vld [vmem:[%s2476 + $0xb0] sm:$0xff]
      %v2500 = vld [vmem:[%s2476 + $0xb8] sm:$0xff]
      %v2501 = vld [vmem:[%s2476 + $0xc0] sm:$0xf]
      %v2503 = vsel %vm592, %v2501, 0
      %2505 = vmatpush.msra.mxu0 %v2492
      %2506 = vmatpush.msra.mxu0 %v2491
      %2507 = vmatpush.msra.mxu0 %v2490
      %2508 = vmatpush.msra.mxu0 %v2489
      %2509 = vmatpush.msra.mxu0 %v2488
      %2510 = vmatpush.msra.mxu0 %v2487
      %2511 = vmatpush.msra.mxu0 %v2486
      %2512 = vmatpush.msra.mxu0 %v2485
      %2513 = vmatpush.msra.mxu0 %v2484
      %2514 = vmatpush.msra.mxu0 %v2483
      %2515 = vmatpush.msra.mxu0 %v2482
      %2516 = vmatpush.msra.mxu0 %v2481
      %2517 = vmatpush.msra.mxu0 %v2480
      %2518 = vmatpush.msra.mxu0 %v2479
      %2519 = vmatpush.msra.mxu0 %v2478
      %2520 = vmatpush.msra.mxu0 %v2477
      %2521 = vmatmul.f32.gmra.mxu0 %v2224
      %v2522 = vpop.f32.mrf.mxu0
      %v2523 = vadd.f32 0.0, %v2522
      %2524 = vmatmul.f32.gmra.mxu0 %v2226
      %v2525 = vpop.f32.mrf.mxu0
      %v2526 = vadd.f32 0.0, %v2525
      %2527 = vdwg.mxu0
      %2528 = vmatpush.msra.mxu0 0.0
      %2529 = vmatpush.msra.mxu0 0.0
      %2530 = vmatpush.msra.mxu0 0.0
      %2531 = vmatpush.msra.mxu0 0.0
      %2532 = vmatpush.msra.mxu0 0.0
      %2533 = vmatpush.msra.mxu0 0.0
      %2534 = vmatpush.msra.mxu0 0.0
      %2535 = vmatpush.msra.mxu0 %v2503
      %2536 = vmatpush.msra.mxu0 %v2500
      %2537 = vmatpush.msra.mxu0 %v2499
      %2538 = vmatpush.msra.mxu0 %v2498
      %2539 = vmatpush.msra.mxu0 %v2497
      %2540 = vmatpush.msra.mxu0 %v2496
      %2541 = vmatpush.msra.mxu0 %v2495
      %2542 = vmatpush.msra.mxu0 %v2494
      %2543 = vmatpush.msra.mxu0 %v2493
      %2544 = vmatmul.f32.gmra.mxu0 %v2255
      %v2545 = vpop.f32.mrf.mxu0
      %v2546 = vadd.f32 %v2523, %v2545
      %2547 = vmatmul.f32.gmra.mxu0 %v2258
      %v2548 = vpop.f32.mrf.mxu0
      %v2549 = vadd.f32 %v2526, %v2548
      %2550 = vdwg.mxu0
      %s2551 = scalar_lea.vmem %s5, 64
      %v2552 = vld [vmem:[%s2551] sm:$0xff]
      %v2553 = vld [vmem:[%s2551 + $0x8] sm:$0xff]
      %v2554 = vld [vmem:[%s2551 + $0x10] sm:$0xff]
      %v2555 = vld [vmem:[%s2551 + $0x18] sm:$0xff]
      %v2557 = vsel %vm2393, %v2552, 0
      %v2560 = vsel %vm2393, %v2553, 0
      %v2563 = vsel %vm2393, %v2554, 0
      %v2566 = vsel %vm2393, %v2555, 0
      %2568 = vmatpush.msra.mxu0 0.0
      %2569 = vmatpush.msra.mxu0 0.0
      %2570 = vmatpush.msra.mxu0 0.0
      %2571 = vmatpush.msra.mxu0 0.0
      %2572 = vmatpush.msra.mxu0 0.0
      %2573 = vmatpush.msra.mxu0 0.0
      %2574 = vmatpush.msra.mxu0 0.0
      %2575 = vmatpush.msra.mxu0 0.0
      %2576 = vmatpush.msra.mxu0 0.0
      %2577 = vmatpush.msra.mxu0 0.0
      %2578 = vmatpush.msra.mxu0 0.0
      %2579 = vmatpush.msra.mxu0 0.0
      %2580 = vmatpush.msra.mxu0 0.0
      %2581 = vmatpush.msra.mxu0 0.0
      %2582 = vmatpush.msra.mxu0 %v2549
      %2583 = vmatpush.msra.mxu0 %v2546
      %2584 = vmatmul.f32.gmra.mxu0 %v2557
      %v2585 = vpop.f32.mrf.mxu0
      %v2586 = vadd.f32 0.0, %v2585
      %2587 = vmatmul.f32.gmra.mxu0 %v2560
      %v2588 = vpop.f32.mrf.mxu0
      %v2589 = vadd.f32 0.0, %v2588
      %2590 = vmatmul.f32.gmra.mxu0 %v2563
      %v2591 = vpop.f32.mrf.mxu0
      %v2592 = vadd.f32 0.0, %v2591
      %2593 = vmatmul.f32.gmra.mxu0 %v2566
      %v2594 = vpop.f32.mrf.mxu0
      %v2595 = vadd.f32 0.0, %v2594
      %2596 = vdwg.mxu0
      %v2597 = vadd.f32 %v2465, %v2586
      %v2598 = vadd.f32 %v2468, %v2589
      %v2599 = vadd.f32 %v2471, %v2592
      %v2600 = vadd.f32 %v2474, %v2595
      %s2601 = scalar_lea.vmem %s4, 600
      %v2602 = vld [vmem:[%s2601] sm:$0xff]
      %v2603 = vld [vmem:[%s2601 + $0x8] sm:$0xff]
      %v2604 = vld [vmem:[%s2601 + $0x10] sm:$0xff]
      %v2605 = vld [vmem:[%s2601 + $0x18] sm:$0xff]
      %v2606 = vld [vmem:[%s2601 + $0x20] sm:$0xff]
      %v2607 = vld [vmem:[%s2601 + $0x28] sm:$0xff]
      %v2608 = vld [vmem:[%s2601 + $0x30] sm:$0xff]
      %v2609 = vld [vmem:[%s2601 + $0x38] sm:$0xff]
      %v2610 = vld [vmem:[%s2601 + $0x40] sm:$0xff]
      %v2611 = vld [vmem:[%s2601 + $0x48] sm:$0xff]
      %v2612 = vld [vmem:[%s2601 + $0x50] sm:$0xff]
      %v2613 = vld [vmem:[%s2601 + $0x58] sm:$0xff]
      %v2614 = vld [vmem:[%s2601 + $0x60] sm:$0xff]
      %v2615 = vld [vmem:[%s2601 + $0x68] sm:$0xff]
      %v2616 = vld [vmem:[%s2601 + $0x70] sm:$0xff]
      %v2617 = vld [vmem:[%s2601 + $0x78] sm:$0xff]
      %v2618 = vld [vmem:[%s2601 + $0x80] sm:$0xff]
      %v2619 = vld [vmem:[%s2601 + $0x88] sm:$0xff]
      %v2620 = vld [vmem:[%s2601 + $0x90] sm:$0xff]
      %v2621 = vld [vmem:[%s2601 + $0x98] sm:$0xff]
      %v2622 = vld [vmem:[%s2601 + $0xa0] sm:$0xff]
      %v2623 = vld [vmem:[%s2601 + $0xa8] sm:$0xff]
      %v2624 = vld [vmem:[%s2601 + $0xb0] sm:$0xff]
      %v2625 = vld [vmem:[%s2601 + $0xb8] sm:$0xff]
      %v2626 = vld [vmem:[%s2601 + $0xc0] sm:$0xf]
      %v2628 = vsel %vm592, %v2626, 0
      %2630 = vmatpush.msra.mxu0 %v2617
      %2631 = vmatpush.msra.mxu0 %v2616
      %2632 = vmatpush.msra.mxu0 %v2615
      %2633 = vmatpush.msra.mxu0 %v2614
      %2634 = vmatpush.msra.mxu0 %v2613
      %2635 = vmatpush.msra.mxu0 %v2612
      %2636 = vmatpush.msra.mxu0 %v2611
      %2637 = vmatpush.msra.mxu0 %v2610
      %2638 = vmatpush.msra.mxu0 %v2609
      %2639 = vmatpush.msra.mxu0 %v2608
      %2640 = vmatpush.msra.mxu0 %v2607
      %2641 = vmatpush.msra.mxu0 %v2606
      %2642 = vmatpush.msra.mxu0 %v2605
      %2643 = vmatpush.msra.mxu0 %v2604
      %2644 = vmatpush.msra.mxu0 %v2603
      %2645 = vmatpush.msra.mxu0 %v2602
      %2646 = vmatmul.f32.gmra.mxu0 %v2224
      %v2647 = vpop.f32.mrf.mxu0
      %v2648 = vadd.f32 0.0, %v2647
      %2649 = vmatmul.f32.gmra.mxu0 %v2226
      %v2650 = vpop.f32.mrf.mxu0
      %v2651 = vadd.f32 0.0, %v2650
      %2652 = vdwg.mxu0
      %2653 = vmatpush.msra.mxu0 0.0
      %2654 = vmatpush.msra.mxu0 0.0
      %2655 = vmatpush.msra.mxu0 0.0
      %2656 = vmatpush.msra.mxu0 0.0
      %2657 = vmatpush.msra.mxu0 0.0
      %2658 = vmatpush.msra.mxu0 0.0
      %2659 = vmatpush.msra.mxu0 0.0
      %2660 = vmatpush.msra.mxu0 %v2628
      %2661 = vmatpush.msra.mxu0 %v2625
      %2662 = vmatpush.msra.mxu0 %v2624
      %2663 = vmatpush.msra.mxu0 %v2623
      %2664 = vmatpush.msra.mxu0 %v2622
      %2665 = vmatpush.msra.mxu0 %v2621
      %2666 = vmatpush.msra.mxu0 %v2620
      %2667 = vmatpush.msra.mxu0 %v2619
      %2668 = vmatpush.msra.mxu0 %v2618
      %2669 = vmatmul.f32.gmra.mxu0 %v2255
      %v2670 = vpop.f32.mrf.mxu0
      %v2671 = vadd.f32 %v2648, %v2670
      %2672 = vmatmul.f32.gmra.mxu0 %v2258
      %v2673 = vpop.f32.mrf.mxu0
      %v2674 = vadd.f32 %v2651, %v2673
      %2675 = vdwg.mxu0
      %s2676 = scalar_lea.vmem %s5, 96
      %v2677 = vld [vmem:[%s2676] sm:$0xff]
      %v2678 = vld [vmem:[%s2676 + $0x8] sm:$0xff]
      %v2679 = vld [vmem:[%s2676 + $0x10] sm:$0xff]
      %v2680 = vld [vmem:[%s2676 + $0x18] sm:$0xff]
      %v2682 = vsel %vm2393, %v2677, 0
      %v2685 = vsel %vm2393, %v2678, 0
      %v2688 = vsel %vm2393, %v2679, 0
      %v2691 = vsel %vm2393, %v2680, 0
      %2693 = vmatpush.msra.mxu0 0.0
      %2694 = vmatpush.msra.mxu0 0.0
      %2695 = vmatpush.msra.mxu0 0.0
      %2696 = vmatpush.msra.mxu0 0.0
      %2697 = vmatpush.msra.mxu0 0.0
      %2698 = vmatpush.msra.mxu0 0.0
      %2699 = vmatpush.msra.mxu0 0.0
      %2700 = vmatpush.msra.mxu0 0.0
      %2701 = vmatpush.msra.mxu0 0.0
      %2702 = vmatpush.msra.mxu0 0.0
      %2703 = vmatpush.msra.mxu0 0.0
      %2704 = vmatpush.msra.mxu0 0.0
      %2705 = vmatpush.msra.mxu0 0.0
      %2706 = vmatpush.msra.mxu0 0.0
      %2707 = vmatpush.msra.mxu0 %v2674
      %2708 = vmatpush.msra.mxu0 %v2671
      %2709 = vmatmul.f32.gmra.mxu0 %v2682
      %v2710 = vpop.f32.mrf.mxu0
      %v2711 = vadd.f32 0.0, %v2710
      %2712 = vmatmul.f32.gmra.mxu0 %v2685
      %v2713 = vpop.f32.mrf.mxu0
      %v2714 = vadd.f32 0.0, %v2713
      %2715 = vmatmul.f32.gmra.mxu0 %v2688
      %v2716 = vpop.f32.mrf.mxu0
      %v2717 = vadd.f32 0.0, %v2716
      %2718 = vmatmul.f32.gmra.mxu0 %v2691
      %v2719 = vpop.f32.mrf.mxu0
      %v2720 = vadd.f32 0.0, %v2719
      %2721 = vdwg.mxu0
      %v2722 = vadd.f32 %v2597, %v2711
      %v2723 = vadd.f32 %v2598, %v2714
      %v2724 = vadd.f32 %v2599, %v2717
      %v2725 = vadd.f32 %v2600, %v2720
      %s2726 = scalar_lea.vmem %s4, 800
      %v2727 = vld [vmem:[%s2726] sm:$0xff]
      %v2728 = vld [vmem:[%s2726 + $0x8] sm:$0xff]
      %v2729 = vld [vmem:[%s2726 + $0x10] sm:$0xff]
      %v2730 = vld [vmem:[%s2726 + $0x18] sm:$0xff]
      %v2731 = vld [vmem:[%s2726 + $0x20] sm:$0xff]
      %v2732 = vld [vmem:[%s2726 + $0x28] sm:$0xff]
      %v2733 = vld [vmem:[%s2726 + $0x30] sm:$0xff]
      %v2734 = vld [vmem:[%s2726 + $0x38] sm:$0xff]
      %v2735 = vld [vmem:[%s2726 + $0x40] sm:$0xff]
      %v2736 = vld [vmem:[%s2726 + $0x48] sm:$0xff]
      %v2737 = vld [vmem:[%s2726 + $0x50] sm:$0xff]
      %v2738 = vld [vmem:[%s2726 + $0x58] sm:$0xff]
      %v2739 = vld [vmem:[%s2726 + $0x60] sm:$0xff]
      %v2740 = vld [vmem:[%s2726 + $0x68] sm:$0xff]
      %v2741 = vld [vmem:[%s2726 + $0x70] sm:$0xff]
      %v2742 = vld [vmem:[%s2726 + $0x78] sm:$0xff]
      %v2743 = vld [vmem:[%s2726 + $0x80] sm:$0xff]
      %v2744 = vld [vmem:[%s2726 + $0x88] sm:$0xff]
      %v2745 = vld [vmem:[%s2726 + $0x90] sm:$0xff]
      %v2746 = vld [vmem:[%s2726 + $0x98] sm:$0xff]
      %v2747 = vld [vmem:[%s2726 + $0xa0] sm:$0xff]
      %v2748 = vld [vmem:[%s2726 + $0xa8] sm:$0xff]
      %v2749 = vld [vmem:[%s2726 + $0xb0] sm:$0xff]
      %v2750 = vld [vmem:[%s2726 + $0xb8] sm:$0xff]
      %v2751 = vld [vmem:[%s2726 + $0xc0] sm:$0xf]
      %v2753 = vsel %vm592, %v2751, 0
      %2755 = vmatpush.msra.mxu0 %v2742
      %2756 = vmatpush.msra.mxu0 %v2741
      %2757 = vmatpush.msra.mxu0 %v2740
      %2758 = vmatpush.msra.mxu0 %v2739
      %2759 = vmatpush.msra.mxu0 %v2738
      %2760 = vmatpush.msra.mxu0 %v2737
      %2761 = vmatpush.msra.mxu0 %v2736
      %2762 = vmatpush.msra.mxu0 %v2735
      %2763 = vmatpush.msra.mxu0 %v2734
      %2764 = vmatpush.msra.mxu0 %v2733
      %2765 = vmatpush.msra.mxu0 %v2732
      %2766 = vmatpush.msra.mxu0 %v2731
      %2767 = vmatpush.msra.mxu0 %v2730
      %2768 = vmatpush.msra.mxu0 %v2729
      %2769 = vmatpush.msra.mxu0 %v2728
      %2770 = vmatpush.msra.mxu0 %v2727
      %2771 = vmatmul.f32.gmra.mxu0 %v2224
      %v2772 = vpop.f32.mrf.mxu0
      %v2773 = vadd.f32 0.0, %v2772
      %2774 = vmatmul.f32.gmra.mxu0 %v2226
      %v2775 = vpop.f32.mrf.mxu0
      %v2776 = vadd.f32 0.0, %v2775
      %2777 = vdwg.mxu0
      %2778 = vmatpush.msra.mxu0 0.0
      %2779 = vmatpush.msra.mxu0 0.0
      %2780 = vmatpush.msra.mxu0 0.0
      %2781 = vmatpush.msra.mxu0 0.0
      %2782 = vmatpush.msra.mxu0 0.0
      %2783 = vmatpush.msra.mxu0 0.0
      %2784 = vmatpush.msra.mxu0 0.0
      %2785 = vmatpush.msra.mxu0 %v2753
      %2786 = vmatpush.msra.mxu0 %v2750
      %2787 = vmatpush.msra.mxu0 %v2749
      %2788 = vmatpush.msra.mxu0 %v2748
      %2789 = vmatpush.msra.mxu0 %v2747
      %2790 = vmatpush.msra.mxu0 %v2746
      %2791 = vmatpush.msra.mxu0 %v2745
      %2792 = vmatpush.msra.mxu0 %v2744
      %2793 = vmatpush.msra.mxu0 %v2743
      %2794 = vmatmul.f32.gmra.mxu0 %v2255
      %v2795 = vpop.f32.mrf.mxu0
      %v2796 = vadd.f32 %v2773, %v2795
      %2797 = vmatmul.f32.gmra.mxu0 %v2258
      %v2798 = vpop.f32.mrf.mxu0
      %v2799 = vadd.f32 %v2776, %v2798
      %2800 = vdwg.mxu0
      %s2801 = scalar_lea.vmem %s5, 128
      %v2802 = vld [vmem:[%s2801] sm:$0xff]
      %v2803 = vld [vmem:[%s2801 + $0x8] sm:$0xff]
      %v2804 = vld [vmem:[%s2801 + $0x10] sm:$0xff]
      %v2805 = vld [vmem:[%s2801 + $0x18] sm:$0xff]
      %v2807 = vsel %vm2393, %v2802, 0
      %v2810 = vsel %vm2393, %v2803, 0
      %v2813 = vsel %vm2393, %v2804, 0
      %v2816 = vsel %vm2393, %v2805, 0
      %2818 = vmatpush.msra.mxu0 0.0
      %2819 = vmatpush.msra.mxu0 0.0
      %2820 = vmatpush.msra.mxu0 0.0
      %2821 = vmatpush.msra.mxu0 0.0
      %2822 = vmatpush.msra.mxu0 0.0
      %2823 = vmatpush.msra.mxu0 0.0
      %2824 = vmatpush.msra.mxu0 0.0
      %2825 = vmatpush.msra.mxu0 0.0
      %2826 = vmatpush.msra.mxu0 0.0
      %2827 = vmatpush.msra.mxu0 0.0
      %2828 = vmatpush.msra.mxu0 0.0
      %2829 = vmatpush.msra.mxu0 0.0
      %2830 = vmatpush.msra.mxu0 0.0
      %2831 = vmatpush.msra.mxu0 0.0
      %2832 = vmatpush.msra.mxu0 %v2799
      %2833 = vmatpush.msra.mxu0 %v2796
      %2834 = vmatmul.f32.gmra.mxu0 %v2807
      %v2835 = vpop.f32.mrf.mxu0
      %v2836 = vadd.f32 0.0, %v2835
      %2837 = vmatmul.f32.gmra.mxu0 %v2810
      %v2838 = vpop.f32.mrf.mxu0
      %v2839 = vadd.f32 0.0, %v2838
      %2840 = vmatmul.f32.gmra.mxu0 %v2813
      %v2841 = vpop.f32.mrf.mxu0
      %v2842 = vadd.f32 0.0, %v2841
      %2843 = vmatmul.f32.gmra.mxu0 %v2816
      %v2844 = vpop.f32.mrf.mxu0
      %v2845 = vadd.f32 0.0, %v2844
      %2846 = vdwg.mxu0
      %v2847 = vadd.f32 %v2722, %v2836
      %v2848 = vadd.f32 %v2723, %v2839
      %v2849 = vadd.f32 %v2724, %v2842
      %v2850 = vadd.f32 %v2725, %v2845
      %s2851 = scalar_lea.vmem %s4, 1000
      %v2852 = vld [vmem:[%s2851] sm:$0xff]
      %v2853 = vld [vmem:[%s2851 + $0x8] sm:$0xff]
      %v2854 = vld [vmem:[%s2851 + $0x10] sm:$0xff]
      %v2855 = vld [vmem:[%s2851 + $0x18] sm:$0xff]
      %v2856 = vld [vmem:[%s2851 + $0x20] sm:$0xff]
      %v2857 = vld [vmem:[%s2851 + $0x28] sm:$0xff]
      %v2858 = vld [vmem:[%s2851 + $0x30] sm:$0xff]
      %v2859 = vld [vmem:[%s2851 + $0x38] sm:$0xff]
      %v2860 = vld [vmem:[%s2851 + $0x40] sm:$0xff]
      %v2861 = vld [vmem:[%s2851 + $0x48] sm:$0xff]
      %v2862 = vld [vmem:[%s2851 + $0x50] sm:$0xff]
      %v2863 = vld [vmem:[%s2851 + $0x58] sm:$0xff]
      %v2864 = vld [vmem:[%s2851 + $0x60] sm:$0xff]
      %v2865 = vld [vmem:[%s2851 + $0x68] sm:$0xff]
      %v2866 = vld [vmem:[%s2851 + $0x70] sm:$0xff]
      %v2867 = vld [vmem:[%s2851 + $0x78] sm:$0xff]
      %v2868 = vld [vmem:[%s2851 + $0x80] sm:$0xff]
      %v2869 = vld [vmem:[%s2851 + $0x88] sm:$0xff]
      %v2870 = vld [vmem:[%s2851 + $0x90] sm:$0xff]
      %v2871 = vld [vmem:[%s2851 + $0x98] sm:$0xff]
      %v2872 = vld [vmem:[%s2851 + $0xa0] sm:$0xff]
      %v2873 = vld [vmem:[%s2851 + $0xa8] sm:$0xff]
      %v2874 = vld [vmem:[%s2851 + $0xb0] sm:$0xff]
      %v2875 = vld [vmem:[%s2851 + $0xb8] sm:$0xff]
      %v2876 = vld [vmem:[%s2851 + $0xc0] sm:$0xf]
      %v2878 = vsel %vm592, %v2876, 0
      %2880 = vmatpush.msra.mxu0 %v2867
      %2881 = vmatpush.msra.mxu0 %v2866
      %2882 = vmatpush.msra.mxu0 %v2865
      %2883 = vmatpush.msra.mxu0 %v2864
      %2884 = vmatpush.msra.mxu0 %v2863
      %2885 = vmatpush.msra.mxu0 %v2862
      %2886 = vmatpush.msra.mxu0 %v2861
      %2887 = vmatpush.msra.mxu0 %v2860
      %2888 = vmatpush.msra.mxu0 %v2859
      %2889 = vmatpush.msra.mxu0 %v2858
      %2890 = vmatpush.msra.mxu0 %v2857
      %2891 = vmatpush.msra.mxu0 %v2856
      %2892 = vmatpush.msra.mxu0 %v2855
      %2893 = vmatpush.msra.mxu0 %v2854
      %2894 = vmatpush.msra.mxu0 %v2853
      %2895 = vmatpush.msra.mxu0 %v2852
      %2896 = vmatmul.f32.gmra.mxu0 %v2224
      %v2897 = vpop.f32.mrf.mxu0
      %v2898 = vadd.f32 0.0, %v2897
      %2899 = vmatmul.f32.gmra.mxu0 %v2226
      %v2900 = vpop.f32.mrf.mxu0
      %v2901 = vadd.f32 0.0, %v2900
      %2902 = vdwg.mxu0
      %2903 = vmatpush.msra.mxu0 0.0
      %2904 = vmatpush.msra.mxu0 0.0
      %2905 = vmatpush.msra.mxu0 0.0
      %2906 = vmatpush.msra.mxu0 0.0
      %2907 = vmatpush.msra.mxu0 0.0
      %2908 = vmatpush.msra.mxu0 0.0
      %2909 = vmatpush.msra.mxu0 0.0
      %2910 = vmatpush.msra.mxu0 %v2878
      %2911 = vmatpush.msra.mxu0 %v2875
      %2912 = vmatpush.msra.mxu0 %v2874
      %2913 = vmatpush.msra.mxu0 %v2873
      %2914 = vmatpush.msra.mxu0 %v2872
      %2915 = vmatpush.msra.mxu0 %v2871
      %2916 = vmatpush.msra.mxu0 %v2870
      %2917 = vmatpush.msra.mxu0 %v2869
      %2918 = vmatpush.msra.mxu0 %v2868
      %2919 = vmatmul.f32.gmra.mxu0 %v2255
      %v2920 = vpop.f32.mrf.mxu0
      %v2921 = vadd.f32 %v2898, %v2920
      %2922 = vmatmul.f32.gmra.mxu0 %v2258
      %v2923 = vpop.f32.mrf.mxu0
      %v2924 = vadd.f32 %v2901, %v2923
      %2925 = vdwg.mxu0
      %s2926 = scalar_lea.vmem %s5, 160
      %v2927 = vld [vmem:[%s2926] sm:$0xff]
      %v2928 = vld [vmem:[%s2926 + $0x8] sm:$0xff]
      %v2929 = vld [vmem:[%s2926 + $0x10] sm:$0xff]
      %v2930 = vld [vmem:[%s2926 + $0x18] sm:$0xff]
      %v2932 = vsel %vm2393, %v2927, 0
      %v2935 = vsel %vm2393, %v2928, 0
      %v2938 = vsel %vm2393, %v2929, 0
      %v2941 = vsel %vm2393, %v2930, 0
      %2943 = vmatpush.msra.mxu0 0.0
      %2944 = vmatpush.msra.mxu0 0.0
      %2945 = vmatpush.msra.mxu0 0.0
      %2946 = vmatpush.msra.mxu0 0.0
      %2947 = vmatpush.msra.mxu0 0.0
      %2948 = vmatpush.msra.mxu0 0.0
      %2949 = vmatpush.msra.mxu0 0.0
      %2950 = vmatpush.msra.mxu0 0.0
      %2951 = vmatpush.msra.mxu0 0.0
      %2952 = vmatpush.msra.mxu0 0.0
      %2953 = vmatpush.msra.mxu0 0.0
      %2954 = vmatpush.msra.mxu0 0.0
      %2955 = vmatpush.msra.mxu0 0.0
      %2956 = vmatpush.msra.mxu0 0.0
      %2957 = vmatpush.msra.mxu0 %v2924
      %2958 = vmatpush.msra.mxu0 %v2921
      %2959 = vmatmul.f32.gmra.mxu0 %v2932
      %v2960 = vpop.f32.mrf.mxu0
      %v2961 = vadd.f32 0.0, %v2960
      %2962 = vmatmul.f32.gmra.mxu0 %v2935
      %v2963 = vpop.f32.mrf.mxu0
      %v2964 = vadd.f32 0.0, %v2963
      %2965 = vmatmul.f32.gmra.mxu0 %v2938
      %v2966 = vpop.f32.mrf.mxu0
      %v2967 = vadd.f32 0.0, %v2966
      %2968 = vmatmul.f32.gmra.mxu0 %v2941
      %v2969 = vpop.f32.mrf.mxu0
      %v2970 = vadd.f32 0.0, %v2969
      %2971 = vdwg.mxu0
      %v2972 = vadd.f32 %v2847, %v2961
      %v2973 = vadd.f32 %v2848, %v2964
      %v2974 = vadd.f32 %v2849, %v2967
      %v2975 = vadd.f32 %v2850, %v2970
      %s2976 = scalar_lea.vmem %s4, 1200
      %v2977 = vld [vmem:[%s2976] sm:$0xff]
      %v2978 = vld [vmem:[%s2976 + $0x8] sm:$0xff]
      %v2979 = vld [vmem:[%s2976 + $0x10] sm:$0xff]
      %v2980 = vld [vmem:[%s2976 + $0x18] sm:$0xff]
      %v2981 = vld [vmem:[%s2976 + $0x20] sm:$0xff]
      %v2982 = vld [vmem:[%s2976 + $0x28] sm:$0xff]
      %v2983 = vld [vmem:[%s2976 + $0x30] sm:$0xff]
      %v2984 = vld [vmem:[%s2976 + $0x38] sm:$0xff]
      %v2985 = vld [vmem:[%s2976 + $0x40] sm:$0xff]
      %v2986 = vld [vmem:[%s2976 + $0x48] sm:$0xff]
      %v2987 = vld [vmem:[%s2976 + $0x50] sm:$0xff]
      %v2988 = vld [vmem:[%s2976 + $0x58] sm:$0xff]
      %v2989 = vld [vmem:[%s2976 + $0x60] sm:$0xff]
      %v2990 = vld [vmem:[%s2976 + $0x68] sm:$0xff]
      %v2991 = vld [vmem:[%s2976 + $0x70] sm:$0xff]
      %v2992 = vld [vmem:[%s2976 + $0x78] sm:$0xff]
      %v2993 = vld [vmem:[%s2976 + $0x80] sm:$0xff]
      %v2994 = vld [vmem:[%s2976 + $0x88] sm:$0xff]
      %v2995 = vld [vmem:[%s2976 + $0x90] sm:$0xff]
      %v2996 = vld [vmem:[%s2976 + $0x98] sm:$0xff]
      %v2997 = vld [vmem:[%s2976 + $0xa0] sm:$0xff]
      %v2998 = vld [vmem:[%s2976 + $0xa8] sm:$0xff]
      %v2999 = vld [vmem:[%s2976 + $0xb0] sm:$0xff]
      %v3000 = vld [vmem:[%s2976 + $0xb8] sm:$0xff]
      %v3001 = vld [vmem:[%s2976 + $0xc0] sm:$0xf]
      %v3003 = vsel %vm592, %v3001, 0
      %3005 = vmatpush.msra.mxu0 %v2992
      %3006 = vmatpush.msra.mxu0 %v2991
      %3007 = vmatpush.msra.mxu0 %v2990
      %3008 = vmatpush.msra.mxu0 %v2989
      %3009 = vmatpush.msra.mxu0 %v2988
      %3010 = vmatpush.msra.mxu0 %v2987
      %3011 = vmatpush.msra.mxu0 %v2986
      %3012 = vmatpush.msra.mxu0 %v2985
      %3013 = vmatpush.msra.mxu0 %v2984
      %3014 = vmatpush.msra.mxu0 %v2983
      %3015 = vmatpush.msra.mxu0 %v2982
      %3016 = vmatpush.msra.mxu0 %v2981
      %3017 = vmatpush.msra.mxu0 %v2980
      %3018 = vmatpush.msra.mxu0 %v2979
      %3019 = vmatpush.msra.mxu0 %v2978
      %3020 = vmatpush.msra.mxu0 %v2977
      %3021 = vmatmul.f32.gmra.mxu0 %v2224
      %v3022 = vpop.f32.mrf.mxu0
      %v3023 = vadd.f32 0.0, %v3022
      %3024 = vmatmul.f32.gmra.mxu0 %v2226
      %v3025 = vpop.f32.mrf.mxu0
      %v3026 = vadd.f32 0.0, %v3025
      %3027 = vdwg.mxu0
      %3028 = vmatpush.msra.mxu0 0.0
      %3029 = vmatpush.msra.mxu0 0.0
      %3030 = vmatpush.msra.mxu0 0.0
      %3031 = vmatpush.msra.mxu0 0.0
      %3032 = vmatpush.msra.mxu0 0.0
      %3033 = vmatpush.msra.mxu0 0.0
      %3034 = vmatpush.msra.mxu0 0.0
      %3035 = vmatpush.msra.mxu0 %v3003
      %3036 = vmatpush.msra.mxu0 %v3000
      %3037 = vmatpush.msra.mxu0 %v2999
      %3038 = vmatpush.msra.mxu0 %v2998
      %3039 = vmatpush.msra.mxu0 %v2997
      %3040 = vmatpush.msra.mxu0 %v2996
      %3041 = vmatpush.msra.mxu0 %v2995
      %3042 = vmatpush.msra.mxu0 %v2994
      %3043 = vmatpush.msra.mxu0 %v2993
      %3044 = vmatmul.f32.gmra.mxu0 %v2255
      %v3045 = vpop.f32.mrf.mxu0
      %v3046 = vadd.f32 %v3023, %v3045
      %3047 = vmatmul.f32.gmra.mxu0 %v2258
      %v3048 = vpop.f32.mrf.mxu0
      %v3049 = vadd.f32 %v3026, %v3048
      %3050 = vdwg.mxu0
      %s3051 = scalar_lea.vmem %s5, 192
      %v3052 = vld [vmem:[%s3051] sm:$0xff]
      %v3053 = vld [vmem:[%s3051 + $0x8] sm:$0xff]
      %v3054 = vld [vmem:[%s3051 + $0x10] sm:$0xff]
      %v3055 = vld [vmem:[%s3051 + $0x18] sm:$0xff]
      %v3057 = vsel %vm2393, %v3052, 0
      %v3060 = vsel %vm2393, %v3053, 0
      %v3063 = vsel %vm2393, %v3054, 0
      %v3066 = vsel %vm2393, %v3055, 0
      %3068 = vmatpush.msra.mxu0 0.0
      %3069 = vmatpush.msra.mxu0 0.0
      %3070 = vmatpush.msra.mxu0 0.0
      %3071 = vmatpush.msra.mxu0 0.0
      %3072 = vmatpush.msra.mxu0 0.0
      %3073 = vmatpush.msra.mxu0 0.0
      %3074 = vmatpush.msra.mxu0 0.0
      %3075 = vmatpush.msra.mxu0 0.0
      %3076 = vmatpush.msra.mxu0 0.0
      %3077 = vmatpush.msra.mxu0 0.0
      %3078 = vmatpush.msra.mxu0 0.0
      %3079 = vmatpush.msra.mxu0 0.0
      %3080 = vmatpush.msra.mxu0 0.0
      %3081 = vmatpush.msra.mxu0 0.0
      %3082 = vmatpush.msra.mxu0 %v3049
      %3083 = vmatpush.msra.mxu0 %v3046
      %3084 = vmatmul.f32.gmra.mxu0 %v3057
      %v3085 = vpop.f32.mrf.mxu0
      %v3086 = vadd.f32 0.0, %v3085
      %3087 = vmatmul.f32.gmra.mxu0 %v3060
      %v3088 = vpop.f32.mrf.mxu0
      %v3089 = vadd.f32 0.0, %v3088
      %3090 = vmatmul.f32.gmra.mxu0 %v3063
      %v3091 = vpop.f32.mrf.mxu0
      %v3092 = vadd.f32 0.0, %v3091
      %3093 = vmatmul.f32.gmra.mxu0 %v3066
      %v3094 = vpop.f32.mrf.mxu0
      %v3095 = vadd.f32 0.0, %v3094
      %3096 = vdwg.mxu0
      %v3097 = vadd.f32 %v2972, %v3086
      %v3098 = vadd.f32 %v2973, %v3089
      %v3099 = vadd.f32 %v2974, %v3092
      %v3100 = vadd.f32 %v2975, %v3095
      %s3101 = scalar_lea.vmem %s4, 1400
      %v3102 = vld [vmem:[%s3101] sm:$0xff]
      %v3103 = vld [vmem:[%s3101 + $0x8] sm:$0xff]
      %v3104 = vld [vmem:[%s3101 + $0x10] sm:$0xff]
      %v3105 = vld [vmem:[%s3101 + $0x18] sm:$0xff]
      %v3106 = vld [vmem:[%s3101 + $0x20] sm:$0xff]
      %v3107 = vld [vmem:[%s3101 + $0x28] sm:$0xff]
      %v3108 = vld [vmem:[%s3101 + $0x30] sm:$0xff]
      %v3109 = vld [vmem:[%s3101 + $0x38] sm:$0xff]
      %v3110 = vld [vmem:[%s3101 + $0x40] sm:$0xff]
      %v3111 = vld [vmem:[%s3101 + $0x48] sm:$0xff]
      %v3112 = vld [vmem:[%s3101 + $0x50] sm:$0xff]
      %v3113 = vld [vmem:[%s3101 + $0x58] sm:$0xff]
      %v3114 = vld [vmem:[%s3101 + $0x60] sm:$0xff]
      %v3115 = vld [vmem:[%s3101 + $0x68] sm:$0xff]
      %v3116 = vld [vmem:[%s3101 + $0x70] sm:$0xff]
      %v3117 = vld [vmem:[%s3101 + $0x78] sm:$0xff]
      %v3118 = vld [vmem:[%s3101 + $0x80] sm:$0xff]
      %v3119 = vld [vmem:[%s3101 + $0x88] sm:$0xff]
      %v3120 = vld [vmem:[%s3101 + $0x90] sm:$0xff]
      %v3121 = vld [vmem:[%s3101 + $0x98] sm:$0xff]
      %v3122 = vld [vmem:[%s3101 + $0xa0] sm:$0xff]
      %v3123 = vld [vmem:[%s3101 + $0xa8] sm:$0xff]
      %v3124 = vld [vmem:[%s3101 + $0xb0] sm:$0xff]
      %v3125 = vld [vmem:[%s3101 + $0xb8] sm:$0xff]
      %v3126 = vld [vmem:[%s3101 + $0xc0] sm:$0xf]
      %v3128 = vsel %vm592, %v3126, 0
      %3130 = vmatpush.msra.mxu0 %v3117
      %3131 = vmatpush.msra.mxu0 %v3116
      %3132 = vmatpush.msra.mxu0 %v3115
      %3133 = vmatpush.msra.mxu0 %v3114
      %3134 = vmatpush.msra.mxu0 %v3113
      %3135 = vmatpush.msra.mxu0 %v3112
      %3136 = vmatpush.msra.mxu0 %v3111
      %3137 = vmatpush.msra.mxu0 %v3110
      %3138 = vmatpush.msra.mxu0 %v3109
      %3139 = vmatpush.msra.mxu0 %v3108
      %3140 = vmatpush.msra.mxu0 %v3107
      %3141 = vmatpush.msra.mxu0 %v3106
      %3142 = vmatpush.msra.mxu0 %v3105
      %3143 = vmatpush.msra.mxu0 %v3104
      %3144 = vmatpush.msra.mxu0 %v3103
      %3145 = vmatpush.msra.mxu0 %v3102
      %3146 = vmatmul.f32.gmra.mxu0 %v2224
      %v3147 = vpop.f32.mrf.mxu0
      %v3148 = vadd.f32 0.0, %v3147
      %3149 = vmatmul.f32.gmra.mxu0 %v2226
      %v3150 = vpop.f32.mrf.mxu0
      %v3151 = vadd.f32 0.0, %v3150
      %3152 = vdwg.mxu0
      %3153 = vmatpush.msra.mxu0 0.0
      %3154 = vmatpush.msra.mxu0 0.0
      %3155 = vmatpush.msra.mxu0 0.0
      %3156 = vmatpush.msra.mxu0 0.0
      %3157 = vmatpush.msra.mxu0 0.0
      %3158 = vmatpush.msra.mxu0 0.0
      %3159 = vmatpush.msra.mxu0 0.0
      %3160 = vmatpush.msra.mxu0 %v3128
      %3161 = vmatpush.msra.mxu0 %v3125
      %3162 = vmatpush.msra.mxu0 %v3124
      %3163 = vmatpush.msra.mxu0 %v3123
      %3164 = vmatpush.msra.mxu0 %v3122
      %3165 = vmatpush.msra.mxu0 %v3121
      %3166 = vmatpush.msra.mxu0 %v3120
      %3167 = vmatpush.msra.mxu0 %v3119
      %3168 = vmatpush.msra.mxu0 %v3118
      %3169 = vmatmul.f32.gmra.mxu0 %v2255
      %v3170 = vpop.f32.mrf.mxu0
      %v3171 = vadd.f32 %v3148, %v3170
      %3172 = vmatmul.f32.gmra.mxu0 %v2258
      %v3173 = vpop.f32.mrf.mxu0
      %v3174 = vadd.f32 %v3151, %v3173
      %3175 = vdwg.mxu0
      %s3176 = scalar_lea.vmem %s5, 224
      %v3177 = vld [vmem:[%s3176] sm:$0xff]
      %v3178 = vld [vmem:[%s3176 + $0x8] sm:$0xff]
      %v3179 = vld [vmem:[%s3176 + $0x10] sm:$0xff]
      %v3180 = vld [vmem:[%s3176 + $0x18] sm:$0xff]
      %v3182 = vsel %vm2393, %v3177, 0
      %v3185 = vsel %vm2393, %v3178, 0
      %v3188 = vsel %vm2393, %v3179, 0
      %v3191 = vsel %vm2393, %v3180, 0
      %3193 = vmatpush.msra.mxu0 0.0
      %3194 = vmatpush.msra.mxu0 0.0
      %3195 = vmatpush.msra.mxu0 0.0
      %3196 = vmatpush.msra.mxu0 0.0
      %3197 = vmatpush.msra.mxu0 0.0
      %3198 = vmatpush.msra.mxu0 0.0
      %3199 = vmatpush.msra.mxu0 0.0
      %3200 = vmatpush.msra.mxu0 0.0
      %3201 = vmatpush.msra.mxu0 0.0
      %3202 = vmatpush.msra.mxu0 0.0
      %3203 = vmatpush.msra.mxu0 0.0
      %3204 = vmatpush.msra.mxu0 0.0
      %3205 = vmatpush.msra.mxu0 0.0
      %3206 = vmatpush.msra.mxu0 0.0
      %3207 = vmatpush.msra.mxu0 %v3174
      %3208 = vmatpush.msra.mxu0 %v3171
      %3209 = vmatmul.f32.gmra.mxu0 %v3182
      %v3210 = vpop.f32.mrf.mxu0
      %v3211 = vadd.f32 0.0, %v3210
      %3212 = vmatmul.f32.gmra.mxu0 %v3185
      %v3213 = vpop.f32.mrf.mxu0
      %v3214 = vadd.f32 0.0, %v3213
      %3215 = vmatmul.f32.gmra.mxu0 %v3188
      %v3216 = vpop.f32.mrf.mxu0
      %v3217 = vadd.f32 0.0, %v3216
      %3218 = vmatmul.f32.gmra.mxu0 %v3191
      %v3219 = vpop.f32.mrf.mxu0
      %v3220 = vadd.f32 0.0, %v3219
      %3221 = vdwg.mxu0
      %v3222 = vadd.f32 %v3097, %v3211
      %v3223 = vadd.f32 %v3098, %v3214
      %v3224 = vadd.f32 %v3099, %v3217
      %v3225 = vadd.f32 %v3100, %v3220
      %s3226 = scalar_lea.vmem %s4, 1600
      %v3227 = vld [vmem:[%s3226] sm:$0xff]
      %v3228 = vld [vmem:[%s3226 + $0x8] sm:$0xff]
      %v3229 = vld [vmem:[%s3226 + $0x10] sm:$0xff]
      %v3230 = vld [vmem:[%s3226 + $0x18] sm:$0xff]
      %v3231 = vld [vmem:[%s3226 + $0x20] sm:$0xff]
      %v3232 = vld [vmem:[%s3226 + $0x28] sm:$0xff]
      %v3233 = vld [vmem:[%s3226 + $0x30] sm:$0xff]
      %v3234 = vld [vmem:[%s3226 + $0x38] sm:$0xff]
      %v3235 = vld [vmem:[%s3226 + $0x40] sm:$0xff]
      %v3236 = vld [vmem:[%s3226 + $0x48] sm:$0xff]
      %v3237 = vld [vmem:[%s3226 + $0x50] sm:$0xff]
      %v3238 = vld [vmem:[%s3226 + $0x58] sm:$0xff]
      %v3239 = vld [vmem:[%s3226 + $0x60] sm:$0xff]
      %v3240 = vld [vmem:[%s3226 + $0x68] sm:$0xff]
      %v3241 = vld [vmem:[%s3226 + $0x70] sm:$0xff]
      %v3242 = vld [vmem:[%s3226 + $0x78] sm:$0xff]
      %v3243 = vld [vmem:[%s3226 + $0x80] sm:$0xff]
      %v3244 = vld [vmem:[%s3226 + $0x88] sm:$0xff]
      %v3245 = vld [vmem:[%s3226 + $0x90] sm:$0xff]
      %v3246 = vld [vmem:[%s3226 + $0x98] sm:$0xff]
      %v3247 = vld [vmem:[%s3226 + $0xa0] sm:$0xff]
      %v3248 = vld [vmem:[%s3226 + $0xa8] sm:$0xff]
      %v3249 = vld [vmem:[%s3226 + $0xb0] sm:$0xff]
      %v3250 = vld [vmem:[%s3226 + $0xb8] sm:$0xff]
      %v3251 = vld [vmem:[%s3226 + $0xc0] sm:$0xf]
      %v3253 = vsel %vm592, %v3251, 0
      %3255 = vmatpush.msra.mxu0 %v3242
      %3256 = vmatpush.msra.mxu0 %v3241
      %3257 = vmatpush.msra.mxu0 %v3240
      %3258 = vmatpush.msra.mxu0 %v3239
      %3259 = vmatpush.msra.mxu0 %v3238
      %3260 = vmatpush.msra.mxu0 %v3237
      %3261 = vmatpush.msra.mxu0 %v3236
      %3262 = vmatpush.msra.mxu0 %v3235
      %3263 = vmatpush.msra.mxu0 %v3234
      %3264 = vmatpush.msra.mxu0 %v3233
      %3265 = vmatpush.msra.mxu0 %v3232
      %3266 = vmatpush.msra.mxu0 %v3231
      %3267 = vmatpush.msra.mxu0 %v3230
      %3268 = vmatpush.msra.mxu0 %v3229
      %3269 = vmatpush.msra.mxu0 %v3228
      %3270 = vmatpush.msra.mxu0 %v3227
      %3271 = vmatmul.f32.gmra.mxu0 %v2224
      %v3272 = vpop.f32.mrf.mxu0
      %v3273 = vadd.f32 0.0, %v3272
      %3274 = vmatmul.f32.gmra.mxu0 %v2226
      %v3275 = vpop.f32.mrf.mxu0
      %v3276 = vadd.f32 0.0, %v3275
      %3277 = vdwg.mxu0
      %3278 = vmatpush.msra.mxu0 0.0
      %3279 = vmatpush.msra.mxu0 0.0
      %3280 = vmatpush.msra.mxu0 0.0
      %3281 = vmatpush.msra.mxu0 0.0
      %3282 = vmatpush.msra.mxu0 0.0
      %3283 = vmatpush.msra.mxu0 0.0
      %3284 = vmatpush.msra.mxu0 0.0
      %3285 = vmatpush.msra.mxu0 %v3253
      %3286 = vmatpush.msra.mxu0 %v3250
      %3287 = vmatpush.msra.mxu0 %v3249
      %3288 = vmatpush.msra.mxu0 %v3248
      %3289 = vmatpush.msra.mxu0 %v3247
      %3290 = vmatpush.msra.mxu0 %v3246
      %3291 = vmatpush.msra.mxu0 %v3245
      %3292 = vmatpush.msra.mxu0 %v3244
      %3293 = vmatpush.msra.mxu0 %v3243
      %3294 = vmatmul.f32.gmra.mxu0 %v2255
      %v3295 = vpop.f32.mrf.mxu0
      %v3296 = vadd.f32 %v3273, %v3295
      %3297 = vmatmul.f32.gmra.mxu0 %v2258
      %v3298 = vpop.f32.mrf.mxu0
      %v3299 = vadd.f32 %v3276, %v3298
      %3300 = vdwg.mxu0
      %s3301 = scalar_lea.vmem %s5, 256
      %v3302 = vld [vmem:[%s3301] sm:$0xff]
      %v3303 = vld [vmem:[%s3301 + $0x8] sm:$0xff]
      %v3304 = vld [vmem:[%s3301 + $0x10] sm:$0xff]
      %v3305 = vld [vmem:[%s3301 + $0x18] sm:$0xff]
      %v3307 = vsel %vm2393, %v3302, 0
      %v3310 = vsel %vm2393, %v3303, 0
      %v3313 = vsel %vm2393, %v3304, 0
      %v3316 = vsel %vm2393, %v3305, 0
      %3318 = vmatpush.msra.mxu0 0.0
      %3319 = vmatpush.msra.mxu0 0.0
      %3320 = vmatpush.msra.mxu0 0.0
      %3321 = vmatpush.msra.mxu0 0.0
      %3322 = vmatpush.msra.mxu0 0.0
      %3323 = vmatpush.msra.mxu0 0.0
      %3324 = vmatpush.msra.mxu0 0.0
      %3325 = vmatpush.msra.mxu0 0.0
      %3326 = vmatpush.msra.mxu0 0.0
      %3327 = vmatpush.msra.mxu0 0.0
      %3328 = vmatpush.msra.mxu0 0.0
      %3329 = vmatpush.msra.mxu0 0.0
      %3330 = vmatpush.msra.mxu0 0.0
      %3331 = vmatpush.msra.mxu0 0.0
      %3332 = vmatpush.msra.mxu0 %v3299
      %3333 = vmatpush.msra.mxu0 %v3296
      %3334 = vmatmul.f32.gmra.mxu0 %v3307
      %v3335 = vpop.f32.mrf.mxu0
      %v3336 = vadd.f32 0.0, %v3335
      %3337 = vmatmul.f32.gmra.mxu0 %v3310
      %v3338 = vpop.f32.mrf.mxu0
      %v3339 = vadd.f32 0.0, %v3338
      %3340 = vmatmul.f32.gmra.mxu0 %v3313
      %v3341 = vpop.f32.mrf.mxu0
      %v3342 = vadd.f32 0.0, %v3341
      %3343 = vmatmul.f32.gmra.mxu0 %v3316
      %v3344 = vpop.f32.mrf.mxu0
      %v3345 = vadd.f32 0.0, %v3344
      %3346 = vdwg.mxu0
      %v3347 = vadd.f32 %v3222, %v3336
      %v3348 = vadd.f32 %v3223, %v3339
      %v3349 = vadd.f32 %v3224, %v3342
      %v3350 = vadd.f32 %v3225, %v3345
      %v3351 = vld [vmem:[%s6] sm:$0xff]
      %v3352 = vld [vmem:[%s6 + $0x8] sm:$0xff]
      %v3353 = vld [vmem:[%s6 + $0x10] sm:$0xff]
      %v3354 = vld [vmem:[%s6 + $0x18] sm:$0xff]
      %3356 = vset.pattern.permute.xlu0 0
      %3357 = vperm.xlu0 %3356, %v3351
      %v3358 = vpop.permute.xlu0 %3357
      %3361 = vset.pattern.permute.xlu0 0
      %3362 = vperm.xlu0 %3361, %v3352
      %v3363 = vpop.permute.xlu0 %3362
      %3366 = vset.pattern.permute.xlu0 0
      %3367 = vperm.xlu0 %3366, %v3353
      %v3368 = vpop.permute.xlu0 %3367
      %3371 = vset.pattern.permute.xlu0 0
      %3372 = vperm.xlu0 %3371, %v3354
      %v3373 = vpop.permute.xlu0 %3372
      %v3375 = vadd.f32 %v3347, %v3358
      %v3376 = vadd.f32 %v3348, %v3363
      %v3377 = vadd.f32 %v3349, %v3368
      %v3378 = vadd.f32 %v3350, %v3373
      %vm3379 = vcmask 293888
      %3380 = vst.msk [vmem:[%s278] sm:$0xff] %vm3379, %v3375
      %3381 = vst.msk [vmem:[%s278 + $0x8] sm:$0xff] %vm3379, %v3376
      %3382 = vst.msk [vmem:[%s278 + $0x10] sm:$0xff] %vm3379, %v3377
      %3383 = vst.msk [vmem:[%s278 + $0x18] sm:$0xff] %vm3379, %v3378
      %p3384 = scmp.lt.s32.totalorder %s18, 1
      %s3385 = scalar_select %p3384, %s18, 1
      %s3386 = smul.addr %s3385, 4
      %s3387 = smul.addr %s3386, 8
      %s3388 = scalar_lea.vmem %s7, %s3387
      // Predicated region
      $region49: #{capsnet_forward.2} parent=47 // pred_check
        %p3389 = pneg %p188
      $region50: #{capsnet_forward.2} parent=47 // pred_check_branch
        %3391 = sbr.rel (%p3389) target = $region52
      $region51: #{capsnet_forward.2} parent=47 // pred_region
        _
      $region52: #{capsnet_forward.2} parent=47 // pred_fallthru
        _
    $region48: #{capsnet_forward.2} parent=5 // pred_fallthru
      _
    %p3392 = scmp.le.s32.totalorder 2, %s13
    // Predicated region
    $region53: #{capsnet_forward.2} parent=5 // pred_check
      %p3393 = pneg %p3392
    $region54: #{capsnet_forward.2} parent=5 // pred_check_branch
      %3395 = sbr.rel (%p3393) target = $region56
    $region55: #{capsnet_forward.2} parent=5 // pred_region
      %s3396 = ssub.s32 %s13, 2
      // Predicated region
      $region57: #{capsnet_forward.2} parent=55 // pred_check
        %p3397 = pneg %p194
      $region58: #{capsnet_forward.2} parent=55 // pred_check_branch
        %3399 = sbr.rel (%p3397) target = $region60
      $region59: #{capsnet_forward.2} parent=55 // pred_region
        %p3400 = scmp.lt.s32.totalorder %s19, 1
        %s3401 = scalar_select %p3400, %s19, 1
        %s3402 = smul.addr %s3401, 4
        %s3403 = smul.addr %s3402, 8
        %s3404 = scalar_lea.vmem %s7, %s3403
      $region60: #{capsnet_forward.2} parent=55 // pred_fallthru
        _
    $region56: #{capsnet_forward.2} parent=5 // pred_fallthru
      _
  $region6: #{capsnet_forward.2} parent=0 // loop_footer
    %s17 = sadd.s32 1, %s13
  $region7: #{capsnet_forward.2} parent=0 // loop_footer_branch
    %12 = sbr.rel target = $region3
  $region8: #{capsnet_forward.2} parent=0 // loop_exit
    _

// kernel: capsnet_forward.3
$region0: #{capsnet_forward.3}
  #allocation0 [shape = 'u32[]', space=smem, size = 0x4, offset = 0x4, fixed_abs, tag = 'smem constant byte address 0x4 - core index']
  #allocation1 [shape = 'u32[72,128]{1,0:T(1,128)}', space=vmem, size = 0x9000, scoped, tag = 'internal scratch']
  #allocation2 [shape = 'f32[10,16,144]{2,1,0:T(8,128)}', space=vmem, size = 0x28000, scoped, tag = 'scratch operand']
  %s0 = inlined_call_operand.vmem [shape: f32[2,8,144], index: 0, kind: input, shape index: {}]
  %s1 = inlined_call_operand.vmem [shape: f32[10,16,8,144], index: 1, kind: input, shape index: {}]
  %s2 = inlined_call_operand.vmem [shape: f32[2,10,16], index: 2, kind: output, shape index: {}]
  %s3 = sld [smem:[#allocation0]]
  $region41: #{capsnet_forward.3} parent=0
    _
  %s5 = ssub.s32 1, %s3
  %s6 = scalar_select 0, %s5, %s3
  loop: start=0, step=1, limit=4
  $region2: #{capsnet_forward.3} parent=0 // loop_pre_header
    _
  $region3: #{capsnet_forward.3} parent=0 // loop_header
    %s8 = sphi 0, %s12
    %p9 = scmp.ge.s32.totalorder %s8, 4
    %s18 = sphi 0, %s20
    %s21 = sphi 0, %s18
    %s22 = sphi 0, %s21
    %s38 = sphi 0, %s22
    %s42 = sphi 0, %s42
    %s44 = sphi 0, %s42
    %s45 = sphi 0, %s44
    %s59 = sphi 0, %s45
    %s65 = sphi 0, %s67
    %s68 = sphi 0, %s65
    %s69 = sphi 0, %s68
    %s85 = sphi 0, %s69
  $region4: #{capsnet_forward.3} parent=0 // loop_header_branch
    %11 = sbr.rel (%p9) target = $region8
  $region5: #{capsnet_forward.3} parent=0 // loop_body
    %s13 = ssub.s32 %s8, 1
    %s14 = ssub.s32 %s8, 2
    %s15 = sadd.s32 %s8, 1
    %s16 = ssub.s32 %s8, %s15
    %p17 = scmp.eq.s32.totalorder %s16, 0
    %s19 = sadd.s32 %s18, 1
    %s20 = scalar_select %p17, %s18, %s19
    %p23 = pneg %p17
    %p24 = scmp.eq.s32.totalorder %s8, 1
    %p25 = por %p23, %p24
    %p26 = scmp.ne.s32.totalorder %s18, %s21
    %p27 = scmp.eq.s32.totalorder %s8, 0
    %p28 = por %p26, %p27
    %p29 = scmp.ne.s32.totalorder %s18, %s21
    %p30 = scmp.eq.s32.totalorder %s13, 1
    %p31 = por %p29, %p30
    %p32 = scmp.ne.s32.totalorder %s21, %s22
    %p33 = scmp.eq.s32.totalorder %s13, 0
    %p34 = por %p32, %p33
    %p35 = scmp.ne.s32.totalorder %s21, %s22
    %p36 = scmp.eq.s32.totalorder %s14, 1
    %p37 = por %p35, %p36
    %p39 = scmp.ne.s32.totalorder %s22, %s38
    %p40 = scmp.eq.s32.totalorder %s14, 0
    %p41 = por %p39, %p40
    %s43 = sadd.s32 %s42, 1
    %p46 = scmp.eq.s32.totalorder %s8, 1
    %p47 = scmp.ne.s32.totalorder %s42, %s44
    %p48 = scmp.eq.s32.totalorder %s8, 0
    %p49 = por %p47, %p48
    %p50 = scmp.ne.s32.totalorder %s42, %s44
    %p51 = scmp.eq.s32.totalorder %s13, 1
    %p52 = por %p50, %p51
    %p53 = scmp.ne.s32.totalorder %s44, %s45
    %p54 = scmp.eq.s32.totalorder %s13, 0
    %p55 = por %p53, %p54
    %p56 = scmp.ne.s32.totalorder %s44, %s45
    %p57 = scmp.eq.s32.totalorder %s14, 1
    %p58 = por %p56, %p57
    %p60 = scmp.ne.s32.totalorder %s45, %s59
    %p61 = scmp.eq.s32.totalorder %s14, 0
    %p62 = por %p60, %p61
    %s63 = ssub.s32 %s8, %s15
    %p64 = scmp.eq.s32.totalorder %s63, 0
    %s66 = sadd.s32 %s65, 1
    %s67 = scalar_select %p64, %s65, %s66
    %p70 = pneg %p64
    %p71 = scmp.eq.s32.totalorder %s8, 1
    %p72 = por %p70, %p71
    %p73 = scmp.ne.s32.totalorder %s65, %s68
    %p74 = scmp.eq.s32.totalorder %s8, 0
    %p75 = por %p73, %p74
    %p76 = scmp.ne.s32.totalorder %s65, %s68
    %p77 = scmp.eq.s32.totalorder %s13, 1
    %p78 = por %p76, %p77
    %p79 = scmp.ne.s32.totalorder %s68, %s69
    %p80 = scmp.eq.s32.totalorder %s13, 0
    %p81 = por %p79, %p80
    %p82 = scmp.ne.s32.totalorder %s68, %s69
    %p83 = scmp.eq.s32.totalorder %s14, 1
    %p84 = por %p82, %p83
    %p86 = scmp.ne.s32.totalorder %s69, %s85
    %p87 = scmp.eq.s32.totalorder %s14, 0
    %p88 = por %p86, %p87
    %p89 = scmp.le.s32.totalorder 1, %s8
    %p90 = scmp.lt.s32.totalorder %s8, 3
    %p91 = pnand %p89, %p90
    %p92 = pneg %p91
    // Predicated region
    $region9: #{capsnet_forward.3} parent=5 // pred_check
      _
    $region10: #{capsnet_forward.3} parent=5 // pred_check_branch
      %94 = sbr.rel (%p91) target = $region12
    $region11: #{capsnet_forward.3} parent=5 // pred_region
      %s95 = ssub.s32 %s8, 1
      // Predicated region
      $region13: #{capsnet_forward.3} parent=11 // pred_check
        %p96 = pneg %p55
      $region14: #{capsnet_forward.3} parent=11 // pred_check_branch
        %98 = sbr.rel (%p96) target = $region16
      $region15: #{capsnet_forward.3} parent=11 // pred_region
        _
      $region16: #{capsnet_forward.3} parent=11 // pred_fallthru
        _
    $region12: #{capsnet_forward.3} parent=5 // pred_fallthru
      _
    %p99 = scmp.lt.s32.totalorder %s8, 2
    // Predicated region
    $region17: #{capsnet_forward.3} parent=5 // pred_check
      %p100 = pneg %p99
    $region18: #{capsnet_forward.3} parent=5 // pred_check_branch
      %102 = sbr.rel (%p100) target = $region20
    $region19: #{capsnet_forward.3} parent=5 // pred_region
      // Predicated region
      $region21: #{capsnet_forward.3} parent=19 // pred_check
        %p103 = pneg %p28
      $region22: #{capsnet_forward.3} parent=19 // pred_check_branch
        %105 = sbr.rel (%p103) target = $region24
      $region23: #{capsnet_forward.3} parent=19 // pred_region
        %p106 = scmp.lt.s32.totalorder %s8, 1
        %s107 = scalar_select %p106, %s8, 1
        %s108 = smul.addr %s107, 2
        %s109 = smul.addr %s108, 8
        %s110 = scalar_lea.vmem %s0, %s109
      $region24: #{capsnet_forward.3} parent=19 // pred_fallthru
        _
    $region20: #{capsnet_forward.3} parent=5 // pred_fallthru
      _
    %p111 = scmp.le.s32.totalorder 1, %s8
    %p112 = scmp.lt.s32.totalorder %s8, 3
    %p113 = pnand %p111, %p112
    %p114 = pneg %p113
    // Predicated region
    $region25: #{capsnet_forward.3} parent=5 // pred_check
      _
    $region26: #{capsnet_forward.3} parent=5 // pred_check_branch
      %116 = sbr.rel (%p113) target = $region28
    $region27: #{capsnet_forward.3} parent=5 // pred_region
      %s117 = ssub.s32 %s8, 1
      %p118 = scmp.lt.s32.totalorder %s13, 1
      %s119 = scalar_select %p118, %s13, 1
      %s120 = smul.addr %s119, 2
      %s121 = smul.addr %s120, 8
      %s122 = scalar_lea.vmem %s0, %s121
      %p123 = pneg %p34
      %p124 = pneg %p31
      %p125 = pneg %p55
      %p126 = pneg %p52
      %p127 = pneg %p81
      %p128 = pneg %p78
      %p129 = scmp.lt.s32.totalorder %s13, 1
      %s130 = scalar_select %p129, %s13, 1
      %s131 = smul.addr %s130, 2
      %s132 = smul.addr %s131, 8
      %s133 = scalar_lea.vmem %s2, %s132
      %p134 = scmp.lt.s32.totalorder %s13, 1
      %s135 = scalar_select %p134, %s13, 1
      %s136 = smul.addr %s135, 2
      %s137 = smul.addr %s136, 8
      %s138 = scalar_lea.vmem %s0, %s137
      %p139 = scmp.lt.s32.totalorder %s13, 1
      %s140 = scalar_select %p139, %s13, 1
      %s141 = smul.addr %s140, 2
      %s142 = smul.addr %s141, 8
      %s143 = scalar_lea.vmem %s2, %s142
      %v144 = vld [vmem:[%s138] sm:$0xff]
      %v145 = vld [vmem:[%s138 + $0x8] sm:$0xff]
      %v146 = vmul.f32 %v144, %v144
      %v147 = vmul.f32 %v145, %v145
      %v148 = vrot.slane %v146, 4
      %v149 = vadd.f32 %v146, %v148
      %v150 = vrot.slane %v149, 2
      %v151 = vadd.f32 %v149, %v150
      %v152 = vrot.slane %v151, 1
      %v153 = vadd.f32 %v151, %v152
      %vm154 = vcmask 130048
      %v155 = vsel %vm154, %v147, 0.0
      %v156 = vrot.slane %v155, 4
      %v157 = vadd.f32 %v155, %v156
      %v158 = vrot.slane %v157, 2
      %v159 = vadd.f32 %v157, %v158
      %v160 = vrot.slane %v159, 1
      %v161 = vadd.f32 %v159, %v160
      %v162 = vadd.f32 %v153, 1.0
      %v163 = vadd.f32 %v161, 1.0
      %v164 = vrcp.pop %v162
      %v165 = vrcp.pop %v163
      %v166 = vmul.f32 %v153, %v164
      %v167 = vmul.f32 %v161, %v165
      %v168 = vadd.f32 %v153, 1e-09
      %v169 = vadd.f32 %v161, 1e-09
      %v170 = vrsqrt.pop %v168
      %v171 = vmul.f32 %v170, %v168
      %v172 = vmul.f32 %v171, %v170
      %v173 = vmul.f32 0.5, %v172
      %v174 = vsub.f32 1.5, %v173
      %v175 = vmul.f32 %v170, %v174
      %vm176 = vweird.f32 %v168
      %vm177 = vweird.f32 %v170
      %vm178 = vmor %vm176, %vm177
      %v179 = vsel %vm178, %v170, %v175
      %v180 = vrsqrt.pop %v169
      %v181 = vmul.f32 %v180, %v169
      %v182 = vmul.f32 %v181, %v180
      %v183 = vmul.f32 0.5, %v182
      %v184 = vsub.f32 1.5, %v183
      %v185 = vmul.f32 %v180, %v184
      %vm186 = vweird.f32 %v169
      %vm187 = vweird.f32 %v180
      %vm188 = vmor %vm186, %vm187
      %v189 = vsel %vm188, %v180, %v185
      %v190 = vmul.f32 %v166, %v179
      %v191 = vmul.f32 %v167, %v189
      %v192 = vmul.f32 %v144, %v190
      %v193 = vmul.f32 %v145, %v191
      %v194 = vld [vmem:[%s1] sm:$0xff]
      %v195 = vld [vmem:[%s1 + $0x8] sm:$0xff]
      %v196 = vld [vmem:[%s1 + $0x10] sm:$0xff]
      %v197 = vld [vmem:[%s1 + $0x18] sm:$0xff]
      %v198 = vld [vmem:[%s1 + $0x20] sm:$0xff]
      %v199 = vld [vmem:[%s1 + $0x28] sm:$0xff]
      %v200 = vld [vmem:[%s1 + $0x30] sm:$0xff]
      %v201 = vld [vmem:[%s1 + $0x38] sm:$0xff]
      %v202 = vld [vmem:[%s1 + $0x40] sm:$0xff]
      %v203 = vld [vmem:[%s1 + $0x48] sm:$0xff]
      %v204 = vld [vmem:[%s1 + $0x50] sm:$0xff]
      %v205 = vld [vmem:[%s1 + $0x58] sm:$0xff]
      %v206 = vld [vmem:[%s1 + $0x60] sm:$0xff]
      %v207 = vld [vmem:[%s1 + $0x68] sm:$0xff]
      %v208 = vld [vmem:[%s1 + $0x70] sm:$0xff]
      %v209 = vld [vmem:[%s1 + $0x78] sm:$0xff]
      %v210 = vld [vmem:[%s1 + $0x80] sm:$0xff]
      %v211 = vld [vmem:[%s1 + $0x88] sm:$0xff]
      %v212 = vld [vmem:[%s1 + $0x90] sm:$0xff]
      %v213 = vld [vmem:[%s1 + $0x98] sm:$0xff]
      %v214 = vld [vmem:[%s1 + $0xa0] sm:$0xff]
      %v215 = vld [vmem:[%s1 + $0xa8] sm:$0xff]
      %v216 = vld [vmem:[%s1 + $0xb0] sm:$0xff]
      %v217 = vld [vmem:[%s1 + $0xb8] sm:$0xff]
      %v218 = vld [vmem:[%s1 + $0xc0] sm:$0xff]
      %v219 = vld [vmem:[%s1 + $0xc8] sm:$0xff]
      %v220 = vld [vmem:[%s1 + $0xd0] sm:$0xff]
      %v221 = vld [vmem:[%s1 + $0xd8] sm:$0xff]
      %v222 = vld [vmem:[%s1 + $0xe0] sm:$0xff]
      %v223 = vld [vmem:[%s1 + $0xe8] sm:$0xff]
      %v224 = vld [vmem:[%s1 + $0xf0] sm:$0xff]
      %v225 = vld [vmem:[%s1 + $0xf8] sm:$0xff]
      %v226 = vmul.f32 %v194, %v192
      %v227 = vmul.f32 %v195, %v193
      %v228 = vmul.f32 %v196, %v192
      %v229 = vmul.f32 %v197, %v193
      %v230 = vmul.f32 %v198, %v192
      %v231 = vmul.f32 %v199, %v193
      %v232 = vmul.f32 %v200, %v192
      %v233 = vmul.f32 %v201, %v193
      %v234 = vmul.f32 %v202, %v192
      %v235 = vmul.f32 %v203, %v193
      %v236 = vmul.f32 %v204, %v192
      %v237 = vmul.f32 %v205, %v193
      %v238 = vmul.f32 %v206, %v192
      %v239 = vmul.f32 %v207, %v193
      %v240 = vmul.f32 %v208, %v192
      %v241 = vmul.f32 %v209, %v193
      %v242 = vmul.f32 %v210, %v192
      %v243 = vmul.f32 %v211, %v193
      %v244 = vmul.f32 %v212, %v192
      %v245 = vmul.f32 %v213, %v193
      %v246 = vmul.f32 %v214, %v192
      %v247 = vmul.f32 %v215, %v193
      %v248 = vmul.f32 %v216, %v192
      %v249 = vmul.f32 %v217, %v193
      %v250 = vmul.f32 %v218, %v192
      %v251 = vmul.f32 %v219, %v193
      %v252 = vmul.f32 %v220, %v192
      %v253 = vmul.f32 %v221, %v193
      %v254 = vmul.f32 %v222, %v192
      %v255 = vmul.f32 %v223, %v193
      %v256 = vmul.f32 %v224, %v192
      %v257 = vmul.f32 %v225, %v193
      %v258 = vrot.slane %v226, 4
      %v259 = vadd.f32 %v226, %v258
      %v260 = vrot.slane %v259, 2
      %v261 = vadd.f32 %v259, %v260
      %v262 = vrot.slane %v261, 1
      %v263 = vadd.f32 %v261, %v262
      %v264 = vsel %vm154, %v227, 0.0
      %v265 = vrot.slane %v264, 4
      %v266 = vadd.f32 %v264, %v265
      %v267 = vrot.slane %v266, 2
      %v268 = vadd.f32 %v266, %v267
      %v269 = vrot.slane %v268, 1
      %v270 = vadd.f32 %v268, %v269
      %v271 = vrot.slane %v228, 4
      %v272 = vadd.f32 %v228, %v271
      %v273 = vrot.slane %v272, 2
      %v274 = vadd.f32 %v272, %v273
      %v275 = vrot.slane %v274, 1
      %v276 = vadd.f32 %v274, %v275
      %v277 = vsel %vm154, %v229, 0.0
      %v278 = vrot.slane %v277, 4
      %v279 = vadd.f32 %v277, %v278
      %v280 = vrot.slane %v279, 2
      %v281 = vadd.f32 %v279, %v280
      %v282 = vrot.slane %v281, 1
      %v283 = vadd.f32 %v281, %v282
      %v284 = vrot.slane %v230, 4
      %v285 = vadd.f32 %v230, %v284
      %v286 = vrot.slane %v285, 2
      %v287 = vadd.f32 %v285, %v286
      %v288 = vrot.slane %v287, 1
      %v289 = vadd.f32 %v287, %v288
      %v290 = vsel %vm154, %v231, 0.0
      %v291 = vrot.slane %v290, 4
      %v292 = vadd.f32 %v290, %v291
      %v293 = vrot.slane %v292, 2
      %v294 = vadd.f32 %v292, %v293
      %v295 = vrot.slane %v294, 1
      %v296 = vadd.f32 %v294, %v295
      %v297 = vrot.slane %v232, 4
      %v298 = vadd.f32 %v232, %v297
      %v299 = vrot.slane %v298, 2
      %v300 = vadd.f32 %v298, %v299
      %v301 = vrot.slane %v300, 1
      %v302 = vadd.f32 %v300, %v301
      %v303 = vsel %vm154, %v233, 0.0
      %v304 = vrot.slane %v303, 4
      %v305 = vadd.f32 %v303, %v304
      %v306 = vrot.slane %v305, 2
      %v307 = vadd.f32 %v305, %v306
      %v308 = vrot.slane %v307, 1
      %v309 = vadd.f32 %v307, %v308
      %v310 = vrot.slane %v234, 4
      %v311 = vadd.f32 %v234, %v310
      %v312 = vrot.slane %v311, 2
      %v313 = vadd.f32 %v311, %v312
      %v314 = vrot.slane %v313, 1
      %v315 = vadd.f32 %v313, %v314
      %v316 = vsel %vm154, %v235, 0.0
      %v317 = vrot.slane %v316, 4
      %v318 = vadd.f32 %v316, %v317
      %v319 = vrot.slane %v318, 2
      %v320 = vadd.f32 %v318, %v319
      %v321 = vrot.slane %v320, 1
      %v322 = vadd.f32 %v320, %v321
      %v323 = vrot.slane %v236, 4
      %v324 = vadd.f32 %v236, %v323
      %v325 = vrot.slane %v324, 2
      %v326 = vadd.f32 %v324, %v325
      %v327 = vrot.slane %v326, 1
      %v328 = vadd.f32 %v326, %v327
      %v329 = vsel %vm154, %v237, 0.0
      %v330 = vrot.slane %v329, 4
      %v331 = vadd.f32 %v329, %v330
      %v332 = vrot.slane %v331, 2
      %v333 = vadd.f32 %v331, %v332
      %v334 = vrot.slane %v333, 1
      %v335 = vadd.f32 %v333, %v334
      %v336 = vrot.slane %v238, 4
      %v337 = vadd.f32 %v238, %v336
      %v338 = vrot.slane %v337, 2
      %v339 = vadd.f32 %v337, %v338
      %v340 = vrot.slane %v339, 1
      %v341 = vadd.f32 %v339, %v340
      %v342 = vsel %vm154, %v239, 0.0
      %v343 = vrot.slane %v342, 4
      %v344 = vadd.f32 %v342, %v343
      %v345 = vrot.slane %v344, 2
      %v346 = vadd.f32 %v344, %v345
      %v347 = vrot.slane %v346, 1
      %v348 = vadd.f32 %v346, %v347
      %v349 = vrot.slane %v240, 4
      %v350 = vadd.f32 %v240, %v349
      %v351 = vrot.slane %v350, 2
      %v352 = vadd.f32 %v350, %v351
      %v353 = vrot.slane %v352, 1
      %v354 = vadd.f32 %v352, %v353
      %v355 = vsel %vm154, %v241, 0.0
      %v356 = vrot.slane %v355, 4
      %v357 = vadd.f32 %v355, %v356
      %v358 = vrot.slane %v357, 2
      %v359 = vadd.f32 %v357, %v358
      %v360 = vrot.slane %v359, 1
      %v361 = vadd.f32 %v359, %v360
      %v362 = vrot.slane %v242, 4
      %v363 = vadd.f32 %v242, %v362
      %v364 = vrot.slane %v363, 2
      %v365 = vadd.f32 %v363, %v364
      %v366 = vrot.slane %v365, 1
      %v367 = vadd.f32 %v365, %v366
      %v368 = vsel %vm154, %v243, 0.0
      %v369 = vrot.slane %v368, 4
      %v370 = vadd.f32 %v368, %v369
      %v371 = vrot.slane %v370, 2
      %v372 = vadd.f32 %v370, %v371
      %v373 = vrot.slane %v372, 1
      %v374 = vadd.f32 %v372, %v373
      %v375 = vrot.slane %v244, 4
      %v376 = vadd.f32 %v244, %v375
      %v377 = vrot.slane %v376, 2
      %v378 = vadd.f32 %v376, %v377
      %v379 = vrot.slane %v378, 1
      %v380 = vadd.f32 %v378, %v379
      %v381 = vsel %vm154, %v245, 0.0
      %v382 = vrot.slane %v381, 4
      %v383 = vadd.f32 %v381, %v382
      %v384 = vrot.slane %v383, 2
      %v385 = vadd.f32 %v383, %v384
      %v386 = vrot.slane %v385, 1
      %v387 = vadd.f32 %v385, %v386
      %v388 = vrot.slane %v246, 4
      %v389 = vadd.f32 %v246, %v388
      %v390 = vrot.slane %v389, 2
      %v391 = vadd.f32 %v389, %v390
      %v392 = vrot.slane %v391, 1
      %v393 = vadd.f32 %v391, %v392
      %v394 = vsel %vm154, %v247, 0.0
      %v395 = vrot.slane %v394, 4
      %v396 = vadd.f32 %v394, %v395
      %v397 = vrot.slane %v396, 2
      %v398 = vadd.f32 %v396, %v397
      %v399 = vrot.slane %v398, 1
      %v400 = vadd.f32 %v398, %v399
      %v401 = vrot.slane %v248, 4
      %v402 = vadd.f32 %v248, %v401
      %v403 = vrot.slane %v402, 2
      %v404 = vadd.f32 %v402, %v403
      %v405 = vrot.slane %v404, 1
      %v406 = vadd.f32 %v404, %v405
      %v407 = vsel %vm154, %v249, 0.0
      %v408 = vrot.slane %v407, 4
      %v409 = vadd.f32 %v407, %v408
      %v410 = vrot.slane %v409, 2
      %v411 = vadd.f32 %v409, %v410
      %v412 = vrot.slane %v411, 1
      %v413 = vadd.f32 %v411, %v412
      %v414 = vrot.slane %v250, 4
      %v415 = vadd.f32 %v250, %v414
      %v416 = vrot.slane %v415, 2
      %v417 = vadd.f32 %v415, %v416
      %v418 = vrot.slane %v417, 1
      %v419 = vadd.f32 %v417, %v418
      %v420 = vsel %vm154, %v251, 0.0
      %v421 = vrot.slane %v420, 4
      %v422 = vadd.f32 %v420, %v421
      %v423 = vrot.slane %v422, 2
      %v424 = vadd.f32 %v422, %v423
      %v425 = vrot.slane %v424, 1
      %v426 = vadd.f32 %v424, %v425
      %v427 = vrot.slane %v252, 4
      %v428 = vadd.f32 %v252, %v427
      %v429 = vrot.slane %v428, 2
      %v430 = vadd.f32 %v428, %v429
      %v431 = vrot.slane %v430, 1
      %v432 = vadd.f32 %v430, %v431
      %v433 = vsel %vm154, %v253, 0.0
      %v434 = vrot.slane %v433, 4
      %v435 = vadd.f32 %v433, %v434
      %v436 = vrot.slane %v435, 2
      %v437 = vadd.f32 %v435, %v436
      %v438 = vrot.slane %v437, 1
      %v439 = vadd.f32 %v437, %v438
      %v440 = vrot.slane %v254, 4
      %v441 = vadd.f32 %v254, %v440
      %v442 = vrot.slane %v441, 2
      %v443 = vadd.f32 %v441, %v442
      %v444 = vrot.slane %v443, 1
      %v445 = vadd.f32 %v443, %v444
      %v446 = vsel %vm154, %v255, 0.0
      %v447 = vrot.slane %v446, 4
      %v448 = vadd.f32 %v446, %v447
      %v449 = vrot.slane %v448, 2
      %v450 = vadd.f32 %v448, %v449
      %v451 = vrot.slane %v450, 1
      %v452 = vadd.f32 %v450, %v451
      %v453 = vrot.slane %v256, 4
      %v454 = vadd.f32 %v256, %v453
      %v455 = vrot.slane %v454, 2
      %v456 = vadd.f32 %v454, %v455
      %v457 = vrot.slane %v456, 1
      %v458 = vadd.f32 %v456, %v457
      %v459 = vsel %vm154, %v257, 0.0
      %v460 = vrot.slane %v459, 4
      %v461 = vadd.f32 %v459, %v460
      %v462 = vrot.slane %v461, 2
      %v463 = vadd.f32 %v461, %v462
      %v464 = vrot.slane %v463, 1
      %v465 = vadd.f32 %v463, %v464
      %vm498 = vcmask 1041409
      %v499 = vsel %vm498, %v276, %v263
      %vm500 = vcmask 1042434
      %v501 = vsel %vm500, %v289, %v499
      %vm502 = vcmask 1043459
      %v503 = vsel %vm502, %v302, %v501
      %vm504 = vcmask 1044484
      %v505 = vsel %vm504, %v315, %v503
      %vm506 = vcmask 1045509
      %v507 = vsel %vm506, %v328, %v505
      %vm508 = vcmask 1046534
      %v509 = vsel %vm508, %v341, %v507
      %vm510 = vcmask 1047559
      %v511 = vsel %vm510, %v354, %v509
      %v512 = vsel %vm498, %v283, %v270
      %v513 = vsel %vm500, %v296, %v512
      %v514 = vsel %vm502, %v309, %v513
      %v515 = vsel %vm504, %v322, %v514
      %v516 = vsel %vm506, %v335, %v515
      %v517 = vsel %vm508, %v348, %v516
      %v518 = vsel %vm510, %v361, %v517
      %v519 = vsel %vm498, %v380, %v367
      %v520 = vsel %vm500, %v393, %v519
      %v521 = vsel %vm502, %v406, %v520
      %v522 = vsel %vm504, %v419, %v521
      %v523 = vsel %vm506, %v432, %v522
      %v524 = vsel %vm508, %v445, %v523
      %v525 = vsel %vm510, %v458, %v524
      %v526 = vsel %vm498, %v387, %v374
      %v527 = vsel %vm500, %v400, %v526
      %v528 = vsel %vm502, %v413, %v527
      %v529 = vsel %vm504, %v426, %v528
      %v530 = vsel %vm506, %v439, %v529
      %v531 = vsel %vm508, %v452, %v530
      %v532 = vsel %vm510, %v465, %v531
      %537 = vst [vmem:[#allocation2] sm:$0xff] %v511
      %538 = vst.msk [vmem:[#allocation2 + $0x8] sm:$0xff] %vm154, %v518
      %539 = vst [vmem:[#allocation2 + $0x10] sm:$0xff] %v525
      %540 = vst.msk [vmem:[#allocation2 + $0x18] sm:$0xff] %vm154, %v532
      %s541 = scalar_lea.vmem %s1, 256
      %v542 = vld [vmem:[%s541] sm:$0xff]
      %v543 = vld [vmem:[%s541 + $0x8] sm:$0xff]
      %v544 = vld [vmem:[%s541 + $0x10] sm:$0xff]
      %v545 = vld [vmem:[%s541 + $0x18] sm:$0xff]
      %v546 = vld [vmem:[%s541 + $0x20] sm:$0xff]
      %v547 = vld [vmem:[%s541 + $0x28] sm:$0xff]
      %v548 = vld [vmem:[%s541 + $0x30] sm:$0xff]
      %v549 = vld [vmem:[%s541 + $0x38] sm:$0xff]
      %v550 = vld [vmem:[%s541 + $0x40] sm:$0xff]
      %v551 = vld [vmem:[%s541 + $0x48] sm:$0xff]
      %v552 = vld [vmem:[%s541 + $0x50] sm:$0xff]
      %v553 = vld [vmem:[%s541 + $0x58] sm:$0xff]
      %v554 = vld [vmem:[%s541 + $0x60] sm:$0xff]
      %v555 = vld [vmem:[%s541 + $0x68] sm:$0xff]
      %v556 = vld [vmem:[%s541 + $0x70] sm:$0xff]
      %v557 = vld [vmem:[%s541 + $0x78] sm:$0xff]
      %v558 = vld [vmem:[%s541 + $0x80] sm:$0xff]
      %v559 = vld [vmem:[%s541 + $0x88] sm:$0xff]
      %v560 = vld [vmem:[%s541 + $0x90] sm:$0xff]
      %v561 = vld [vmem:[%s541 + $0x98] sm:$0xff]
      %v562 = vld [vmem:[%s541 + $0xa0] sm:$0xff]
      %v563 = vld [vmem:[%s541 + $0xa8] sm:$0xff]
      %v564 = vld [vmem:[%s541 + $0xb0] sm:$0xff]
      %v565 = vld [vmem:[%s541 + $0xb8] sm:$0xff]
      %v566 = vld [vmem:[%s541 + $0xc0] sm:$0xff]
      %v567 = vld [vmem:[%s541 + $0xc8] sm:$0xff]
      %v568 = vld [vmem:[%s541 + $0xd0] sm:$0xff]
      %v569 = vld [vmem:[%s541 + $0xd8] sm:$0xff]
      %v570 = vld [vmem:[%s541 + $0xe0] sm:$0xff]
      %v571 = vld [vmem:[%s541 + $0xe8] sm:$0xff]
      %v572 = vld [vmem:[%s541 + $0xf0] sm:$0xff]
      %v573 = vld [vmem:[%s541 + $0xf8] sm:$0xff]
      %v574 = vmul.f32 %v542, %v192
      %v575 = vmul.f32 %v543, %v193
      %v576 = vmul.f32 %v544, %v192
      %v577 = vmul.f32 %v545, %v193
      %v578 = vmul.f32 %v546, %v192
      %v579 = vmul.f32 %v547, %v193
      %v580 = vmul.f32 %v548, %v192
      %v581 = vmul.f32 %v549, %v193
      %v582 = vmul.f32 %v550, %v192
      %v583 = vmul.f32 %v551, %v193
      %v584 = vmul.f32 %v552, %v192
      %v585 = vmul.f32 %v553, %v193
      %v586 = vmul.f32 %v554, %v192
      %v587 = vmul.f32 %v555, %v193
      %v588 = vmul.f32 %v556, %v192
      %v589 = vmul.f32 %v557, %v193
      %v590 = vmul.f32 %v558, %v192
      %v591 = vmul.f32 %v559, %v193
      %v592 = vmul.f32 %v560, %v192
      %v593 = vmul.f32 %v561, %v193
      %v594 = vmul.f32 %v562, %v192
      %v595 = vmul.f32 %v563, %v193
      %v596 = vmul.f32 %v564, %v192
      %v597 = vmul.f32 %v565, %v193
      %v598 = vmul.f32 %v566, %v192
      %v599 = vmul.f32 %v567, %v193
      %v600 = vmul.f32 %v568, %v192
      %v601 = vmul.f32 %v569, %v193
      %v602 = vmul.f32 %v570, %v192
      %v603 = vmul.f32 %v571, %v193
      %v604 = vmul.f32 %v572, %v192
      %v605 = vmul.f32 %v573, %v193
      %v606 = vrot.slane %v574, 4
      %v607 = vadd.f32 %v574, %v606
      %v608 = vrot.slane %v607, 2
      %v609 = vadd.f32 %v607, %v608
      %v610 = vrot.slane %v609, 1
      %v611 = vadd.f32 %v609, %v610
      %v612 = vsel %vm154, %v575, 0.0
      %v613 = vrot.slane %v612, 4
      %v614 = vadd.f32 %v612, %v613
      %v615 = vrot.slane %v614, 2
      %v616 = vadd.f32 %v614, %v615
      %v617 = vrot.slane %v616, 1
      %v618 = vadd.f32 %v616, %v617
      %v619 = vrot.slane %v576, 4
      %v620 = vadd.f32 %v576, %v619
      %v621 = vrot.slane %v620, 2
      %v622 = vadd.f32 %v620, %v621
      %v623 = vrot.slane %v622, 1
      %v624 = vadd.f32 %v622, %v623
      %v625 = vsel %vm154, %v577, 0.0
      %v626 = vrot.slane %v625, 4
      %v627 = vadd.f32 %v625, %v626
      %v628 = vrot.slane %v627, 2
      %v629 = vadd.f32 %v627, %v628
      %v630 = vrot.slane %v629, 1
      %v631 = vadd.f32 %v629, %v630
      %v632 = vrot.slane %v578, 4
      %v633 = vadd.f32 %v578, %v632
      %v634 = vrot.slane %v633, 2
      %v635 = vadd.f32 %v633, %v634
      %v636 = vrot.slane %v635, 1
      %v637 = vadd.f32 %v635, %v636
      %v638 = vsel %vm154, %v579, 0.0
      %v639 = vrot.slane %v638, 4
      %v640 = vadd.f32 %v638, %v639
      %v641 = vrot.slane %v640, 2
      %v642 = vadd.f32 %v640, %v641
      %v643 = vrot.slane %v642, 1
      %v644 = vadd.f32 %v642, %v643
      %v645 = vrot.slane %v580, 4
      %v646 = vadd.f32 %v580, %v645
      %v647 = vrot.slane %v646, 2
      %v648 = vadd.f32 %v646, %v647
      %v649 = vrot.slane %v648, 1
      %v650 = vadd.f32 %v648, %v649
      %v651 = vsel %vm154, %v581, 0.0
      %v652 = vrot.slane %v651, 4
      %v653 = vadd.f32 %v651, %v652
      %v654 = vrot.slane %v653, 2
      %v655 = vadd.f32 %v653, %v654
      %v656 = vrot.slane %v655, 1
      %v657 = vadd.f32 %v655, %v656
      %v658 = vrot.slane %v582, 4
      %v659 = vadd.f32 %v582, %v658
      %v660 = vrot.slane %v659, 2
      %v661 = vadd.f32 %v659, %v660
      %v662 = vrot.slane %v661, 1
      %v663 = vadd.f32 %v661, %v662
      %v664 = vsel %vm154, %v583, 0.0
      %v665 = vrot.slane %v664, 4
      %v666 = vadd.f32 %v664, %v665
      %v667 = vrot.slane %v666, 2
      %v668 = vadd.f32 %v666, %v667
      %v669 = vrot.slane %v668, 1
      %v670 = vadd.f32 %v668, %v669
      %v671 = vrot.slane %v584, 4
      %v672 = vadd.f32 %v584, %v671
      %v673 = vrot.slane %v672, 2
      %v674 = vadd.f32 %v672, %v673
      %v675 = vrot.slane %v674, 1
      %v676 = vadd.f32 %v674, %v675
      %v677 = vsel %vm154, %v585, 0.0
      %v678 = vrot.slane %v677, 4
      %v679 = vadd.f32 %v677, %v678
      %v680 = vrot.slane %v679, 2
      %v681 = vadd.f32 %v679, %v680
      %v682 = vrot.slane %v681, 1
      %v683 = vadd.f32 %v681, %v682
      %v684 = vrot.slane %v586, 4
      %v685 = vadd.f32 %v586, %v684
      %v686 = vrot.slane %v685, 2
      %v687 = vadd.f32 %v685, %v686
      %v688 = vrot.slane %v687, 1
      %v689 = vadd.f32 %v687, %v688
      %v690 = vsel %vm154, %v587, 0.0
      %v691 = vrot.slane %v690, 4
      %v692 = vadd.f32 %v690, %v691
      %v693 = vrot.slane %v692, 2
      %v694 = vadd.f32 %v692, %v693
      %v695 = vrot.slane %v694, 1
      %v696 = vadd.f32 %v694, %v695
      %v697 = vrot.slane %v588, 4
      %v698 = vadd.f32 %v588, %v697
      %v699 = vrot.slane %v698, 2
      %v700 = vadd.f32 %v698, %v699
      %v701 = vrot.slane %v700, 1
      %v702 = vadd.f32 %v700, %v701
      %v703 = vsel %vm154, %v589, 0.0
      %v704 = vrot.slane %v703, 4
      %v705 = vadd.f32 %v703, %v704
      %v706 = vrot.slane %v705, 2
      %v707 = vadd.f32 %v705, %v706
      %v708 = vrot.slane %v707, 1
      %v709 = vadd.f32 %v707, %v708
      %v710 = vrot.slane %v590, 4
      %v711 = vadd.f32 %v590, %v710
      %v712 = vrot.slane %v711, 2
      %v713 = vadd.f32 %v711, %v712
      %v714 = vrot.slane %v713, 1
      %v715 = vadd.f32 %v713, %v714
      %v716 = vsel %vm154, %v591, 0.0
      %v717 = vrot.slane %v716, 4
      %v718 = vadd.f32 %v716, %v717
      %v719 = vrot.slane %v718, 2
      %v720 = vadd.f32 %v718, %v719
      %v721 = vrot.slane %v720, 1
      %v722 = vadd.f32 %v720, %v721
      %v723 = vrot.slane %v592, 4
      %v724 = vadd.f32 %v592, %v723
      %v725 = vrot.slane %v724, 2
      %v726 = vadd.f32 %v724, %v725
      %v727 = vrot.slane %v726, 1
      %v728 = vadd.f32 %v726, %v727
      %v729 = vsel %vm154, %v593, 0.0
      %v730 = vrot.slane %v729, 4
      %v731 = vadd.f32 %v729, %v730
      %v732 = vrot.slane %v731, 2
      %v733 = vadd.f32 %v731, %v732
      %v734 = vrot.slane %v733, 1
      %v735 = vadd.f32 %v733, %v734
      %v736 = vrot.slane %v594, 4
      %v737 = vadd.f32 %v594, %v736
      %v738 = vrot.slane %v737, 2
      %v739 = vadd.f32 %v737, %v738
      %v740 = vrot.slane %v739, 1
      %v741 = vadd.f32 %v739, %v740
      %v742 = vsel %vm154, %v595, 0.0
      %v743 = vrot.slane %v742, 4
      %v744 = vadd.f32 %v742, %v743
      %v745 = vrot.slane %v744, 2
      %v746 = vadd.f32 %v744, %v745
      %v747 = vrot.slane %v746, 1
      %v748 = vadd.f32 %v746, %v747
      %v749 = vrot.slane %v596, 4
      %v750 = vadd.f32 %v596, %v749
      %v751 = vrot.slane %v750, 2
      %v752 = vadd.f32 %v750, %v751
      %v753 = vrot.slane %v752, 1
      %v754 = vadd.f32 %v752, %v753
      %v755 = vsel %vm154, %v597, 0.0
      %v756 = vrot.slane %v755, 4
      %v757 = vadd.f32 %v755, %v756
      %v758 = vrot.slane %v757, 2
      %v759 = vadd.f32 %v757, %v758
      %v760 = vrot.slane %v759, 1
      %v761 = vadd.f32 %v759, %v760
      %v762 = vrot.slane %v598, 4
      %v763 = vadd.f32 %v598, %v762
      %v764 = vrot.slane %v763, 2
      %v765 = vadd.f32 %v763, %v764
      %v766 = vrot.slane %v765, 1
      %v767 = vadd.f32 %v765, %v766
      %v768 = vsel %vm154, %v599, 0.0
      %v769 = vrot.slane %v768, 4
      %v770 = vadd.f32 %v768, %v769
      %v771 = vrot.slane %v770, 2
      %v772 = vadd.f32 %v770, %v771
      %v773 = vrot.slane %v772, 1
      %v774 = vadd.f32 %v772, %v773
      %v775 = vrot.slane %v600, 4
      %v776 = vadd.f32 %v600, %v775
      %v777 = vrot.slane %v776, 2
      %v778 = vadd.f32 %v776, %v777
      %v779 = vrot.slane %v778, 1
      %v780 = vadd.f32 %v778, %v779
      %v781 = vsel %vm154, %v601, 0.0
      %v782 = vrot.slane %v781, 4
      %v783 = vadd.f32 %v781, %v782
      %v784 = vrot.slane %v783, 2
      %v785 = vadd.f32 %v783, %v784
      %v786 = vrot.slane %v785, 1
      %v787 = vadd.f32 %v785, %v786
      %v788 = vrot.slane %v602, 4
      %v789 = vadd.f32 %v602, %v788
      %v790 = vrot.slane %v789, 2
      %v791 = vadd.f32 %v789, %v790
      %v792 = vrot.slane %v791, 1
      %v793 = vadd.f32 %v791, %v792
      %v794 = vsel %vm154, %v603, 0.0
      %v795 = vrot.slane %v794, 4
      %v796 = vadd.f32 %v794, %v795
      %v797 = vrot.slane %v796, 2
      %v798 = vadd.f32 %v796, %v797
      %v799 = vrot.slane %v798, 1
      %v800 = vadd.f32 %v798, %v799
      %v801 = vrot.slane %v604, 4
      %v802 = vadd.f32 %v604, %v801
      %v803 = vrot.slane %v802, 2
      %v804 = vadd.f32 %v802, %v803
      %v805 = vrot.slane %v804, 1
      %v806 = vadd.f32 %v804, %v805
      %v807 = vsel %vm154, %v605, 0.0
      %v808 = vrot.slane %v807, 4
      %v809 = vadd.f32 %v807, %v808
      %v810 = vrot.slane %v809, 2
      %v811 = vadd.f32 %v809, %v810
      %v812 = vrot.slane %v811, 1
      %v813 = vadd.f32 %v811, %v812
      %v846 = vsel %vm498, %v624, %v611
      %v847 = vsel %vm500, %v637, %v846
      %v848 = vsel %vm502, %v650, %v847
      %v849 = vsel %vm504, %v663, %v848
      %v850 = vsel %vm506, %v676, %v849
      %v851 = vsel %vm508, %v689, %v850
      %v852 = vsel %vm510, %v702, %v851
      %v853 = vsel %vm498, %v631, %v618
      %v854 = vsel %vm500, %v644, %v853
      %v855 = vsel %vm502, %v657, %v854
      %v856 = vsel %vm504, %v670, %v855
      %v857 = vsel %vm506, %v683, %v856
      %v858 = vsel %vm508, %v696, %v857
      %v859 = vsel %vm510, %v709, %v858
      %v860 = vsel %vm498, %v728, %v715
      %v861 = vsel %vm500, %v741, %v860
      %v862 = vsel %vm502, %v754, %v861
      %v863 = vsel %vm504, %v767, %v862
      %v864 = vsel %vm506, %v780, %v863
      %v865 = vsel %vm508, %v793, %v864
      %v866 = vsel %vm510, %v806, %v865
      %v867 = vsel %vm498, %v735, %v722
      %v868 = vsel %vm500, %v748, %v867
      %v869 = vsel %vm502, %v761, %v868
      %v870 = vsel %vm504, %v774, %v869
      %v871 = vsel %vm506, %v787, %v870
      %v872 = vsel %vm508, %v800, %v871
      %v873 = vsel %vm510, %v813, %v872
      %s878 = scalar_lea.vmem [#allocation2], 32
      %879 = vst [vmem:[%s878] sm:$0xff] %v852
      %880 = vst.msk [vmem:[%s878 + $0x8] sm:$0xff] %vm154, %v859
      %881 = vst [vmem:[%s878 + $0x10] sm:$0xff] %v866
      %882 = vst.msk [vmem:[%s878 + $0x18] sm:$0xff] %vm154, %v873
      %s883 = scalar_lea.vmem %s1, 512
      %v884 = vld [vmem:[%s883] sm:$0xff]
      %v885 = vld [vmem:[%s883 + $0x8] sm:$0xff]
      %v886 = vld [vmem:[%s883 + $0x10] sm:$0xff]
      %v887 = vld [vmem:[%s883 + $0x18] sm:$0xff]
      %v888 = vld [vmem:[%s883 + $0x20] sm:$0xff]
      %v889 = vld [vmem:[%s883 + $0x28] sm:$0xff]
      %v890 = vld [vmem:[%s883 + $0x30] sm:$0xff]
      %v891 = vld [vmem:[%s883 + $0x38] sm:$0xff]
      %v892 = vld [vmem:[%s883 + $0x40] sm:$0xff]
      %v893 = vld [vmem:[%s883 + $0x48] sm:$0xff]
      %v894 = vld [vmem:[%s883 + $0x50] sm:$0xff]
      %v895 = vld [vmem:[%s883 + $0x58] sm:$0xff]
      %v896 = vld [vmem:[%s883 + $0x60] sm:$0xff]
      %v897 = vld [vmem:[%s883 + $0x68] sm:$0xff]
      %v898 = vld [vmem:[%s883 + $0x70] sm:$0xff]
      %v899 = vld [vmem:[%s883 + $0x78] sm:$0xff]
      %v900 = vld [vmem:[%s883 + $0x80] sm:$0xff]
      %v901 = vld [vmem:[%s883 + $0x88] sm:$0xff]
      %v902 = vld [vmem:[%s883 + $0x90] sm:$0xff]
      %v903 = vld [vmem:[%s883 + $0x98] sm:$0xff]
      %v904 = vld [vmem:[%s883 + $0xa0] sm:$0xff]
      %v905 = vld [vmem:[%s883 + $0xa8] sm:$0xff]
      %v906 = vld [vmem:[%s883 + $0xb0] sm:$0xff]
      %v907 = vld [vmem:[%s883 + $0xb8] sm:$0xff]
      %v908 = vld [vmem:[%s883 + $0xc0] sm:$0xff]
      %v909 = vld [vmem:[%s883 + $0xc8] sm:$0xff]
      %v910 = vld [vmem:[%s883 + $0xd0] sm:$0xff]
      %v911 = vld [vmem:[%s883 + $0xd8] sm:$0xff]
      %v912 = vld [vmem:[%s883 + $0xe0] sm:$0xff]
      %v913 = vld [vmem:[%s883 + $0xe8] sm:$0xff]
      %v914 = vld [vmem:[%s883 + $0xf0] sm:$0xff]
      %v915 = vld [vmem:[%s883 + $0xf8] sm:$0xff]
      %v916 = vmul.f32 %v884, %v192
      %v917 = vmul.f32 %v885, %v193
      %v918 = vmul.f32 %v886, %v192
      %v919 = vmul.f32 %v887, %v193
      %v920 = vmul.f32 %v888, %v192
      %v921 = vmul.f32 %v889, %v193
      %v922 = vmul.f32 %v890, %v192
      %v923 = vmul.f32 %v891, %v193
      %v924 = vmul.f32 %v892, %v192
      %v925 = vmul.f32 %v893, %v193
      %v926 = vmul.f32 %v894, %v192
      %v927 = vmul.f32 %v895, %v193
      %v928 = vmul.f32 %v896, %v192
      %v929 = vmul.f32 %v897, %v193
      %v930 = vmul.f32 %v898, %v192
      %v931 = vmul.f32 %v899, %v193
      %v932 = vmul.f32 %v900, %v192
      %v933 = vmul.f32 %v901, %v193
      %v934 = vmul.f32 %v902, %v192
      %v935 = vmul.f32 %v903, %v193
      %v936 = vmul.f32 %v904, %v192
      %v937 = vmul.f32 %v905, %v193
      %v938 = vmul.f32 %v906, %v192
      %v939 = vmul.f32 %v907, %v193
      %v940 = vmul.f32 %v908, %v192
      %v941 = vmul.f32 %v909, %v193
      %v942 = vmul.f32 %v910, %v192
      %v943 = vmul.f32 %v911, %v193
      %v944 = vmul.f32 %v912, %v192
      %v945 = vmul.f32 %v913, %v193
      %v946 = vmul.f32 %v914, %v192
      %v947 = vmul.f32 %v915, %v193
      %v948 = vrot.slane %v916, 4
      %v949 = vadd.f32 %v916, %v948
      %v950 = vrot.slane %v949, 2
      %v951 = vadd.f32 %v949, %v950
      %v952 = vrot.slane %v951, 1
      %v953 = vadd.f32 %v951, %v952
      %v954 = vsel %vm154, %v917, 0.0
      %v955 = vrot.slane %v954, 4
      %v956 = vadd.f32 %v954, %v955
      %v957 = vrot.slane %v956, 2
      %v958 = vadd.f32 %v956, %v957
      %v959 = vrot.slane %v958, 1
      %v960 = vadd.f32 %v958, %v959
      %v961 = vrot.slane %v918, 4
      %v962 = vadd.f32 %v918, %v961
      %v963 = vrot.slane %v962, 2
      %v964 = vadd.f32 %v962, %v963
      %v965 = vrot.slane %v964, 1
      %v966 = vadd.f32 %v964, %v965
      %v967 = vsel %vm154, %v919, 0.0
      %v968 = vrot.slane %v967, 4
      %v969 = vadd.f32 %v967, %v968
      %v970 = vrot.slane %v969, 2
      %v971 = vadd.f32 %v969, %v970
      %v972 = vrot.slane %v971, 1
      %v973 = vadd.f32 %v971, %v972
      %v974 = vrot.slane %v920, 4
      %v975 = vadd.f32 %v920, %v974
      %v976 = vrot.slane %v975, 2
      %v977 = vadd.f32 %v975, %v976
      %v978 = vrot.slane %v977, 1
      %v979 = vadd.f32 %v977, %v978
      %v980 = vsel %vm154, %v921, 0.0
      %v981 = vrot.slane %v980, 4
      %v982 = vadd.f32 %v980, %v981
      %v983 = vrot.slane %v982, 2
      %v984 = vadd.f32 %v982, %v983
      %v985 = vrot.slane %v984, 1
      %v986 = vadd.f32 %v984, %v985
      %v987 = vrot.slane %v922, 4
      %v988 = vadd.f32 %v922, %v987
      %v989 = vrot.slane %v988, 2
      %v990 = vadd.f32 %v988, %v989
      %v991 = vrot.slane %v990, 1
      %v992 = vadd.f32 %v990, %v991
      %v993 = vsel %vm154, %v923, 0.0
      %v994 = vrot.slane %v993, 4
      %v995 = vadd.f32 %v993, %v994
      %v996 = vrot.slane %v995, 2
      %v997 = vadd.f32 %v995, %v996
      %v998 = vrot.slane %v997, 1
      %v999 = vadd.f32 %v997, %v998
      %v1000 = vrot.slane %v924, 4
      %v1001 = vadd.f32 %v924, %v1000
      %v1002 = vrot.slane %v1001, 2
      %v1003 = vadd.f32 %v1001, %v1002
      %v1004 = vrot.slane %v1003, 1
      %v1005 = vadd.f32 %v1003, %v1004
      %v1006 = vsel %vm154, %v925, 0.0
      %v1007 = vrot.slane %v1006, 4
      %v1008 = vadd.f32 %v1006, %v1007
      %v1009 = vrot.slane %v1008, 2
      %v1010 = vadd.f32 %v1008, %v1009
      %v1011 = vrot.slane %v1010, 1
      %v1012 = vadd.f32 %v1010, %v1011
      %v1013 = vrot.slane %v926, 4
      %v1014 = vadd.f32 %v926, %v1013
      %v1015 = vrot.slane %v1014, 2
      %v1016 = vadd.f32 %v1014, %v1015
      %v1017 = vrot.slane %v1016, 1
      %v1018 = vadd.f32 %v1016, %v1017
      %v1019 = vsel %vm154, %v927, 0.0
      %v1020 = vrot.slane %v1019, 4
      %v1021 = vadd.f32 %v1019, %v1020
      %v1022 = vrot.slane %v1021, 2
      %v1023 = vadd.f32 %v1021, %v1022
      %v1024 = vrot.slane %v1023, 1
      %v1025 = vadd.f32 %v1023, %v1024
      %v1026 = vrot.slane %v928, 4
      %v1027 = vadd.f32 %v928, %v1026
      %v1028 = vrot.slane %v1027, 2
      %v1029 = vadd.f32 %v1027, %v1028
      %v1030 = vrot.slane %v1029, 1
      %v1031 = vadd.f32 %v1029, %v1030
      %v1032 = vsel %vm154, %v929, 0.0
      %v1033 = vrot.slane %v1032, 4
      %v1034 = vadd.f32 %v1032, %v1033
      %v1035 = vrot.slane %v1034, 2
      %v1036 = vadd.f32 %v1034, %v1035
      %v1037 = vrot.slane %v1036, 1
      %v1038 = vadd.f32 %v1036, %v1037
      %v1039 = vrot.slane %v930, 4
      %v1040 = vadd.f32 %v930, %v1039
      %v1041 = vrot.slane %v1040, 2
      %v1042 = vadd.f32 %v1040, %v1041
      %v1043 = vrot.slane %v1042, 1
      %v1044 = vadd.f32 %v1042, %v1043
      %v1045 = vsel %vm154, %v931, 0.0
      %v1046 = vrot.slane %v1045, 4
      %v1047 = vadd.f32 %v1045, %v1046
      %v1048 = vrot.slane %v1047, 2
      %v1049 = vadd.f32 %v1047, %v1048
      %v1050 = vrot.slane %v1049, 1
      %v1051 = vadd.f32 %v1049, %v1050
      %v1052 = vrot.slane %v932, 4
      %v1053 = vadd.f32 %v932, %v1052
      %v1054 = vrot.slane %v1053, 2
      %v1055 = vadd.f32 %v1053, %v1054
      %v1056 = vrot.slane %v1055, 1
      %v1057 = vadd.f32 %v1055, %v1056
      %v1058 = vsel %vm154, %v933, 0.0
      %v1059 = vrot.slane %v1058, 4
      %v1060 = vadd.f32 %v1058, %v1059
      %v1061 = vrot.slane %v1060, 2
      %v1062 = vadd.f32 %v1060, %v1061
      %v1063 = vrot.slane %v1062, 1
      %v1064 = vadd.f32 %v1062, %v1063
      %v1065 = vrot.slane %v934, 4
      %v1066 = vadd.f32 %v934, %v1065
      %v1067 = vrot.slane %v1066, 2
      %v1068 = vadd.f32 %v1066, %v1067
      %v1069 = vrot.slane %v1068, 1
      %v1070 = vadd.f32 %v1068, %v1069
      %v1071 = vsel %vm154, %v935, 0.0
      %v1072 = vrot.slane %v1071, 4
      %v1073 = vadd.f32 %v1071, %v1072
      %v1074 = vrot.slane %v1073, 2
      %v1075 = vadd.f32 %v1073, %v1074
      %v1076 = vrot.slane %v1075, 1
      %v1077 = vadd.f32 %v1075, %v1076
      %v1078 = vrot.slane %v936, 4
      %v1079 = vadd.f32 %v936, %v1078
      %v1080 = vrot.slane %v1079, 2
      %v1081 = vadd.f32 %v1079, %v1080
      %v1082 = vrot.slane %v1081, 1
      %v1083 = vadd.f32 %v1081, %v1082
      %v1084 = vsel %vm154, %v937, 0.0
      %v1085 = vrot.slane %v1084, 4
      %v1086 = vadd.f32 %v1084, %v1085
      %v1087 = vrot.slane %v1086, 2
      %v1088 = vadd.f32 %v1086, %v1087
      %v1089 = vrot.slane %v1088, 1
      %v1090 = vadd.f32 %v1088, %v1089
      %v1091 = vrot.slane %v938, 4
      %v1092 = vadd.f32 %v938, %v1091
      %v1093 = vrot.slane %v1092, 2
      %v1094 = vadd.f32 %v1092, %v1093
      %v1095 = vrot.slane %v1094, 1
      %v1096 = vadd.f32 %v1094, %v1095
      %v1097 = vsel %vm154, %v939, 0.0
      %v1098 = vrot.slane %v1097, 4
      %v1099 = vadd.f32 %v1097, %v1098
      %v1100 = vrot.slane %v1099, 2
      %v1101 = vadd.f32 %v1099, %v1100
      %v1102 = vrot.slane %v1101, 1
      %v1103 = vadd.f32 %v1101, %v1102
      %v1104 = vrot.slane %v940, 4
      %v1105 = vadd.f32 %v940, %v1104
      %v1106 = vrot.slane %v1105, 2
      %v1107 = vadd.f32 %v1105, %v1106
      %v1108 = vrot.slane %v1107, 1
      %v1109 = vadd.f32 %v1107, %v1108
      %v1110 = vsel %vm154, %v941, 0.0
      %v1111 = vrot.slane %v1110, 4
      %v1112 = vadd.f32 %v1110, %v1111
      %v1113 = vrot.slane %v1112, 2
      %v1114 = vadd.f32 %v1112, %v1113
      %v1115 = vrot.slane %v1114, 1
      %v1116 = vadd.f32 %v1114, %v1115
      %v1117 = vrot.slane %v942, 4
      %v1118 = vadd.f32 %v942, %v1117
      %v1119 = vrot.slane %v1118, 2
      %v1120 = vadd.f32 %v1118, %v1119
      %v1121 = vrot.slane %v1120, 1
      %v1122 = vadd.f32 %v1120, %v1121
      %v1123 = vsel %vm154, %v943, 0.0
      %v1124 = vrot.slane %v1123, 4
      %v1125 = vadd.f32 %v1123, %v1124
      %v1126 = vrot.slane %v1125, 2
      %v1127 = vadd.f32 %v1125, %v1126
      %v1128 = vrot.slane %v1127, 1
      %v1129 = vadd.f32 %v1127, %v1128
      %v1130 = vrot.slane %v944, 4
      %v1131 = vadd.f32 %v944, %v1130
      %v1132 = vrot.slane %v1131, 2
      %v1133 = vadd.f32 %v1131, %v1132
      %v1134 = vrot.slane %v1133, 1
      %v1135 = vadd.f32 %v1133, %v1134
      %v1136 = vsel %vm154, %v945, 0.0
      %v1137 = vrot.slane %v1136, 4
      %v1138 = vadd.f32 %v1136, %v1137
      %v1139 = vrot.slane %v1138, 2
      %v1140 = vadd.f32 %v1138, %v1139
      %v1141 = vrot.slane %v1140, 1
      %v1142 = vadd.f32 %v1140, %v1141
      %v1143 = vrot.slane %v946, 4
      %v1144 = vadd.f32 %v946, %v1143
      %v1145 = vrot.slane %v1144, 2
      %v1146 = vadd.f32 %v1144, %v1145
      %v1147 = vrot.slane %v1146, 1
      %v1148 = vadd.f32 %v1146, %v1147
      %v1149 = vsel %vm154, %v947, 0.0
      %v1150 = vrot.slane %v1149, 4
      %v1151 = vadd.f32 %v1149, %v1150
      %v1152 = vrot.slane %v1151, 2
      %v1153 = vadd.f32 %v1151, %v1152
      %v1154 = vrot.slane %v1153, 1
      %v1155 = vadd.f32 %v1153, %v1154
      %v1188 = vsel %vm498, %v966, %v953
      %v1189 = vsel %vm500, %v979, %v1188
      %v1190 = vsel %vm502, %v992, %v1189
      %v1191 = vsel %vm504, %v1005, %v1190
      %v1192 = vsel %vm506, %v1018, %v1191
      %v1193 = vsel %vm508, %v1031, %v1192
      %v1194 = vsel %vm510, %v1044, %v1193
      %v1195 = vsel %vm498, %v973, %v960
      %v1196 = vsel %vm500, %v986, %v1195
      %v1197 = vsel %vm502, %v999, %v1196
      %v1198 = vsel %vm504, %v1012, %v1197
      %v1199 = vsel %vm506, %v1025, %v1198
      %v1200 = vsel %vm508, %v1038, %v1199
      %v1201 = vsel %vm510, %v1051, %v1200
      %v1202 = vsel %vm498, %v1070, %v1057
      %v1203 = vsel %vm500, %v1083, %v1202
      %v1204 = vsel %vm502, %v1096, %v1203
      %v1205 = vsel %vm504, %v1109, %v1204
      %v1206 = vsel %vm506, %v1122, %v1205
      %v1207 = vsel %vm508, %v1135, %v1206
      %v1208 = vsel %vm510, %v1148, %v1207
      %v1209 = vsel %vm498, %v1077, %v1064
      %v1210 = vsel %vm500, %v1090, %v1209
      %v1211 = vsel %vm502, %v1103, %v1210
      %v1212 = vsel %vm504, %v1116, %v1211
      %v1213 = vsel %vm506, %v1129, %v1212
      %v1214 = vsel %vm508, %v1142, %v1213
      %v1215 = vsel %vm510, %v1155, %v1214
      %s1220 = scalar_lea.vmem [#allocation2], 64
      %1221 = vst [vmem:[%s1220] sm:$0xff] %v1194
      %1222 = vst.msk [vmem:[%s1220 + $0x8] sm:$0xff] %vm154, %v1201
      %1223 = vst [vmem:[%s1220 + $0x10] sm:$0xff] %v1208
      %1224 = vst.msk [vmem:[%s1220 + $0x18] sm:$0xff] %vm154, %v1215
      %s1225 = scalar_lea.vmem %s1, 768
      %v1226 = vld [vmem:[%s1225] sm:$0xff]
      %v1227 = vld [vmem:[%s1225 + $0x8] sm:$0xff]
      %v1228 = vld [vmem:[%s1225 + $0x10] sm:$0xff]
      %v1229 = vld [vmem:[%s1225 + $0x18] sm:$0xff]
      %v1230 = vld [vmem:[%s1225 + $0x20] sm:$0xff]
      %v1231 = vld [vmem:[%s1225 + $0x28] sm:$0xff]
      %v1232 = vld [vmem:[%s1225 + $0x30] sm:$0xff]
      %v1233 = vld [vmem:[%s1225 + $0x38] sm:$0xff]
      %v1234 = vld [vmem:[%s1225 + $0x40] sm:$0xff]
      %v1235 = vld [vmem:[%s1225 + $0x48] sm:$0xff]
      %v1236 = vld [vmem:[%s1225 + $0x50] sm:$0xff]
      %v1237 = vld [vmem:[%s1225 + $0x58] sm:$0xff]
      %v1238 = vld [vmem:[%s1225 + $0x60] sm:$0xff]
      %v1239 = vld [vmem:[%s1225 + $0x68] sm:$0xff]
      %v1240 = vld [vmem:[%s1225 + $0x70] sm:$0xff]
      %v1241 = vld [vmem:[%s1225 + $0x78] sm:$0xff]
      %v1242 = vld [vmem:[%s1225 + $0x80] sm:$0xff]
      %v1243 = vld [vmem:[%s1225 + $0x88] sm:$0xff]
      %v1244 = vld [vmem:[%s1225 + $0x90] sm:$0xff]
      %v1245 = vld [vmem:[%s1225 + $0x98] sm:$0xff]
      %v1246 = vld [vmem:[%s1225 + $0xa0] sm:$0xff]
      %v1247 = vld [vmem:[%s1225 + $0xa8] sm:$0xff]
      %v1248 = vld [vmem:[%s1225 + $0xb0] sm:$0xff]
      %v1249 = vld [vmem:[%s1225 + $0xb8] sm:$0xff]
      %v1250 = vld [vmem:[%s1225 + $0xc0] sm:$0xff]
      %v1251 = vld [vmem:[%s1225 + $0xc8] sm:$0xff]
      %v1252 = vld [vmem:[%s1225 + $0xd0] sm:$0xff]
      %v1253 = vld [vmem:[%s1225 + $0xd8] sm:$0xff]
      %v1254 = vld [vmem:[%s1225 + $0xe0] sm:$0xff]
      %v1255 = vld [vmem:[%s1225 + $0xe8] sm:$0xff]
      %v1256 = vld [vmem:[%s1225 + $0xf0] sm:$0xff]
      %v1257 = vld [vmem:[%s1225 + $0xf8] sm:$0xff]
      %v1258 = vmul.f32 %v1226, %v192
      %v1259 = vmul.f32 %v1227, %v193
      %v1260 = vmul.f32 %v1228, %v192
      %v1261 = vmul.f32 %v1229, %v193
      %v1262 = vmul.f32 %v1230, %v192
      %v1263 = vmul.f32 %v1231, %v193
      %v1264 = vmul.f32 %v1232, %v192
      %v1265 = vmul.f32 %v1233, %v193
      %v1266 = vmul.f32 %v1234, %v192
      %v1267 = vmul.f32 %v1235, %v193
      %v1268 = vmul.f32 %v1236, %v192
      %v1269 = vmul.f32 %v1237, %v193
      %v1270 = vmul.f32 %v1238, %v192
      %v1271 = vmul.f32 %v1239, %v193
      %v1272 = vmul.f32 %v1240, %v192
      %v1273 = vmul.f32 %v1241, %v193
      %v1274 = vmul.f32 %v1242, %v192
      %v1275 = vmul.f32 %v1243, %v193
      %v1276 = vmul.f32 %v1244, %v192
      %v1277 = vmul.f32 %v1245, %v193
      %v1278 = vmul.f32 %v1246, %v192
      %v1279 = vmul.f32 %v1247, %v193
      %v1280 = vmul.f32 %v1248, %v192
      %v1281 = vmul.f32 %v1249, %v193
      %v1282 = vmul.f32 %v1250, %v192
      %v1283 = vmul.f32 %v1251, %v193
      %v1284 = vmul.f32 %v1252, %v192
      %v1285 = vmul.f32 %v1253, %v193
      %v1286 = vmul.f32 %v1254, %v192
      %v1287 = vmul.f32 %v1255, %v193
      %v1288 = vmul.f32 %v1256, %v192
      %v1289 = vmul.f32 %v1257, %v193
      %v1290 = vrot.slane %v1258, 4
      %v1291 = vadd.f32 %v1258, %v1290
      %v1292 = vrot.slane %v1291, 2
      %v1293 = vadd.f32 %v1291, %v1292
      %v1294 = vrot.slane %v1293, 1
      %v1295 = vadd.f32 %v1293, %v1294
      %v1296 = vsel %vm154, %v1259, 0.0
      %v1297 = vrot.slane %v1296, 4
      %v1298 = vadd.f32 %v1296, %v1297
      %v1299 = vrot.slane %v1298, 2
      %v1300 = vadd.f32 %v1298, %v1299
      %v1301 = vrot.slane %v1300, 1
      %v1302 = vadd.f32 %v1300, %v1301
      %v1303 = vrot.slane %v1260, 4
      %v1304 = vadd.f32 %v1260, %v1303
      %v1305 = vrot.slane %v1304, 2
      %v1306 = vadd.f32 %v1304, %v1305
      %v1307 = vrot.slane %v1306, 1
      %v1308 = vadd.f32 %v1306, %v1307
      %v1309 = vsel %vm154, %v1261, 0.0
      %v1310 = vrot.slane %v1309, 4
      %v1311 = vadd.f32 %v1309, %v1310
      %v1312 = vrot.slane %v1311, 2
      %v1313 = vadd.f32 %v1311, %v1312
      %v1314 = vrot.slane %v1313, 1
      %v1315 = vadd.f32 %v1313, %v1314
      %v1316 = vrot.slane %v1262, 4
      %v1317 = vadd.f32 %v1262, %v1316
      %v1318 = vrot.slane %v1317, 2
      %v1319 = vadd.f32 %v1317, %v1318
      %v1320 = vrot.slane %v1319, 1
      %v1321 = vadd.f32 %v1319, %v1320
      %v1322 = vsel %vm154, %v1263, 0.0
      %v1323 = vrot.slane %v1322, 4
      %v1324 = vadd.f32 %v1322, %v1323
      %v1325 = vrot.slane %v1324, 2
      %v1326 = vadd.f32 %v1324, %v1325
      %v1327 = vrot.slane %v1326, 1
      %v1328 = vadd.f32 %v1326, %v1327
      %v1329 = vrot.slane %v1264, 4
      %v1330 = vadd.f32 %v1264, %v1329
      %v1331 = vrot.slane %v1330, 2
      %v1332 = vadd.f32 %v1330, %v1331
      %v1333 = vrot.slane %v1332, 1
      %v1334 = vadd.f32 %v1332, %v1333
      %v1335 = vsel %vm154, %v1265, 0.0
      %v1336 = vrot.slane %v1335, 4
      %v1337 = vadd.f32 %v1335, %v1336
      %v1338 = vrot.slane %v1337, 2
      %v1339 = vadd.f32 %v1337, %v1338
      %v1340 = vrot.slane %v1339, 1
      %v1341 = vadd.f32 %v1339, %v1340
      %v1342 = vrot.slane %v1266, 4
      %v1343 = vadd.f32 %v1266, %v1342
      %v1344 = vrot.slane %v1343, 2
      %v1345 = vadd.f32 %v1343, %v1344
      %v1346 = vrot.slane %v1345, 1
      %v1347 = vadd.f32 %v1345, %v1346
      %v1348 = vsel %vm154, %v1267, 0.0
      %v1349 = vrot.slane %v1348, 4
      %v1350 = vadd.f32 %v1348, %v1349
      %v1351 = vrot.slane %v1350, 2
      %v1352 = vadd.f32 %v1350, %v1351
      %v1353 = vrot.slane %v1352, 1
      %v1354 = vadd.f32 %v1352, %v1353
      %v1355 = vrot.slane %v1268, 4
      %v1356 = vadd.f32 %v1268, %v1355
      %v1357 = vrot.slane %v1356, 2
      %v1358 = vadd.f32 %v1356, %v1357
      %v1359 = vrot.slane %v1358, 1
      %v1360 = vadd.f32 %v1358, %v1359
      %v1361 = vsel %vm154, %v1269, 0.0
      %v1362 = vrot.slane %v1361, 4
      %v1363 = vadd.f32 %v1361, %v1362
      %v1364 = vrot.slane %v1363, 2
      %v1365 = vadd.f32 %v1363, %v1364
      %v1366 = vrot.slane %v1365, 1
      %v1367 = vadd.f32 %v1365, %v1366
      %v1368 = vrot.slane %v1270, 4
      %v1369 = vadd.f32 %v1270, %v1368
      %v1370 = vrot.slane %v1369, 2
      %v1371 = vadd.f32 %v1369, %v1370
      %v1372 = vrot.slane %v1371, 1
      %v1373 = vadd.f32 %v1371, %v1372
      %v1374 = vsel %vm154, %v1271, 0.0
      %v1375 = vrot.slane %v1374, 4
      %v1376 = vadd.f32 %v1374, %v1375
      %v1377 = vrot.slane %v1376, 2
      %v1378 = vadd.f32 %v1376, %v1377
      %v1379 = vrot.slane %v1378, 1
      %v1380 = vadd.f32 %v1378, %v1379
      %v1381 = vrot.slane %v1272, 4
      %v1382 = vadd.f32 %v1272, %v1381
      %v1383 = vrot.slane %v1382, 2
      %v1384 = vadd.f32 %v1382, %v1383
      %v1385 = vrot.slane %v1384, 1
      %v1386 = vadd.f32 %v1384, %v1385
      %v1387 = vsel %vm154, %v1273, 0.0
      %v1388 = vrot.slane %v1387, 4
      %v1389 = vadd.f32 %v1387, %v1388
      %v1390 = vrot.slane %v1389, 2
      %v1391 = vadd.f32 %v1389, %v1390
      %v1392 = vrot.slane %v1391, 1
      %v1393 = vadd.f32 %v1391, %v1392
      %v1394 = vrot.slane %v1274, 4
      %v1395 = vadd.f32 %v1274, %v1394
      %v1396 = vrot.slane %v1395, 2
      %v1397 = vadd.f32 %v1395, %v1396
      %v1398 = vrot.slane %v1397, 1
      %v1399 = vadd.f32 %v1397, %v1398
      %v1400 = vsel %vm154, %v1275, 0.0
      %v1401 = vrot.slane %v1400, 4
      %v1402 = vadd.f32 %v1400, %v1401
      %v1403 = vrot.slane %v1402, 2
      %v1404 = vadd.f32 %v1402, %v1403
      %v1405 = vrot.slane %v1404, 1
      %v1406 = vadd.f32 %v1404, %v1405
      %v1407 = vrot.slane %v1276, 4
      %v1408 = vadd.f32 %v1276, %v1407
      %v1409 = vrot.slane %v1408, 2
      %v1410 = vadd.f32 %v1408, %v1409
      %v1411 = vrot.slane %v1410, 1
      %v1412 = vadd.f32 %v1410, %v1411
      %v1413 = vsel %vm154, %v1277, 0.0
      %v1414 = vrot.slane %v1413, 4
      %v1415 = vadd.f32 %v1413, %v1414
      %v1416 = vrot.slane %v1415, 2
      %v1417 = vadd.f32 %v1415, %v1416
      %v1418 = vrot.slane %v1417, 1
      %v1419 = vadd.f32 %v1417, %v1418
      %v1420 = vrot.slane %v1278, 4
      %v1421 = vadd.f32 %v1278, %v1420
      %v1422 = vrot.slane %v1421, 2
      %v1423 = vadd.f32 %v1421, %v1422
      %v1424 = vrot.slane %v1423, 1
      %v1425 = vadd.f32 %v1423, %v1424
      %v1426 = vsel %vm154, %v1279, 0.0
      %v1427 = vrot.slane %v1426, 4
      %v1428 = vadd.f32 %v1426, %v1427
      %v1429 = vrot.slane %v1428, 2
      %v1430 = vadd.f32 %v1428, %v1429
      %v1431 = vrot.slane %v1430, 1
      %v1432 = vadd.f32 %v1430, %v1431
      %v1433 = vrot.slane %v1280, 4
      %v1434 = vadd.f32 %v1280, %v1433
      %v1435 = vrot.slane %v1434, 2
      %v1436 = vadd.f32 %v1434, %v1435
      %v1437 = vrot.slane %v1436, 1
      %v1438 = vadd.f32 %v1436, %v1437
      %v1439 = vsel %vm154, %v1281, 0.0
      %v1440 = vrot.slane %v1439, 4
      %v1441 = vadd.f32 %v1439, %v1440
      %v1442 = vrot.slane %v1441, 2
      %v1443 = vadd.f32 %v1441, %v1442
      %v1444 = vrot.slane %v1443, 1
      %v1445 = vadd.f32 %v1443, %v1444
      %v1446 = vrot.slane %v1282, 4
      %v1447 = vadd.f32 %v1282, %v1446
      %v1448 = vrot.slane %v1447, 2
      %v1449 = vadd.f32 %v1447, %v1448
      %v1450 = vrot.slane %v1449, 1
      %v1451 = vadd.f32 %v1449, %v1450
      %v1452 = vsel %vm154, %v1283, 0.0
      %v1453 = vrot.slane %v1452, 4
      %v1454 = vadd.f32 %v1452, %v1453
      %v1455 = vrot.slane %v1454, 2
      %v1456 = vadd.f32 %v1454, %v1455
      %v1457 = vrot.slane %v1456, 1
      %v1458 = vadd.f32 %v1456, %v1457
      %v1459 = vrot.slane %v1284, 4
      %v1460 = vadd.f32 %v1284, %v1459
      %v1461 = vrot.slane %v1460, 2
      %v1462 = vadd.f32 %v1460, %v1461
      %v1463 = vrot.slane %v1462, 1
      %v1464 = vadd.f32 %v1462, %v1463
      %v1465 = vsel %vm154, %v1285, 0.0
      %v1466 = vrot.slane %v1465, 4
      %v1467 = vadd.f32 %v1465, %v1466
      %v1468 = vrot.slane %v1467, 2
      %v1469 = vadd.f32 %v1467, %v1468
      %v1470 = vrot.slane %v1469, 1
      %v1471 = vadd.f32 %v1469, %v1470
      %v1472 = vrot.slane %v1286, 4
      %v1473 = vadd.f32 %v1286, %v1472
      %v1474 = vrot.slane %v1473, 2
      %v1475 = vadd.f32 %v1473, %v1474
      %v1476 = vrot.slane %v1475, 1
      %v1477 = vadd.f32 %v1475, %v1476
      %v1478 = vsel %vm154, %v1287, 0.0
      %v1479 = vrot.slane %v1478, 4
      %v1480 = vadd.f32 %v1478, %v1479
      %v1481 = vrot.slane %v1480, 2
      %v1482 = vadd.f32 %v1480, %v1481
      %v1483 = vrot.slane %v1482, 1
      %v1484 = vadd.f32 %v1482, %v1483
      %v1485 = vrot.slane %v1288, 4
      %v1486 = vadd.f32 %v1288, %v1485
      %v1487 = vrot.slane %v1486, 2
      %v1488 = vadd.f32 %v1486, %v1487
      %v1489 = vrot.slane %v1488, 1
      %v1490 = vadd.f32 %v1488, %v1489
      %v1491 = vsel %vm154, %v1289, 0.0
      %v1492 = vrot.slane %v1491, 4
      %v1493 = vadd.f32 %v1491, %v1492
      %v1494 = vrot.slane %v1493, 2
      %v1495 = vadd.f32 %v1493, %v1494
      %v1496 = vrot.slane %v1495, 1
      %v1497 = vadd.f32 %v1495, %v1496
      %v1530 = vsel %vm498, %v1308, %v1295
      %v1531 = vsel %vm500, %v1321, %v1530
      %v1532 = vsel %vm502, %v1334, %v1531
      %v1533 = vsel %vm504, %v1347, %v1532
      %v1534 = vsel %vm506, %v1360, %v1533
      %v1535 = vsel %vm508, %v1373, %v1534
      %v1536 = vsel %vm510, %v1386, %v1535
      %v1537 = vsel %vm498, %v1315, %v1302
      %v1538 = vsel %vm500, %v1328, %v1537
      %v1539 = vsel %vm502, %v1341, %v1538
      %v1540 = vsel %vm504, %v1354, %v1539
      %v1541 = vsel %vm506, %v1367, %v1540
      %v1542 = vsel %vm508, %v1380, %v1541
      %v1543 = vsel %vm510, %v1393, %v1542
      %v1544 = vsel %vm498, %v1412, %v1399
      %v1545 = vsel %vm500, %v1425, %v1544
      %v1546 = vsel %vm502, %v1438, %v1545
      %v1547 = vsel %vm504, %v1451, %v1546
      %v1548 = vsel %vm506, %v1464, %v1547
      %v1549 = vsel %vm508, %v1477, %v1548
      %v1550 = vsel %vm510, %v1490, %v1549
      %v1551 = vsel %vm498, %v1419, %v1406
      %v1552 = vsel %vm500, %v1432, %v1551
      %v1553 = vsel %vm502, %v1445, %v1552
      %v1554 = vsel %vm504, %v1458, %v1553
      %v1555 = vsel %vm506, %v1471, %v1554
      %v1556 = vsel %vm508, %v1484, %v1555
      %v1557 = vsel %vm510, %v1497, %v1556
      %s1562 = scalar_lea.vmem [#allocation2], 96
      %1563 = vst [vmem:[%s1562] sm:$0xff] %v1536
      %1564 = vst.msk [vmem:[%s1562 + $0x8] sm:$0xff] %vm154, %v1543
      %1565 = vst [vmem:[%s1562 + $0x10] sm:$0xff] %v1550
      %1566 = vst.msk [vmem:[%s1562 + $0x18] sm:$0xff] %vm154, %v1557
      %s1567 = scalar_lea.vmem %s1, 1024
      %v1568 = vld [vmem:[%s1567] sm:$0xff]
      %v1569 = vld [vmem:[%s1567 + $0x8] sm:$0xff]
      %v1570 = vld [vmem:[%s1567 + $0x10] sm:$0xff]
      %v1571 = vld [vmem:[%s1567 + $0x18] sm:$0xff]
      %v1572 = vld [vmem:[%s1567 + $0x20] sm:$0xff]
      %v1573 = vld [vmem:[%s1567 + $0x28] sm:$0xff]
      %v1574 = vld [vmem:[%s1567 + $0x30] sm:$0xff]
      %v1575 = vld [vmem:[%s1567 + $0x38] sm:$0xff]
      %v1576 = vld [vmem:[%s1567 + $0x40] sm:$0xff]
      %v1577 = vld [vmem:[%s1567 + $0x48] sm:$0xff]
      %v1578 = vld [vmem:[%s1567 + $0x50] sm:$0xff]
      %v1579 = vld [vmem:[%s1567 + $0x58] sm:$0xff]
      %v1580 = vld [vmem:[%s1567 + $0x60] sm:$0xff]
      %v1581 = vld [vmem:[%s1567 + $0x68] sm:$0xff]
      %v1582 = vld [vmem:[%s1567 + $0x70] sm:$0xff]
      %v1583 = vld [vmem:[%s1567 + $0x78] sm:$0xff]
      %v1584 = vld [vmem:[%s1567 + $0x80] sm:$0xff]
      %v1585 = vld [vmem:[%s1567 + $0x88] sm:$0xff]
      %v1586 = vld [vmem:[%s1567 + $0x90] sm:$0xff]
      %v1587 = vld [vmem:[%s1567 + $0x98] sm:$0xff]
      %v1588 = vld [vmem:[%s1567 + $0xa0] sm:$0xff]
      %v1589 = vld [vmem:[%s1567 + $0xa8] sm:$0xff]
      %v1590 = vld [vmem:[%s1567 + $0xb0] sm:$0xff]
      %v1591 = vld [vmem:[%s1567 + $0xb8] sm:$0xff]
      %v1592 = vld [vmem:[%s1567 + $0xc0] sm:$0xff]
      %v1593 = vld [vmem:[%s1567 + $0xc8] sm:$0xff]
      %v1594 = vld [vmem:[%s1567 + $0xd0] sm:$0xff]
      %v1595 = vld [vmem:[%s1567 + $0xd8] sm:$0xff]
      %v1596 = vld [vmem:[%s1567 + $0xe0] sm:$0xff]
      %v1597 = vld [vmem:[%s1567 + $0xe8] sm:$0xff]
      %v1598 = vld [vmem:[%s1567 + $0xf0] sm:$0xff]
      %v1599 = vld [vmem:[%s1567 + $0xf8] sm:$0xff]
      %v1600 = vmul.f32 %v1568, %v192
      %v1601 = vmul.f32 %v1569, %v193
      %v1602 = vmul.f32 %v1570, %v192
      %v1603 = vmul.f32 %v1571, %v193
      %v1604 = vmul.f32 %v1572, %v192
      %v1605 = vmul.f32 %v1573, %v193
      %v1606 = vmul.f32 %v1574, %v192
      %v1607 = vmul.f32 %v1575, %v193
      %v1608 = vmul.f32 %v1576, %v192
      %v1609 = vmul.f32 %v1577, %v193
      %v1610 = vmul.f32 %v1578, %v192
      %v1611 = vmul.f32 %v1579, %v193
      %v1612 = vmul.f32 %v1580, %v192
      %v1613 = vmul.f32 %v1581, %v193
      %v1614 = vmul.f32 %v1582, %v192
      %v1615 = vmul.f32 %v1583, %v193
      %v1616 = vmul.f32 %v1584, %v192
      %v1617 = vmul.f32 %v1585, %v193
      %v1618 = vmul.f32 %v1586, %v192
      %v1619 = vmul.f32 %v1587, %v193
      %v1620 = vmul.f32 %v1588, %v192
      %v1621 = vmul.f32 %v1589, %v193
      %v1622 = vmul.f32 %v1590, %v192
      %v1623 = vmul.f32 %v1591, %v193
      %v1624 = vmul.f32 %v1592, %v192
      %v1625 = vmul.f32 %v1593, %v193
      %v1626 = vmul.f32 %v1594, %v192
      %v1627 = vmul.f32 %v1595, %v193
      %v1628 = vmul.f32 %v1596, %v192
      %v1629 = vmul.f32 %v1597, %v193
      %v1630 = vmul.f32 %v1598, %v192
      %v1631 = vmul.f32 %v1599, %v193
      %v1632 = vrot.slane %v1600, 4
      %v1633 = vadd.f32 %v1600, %v1632
      %v1634 = vrot.slane %v1633, 2
      %v1635 = vadd.f32 %v1633, %v1634
      %v1636 = vrot.slane %v1635, 1
      %v1637 = vadd.f32 %v1635, %v1636
      %v1638 = vsel %vm154, %v1601, 0.0
      %v1639 = vrot.slane %v1638, 4
      %v1640 = vadd.f32 %v1638, %v1639
      %v1641 = vrot.slane %v1640, 2
      %v1642 = vadd.f32 %v1640, %v1641
      %v1643 = vrot.slane %v1642, 1
      %v1644 = vadd.f32 %v1642, %v1643
      %v1645 = vrot.slane %v1602, 4
      %v1646 = vadd.f32 %v1602, %v1645
      %v1647 = vrot.slane %v1646, 2
      %v1648 = vadd.f32 %v1646, %v1647
      %v1649 = vrot.slane %v1648, 1
      %v1650 = vadd.f32 %v1648, %v1649
      %v1651 = vsel %vm154, %v1603, 0.0
      %v1652 = vrot.slane %v1651, 4
      %v1653 = vadd.f32 %v1651, %v1652
      %v1654 = vrot.slane %v1653, 2
      %v1655 = vadd.f32 %v1653, %v1654
      %v1656 = vrot.slane %v1655, 1
      %v1657 = vadd.f32 %v1655, %v1656
      %v1658 = vrot.slane %v1604, 4
      %v1659 = vadd.f32 %v1604, %v1658
      %v1660 = vrot.slane %v1659, 2
      %v1661 = vadd.f32 %v1659, %v1660
      %v1662 = vrot.slane %v1661, 1
      %v1663 = vadd.f32 %v1661, %v1662
      %v1664 = vsel %vm154, %v1605, 0.0
      %v1665 = vrot.slane %v1664, 4
      %v1666 = vadd.f32 %v1664, %v1665
      %v1667 = vrot.slane %v1666, 2
      %v1668 = vadd.f32 %v1666, %v1667
      %v1669 = vrot.slane %v1668, 1
      %v1670 = vadd.f32 %v1668, %v1669
      %v1671 = vrot.slane %v1606, 4
      %v1672 = vadd.f32 %v1606, %v1671
      %v1673 = vrot.slane %v1672, 2
      %v1674 = vadd.f32 %v1672, %v1673
      %v1675 = vrot.slane %v1674, 1
      %v1676 = vadd.f32 %v1674, %v1675
      %v1677 = vsel %vm154, %v1607, 0.0
      %v1678 = vrot.slane %v1677, 4
      %v1679 = vadd.f32 %v1677, %v1678
      %v1680 = vrot.slane %v1679, 2
      %v1681 = vadd.f32 %v1679, %v1680
      %v1682 = vrot.slane %v1681, 1
      %v1683 = vadd.f32 %v1681, %v1682
      %v1684 = vrot.slane %v1608, 4
      %v1685 = vadd.f32 %v1608, %v1684
      %v1686 = vrot.slane %v1685, 2
      %v1687 = vadd.f32 %v1685, %v1686
      %v1688 = vrot.slane %v1687, 1
      %v1689 = vadd.f32 %v1687, %v1688
      %v1690 = vsel %vm154, %v1609, 0.0
      %v1691 = vrot.slane %v1690, 4
      %v1692 = vadd.f32 %v1690, %v1691
      %v1693 = vrot.slane %v1692, 2
      %v1694 = vadd.f32 %v1692, %v1693
      %v1695 = vrot.slane %v1694, 1
      %v1696 = vadd.f32 %v1694, %v1695
      %v1697 = vrot.slane %v1610, 4
      %v1698 = vadd.f32 %v1610, %v1697
      %v1699 = vrot.slane %v1698, 2
      %v1700 = vadd.f32 %v1698, %v1699
      %v1701 = vrot.slane %v1700, 1
      %v1702 = vadd.f32 %v1700, %v1701
      %v1703 = vsel %vm154, %v1611, 0.0
      %v1704 = vrot.slane %v1703, 4
      %v1705 = vadd.f32 %v1703, %v1704
      %v1706 = vrot.slane %v1705, 2
      %v1707 = vadd.f32 %v1705, %v1706
      %v1708 = vrot.slane %v1707, 1
      %v1709 = vadd.f32 %v1707, %v1708
      %v1710 = vrot.slane %v1612, 4
      %v1711 = vadd.f32 %v1612, %v1710
      %v1712 = vrot.slane %v1711, 2
      %v1713 = vadd.f32 %v1711, %v1712
      %v1714 = vrot.slane %v1713, 1
      %v1715 = vadd.f32 %v1713, %v1714
      %v1716 = vsel %vm154, %v1613, 0.0
      %v1717 = vrot.slane %v1716, 4
      %v1718 = vadd.f32 %v1716, %v1717
      %v1719 = vrot.slane %v1718, 2
      %v1720 = vadd.f32 %v1718, %v1719
      %v1721 = vrot.slane %v1720, 1
      %v1722 = vadd.f32 %v1720, %v1721
      %v1723 = vrot.slane %v1614, 4
      %v1724 = vadd.f32 %v1614, %v1723
      %v1725 = vrot.slane %v1724, 2
      %v1726 = vadd.f32 %v1724, %v1725
      %v1727 = vrot.slane %v1726, 1
      %v1728 = vadd.f32 %v1726, %v1727
      %v1729 = vsel %vm154, %v1615, 0.0
      %v1730 = vrot.slane %v1729, 4
      %v1731 = vadd.f32 %v1729, %v1730
      %v1732 = vrot.slane %v1731, 2
      %v1733 = vadd.f32 %v1731, %v1732
      %v1734 = vrot.slane %v1733, 1
      %v1735 = vadd.f32 %v1733, %v1734
      %v1736 = vrot.slane %v1616, 4
      %v1737 = vadd.f32 %v1616, %v1736
      %v1738 = vrot.slane %v1737, 2
      %v1739 = vadd.f32 %v1737, %v1738
      %v1740 = vrot.slane %v1739, 1
      %v1741 = vadd.f32 %v1739, %v1740
      %v1742 = vsel %vm154, %v1617, 0.0
      %v1743 = vrot.slane %v1742, 4
      %v1744 = vadd.f32 %v1742, %v1743
      %v1745 = vrot.slane %v1744, 2
      %v1746 = vadd.f32 %v1744, %v1745
      %v1747 = vrot.slane %v1746, 1
      %v1748 = vadd.f32 %v1746, %v1747
      %v1749 = vrot.slane %v1618, 4
      %v1750 = vadd.f32 %v1618, %v1749
      %v1751 = vrot.slane %v1750, 2
      %v1752 = vadd.f32 %v1750, %v1751
      %v1753 = vrot.slane %v1752, 1
      %v1754 = vadd.f32 %v1752, %v1753
      %v1755 = vsel %vm154, %v1619, 0.0
      %v1756 = vrot.slane %v1755, 4
      %v1757 = vadd.f32 %v1755, %v1756
      %v1758 = vrot.slane %v1757, 2
      %v1759 = vadd.f32 %v1757, %v1758
      %v1760 = vrot.slane %v1759, 1
      %v1761 = vadd.f32 %v1759, %v1760
      %v1762 = vrot.slane %v1620, 4
      %v1763 = vadd.f32 %v1620, %v1762
      %v1764 = vrot.slane %v1763, 2
      %v1765 = vadd.f32 %v1763, %v1764
      %v1766 = vrot.slane %v1765, 1
      %v1767 = vadd.f32 %v1765, %v1766
      %v1768 = vsel %vm154, %v1621, 0.0
      %v1769 = vrot.slane %v1768, 4
      %v1770 = vadd.f32 %v1768, %v1769
      %v1771 = vrot.slane %v1770, 2
      %v1772 = vadd.f32 %v1770, %v1771
      %v1773 = vrot.slane %v1772, 1
      %v1774 = vadd.f32 %v1772, %v1773
      %v1775 = vrot.slane %v1622, 4
      %v1776 = vadd.f32 %v1622, %v1775
      %v1777 = vrot.slane %v1776, 2
      %v1778 = vadd.f32 %v1776, %v1777
      %v1779 = vrot.slane %v1778, 1
      %v1780 = vadd.f32 %v1778, %v1779
      %v1781 = vsel %vm154, %v1623, 0.0
      %v1782 = vrot.slane %v1781, 4
      %v1783 = vadd.f32 %v1781, %v1782
      %v1784 = vrot.slane %v1783, 2
      %v1785 = vadd.f32 %v1783, %v1784
      %v1786 = vrot.slane %v1785, 1
      %v1787 = vadd.f32 %v1785, %v1786
      %v1788 = vrot.slane %v1624, 4
      %v1789 = vadd.f32 %v1624, %v1788
      %v1790 = vrot.slane %v1789, 2
      %v1791 = vadd.f32 %v1789, %v1790
      %v1792 = vrot.slane %v1791, 1
      %v1793 = vadd.f32 %v1791, %v1792
      %v1794 = vsel %vm154, %v1625, 0.0
      %v1795 = vrot.slane %v1794, 4
      %v1796 = vadd.f32 %v1794, %v1795
      %v1797 = vrot.slane %v1796, 2
      %v1798 = vadd.f32 %v1796, %v1797
      %v1799 = vrot.slane %v1798, 1
      %v1800 = vadd.f32 %v1798, %v1799
      %v1801 = vrot.slane %v1626, 4
      %v1802 = vadd.f32 %v1626, %v1801
      %v1803 = vrot.slane %v1802, 2
      %v1804 = vadd.f32 %v1802, %v1803
      %v1805 = vrot.slane %v1804, 1
      %v1806 = vadd.f32 %v1804, %v1805
      %v1807 = vsel %vm154, %v1627, 0.0
      %v1808 = vrot.slane %v1807, 4
      %v1809 = vadd.f32 %v1807, %v1808
      %v1810 = vrot.slane %v1809, 2
      %v1811 = vadd.f32 %v1809, %v1810
      %v1812 = vrot.slane %v1811, 1
      %v1813 = vadd.f32 %v1811, %v1812
      %v1814 = vrot.slane %v1628, 4
      %v1815 = vadd.f32 %v1628, %v1814
      %v1816 = vrot.slane %v1815, 2
      %v1817 = vadd.f32 %v1815, %v1816
      %v1818 = vrot.slane %v1817, 1
      %v1819 = vadd.f32 %v1817, %v1818
      %v1820 = vsel %vm154, %v1629, 0.0
      %v1821 = vrot.slane %v1820, 4
      %v1822 = vadd.f32 %v1820, %v1821
      %v1823 = vrot.slane %v1822, 2
      %v1824 = vadd.f32 %v1822, %v1823
      %v1825 = vrot.slane %v1824, 1
      %v1826 = vadd.f32 %v1824, %v1825
      %v1827 = vrot.slane %v1630, 4
      %v1828 = vadd.f32 %v1630, %v1827
      %v1829 = vrot.slane %v1828, 2
      %v1830 = vadd.f32 %v1828, %v1829
      %v1831 = vrot.slane %v1830, 1
      %v1832 = vadd.f32 %v1830, %v1831
      %v1833 = vsel %vm154, %v1631, 0.0
      %v1834 = vrot.slane %v1833, 4
      %v1835 = vadd.f32 %v1833, %v1834
      %v1836 = vrot.slane %v1835, 2
      %v1837 = vadd.f32 %v1835, %v1836
      %v1838 = vrot.slane %v1837, 1
      %v1839 = vadd.f32 %v1837, %v1838
      %v1872 = vsel %vm498, %v1650, %v1637
      %v1873 = vsel %vm500, %v1663, %v1872
      %v1874 = vsel %vm502, %v1676, %v1873
      %v1875 = vsel %vm504, %v1689, %v1874
      %v1876 = vsel %vm506, %v1702, %v1875
      %v1877 = vsel %vm508, %v1715, %v1876
      %v1878 = vsel %vm510, %v1728, %v1877
      %v1879 = vsel %vm498, %v1657, %v1644
      %v1880 = vsel %vm500, %v1670, %v1879
      %v1881 = vsel %vm502, %v1683, %v1880
      %v1882 = vsel %vm504, %v1696, %v1881
      %v1883 = vsel %vm506, %v1709, %v1882
      %v1884 = vsel %vm508, %v1722, %v1883
      %v1885 = vsel %vm510, %v1735, %v1884
      %v1886 = vsel %vm498, %v1754, %v1741
      %v1887 = vsel %vm500, %v1767, %v1886
      %v1888 = vsel %vm502, %v1780, %v1887
      %v1889 = vsel %vm504, %v1793, %v1888
      %v1890 = vsel %vm506, %v1806, %v1889
      %v1891 = vsel %vm508, %v1819, %v1890
      %v1892 = vsel %vm510, %v1832, %v1891
      %v1893 = vsel %vm498, %v1761, %v1748
      %v1894 = vsel %vm500, %v1774, %v1893
      %v1895 = vsel %vm502, %v1787, %v1894
      %v1896 = vsel %vm504, %v1800, %v1895
      %v1897 = vsel %vm506, %v1813, %v1896
      %v1898 = vsel %vm508, %v1826, %v1897
      %v1899 = vsel %vm510, %v1839, %v1898
      %s1904 = scalar_lea.vmem [#allocation2], 128
      %1905 = vst [vmem:[%s1904] sm:$0xff] %v1878
      %1906 = vst.msk [vmem:[%s1904 + $0x8] sm:$0xff] %vm154, %v1885
      %1907 = vst [vmem:[%s1904 + $0x10] sm:$0xff] %v1892
      %1908 = vst.msk [vmem:[%s1904 + $0x18] sm:$0xff] %vm154, %v1899
      %s1909 = scalar_lea.vmem %s1, 1280
      %v1910 = vld [vmem:[%s1909] sm:$0xff]
      %v1911 = vld [vmem:[%s1909 + $0x8] sm:$0xff]
      %v1912 = vld [vmem:[%s1909 + $0x10] sm:$0xff]
      %v1913 = vld [vmem:[%s1909 + $0x18] sm:$0xff]
      %v1914 = vld [vmem:[%s1909 + $0x20] sm:$0xff]
      %v1915 = vld [vmem:[%s1909 + $0x28] sm:$0xff]
      %v1916 = vld [vmem:[%s1909 + $0x30] sm:$0xff]
      %v1917 = vld [vmem:[%s1909 + $0x38] sm:$0xff]
      %v1918 = vld [vmem:[%s1909 + $0x40] sm:$0xff]
      %v1919 = vld [vmem:[%s1909 + $0x48] sm:$0xff]
      %v1920 = vld [vmem:[%s1909 + $0x50] sm:$0xff]
      %v1921 = vld [vmem:[%s1909 + $0x58] sm:$0xff]
      %v1922 = vld [vmem:[%s1909 + $0x60] sm:$0xff]
      %v1923 = vld [vmem:[%s1909 + $0x68] sm:$0xff]
      %v1924 = vld [vmem:[%s1909 + $0x70] sm:$0xff]
      %v1925 = vld [vmem:[%s1909 + $0x78] sm:$0xff]
      %v1926 = vld [vmem:[%s1909 + $0x80] sm:$0xff]
      %v1927 = vld [vmem:[%s1909 + $0x88] sm:$0xff]
      %v1928 = vld [vmem:[%s1909 + $0x90] sm:$0xff]
      %v1929 = vld [vmem:[%s1909 + $0x98] sm:$0xff]
      %v1930 = vld [vmem:[%s1909 + $0xa0] sm:$0xff]
      %v1931 = vld [vmem:[%s1909 + $0xa8] sm:$0xff]
      %v1932 = vld [vmem:[%s1909 + $0xb0] sm:$0xff]
      %v1933 = vld [vmem:[%s1909 + $0xb8] sm:$0xff]
      %v1934 = vld [vmem:[%s1909 + $0xc0] sm:$0xff]
      %v1935 = vld [vmem:[%s1909 + $0xc8] sm:$0xff]
      %v1936 = vld [vmem:[%s1909 + $0xd0] sm:$0xff]
      %v1937 = vld [vmem:[%s1909 + $0xd8] sm:$0xff]
      %v1938 = vld [vmem:[%s1909 + $0xe0] sm:$0xff]
      %v1939 = vld [vmem:[%s1909 + $0xe8] sm:$0xff]
      %v1940 = vld [vmem:[%s1909 + $0xf0] sm:$0xff]
      %v1941 = vld [vmem:[%s1909 + $0xf8] sm:$0xff]
      %v1942 = vmul.f32 %v1910, %v192
      %v1943 = vmul.f32 %v1911, %v193
      %v1944 = vmul.f32 %v1912, %v192
      %v1945 = vmul.f32 %v1913, %v193
      %v1946 = vmul.f32 %v1914, %v192
      %v1947 = vmul.f32 %v1915, %v193
      %v1948 = vmul.f32 %v1916, %v192
      %v1949 = vmul.f32 %v1917, %v193
      %v1950 = vmul.f32 %v1918, %v192
      %v1951 = vmul.f32 %v1919, %v193
      %v1952 = vmul.f32 %v1920, %v192
      %v1953 = vmul.f32 %v1921, %v193
      %v1954 = vmul.f32 %v1922, %v192
      %v1955 = vmul.f32 %v1923, %v193
      %v1956 = vmul.f32 %v1924, %v192
      %v1957 = vmul.f32 %v1925, %v193
      %v1958 = vmul.f32 %v1926, %v192
      %v1959 = vmul.f32 %v1927, %v193
      %v1960 = vmul.f32 %v1928, %v192
      %v1961 = vmul.f32 %v1929, %v193
      %v1962 = vmul.f32 %v1930, %v192
      %v1963 = vmul.f32 %v1931, %v193
      %v1964 = vmul.f32 %v1932, %v192
      %v1965 = vmul.f32 %v1933, %v193
      %v1966 = vmul.f32 %v1934, %v192
      %v1967 = vmul.f32 %v1935, %v193
      %v1968 = vmul.f32 %v1936, %v192
      %v1969 = vmul.f32 %v1937, %v193
      %v1970 = vmul.f32 %v1938, %v192
      %v1971 = vmul.f32 %v1939, %v193
      %v1972 = vmul.f32 %v1940, %v192
      %v1973 = vmul.f32 %v1941, %v193
      %v1974 = vrot.slane %v1942, 4
      %v1975 = vadd.f32 %v1942, %v1974
      %v1976 = vrot.slane %v1975, 2
      %v1977 = vadd.f32 %v1975, %v1976
      %v1978 = vrot.slane %v1977, 1
      %v1979 = vadd.f32 %v1977, %v1978
      %v1980 = vsel %vm154, %v1943, 0.0
      %v1981 = vrot.slane %v1980, 4
      %v1982 = vadd.f32 %v1980, %v1981
      %v1983 = vrot.slane %v1982, 2
      %v1984 = vadd.f32 %v1982, %v1983
      %v1985 = vrot.slane %v1984, 1
      %v1986 = vadd.f32 %v1984, %v1985
      %v1987 = vrot.slane %v1944, 4
      %v1988 = vadd.f32 %v1944, %v1987
      %v1989 = vrot.slane %v1988, 2
      %v1990 = vadd.f32 %v1988, %v1989
      %v1991 = vrot.slane %v1990, 1
      %v1992 = vadd.f32 %v1990, %v1991
      %v1993 = vsel %vm154, %v1945, 0.0
      %v1994 = vrot.slane %v1993, 4
      %v1995 = vadd.f32 %v1993, %v1994
      %v1996 = vrot.slane %v1995, 2
      %v1997 = vadd.f32 %v1995, %v1996
      %v1998 = vrot.slane %v1997, 1
      %v1999 = vadd.f32 %v1997, %v1998
      %v2000 = vrot.slane %v1946, 4
      %v2001 = vadd.f32 %v1946, %v2000
      %v2002 = vrot.slane %v2001, 2
      %v2003 = vadd.f32 %v2001, %v2002
      %v2004 = vrot.slane %v2003, 1
      %v2005 = vadd.f32 %v2003, %v2004
      %v2006 = vsel %vm154, %v1947, 0.0
      %v2007 = vrot.slane %v2006, 4
      %v2008 = vadd.f32 %v2006, %v2007
      %v2009 = vrot.slane %v2008, 2
      %v2010 = vadd.f32 %v2008, %v2009
      %v2011 = vrot.slane %v2010, 1
      %v2012 = vadd.f32 %v2010, %v2011
      %v2013 = vrot.slane %v1948, 4
      %v2014 = vadd.f32 %v1948, %v2013
      %v2015 = vrot.slane %v2014, 2
      %v2016 = vadd.f32 %v2014, %v2015
      %v2017 = vrot.slane %v2016, 1
      %v2018 = vadd.f32 %v2016, %v2017
      %v2019 = vsel %vm154, %v1949, 0.0
      %v2020 = vrot.slane %v2019, 4
      %v2021 = vadd.f32 %v2019, %v2020
      %v2022 = vrot.slane %v2021, 2
      %v2023 = vadd.f32 %v2021, %v2022
      %v2024 = vrot.slane %v2023, 1
      %v2025 = vadd.f32 %v2023, %v2024
      %v2026 = vrot.slane %v1950, 4
      %v2027 = vadd.f32 %v1950, %v2026
      %v2028 = vrot.slane %v2027, 2
      %v2029 = vadd.f32 %v2027, %v2028
      %v2030 = vrot.slane %v2029, 1
      %v2031 = vadd.f32 %v2029, %v2030
      %v2032 = vsel %vm154, %v1951, 0.0
      %v2033 = vrot.slane %v2032, 4
      %v2034 = vadd.f32 %v2032, %v2033
      %v2035 = vrot.slane %v2034, 2
      %v2036 = vadd.f32 %v2034, %v2035
      %v2037 = vrot.slane %v2036, 1
      %v2038 = vadd.f32 %v2036, %v2037
      %v2039 = vrot.slane %v1952, 4
      %v2040 = vadd.f32 %v1952, %v2039
      %v2041 = vrot.slane %v2040, 2
      %v2042 = vadd.f32 %v2040, %v2041
      %v2043 = vrot.slane %v2042, 1
      %v2044 = vadd.f32 %v2042, %v2043
      %v2045 = vsel %vm154, %v1953, 0.0
      %v2046 = vrot.slane %v2045, 4
      %v2047 = vadd.f32 %v2045, %v2046
      %v2048 = vrot.slane %v2047, 2
      %v2049 = vadd.f32 %v2047, %v2048
      %v2050 = vrot.slane %v2049, 1
      %v2051 = vadd.f32 %v2049, %v2050
      %v2052 = vrot.slane %v1954, 4
      %v2053 = vadd.f32 %v1954, %v2052
      %v2054 = vrot.slane %v2053, 2
      %v2055 = vadd.f32 %v2053, %v2054
      %v2056 = vrot.slane %v2055, 1
      %v2057 = vadd.f32 %v2055, %v2056
      %v2058 = vsel %vm154, %v1955, 0.0
      %v2059 = vrot.slane %v2058, 4
      %v2060 = vadd.f32 %v2058, %v2059
      %v2061 = vrot.slane %v2060, 2
      %v2062 = vadd.f32 %v2060, %v2061
      %v2063 = vrot.slane %v2062, 1
      %v2064 = vadd.f32 %v2062, %v2063
      %v2065 = vrot.slane %v1956, 4
      %v2066 = vadd.f32 %v1956, %v2065
      %v2067 = vrot.slane %v2066, 2
      %v2068 = vadd.f32 %v2066, %v2067
      %v2069 = vrot.slane %v2068, 1
      %v2070 = vadd.f32 %v2068, %v2069
      %v2071 = vsel %vm154, %v1957, 0.0
      %v2072 = vrot.slane %v2071, 4
      %v2073 = vadd.f32 %v2071, %v2072
      %v2074 = vrot.slane %v2073, 2
      %v2075 = vadd.f32 %v2073, %v2074
      %v2076 = vrot.slane %v2075, 1
      %v2077 = vadd.f32 %v2075, %v2076
      %v2078 = vrot.slane %v1958, 4
      %v2079 = vadd.f32 %v1958, %v2078
      %v2080 = vrot.slane %v2079, 2
      %v2081 = vadd.f32 %v2079, %v2080
      %v2082 = vrot.slane %v2081, 1
      %v2083 = vadd.f32 %v2081, %v2082
      %v2084 = vsel %vm154, %v1959, 0.0
      %v2085 = vrot.slane %v2084, 4
      %v2086 = vadd.f32 %v2084, %v2085
      %v2087 = vrot.slane %v2086, 2
      %v2088 = vadd.f32 %v2086, %v2087
      %v2089 = vrot.slane %v2088, 1
      %v2090 = vadd.f32 %v2088, %v2089
      %v2091 = vrot.slane %v1960, 4
      %v2092 = vadd.f32 %v1960, %v2091
      %v2093 = vrot.slane %v2092, 2
      %v2094 = vadd.f32 %v2092, %v2093
      %v2095 = vrot.slane %v2094, 1
      %v2096 = vadd.f32 %v2094, %v2095
      %v2097 = vsel %vm154, %v1961, 0.0
      %v2098 = vrot.slane %v2097, 4
      %v2099 = vadd.f32 %v2097, %v2098
      %v2100 = vrot.slane %v2099, 2
      %v2101 = vadd.f32 %v2099, %v2100
      %v2102 = vrot.slane %v2101, 1
      %v2103 = vadd.f32 %v2101, %v2102
      %v2104 = vrot.slane %v1962, 4
      %v2105 = vadd.f32 %v1962, %v2104
      %v2106 = vrot.slane %v2105, 2
      %v2107 = vadd.f32 %v2105, %v2106
      %v2108 = vrot.slane %v2107, 1
      %v2109 = vadd.f32 %v2107, %v2108
      %v2110 = vsel %vm154, %v1963, 0.0
      %v2111 = vrot.slane %v2110, 4
      %v2112 = vadd.f32 %v2110, %v2111
      %v2113 = vrot.slane %v2112, 2
      %v2114 = vadd.f32 %v2112, %v2113
      %v2115 = vrot.slane %v2114, 1
      %v2116 = vadd.f32 %v2114, %v2115
      %v2117 = vrot.slane %v1964, 4
      %v2118 = vadd.f32 %v1964, %v2117
      %v2119 = vrot.slane %v2118, 2
      %v2120 = vadd.f32 %v2118, %v2119
      %v2121 = vrot.slane %v2120, 1
      %v2122 = vadd.f32 %v2120, %v2121
      %v2123 = vsel %vm154, %v1965, 0.0
      %v2124 = vrot.slane %v2123, 4
      %v2125 = vadd.f32 %v2123, %v2124
      %v2126 = vrot.slane %v2125, 2
      %v2127 = vadd.f32 %v2125, %v2126
      %v2128 = vrot.slane %v2127, 1
      %v2129 = vadd.f32 %v2127, %v2128
      %v2130 = vrot.slane %v1966, 4
      %v2131 = vadd.f32 %v1966, %v2130
      %v2132 = vrot.slane %v2131, 2
      %v2133 = vadd.f32 %v2131, %v2132
      %v2134 = vrot.slane %v2133, 1
      %v2135 = vadd.f32 %v2133, %v2134
      %v2136 = vsel %vm154, %v1967, 0.0
      %v2137 = vrot.slane %v2136, 4
      %v2138 = vadd.f32 %v2136, %v2137
      %v2139 = vrot.slane %v2138, 2
      %v2140 = vadd.f32 %v2138, %v2139
      %v2141 = vrot.slane %v2140, 1
      %v2142 = vadd.f32 %v2140, %v2141
      %v2143 = vrot.slane %v1968, 4
      %v2144 = vadd.f32 %v1968, %v2143
      %v2145 = vrot.slane %v2144, 2
      %v2146 = vadd.f32 %v2144, %v2145
      %v2147 = vrot.slane %v2146, 1
      %v2148 = vadd.f32 %v2146, %v2147
      %v2149 = vsel %vm154, %v1969, 0.0
      %v2150 = vrot.slane %v2149, 4
      %v2151 = vadd.f32 %v2149, %v2150
      %v2152 = vrot.slane %v2151, 2
      %v2153 = vadd.f32 %v2151, %v2152
      %v2154 = vrot.slane %v2153, 1
      %v2155 = vadd.f32 %v2153, %v2154
      %v2156 = vrot.slane %v1970, 4
      %v2157 = vadd.f32 %v1970, %v2156
      %v2158 = vrot.slane %v2157, 2
      %v2159 = vadd.f32 %v2157, %v2158
      %v2160 = vrot.slane %v2159, 1
      %v2161 = vadd.f32 %v2159, %v2160
      %v2162 = vsel %vm154, %v1971, 0.0
      %v2163 = vrot.slane %v2162, 4
      %v2164 = vadd.f32 %v2162, %v2163
      %v2165 = vrot.slane %v2164, 2
      %v2166 = vadd.f32 %v2164, %v2165
      %v2167 = vrot.slane %v2166, 1
      %v2168 = vadd.f32 %v2166, %v2167
      %v2169 = vrot.slane %v1972, 4
      %v2170 = vadd.f32 %v1972, %v2169
      %v2171 = vrot.slane %v2170, 2
      %v2172 = vadd.f32 %v2170, %v2171
      %v2173 = vrot.slane %v2172, 1
      %v2174 = vadd.f32 %v2172, %v2173
      %v2175 = vsel %vm154, %v1973, 0.0
      %v2176 = vrot.slane %v2175, 4
      %v2177 = vadd.f32 %v2175, %v2176
      %v2178 = vrot.slane %v2177, 2
      %v2179 = vadd.f32 %v2177, %v2178
      %v2180 = vrot.slane %v2179, 1
      %v2181 = vadd.f32 %v2179, %v2180
      %v2214 = vsel %vm498, %v1992, %v1979
      %v2215 = vsel %vm500, %v2005, %v2214
      %v2216 = vsel %vm502, %v2018, %v2215
      %v2217 = vsel %vm504, %v2031, %v2216
      %v2218 = vsel %vm506, %v2044, %v2217
      %v2219 = vsel %vm508, %v2057, %v2218
      %v2220 = vsel %vm510, %v2070, %v2219
      %v2221 = vsel %vm498, %v1999, %v1986
      %v2222 = vsel %vm500, %v2012, %v2221
      %v2223 = vsel %vm502, %v2025, %v2222
      %v2224 = vsel %vm504, %v2038, %v2223
      %v2225 = vsel %vm506, %v2051, %v2224
      %v2226 = vsel %vm508, %v2064, %v2225
      %v2227 = vsel %vm510, %v2077, %v2226
      %v2228 = vsel %vm498, %v2096, %v2083
      %v2229 = vsel %vm500, %v2109, %v2228
      %v2230 = vsel %vm502, %v2122, %v2229
      %v2231 = vsel %vm504, %v2135, %v2230
      %v2232 = vsel %vm506, %v2148, %v2231
      %v2233 = vsel %vm508, %v2161, %v2232
      %v2234 = vsel %vm510, %v2174, %v2233
      %v2235 = vsel %vm498, %v2103, %v2090
      %v2236 = vsel %vm500, %v2116, %v2235
      %v2237 = vsel %vm502, %v2129, %v2236
      %v2238 = vsel %vm504, %v2142, %v2237
      %v2239 = vsel %vm506, %v2155, %v2238
      %v2240 = vsel %vm508, %v2168, %v2239
      %v2241 = vsel %vm510, %v2181, %v2240
      %s2246 = scalar_lea.vmem [#allocation2], 160
      %2247 = vst [vmem:[%s2246] sm:$0xff] %v2220
      %2248 = vst.msk [vmem:[%s2246 + $0x8] sm:$0xff] %vm154, %v2227
      %2249 = vst [vmem:[%s2246 + $0x10] sm:$0xff] %v2234
      %2250 = vst.msk [vmem:[%s2246 + $0x18] sm:$0xff] %vm154, %v2241
      %s2251 = scalar_lea.vmem %s1, 1536
      %v2252 = vld [vmem:[%s2251] sm:$0xff]
      %v2253 = vld [vmem:[%s2251 + $0x8] sm:$0xff]
      %v2254 = vld [vmem:[%s2251 + $0x10] sm:$0xff]
      %v2255 = vld [vmem:[%s2251 + $0x18] sm:$0xff]
      %v2256 = vld [vmem:[%s2251 + $0x20] sm:$0xff]
      %v2257 = vld [vmem:[%s2251 + $0x28] sm:$0xff]
      %v2258 = vld [vmem:[%s2251 + $0x30] sm:$0xff]
      %v2259 = vld [vmem:[%s2251 + $0x38] sm:$0xff]
      %v2260 = vld [vmem:[%s2251 + $0x40] sm:$0xff]
      %v2261 = vld [vmem:[%s2251 + $0x48] sm:$0xff]
      %v2262 = vld [vmem:[%s2251 + $0x50] sm:$0xff]
      %v2263 = vld [vmem:[%s2251 + $0x58] sm:$0xff]
      %v2264 = vld [vmem:[%s2251 + $0x60] sm:$0xff]
      %v2265 = vld [vmem:[%s2251 + $0x68] sm:$0xff]
      %v2266 = vld [vmem:[%s2251 + $0x70] sm:$0xff]
      %v2267 = vld [vmem:[%s2251 + $0x78] sm:$0xff]
      %v2268 = vld [vmem:[%s2251 + $0x80] sm:$0xff]
      %v2269 = vld [vmem:[%s2251 + $0x88] sm:$0xff]
      %v2270 = vld [vmem:[%s2251 + $0x90] sm:$0xff]
      %v2271 = vld [vmem:[%s2251 + $0x98] sm:$0xff]
      %v2272 = vld [vmem:[%s2251 + $0xa0] sm:$0xff]
      %v2273 = vld [vmem:[%s2251 + $0xa8] sm:$0xff]
      %v2274 = vld [vmem:[%s2251 + $0xb0] sm:$0xff]
      %v2275 = vld [vmem:[%s2251 + $0xb8] sm:$0xff]
      %v2276 = vld [vmem:[%s2251 + $0xc0] sm:$0xff]
      %v2277 = vld [vmem:[%s2251 + $0xc8] sm:$0xff]
      %v2278 = vld [vmem:[%s2251 + $0xd0] sm:$0xff]
      %v2279 = vld [vmem:[%s2251 + $0xd8] sm:$0xff]
      %v2280 = vld [vmem:[%s2251 + $0xe0] sm:$0xff]
      %v2281 = vld [vmem:[%s2251 + $0xe8] sm:$0xff]
      %v2282 = vld [vmem:[%s2251 + $0xf0] sm:$0xff]
      %v2283 = vld [vmem:[%s2251 + $0xf8] sm:$0xff]
      %v2284 = vmul.f32 %v2252, %v192
      %v2285 = vmul.f32 %v2253, %v193
      %v2286 = vmul.f32 %v2254, %v192
      %v2287 = vmul.f32 %v2255, %v193
      %v2288 = vmul.f32 %v2256, %v192
      %v2289 = vmul.f32 %v2257, %v193
      %v2290 = vmul.f32 %v2258, %v192
      %v2291 = vmul.f32 %v2259, %v193
      %v2292 = vmul.f32 %v2260, %v192
      %v2293 = vmul.f32 %v2261, %v193
      %v2294 = vmul.f32 %v2262, %v192
      %v2295 = vmul.f32 %v2263, %v193
      %v2296 = vmul.f32 %v2264, %v192
      %v2297 = vmul.f32 %v2265, %v193
      %v2298 = vmul.f32 %v2266, %v192
      %v2299 = vmul.f32 %v2267, %v193
      %v2300 = vmul.f32 %v2268, %v192
      %v2301 = vmul.f32 %v2269, %v193
      %v2302 = vmul.f32 %v2270, %v192
      %v2303 = vmul.f32 %v2271, %v193
      %v2304 = vmul.f32 %v2272, %v192
      %v2305 = vmul.f32 %v2273, %v193
      %v2306 = vmul.f32 %v2274, %v192
      %v2307 = vmul.f32 %v2275, %v193
      %v2308 = vmul.f32 %v2276, %v192
      %v2309 = vmul.f32 %v2277, %v193
      %v2310 = vmul.f32 %v2278, %v192
      %v2311 = vmul.f32 %v2279, %v193
      %v2312 = vmul.f32 %v2280, %v192
      %v2313 = vmul.f32 %v2281, %v193
      %v2314 = vmul.f32 %v2282, %v192
      %v2315 = vmul.f32 %v2283, %v193
      %v2316 = vrot.slane %v2284, 4
      %v2317 = vadd.f32 %v2284, %v2316
      %v2318 = vrot.slane %v2317, 2
      %v2319 = vadd.f32 %v2317, %v2318
      %v2320 = vrot.slane %v2319, 1
      %v2321 = vadd.f32 %v2319, %v2320
      %v2322 = vsel %vm154, %v2285, 0.0
      %v2323 = vrot.slane %v2322, 4
      %v2324 = vadd.f32 %v2322, %v2323
      %v2325 = vrot.slane %v2324, 2
      %v2326 = vadd.f32 %v2324, %v2325
      %v2327 = vrot.slane %v2326, 1
      %v2328 = vadd.f32 %v2326, %v2327
      %v2329 = vrot.slane %v2286, 4
      %v2330 = vadd.f32 %v2286, %v2329
      %v2331 = vrot.slane %v2330, 2
      %v2332 = vadd.f32 %v2330, %v2331
      %v2333 = vrot.slane %v2332, 1
      %v2334 = vadd.f32 %v2332, %v2333
      %v2335 = vsel %vm154, %v2287, 0.0
      %v2336 = vrot.slane %v2335, 4
      %v2337 = vadd.f32 %v2335, %v2336
      %v2338 = vrot.slane %v2337, 2
      %v2339 = vadd.f32 %v2337, %v2338
      %v2340 = vrot.slane %v2339, 1
      %v2341 = vadd.f32 %v2339, %v2340
      %v2342 = vrot.slane %v2288, 4
      %v2343 = vadd.f32 %v2288, %v2342
      %v2344 = vrot.slane %v2343, 2
      %v2345 = vadd.f32 %v2343, %v2344
      %v2346 = vrot.slane %v2345, 1
      %v2347 = vadd.f32 %v2345, %v2346
      %v2348 = vsel %vm154, %v2289, 0.0
      %v2349 = vrot.slane %v2348, 4
      %v2350 = vadd.f32 %v2348, %v2349
      %v2351 = vrot.slane %v2350, 2
      %v2352 = vadd.f32 %v2350, %v2351
      %v2353 = vrot.slane %v2352, 1
      %v2354 = vadd.f32 %v2352, %v2353
      %v2355 = vrot.slane %v2290, 4
      %v2356 = vadd.f32 %v2290, %v2355
      %v2357 = vrot.slane %v2356, 2
      %v2358 = vadd.f32 %v2356, %v2357
      %v2359 = vrot.slane %v2358, 1
      %v2360 = vadd.f32 %v2358, %v2359
      %v2361 = vsel %vm154, %v2291, 0.0
      %v2362 = vrot.slane %v2361, 4
      %v2363 = vadd.f32 %v2361, %v2362
      %v2364 = vrot.slane %v2363, 2
      %v2365 = vadd.f32 %v2363, %v2364
      %v2366 = vrot.slane %v2365, 1
      %v2367 = vadd.f32 %v2365, %v2366
      %v2368 = vrot.slane %v2292, 4
      %v2369 = vadd.f32 %v2292, %v2368
      %v2370 = vrot.slane %v2369, 2
      %v2371 = vadd.f32 %v2369, %v2370
      %v2372 = vrot.slane %v2371, 1
      %v2373 = vadd.f32 %v2371, %v2372
      %v2374 = vsel %vm154, %v2293, 0.0
      %v2375 = vrot.slane %v2374, 4
      %v2376 = vadd.f32 %v2374, %v2375
      %v2377 = vrot.slane %v2376, 2
      %v2378 = vadd.f32 %v2376, %v2377
      %v2379 = vrot.slane %v2378, 1
      %v2380 = vadd.f32 %v2378, %v2379
      %v2381 = vrot.slane %v2294, 4
      %v2382 = vadd.f32 %v2294, %v2381
      %v2383 = vrot.slane %v2382, 2
      %v2384 = vadd.f32 %v2382, %v2383
      %v2385 = vrot.slane %v2384, 1
      %v2386 = vadd.f32 %v2384, %v2385
      %v2387 = vsel %vm154, %v2295, 0.0
      %v2388 = vrot.slane %v2387, 4
      %v2389 = vadd.f32 %v2387, %v2388
      %v2390 = vrot.slane %v2389, 2
      %v2391 = vadd.f32 %v2389, %v2390
      %v2392 = vrot.slane %v2391, 1
      %v2393 = vadd.f32 %v2391, %v2392
      %v2394 = vrot.slane %v2296, 4
      %v2395 = vadd.f32 %v2296, %v2394
      %v2396 = vrot.slane %v2395, 2
      %v2397 = vadd.f32 %v2395, %v2396
      %v2398 = vrot.slane %v2397, 1
      %v2399 = vadd.f32 %v2397, %v2398
      %v2400 = vsel %vm154, %v2297, 0.0
      %v2401 = vrot.slane %v2400, 4
      %v2402 = vadd.f32 %v2400, %v2401
      %v2403 = vrot.slane %v2402, 2
      %v2404 = vadd.f32 %v2402, %v2403
      %v2405 = vrot.slane %v2404, 1
      %v2406 = vadd.f32 %v2404, %v2405
      %v2407 = vrot.slane %v2298, 4
      %v2408 = vadd.f32 %v2298, %v2407
      %v2409 = vrot.slane %v2408, 2
      %v2410 = vadd.f32 %v2408, %v2409
      %v2411 = vrot.slane %v2410, 1
      %v2412 = vadd.f32 %v2410, %v2411
      %v2413 = vsel %vm154, %v2299, 0.0
      %v2414 = vrot.slane %v2413, 4
      %v2415 = vadd.f32 %v2413, %v2414
      %v2416 = vrot.slane %v2415, 2
      %v2417 = vadd.f32 %v2415, %v2416
      %v2418 = vrot.slane %v2417, 1
      %v2419 = vadd.f32 %v2417, %v2418
      %v2420 = vrot.slane %v2300, 4
      %v2421 = vadd.f32 %v2300, %v2420
      %v2422 = vrot.slane %v2421, 2
      %v2423 = vadd.f32 %v2421, %v2422
      %v2424 = vrot.slane %v2423, 1
      %v2425 = vadd.f32 %v2423, %v2424
      %v2426 = vsel %vm154, %v2301, 0.0
      %v2427 = vrot.slane %v2426, 4
      %v2428 = vadd.f32 %v2426, %v2427
      %v2429 = vrot.slane %v2428, 2
      %v2430 = vadd.f32 %v2428, %v2429
      %v2431 = vrot.slane %v2430, 1
      %v2432 = vadd.f32 %v2430, %v2431
      %v2433 = vrot.slane %v2302, 4
      %v2434 = vadd.f32 %v2302, %v2433
      %v2435 = vrot.slane %v2434, 2
      %v2436 = vadd.f32 %v2434, %v2435
      %v2437 = vrot.slane %v2436, 1
      %v2438 = vadd.f32 %v2436, %v2437
      %v2439 = vsel %vm154, %v2303, 0.0
      %v2440 = vrot.slane %v2439, 4
      %v2441 = vadd.f32 %v2439, %v2440
      %v2442 = vrot.slane %v2441, 2
      %v2443 = vadd.f32 %v2441, %v2442
      %v2444 = vrot.slane %v2443, 1
      %v2445 = vadd.f32 %v2443, %v2444
      %v2446 = vrot.slane %v2304, 4
      %v2447 = vadd.f32 %v2304, %v2446
      %v2448 = vrot.slane %v2447, 2
      %v2449 = vadd.f32 %v2447, %v2448
      %v2450 = vrot.slane %v2449, 1
      %v2451 = vadd.f32 %v2449, %v2450
      %v2452 = vsel %vm154, %v2305, 0.0
      %v2453 = vrot.slane %v2452, 4
      %v2454 = vadd.f32 %v2452, %v2453
      %v2455 = vrot.slane %v2454, 2
      %v2456 = vadd.f32 %v2454, %v2455
      %v2457 = vrot.slane %v2456, 1
      %v2458 = vadd.f32 %v2456, %v2457
      %v2459 = vrot.slane %v2306, 4
      %v2460 = vadd.f32 %v2306, %v2459
      %v2461 = vrot.slane %v2460, 2
      %v2462 = vadd.f32 %v2460, %v2461
      %v2463 = vrot.slane %v2462, 1
      %v2464 = vadd.f32 %v2462, %v2463
      %v2465 = vsel %vm154, %v2307, 0.0
      %v2466 = vrot.slane %v2465, 4
      %v2467 = vadd.f32 %v2465, %v2466
      %v2468 = vrot.slane %v2467, 2
      %v2469 = vadd.f32 %v2467, %v2468
      %v2470 = vrot.slane %v2469, 1
      %v2471 = vadd.f32 %v2469, %v2470
      %v2472 = vrot.slane %v2308, 4
      %v2473 = vadd.f32 %v2308, %v2472
      %v2474 = vrot.slane %v2473, 2
      %v2475 = vadd.f32 %v2473, %v2474
      %v2476 = vrot.slane %v2475, 1
      %v2477 = vadd.f32 %v2475, %v2476
      %v2478 = vsel %vm154, %v2309, 0.0
      %v2479 = vrot.slane %v2478, 4
      %v2480 = vadd.f32 %v2478, %v2479
      %v2481 = vrot.slane %v2480, 2
      %v2482 = vadd.f32 %v2480, %v2481
      %v2483 = vrot.slane %v2482, 1
      %v2484 = vadd.f32 %v2482, %v2483
      %v2485 = vrot.slane %v2310, 4
      %v2486 = vadd.f32 %v2310, %v2485
      %v2487 = vrot.slane %v2486, 2
      %v2488 = vadd.f32 %v2486, %v2487
      %v2489 = vrot.slane %v2488, 1
      %v2490 = vadd.f32 %v2488, %v2489
      %v2491 = vsel %vm154, %v2311, 0.0
      %v2492 = vrot.slane %v2491, 4
      %v2493 = vadd.f32 %v2491, %v2492
      %v2494 = vrot.slane %v2493, 2
      %v2495 = vadd.f32 %v2493, %v2494
      %v2496 = vrot.slane %v2495, 1
      %v2497 = vadd.f32 %v2495, %v2496
      %v2498 = vrot.slane %v2312, 4
      %v2499 = vadd.f32 %v2312, %v2498
      %v2500 = vrot.slane %v2499, 2
      %v2501 = vadd.f32 %v2499, %v2500
      %v2502 = vrot.slane %v2501, 1
      %v2503 = vadd.f32 %v2501, %v2502
      %v2504 = vsel %vm154, %v2313, 0.0
      %v2505 = vrot.slane %v2504, 4
      %v2506 = vadd.f32 %v2504, %v2505
      %v2507 = vrot.slane %v2506, 2
      %v2508 = vadd.f32 %v2506, %v2507
      %v2509 = vrot.slane %v2508, 1
      %v2510 = vadd.f32 %v2508, %v2509
      %v2511 = vrot.slane %v2314, 4
      %v2512 = vadd.f32 %v2314, %v2511
      %v2513 = vrot.slane %v2512, 2
      %v2514 = vadd.f32 %v2512, %v2513
      %v2515 = vrot.slane %v2514, 1
      %v2516 = vadd.f32 %v2514, %v2515
      %v2517 = vsel %vm154, %v2315, 0.0
      %v2518 = vrot.slane %v2517, 4
      %v2519 = vadd.f32 %v2517, %v2518
      %v2520 = vrot.slane %v2519, 2
      %v2521 = vadd.f32 %v2519, %v2520
      %v2522 = vrot.slane %v2521, 1
      %v2523 = vadd.f32 %v2521, %v2522
      %v2556 = vsel %vm498, %v2334, %v2321
      %v2557 = vsel %vm500, %v2347, %v2556
      %v2558 = vsel %vm502, %v2360, %v2557
      %v2559 = vsel %vm504, %v2373, %v2558
      %v2560 = vsel %vm506, %v2386, %v2559
      %v2561 = vsel %vm508, %v2399, %v2560
      %v2562 = vsel %vm510, %v2412, %v2561
      %v2563 = vsel %vm498, %v2341, %v2328
      %v2564 = vsel %vm500, %v2354, %v2563
      %v2565 = vsel %vm502, %v2367, %v2564
      %v2566 = vsel %vm504, %v2380, %v2565
      %v2567 = vsel %vm506, %v2393, %v2566
      %v2568 = vsel %vm508, %v2406, %v2567
      %v2569 = vsel %vm510, %v2419, %v2568
      %v2570 = vsel %vm498, %v2438, %v2425
      %v2571 = vsel %vm500, %v2451, %v2570
      %v2572 = vsel %vm502, %v2464, %v2571
      %v2573 = vsel %vm504, %v2477, %v2572
      %v2574 = vsel %vm506, %v2490, %v2573
      %v2575 = vsel %vm508, %v2503, %v2574
      %v2576 = vsel %vm510, %v2516, %v2575
      %v2577 = vsel %vm498, %v2445, %v2432
      %v2578 = vsel %vm500, %v2458, %v2577
      %v2579 = vsel %vm502, %v2471, %v2578
      %v2580 = vsel %vm504, %v2484, %v2579
      %v2581 = vsel %vm506, %v2497, %v2580
      %v2582 = vsel %vm508, %v2510, %v2581
      %v2583 = vsel %vm510, %v2523, %v2582
      %s2588 = scalar_lea.vmem [#allocation2], 192
      %2589 = vst [vmem:[%s2588] sm:$0xff] %v2562
      %2590 = vst.msk [vmem:[%s2588 + $0x8] sm:$0xff] %vm154, %v2569
      %2591 = vst [vmem:[%s2588 + $0x10] sm:$0xff] %v2576
      %2592 = vst.msk [vmem:[%s2588 + $0x18] sm:$0xff] %vm154, %v2583
      %s2593 = scalar_lea.vmem %s1, 1792
      %v2594 = vld [vmem:[%s2593] sm:$0xff]
      %v2595 = vld [vmem:[%s2593 + $0x8] sm:$0xff]
      %v2596 = vld [vmem:[%s2593 + $0x10] sm:$0xff]
      %v2597 = vld [vmem:[%s2593 + $0x18] sm:$0xff]
      %v2598 = vld [vmem:[%s2593 + $0x20] sm:$0xff]
      %v2599 = vld [vmem:[%s2593 + $0x28] sm:$0xff]
      %v2600 = vld [vmem:[%s2593 + $0x30] sm:$0xff]
      %v2601 = vld [vmem:[%s2593 + $0x38] sm:$0xff]
      %v2602 = vld [vmem:[%s2593 + $0x40] sm:$0xff]
      %v2603 = vld [vmem:[%s2593 + $0x48] sm:$0xff]
      %v2604 = vld [vmem:[%s2593 + $0x50] sm:$0xff]
      %v2605 = vld [vmem:[%s2593 + $0x58] sm:$0xff]
      %v2606 = vld [vmem:[%s2593 + $0x60] sm:$0xff]
      %v2607 = vld [vmem:[%s2593 + $0x68] sm:$0xff]
      %v2608 = vld [vmem:[%s2593 + $0x70] sm:$0xff]
      %v2609 = vld [vmem:[%s2593 + $0x78] sm:$0xff]
      %v2610 = vld [vmem:[%s2593 + $0x80] sm:$0xff]
      %v2611 = vld [vmem:[%s2593 + $0x88] sm:$0xff]
      %v2612 = vld [vmem:[%s2593 + $0x90] sm:$0xff]
      %v2613 = vld [vmem:[%s2593 + $0x98] sm:$0xff]
      %v2614 = vld [vmem:[%s2593 + $0xa0] sm:$0xff]
      %v2615 = vld [vmem:[%s2593 + $0xa8] sm:$0xff]
      %v2616 = vld [vmem:[%s2593 + $0xb0] sm:$0xff]
      %v2617 = vld [vmem:[%s2593 + $0xb8] sm:$0xff]
      %v2618 = vld [vmem:[%s2593 + $0xc0] sm:$0xff]
      %v2619 = vld [vmem:[%s2593 + $0xc8] sm:$0xff]
      %v2620 = vld [vmem:[%s2593 + $0xd0] sm:$0xff]
      %v2621 = vld [vmem:[%s2593 + $0xd8] sm:$0xff]
      %v2622 = vld [vmem:[%s2593 + $0xe0] sm:$0xff]
      %v2623 = vld [vmem:[%s2593 + $0xe8] sm:$0xff]
      %v2624 = vld [vmem:[%s2593 + $0xf0] sm:$0xff]
      %v2625 = vld [vmem:[%s2593 + $0xf8] sm:$0xff]
      %v2626 = vmul.f32 %v2594, %v192
      %v2627 = vmul.f32 %v2595, %v193
      %v2628 = vmul.f32 %v2596, %v192
      %v2629 = vmul.f32 %v2597, %v193
      %v2630 = vmul.f32 %v2598, %v192
      %v2631 = vmul.f32 %v2599, %v193
      %v2632 = vmul.f32 %v2600, %v192
      %v2633 = vmul.f32 %v2601, %v193
      %v2634 = vmul.f32 %v2602, %v192
      %v2635 = vmul.f32 %v2603, %v193
      %v2636 = vmul.f32 %v2604, %v192
      %v2637 = vmul.f32 %v2605, %v193
      %v2638 = vmul.f32 %v2606, %v192
      %v2639 = vmul.f32 %v2607, %v193
      %v2640 = vmul.f32 %v2608, %v192
      %v2641 = vmul.f32 %v2609, %v193
      %v2642 = vmul.f32 %v2610, %v192
      %v2643 = vmul.f32 %v2611, %v193
      %v2644 = vmul.f32 %v2612, %v192
      %v2645 = vmul.f32 %v2613, %v193
      %v2646 = vmul.f32 %v2614, %v192
      %v2647 = vmul.f32 %v2615, %v193
      %v2648 = vmul.f32 %v2616, %v192
      %v2649 = vmul.f32 %v2617, %v193
      %v2650 = vmul.f32 %v2618, %v192
      %v2651 = vmul.f32 %v2619, %v193
      %v2652 = vmul.f32 %v2620, %v192
      %v2653 = vmul.f32 %v2621, %v193
      %v2654 = vmul.f32 %v2622, %v192
      %v2655 = vmul.f32 %v2623, %v193
      %v2656 = vmul.f32 %v2624, %v192
      %v2657 = vmul.f32 %v2625, %v193
      %v2658 = vrot.slane %v2626, 4
      %v2659 = vadd.f32 %v2626, %v2658
      %v2660 = vrot.slane %v2659, 2
      %v2661 = vadd.f32 %v2659, %v2660
      %v2662 = vrot.slane %v2661, 1
      %v2663 = vadd.f32 %v2661, %v2662
      %v2664 = vsel %vm154, %v2627, 0.0
      %v2665 = vrot.slane %v2664, 4
      %v2666 = vadd.f32 %v2664, %v2665
      %v2667 = vrot.slane %v2666, 2
      %v2668 = vadd.f32 %v2666, %v2667
      %v2669 = vrot.slane %v2668, 1
      %v2670 = vadd.f32 %v2668, %v2669
      %v2671 = vrot.slane %v2628, 4
      %v2672 = vadd.f32 %v2628, %v2671
      %v2673 = vrot.slane %v2672, 2
      %v2674 = vadd.f32 %v2672, %v2673
      %v2675 = vrot.slane %v2674, 1
      %v2676 = vadd.f32 %v2674, %v2675
      %v2677 = vsel %vm154, %v2629, 0.0
      %v2678 = vrot.slane %v2677, 4
      %v2679 = vadd.f32 %v2677, %v2678
      %v2680 = vrot.slane %v2679, 2
      %v2681 = vadd.f32 %v2679, %v2680
      %v2682 = vrot.slane %v2681, 1
      %v2683 = vadd.f32 %v2681, %v2682
      %v2684 = vrot.slane %v2630, 4
      %v2685 = vadd.f32 %v2630, %v2684
      %v2686 = vrot.slane %v2685, 2
      %v2687 = vadd.f32 %v2685, %v2686
      %v2688 = vrot.slane %v2687, 1
      %v2689 = vadd.f32 %v2687, %v2688
      %v2690 = vsel %vm154, %v2631, 0.0
      %v2691 = vrot.slane %v2690, 4
      %v2692 = vadd.f32 %v2690, %v2691
      %v2693 = vrot.slane %v2692, 2
      %v2694 = vadd.f32 %v2692, %v2693
      %v2695 = vrot.slane %v2694, 1
      %v2696 = vadd.f32 %v2694, %v2695
      %v2697 = vrot.slane %v2632, 4
      %v2698 = vadd.f32 %v2632, %v2697
      %v2699 = vrot.slane %v2698, 2
      %v2700 = vadd.f32 %v2698, %v2699
      %v2701 = vrot.slane %v2700, 1
      %v2702 = vadd.f32 %v2700, %v2701
      %v2703 = vsel %vm154, %v2633, 0.0
      %v2704 = vrot.slane %v2703, 4
      %v2705 = vadd.f32 %v2703, %v2704
      %v2706 = vrot.slane %v2705, 2
      %v2707 = vadd.f32 %v2705, %v2706
      %v2708 = vrot.slane %v2707, 1
      %v2709 = vadd.f32 %v2707, %v2708
      %v2710 = vrot.slane %v2634, 4
      %v2711 = vadd.f32 %v2634, %v2710
      %v2712 = vrot.slane %v2711, 2
      %v2713 = vadd.f32 %v2711, %v2712
      %v2714 = vrot.slane %v2713, 1
      %v2715 = vadd.f32 %v2713, %v2714
      %v2716 = vsel %vm154, %v2635, 0.0
      %v2717 = vrot.slane %v2716, 4
      %v2718 = vadd.f32 %v2716, %v2717
      %v2719 = vrot.slane %v2718, 2
      %v2720 = vadd.f32 %v2718, %v2719
      %v2721 = vrot.slane %v2720, 1
      %v2722 = vadd.f32 %v2720, %v2721
      %v2723 = vrot.slane %v2636, 4
      %v2724 = vadd.f32 %v2636, %v2723
      %v2725 = vrot.slane %v2724, 2
      %v2726 = vadd.f32 %v2724, %v2725
      %v2727 = vrot.slane %v2726, 1
      %v2728 = vadd.f32 %v2726, %v2727
      %v2729 = vsel %vm154, %v2637, 0.0
      %v2730 = vrot.slane %v2729, 4
      %v2731 = vadd.f32 %v2729, %v2730
      %v2732 = vrot.slane %v2731, 2
      %v2733 = vadd.f32 %v2731, %v2732
      %v2734 = vrot.slane %v2733, 1
      %v2735 = vadd.f32 %v2733, %v2734
      %v2736 = vrot.slane %v2638, 4
      %v2737 = vadd.f32 %v2638, %v2736
      %v2738 = vrot.slane %v2737, 2
      %v2739 = vadd.f32 %v2737, %v2738
      %v2740 = vrot.slane %v2739, 1
      %v2741 = vadd.f32 %v2739, %v2740
      %v2742 = vsel %vm154, %v2639, 0.0
      %v2743 = vrot.slane %v2742, 4
      %v2744 = vadd.f32 %v2742, %v2743
      %v2745 = vrot.slane %v2744, 2
      %v2746 = vadd.f32 %v2744, %v2745
      %v2747 = vrot.slane %v2746, 1
      %v2748 = vadd.f32 %v2746, %v2747
      %v2749 = vrot.slane %v2640, 4
      %v2750 = vadd.f32 %v2640, %v2749
      %v2751 = vrot.slane %v2750, 2
      %v2752 = vadd.f32 %v2750, %v2751
      %v2753 = vrot.slane %v2752, 1
      %v2754 = vadd.f32 %v2752, %v2753
      %v2755 = vsel %vm154, %v2641, 0.0
      %v2756 = vrot.slane %v2755, 4
      %v2757 = vadd.f32 %v2755, %v2756
      %v2758 = vrot.slane %v2757, 2
      %v2759 = vadd.f32 %v2757, %v2758
      %v2760 = vrot.slane %v2759, 1
      %v2761 = vadd.f32 %v2759, %v2760
      %v2762 = vrot.slane %v2642, 4
      %v2763 = vadd.f32 %v2642, %v2762
      %v2764 = vrot.slane %v2763, 2
      %v2765 = vadd.f32 %v2763, %v2764
      %v2766 = vrot.slane %v2765, 1
      %v2767 = vadd.f32 %v2765, %v2766
      %v2768 = vsel %vm154, %v2643, 0.0
      %v2769 = vrot.slane %v2768, 4
      %v2770 = vadd.f32 %v2768, %v2769
      %v2771 = vrot.slane %v2770, 2
      %v2772 = vadd.f32 %v2770, %v2771
      %v2773 = vrot.slane %v2772, 1
      %v2774 = vadd.f32 %v2772, %v2773
      %v2775 = vrot.slane %v2644, 4
      %v2776 = vadd.f32 %v2644, %v2775
      %v2777 = vrot.slane %v2776, 2
      %v2778 = vadd.f32 %v2776, %v2777
      %v2779 = vrot.slane %v2778, 1
      %v2780 = vadd.f32 %v2778, %v2779
      %v2781 = vsel %vm154, %v2645, 0.0
      %v2782 = vrot.slane %v2781, 4
      %v2783 = vadd.f32 %v2781, %v2782
      %v2784 = vrot.slane %v2783, 2
      %v2785 = vadd.f32 %v2783, %v2784
      %v2786 = vrot.slane %v2785, 1
      %v2787 = vadd.f32 %v2785, %v2786
      %v2788 = vrot.slane %v2646, 4
      %v2789 = vadd.f32 %v2646, %v2788
      %v2790 = vrot.slane %v2789, 2
      %v2791 = vadd.f32 %v2789, %v2790
      %v2792 = vrot.slane %v2791, 1
      %v2793 = vadd.f32 %v2791, %v2792
      %v2794 = vsel %vm154, %v2647, 0.0
      %v2795 = vrot.slane %v2794, 4
      %v2796 = vadd.f32 %v2794, %v2795
      %v2797 = vrot.slane %v2796, 2
      %v2798 = vadd.f32 %v2796, %v2797
      %v2799 = vrot.slane %v2798, 1
      %v2800 = vadd.f32 %v2798, %v2799
      %v2801 = vrot.slane %v2648, 4
      %v2802 = vadd.f32 %v2648, %v2801
      %v2803 = vrot.slane %v2802, 2
      %v2804 = vadd.f32 %v2802, %v2803
      %v2805 = vrot.slane %v2804, 1
      %v2806 = vadd.f32 %v2804, %v2805
      %v2807 = vsel %vm154, %v2649, 0.0
      %v2808 = vrot.slane %v2807, 4
      %v2809 = vadd.f32 %v2807, %v2808
      %v2810 = vrot.slane %v2809, 2
      %v2811 = vadd.f32 %v2809, %v2810
      %v2812 = vrot.slane %v2811, 1
      %v2813 = vadd.f32 %v2811, %v2812
      %v2814 = vrot.slane %v2650, 4
      %v2815 = vadd.f32 %v2650, %v2814
      %v2816 = vrot.slane %v2815, 2
      %v2817 = vadd.f32 %v2815, %v2816
      %v2818 = vrot.slane %v2817, 1
      %v2819 = vadd.f32 %v2817, %v2818
      %v2820 = vsel %vm154, %v2651, 0.0
      %v2821 = vrot.slane %v2820, 4
      %v2822 = vadd.f32 %v2820, %v2821
      %v2823 = vrot.slane %v2822, 2
      %v2824 = vadd.f32 %v2822, %v2823
      %v2825 = vrot.slane %v2824, 1
      %v2826 = vadd.f32 %v2824, %v2825
      %v2827 = vrot.slane %v2652, 4
      %v2828 = vadd.f32 %v2652, %v2827
      %v2829 = vrot.slane %v2828, 2
      %v2830 = vadd.f32 %v2828, %v2829
      %v2831 = vrot.slane %v2830, 1
      %v2832 = vadd.f32 %v2830, %v2831
      %v2833 = vsel %vm154, %v2653, 0.0
      %v2834 = vrot.slane %v2833, 4
      %v2835 = vadd.f32 %v2833, %v2834
      %v2836 = vrot.slane %v2835, 2
      %v2837 = vadd.f32 %v2835, %v2836
      %v2838 = vrot.slane %v2837, 1
      %v2839 = vadd.f32 %v2837, %v2838
      %v2840 = vrot.slane %v2654, 4
      %v2841 = vadd.f32 %v2654, %v2840
      %v2842 = vrot.slane %v2841, 2
      %v2843 = vadd.f32 %v2841, %v2842
      %v2844 = vrot.slane %v2843, 1
      %v2845 = vadd.f32 %v2843, %v2844
      %v2846 = vsel %vm154, %v2655, 0.0
      %v2847 = vrot.slane %v2846, 4
      %v2848 = vadd.f32 %v2846, %v2847
      %v2849 = vrot.slane %v2848, 2
      %v2850 = vadd.f32 %v2848, %v2849
      %v2851 = vrot.slane %v2850, 1
      %v2852 = vadd.f32 %v2850, %v2851
      %v2853 = vrot.slane %v2656, 4
      %v2854 = vadd.f32 %v2656, %v2853
      %v2855 = vrot.slane %v2854, 2
      %v2856 = vadd.f32 %v2854, %v2855
      %v2857 = vrot.slane %v2856, 1
      %v2858 = vadd.f32 %v2856, %v2857
      %v2859 = vsel %vm154, %v2657, 0.0
      %v2860 = vrot.slane %v2859, 4
      %v2861 = vadd.f32 %v2859, %v2860
      %v2862 = vrot.slane %v2861, 2
      %v2863 = vadd.f32 %v2861, %v2862
      %v2864 = vrot.slane %v2863, 1
      %v2865 = vadd.f32 %v2863, %v2864
      %v2898 = vsel %vm498, %v2676, %v2663
      %v2899 = vsel %vm500, %v2689, %v2898
      %v2900 = vsel %vm502, %v2702, %v2899
      %v2901 = vsel %vm504, %v2715, %v2900
      %v2902 = vsel %vm506, %v2728, %v2901
      %v2903 = vsel %vm508, %v2741, %v2902
      %v2904 = vsel %vm510, %v2754, %v2903
      %v2905 = vsel %vm498, %v2683, %v2670
      %v2906 = vsel %vm500, %v2696, %v2905
      %v2907 = vsel %vm502, %v2709, %v2906
      %v2908 = vsel %vm504, %v2722, %v2907
      %v2909 = vsel %vm506, %v2735, %v2908
      %v2910 = vsel %vm508, %v2748, %v2909
      %v2911 = vsel %vm510, %v2761, %v2910
      %v2912 = vsel %vm498, %v2780, %v2767
      %v2913 = vsel %vm500, %v2793, %v2912
      %v2914 = vsel %vm502, %v2806, %v2913
      %v2915 = vsel %vm504, %v2819, %v2914
      %v2916 = vsel %vm506, %v2832, %v2915
      %v2917 = vsel %vm508, %v2845, %v2916
      %v2918 = vsel %vm510, %v2858, %v2917
      %v2919 = vsel %vm498, %v2787, %v2774
      %v2920 = vsel %vm500, %v2800, %v2919
      %v2921 = vsel %vm502, %v2813, %v2920
      %v2922 = vsel %vm504, %v2826, %v2921
      %v2923 = vsel %vm506, %v2839, %v2922
      %v2924 = vsel %vm508, %v2852, %v2923
      %v2925 = vsel %vm510, %v2865, %v2924
      %s2930 = scalar_lea.vmem [#allocation2], 224
      %2931 = vst [vmem:[%s2930] sm:$0xff] %v2904
      %2932 = vst.msk [vmem:[%s2930 + $0x8] sm:$0xff] %vm154, %v2911
      %2933 = vst [vmem:[%s2930 + $0x10] sm:$0xff] %v2918
      %2934 = vst.msk [vmem:[%s2930 + $0x18] sm:$0xff] %vm154, %v2925
      %s2935 = scalar_lea.vmem %s1, 2048
      %v2936 = vld [vmem:[%s2935] sm:$0xff]
      %v2937 = vld [vmem:[%s2935 + $0x8] sm:$0xff]
      %v2938 = vld [vmem:[%s2935 + $0x10] sm:$0xff]
      %v2939 = vld [vmem:[%s2935 + $0x18] sm:$0xff]
      %v2940 = vld [vmem:[%s2935 + $0x20] sm:$0xff]
      %v2941 = vld [vmem:[%s2935 + $0x28] sm:$0xff]
      %v2942 = vld [vmem:[%s2935 + $0x30] sm:$0xff]
      %v2943 = vld [vmem:[%s2935 + $0x38] sm:$0xff]
      %v2944 = vld [vmem:[%s2935 + $0x40] sm:$0xff]
      %v2945 = vld [vmem:[%s2935 + $0x48] sm:$0xff]
      %v2946 = vld [vmem:[%s2935 + $0x50] sm:$0xff]
      %v2947 = vld [vmem:[%s2935 + $0x58] sm:$0xff]
      %v2948 = vld [vmem:[%s2935 + $0x60] sm:$0xff]
      %v2949 = vld [vmem:[%s2935 + $0x68] sm:$0xff]
      %v2950 = vld [vmem:[%s2935 + $0x70] sm:$0xff]
      %v2951 = vld [vmem:[%s2935 + $0x78] sm:$0xff]
      %v2952 = vld [vmem:[%s2935 + $0x80] sm:$0xff]
      %v2953 = vld [vmem:[%s2935 + $0x88] sm:$0xff]
      %v2954 = vld [vmem:[%s2935 + $0x90] sm:$0xff]
      %v2955 = vld [vmem:[%s2935 + $0x98] sm:$0xff]
      %v2956 = vld [vmem:[%s2935 + $0xa0] sm:$0xff]
      %v2957 = vld [vmem:[%s2935 + $0xa8] sm:$0xff]
      %v2958 = vld [vmem:[%s2935 + $0xb0] sm:$0xff]
      %v2959 = vld [vmem:[%s2935 + $0xb8] sm:$0xff]
      %v2960 = vld [vmem:[%s2935 + $0xc0] sm:$0xff]
      %v2961 = vld [vmem:[%s2935 + $0xc8] sm:$0xff]
      %v2962 = vld [vmem:[%s2935 + $0xd0] sm:$0xff]
      %v2963 = vld [vmem:[%s2935 + $0xd8] sm:$0xff]
      %v2964 = vld [vmem:[%s2935 + $0xe0] sm:$0xff]
      %v2965 = vld [vmem:[%s2935 + $0xe8] sm:$0xff]
      %v2966 = vld [vmem:[%s2935 + $0xf0] sm:$0xff]
      %v2967 = vld [vmem:[%s2935 + $0xf8] sm:$0xff]
      %v2968 = vmul.f32 %v2936, %v192
      %v2969 = vmul.f32 %v2937, %v193
      %v2970 = vmul.f32 %v2938, %v192
      %v2971 = vmul.f32 %v2939, %v193
      %v2972 = vmul.f32 %v2940, %v192
      %v2973 = vmul.f32 %v2941, %v193
      %v2974 = vmul.f32 %v2942, %v192
      %v2975 = vmul.f32 %v2943, %v193
      %v2976 = vmul.f32 %v2944, %v192
      %v2977 = vmul.f32 %v2945, %v193
      %v2978 = vmul.f32 %v2946, %v192
      %v2979 = vmul.f32 %v2947, %v193
      %v2980 = vmul.f32 %v2948, %v192
      %v2981 = vmul.f32 %v2949, %v193
      %v2982 = vmul.f32 %v2950, %v192
      %v2983 = vmul.f32 %v2951, %v193
      %v2984 = vmul.f32 %v2952, %v192
      %v2985 = vmul.f32 %v2953, %v193
      %v2986 = vmul.f32 %v2954, %v192
      %v2987 = vmul.f32 %v2955, %v193
      %v2988 = vmul.f32 %v2956, %v192
      %v2989 = vmul.f32 %v2957, %v193
      %v2990 = vmul.f32 %v2958, %v192
      %v2991 = vmul.f32 %v2959, %v193
      %v2992 = vmul.f32 %v2960, %v192
      %v2993 = vmul.f32 %v2961, %v193
      %v2994 = vmul.f32 %v2962, %v192
      %v2995 = vmul.f32 %v2963, %v193
      %v2996 = vmul.f32 %v2964, %v192
      %v2997 = vmul.f32 %v2965, %v193
      %v2998 = vmul.f32 %v2966, %v192
      %v2999 = vmul.f32 %v2967, %v193
      %v3000 = vrot.slane %v2968, 4
      %v3001 = vadd.f32 %v2968, %v3000
      %v3002 = vrot.slane %v3001, 2
      %v3003 = vadd.f32 %v3001, %v3002
      %v3004 = vrot.slane %v3003, 1
      %v3005 = vadd.f32 %v3003, %v3004
      %v3006 = vsel %vm154, %v2969, 0.0
      %v3007 = vrot.slane %v3006, 4
      %v3008 = vadd.f32 %v3006, %v3007
      %v3009 = vrot.slane %v3008, 2
      %v3010 = vadd.f32 %v3008, %v3009
      %v3011 = vrot.slane %v3010, 1
      %v3012 = vadd.f32 %v3010, %v3011
      %v3013 = vrot.slane %v2970, 4
      %v3014 = vadd.f32 %v2970, %v3013
      %v3015 = vrot.slane %v3014, 2
      %v3016 = vadd.f32 %v3014, %v3015
      %v3017 = vrot.slane %v3016, 1
      %v3018 = vadd.f32 %v3016, %v3017
      %v3019 = vsel %vm154, %v2971, 0.0
      %v3020 = vrot.slane %v3019, 4
      %v3021 = vadd.f32 %v3019, %v3020
      %v3022 = vrot.slane %v3021, 2
      %v3023 = vadd.f32 %v3021, %v3022
      %v3024 = vrot.slane %v3023, 1
      %v3025 = vadd.f32 %v3023, %v3024
      %v3026 = vrot.slane %v2972, 4
      %v3027 = vadd.f32 %v2972, %v3026
      %v3028 = vrot.slane %v3027, 2
      %v3029 = vadd.f32 %v3027, %v3028
      %v3030 = vrot.slane %v3029, 1
      %v3031 = vadd.f32 %v3029, %v3030
      %v3032 = vsel %vm154, %v2973, 0.0
      %v3033 = vrot.slane %v3032, 4
      %v3034 = vadd.f32 %v3032, %v3033
      %v3035 = vrot.slane %v3034, 2
      %v3036 = vadd.f32 %v3034, %v3035
      %v3037 = vrot.slane %v3036, 1
      %v3038 = vadd.f32 %v3036, %v3037
      %v3039 = vrot.slane %v2974, 4
      %v3040 = vadd.f32 %v2974, %v3039
      %v3041 = vrot.slane %v3040, 2
      %v3042 = vadd.f32 %v3040, %v3041
      %v3043 = vrot.slane %v3042, 1
      %v3044 = vadd.f32 %v3042, %v3043
      %v3045 = vsel %vm154, %v2975, 0.0
      %v3046 = vrot.slane %v3045, 4
      %v3047 = vadd.f32 %v3045, %v3046
      %v3048 = vrot.slane %v3047, 2
      %v3049 = vadd.f32 %v3047, %v3048
      %v3050 = vrot.slane %v3049, 1
      %v3051 = vadd.f32 %v3049, %v3050
      %v3052 = vrot.slane %v2976, 4
      %v3053 = vadd.f32 %v2976, %v3052
      %v3054 = vrot.slane %v3053, 2
      %v3055 = vadd.f32 %v3053, %v3054
      %v3056 = vrot.slane %v3055, 1
      %v3057 = vadd.f32 %v3055, %v3056
      %v3058 = vsel %vm154, %v2977, 0.0
      %v3059 = vrot.slane %v3058, 4
      %v3060 = vadd.f32 %v3058, %v3059
      %v3061 = vrot.slane %v3060, 2
      %v3062 = vadd.f32 %v3060, %v3061
      %v3063 = vrot.slane %v3062, 1
      %v3064 = vadd.f32 %v3062, %v3063
      %v3065 = vrot.slane %v2978, 4
      %v3066 = vadd.f32 %v2978, %v3065
      %v3067 = vrot.slane %v3066, 2
      %v3068 = vadd.f32 %v3066, %v3067
      %v3069 = vrot.slane %v3068, 1
      %v3070 = vadd.f32 %v3068, %v3069
      %v3071 = vsel %vm154, %v2979, 0.0
      %v3072 = vrot.slane %v3071, 4
      %v3073 = vadd.f32 %v3071, %v3072
      %v3074 = vrot.slane %v3073, 2
      %v3075 = vadd.f32 %v3073, %v3074
      %v3076 = vrot.slane %v3075, 1
      %v3077 = vadd.f32 %v3075, %v3076
      %v3078 = vrot.slane %v2980, 4
      %v3079 = vadd.f32 %v2980, %v3078
      %v3080 = vrot.slane %v3079, 2
      %v3081 = vadd.f32 %v3079, %v3080
      %v3082 = vrot.slane %v3081, 1
      %v3083 = vadd.f32 %v3081, %v3082
      %v3084 = vsel %vm154, %v2981, 0.0
      %v3085 = vrot.slane %v3084, 4
      %v3086 = vadd.f32 %v3084, %v3085
      %v3087 = vrot.slane %v3086, 2
      %v3088 = vadd.f32 %v3086, %v3087
      %v3089 = vrot.slane %v3088, 1
      %v3090 = vadd.f32 %v3088, %v3089
      %v3091 = vrot.slane %v2982, 4
      %v3092 = vadd.f32 %v2982, %v3091
      %v3093 = vrot.slane %v3092, 2
      %v3094 = vadd.f32 %v3092, %v3093
      %v3095 = vrot.slane %v3094, 1
      %v3096 = vadd.f32 %v3094, %v3095
      %v3097 = vsel %vm154, %v2983, 0.0
      %v3098 = vrot.slane %v3097, 4
      %v3099 = vadd.f32 %v3097, %v3098
      %v3100 = vrot.slane %v3099, 2
      %v3101 = vadd.f32 %v3099, %v3100
      %v3102 = vrot.slane %v3101, 1
      %v3103 = vadd.f32 %v3101, %v3102
      %v3104 = vrot.slane %v2984, 4
      %v3105 = vadd.f32 %v2984, %v3104
      %v3106 = vrot.slane %v3105, 2
      %v3107 = vadd.f32 %v3105, %v3106
      %v3108 = vrot.slane %v3107, 1
      %v3109 = vadd.f32 %v3107, %v3108
      %v3110 = vsel %vm154, %v2985, 0.0
      %v3111 = vrot.slane %v3110, 4
      %v3112 = vadd.f32 %v3110, %v3111
      %v3113 = vrot.slane %v3112, 2
      %v3114 = vadd.f32 %v3112, %v3113
      %v3115 = vrot.slane %v3114, 1
      %v3116 = vadd.f32 %v3114, %v3115
      %v3117 = vrot.slane %v2986, 4
      %v3118 = vadd.f32 %v2986, %v3117
      %v3119 = vrot.slane %v3118, 2
      %v3120 = vadd.f32 %v3118, %v3119
      %v3121 = vrot.slane %v3120, 1
      %v3122 = vadd.f32 %v3120, %v3121
      %v3123 = vsel %vm154, %v2987, 0.0
      %v3124 = vrot.slane %v3123, 4
      %v3125 = vadd.f32 %v3123, %v3124
      %v3126 = vrot.slane %v3125, 2
      %v3127 = vadd.f32 %v3125, %v3126
      %v3128 = vrot.slane %v3127, 1
      %v3129 = vadd.f32 %v3127, %v3128
      %v3130 = vrot.slane %v2988, 4
      %v3131 = vadd.f32 %v2988, %v3130
      %v3132 = vrot.slane %v3131, 2
      %v3133 = vadd.f32 %v3131, %v3132
      %v3134 = vrot.slane %v3133, 1
      %v3135 = vadd.f32 %v3133, %v3134
      %v3136 = vsel %vm154, %v2989, 0.0
      %v3137 = vrot.slane %v3136, 4
      %v3138 = vadd.f32 %v3136, %v3137
      %v3139 = vrot.slane %v3138, 2
      %v3140 = vadd.f32 %v3138, %v3139
      %v3141 = vrot.slane %v3140, 1
      %v3142 = vadd.f32 %v3140, %v3141
      %v3143 = vrot.slane %v2990, 4
      %v3144 = vadd.f32 %v2990, %v3143
      %v3145 = vrot.slane %v3144, 2
      %v3146 = vadd.f32 %v3144, %v3145
      %v3147 = vrot.slane %v3146, 1
      %v3148 = vadd.f32 %v3146, %v3147
      %v3149 = vsel %vm154, %v2991, 0.0
      %v3150 = vrot.slane %v3149, 4
      %v3151 = vadd.f32 %v3149, %v3150
      %v3152 = vrot.slane %v3151, 2
      %v3153 = vadd.f32 %v3151, %v3152
      %v3154 = vrot.slane %v3153, 1
      %v3155 = vadd.f32 %v3153, %v3154
      %v3156 = vrot.slane %v2992, 4
      %v3157 = vadd.f32 %v2992, %v3156
      %v3158 = vrot.slane %v3157, 2
      %v3159 = vadd.f32 %v3157, %v3158
      %v3160 = vrot.slane %v3159, 1
      %v3161 = vadd.f32 %v3159, %v3160
      %v3162 = vsel %vm154, %v2993, 0.0
      %v3163 = vrot.slane %v3162, 4
      %v3164 = vadd.f32 %v3162, %v3163
      %v3165 = vrot.slane %v3164, 2
      %v3166 = vadd.f32 %v3164, %v3165
      %v3167 = vrot.slane %v3166, 1
      %v3168 = vadd.f32 %v3166, %v3167
      %v3169 = vrot.slane %v2994, 4
      %v3170 = vadd.f32 %v2994, %v3169
      %v3171 = vrot.slane %v3170, 2
      %v3172 = vadd.f32 %v3170, %v3171
      %v3173 = vrot.slane %v3172, 1
      %v3174 = vadd.f32 %v3172, %v3173
      %v3175 = vsel %vm154, %v2995, 0.0
      %v3176 = vrot.slane %v3175, 4
      %v3177 = vadd.f32 %v3175, %v3176
      %v3178 = vrot.slane %v3177, 2
      %v3179 = vadd.f32 %v3177, %v3178
      %v3180 = vrot.slane %v3179, 1
      %v3181 = vadd.f32 %v3179, %v3180
      %v3182 = vrot.slane %v2996, 4
      %v3183 = vadd.f32 %v2996, %v3182
      %v3184 = vrot.slane %v3183, 2
      %v3185 = vadd.f32 %v3183, %v3184
      %v3186 = vrot.slane %v3185, 1
      %v3187 = vadd.f32 %v3185, %v3186
      %v3188 = vsel %vm154, %v2997, 0.0
      %v3189 = vrot.slane %v3188, 4
      %v3190 = vadd.f32 %v3188, %v3189
      %v3191 = vrot.slane %v3190, 2
      %v3192 = vadd.f32 %v3190, %v3191
      %v3193 = vrot.slane %v3192, 1
      %v3194 = vadd.f32 %v3192, %v3193
      %v3195 = vrot.slane %v2998, 4
      %v3196 = vadd.f32 %v2998, %v3195
      %v3197 = vrot.slane %v3196, 2
      %v3198 = vadd.f32 %v3196, %v3197
      %v3199 = vrot.slane %v3198, 1
      %v3200 = vadd.f32 %v3198, %v3199
      %v3201 = vsel %vm154, %v2999, 0.0
      %v3202 = vrot.slane %v3201, 4
      %v3203 = vadd.f32 %v3201, %v3202
      %v3204 = vrot.slane %v3203, 2
      %v3205 = vadd.f32 %v3203, %v3204
      %v3206 = vrot.slane %v3205, 1
      %v3207 = vadd.f32 %v3205, %v3206
      %v3240 = vsel %vm498, %v3018, %v3005
      %v3241 = vsel %vm500, %v3031, %v3240
      %v3242 = vsel %vm502, %v3044, %v3241
      %v3243 = vsel %vm504, %v3057, %v3242
      %v3244 = vsel %vm506, %v3070, %v3243
      %v3245 = vsel %vm508, %v3083, %v3244
      %v3246 = vsel %vm510, %v3096, %v3245
      %v3247 = vsel %vm498, %v3025, %v3012
      %v3248 = vsel %vm500, %v3038, %v3247
      %v3249 = vsel %vm502, %v3051, %v3248
      %v3250 = vsel %vm504, %v3064, %v3249
      %v3251 = vsel %vm506, %v3077, %v3250
      %v3252 = vsel %vm508, %v3090, %v3251
      %v3253 = vsel %vm510, %v3103, %v3252
      %v3254 = vsel %vm498, %v3122, %v3109
      %v3255 = vsel %vm500, %v3135, %v3254
      %v3256 = vsel %vm502, %v3148, %v3255
      %v3257 = vsel %vm504, %v3161, %v3256
      %v3258 = vsel %vm506, %v3174, %v3257
      %v3259 = vsel %vm508, %v3187, %v3258
      %v3260 = vsel %vm510, %v3200, %v3259
      %v3261 = vsel %vm498, %v3129, %v3116
      %v3262 = vsel %vm500, %v3142, %v3261
      %v3263 = vsel %vm502, %v3155, %v3262
      %v3264 = vsel %vm504, %v3168, %v3263
      %v3265 = vsel %vm506, %v3181, %v3264
      %v3266 = vsel %vm508, %v3194, %v3265
      %v3267 = vsel %vm510, %v3207, %v3266
      %s3272 = scalar_lea.vmem [#allocation2], 256
      %3273 = vst [vmem:[%s3272] sm:$0xff] %v3246
      %3274 = vst.msk [vmem:[%s3272 + $0x8] sm:$0xff] %vm154, %v3253
      %3275 = vst [vmem:[%s3272 + $0x10] sm:$0xff] %v3260
      %3276 = vst.msk [vmem:[%s3272 + $0x18] sm:$0xff] %vm154, %v3267
      %s3277 = scalar_lea.vmem %s1, 2304
      %v3278 = vld [vmem:[%s3277] sm:$0xff]
      %v3279 = vld [vmem:[%s3277 + $0x8] sm:$0xff]
      %v3280 = vld [vmem:[%s3277 + $0x10] sm:$0xff]
      %v3281 = vld [vmem:[%s3277 + $0x18] sm:$0xff]
      %v3282 = vld [vmem:[%s3277 + $0x20] sm:$0xff]
      %v3283 = vld [vmem:[%s3277 + $0x28] sm:$0xff]
      %v3284 = vld [vmem:[%s3277 + $0x30] sm:$0xff]
      %v3285 = vld [vmem:[%s3277 + $0x38] sm:$0xff]
      %v3286 = vld [vmem:[%s3277 + $0x40] sm:$0xff]
      %v3287 = vld [vmem:[%s3277 + $0x48] sm:$0xff]
      %v3288 = vld [vmem:[%s3277 + $0x50] sm:$0xff]
      %v3289 = vld [vmem:[%s3277 + $0x58] sm:$0xff]
      %v3290 = vld [vmem:[%s3277 + $0x60] sm:$0xff]
      %v3291 = vld [vmem:[%s3277 + $0x68] sm:$0xff]
      %v3292 = vld [vmem:[%s3277 + $0x70] sm:$0xff]
      %v3293 = vld [vmem:[%s3277 + $0x78] sm:$0xff]
      %v3294 = vld [vmem:[%s3277 + $0x80] sm:$0xff]
      %v3295 = vld [vmem:[%s3277 + $0x88] sm:$0xff]
      %v3296 = vld [vmem:[%s3277 + $0x90] sm:$0xff]
      %v3297 = vld [vmem:[%s3277 + $0x98] sm:$0xff]
      %v3298 = vld [vmem:[%s3277 + $0xa0] sm:$0xff]
      %v3299 = vld [vmem:[%s3277 + $0xa8] sm:$0xff]
      %v3300 = vld [vmem:[%s3277 + $0xb0] sm:$0xff]
      %v3301 = vld [vmem:[%s3277 + $0xb8] sm:$0xff]
      %v3302 = vld [vmem:[%s3277 + $0xc0] sm:$0xff]
      %v3303 = vld [vmem:[%s3277 + $0xc8] sm:$0xff]
      %v3304 = vld [vmem:[%s3277 + $0xd0] sm:$0xff]
      %v3305 = vld [vmem:[%s3277 + $0xd8] sm:$0xff]
      %v3306 = vld [vmem:[%s3277 + $0xe0] sm:$0xff]
      %v3307 = vld [vmem:[%s3277 + $0xe8] sm:$0xff]
      %v3308 = vld [vmem:[%s3277 + $0xf0] sm:$0xff]
      %v3309 = vld [vmem:[%s3277 + $0xf8] sm:$0xff]
      %v3310 = vmul.f32 %v3278, %v192
      %v3311 = vmul.f32 %v3279, %v193
      %v3312 = vmul.f32 %v3280, %v192
      %v3313 = vmul.f32 %v3281, %v193
      %v3314 = vmul.f32 %v3282, %v192
      %v3315 = vmul.f32 %v3283, %v193
      %v3316 = vmul.f32 %v3284, %v192
      %v3317 = vmul.f32 %v3285, %v193
      %v3318 = vmul.f32 %v3286, %v192
      %v3319 = vmul.f32 %v3287, %v193
      %v3320 = vmul.f32 %v3288, %v192
      %v3321 = vmul.f32 %v3289, %v193
      %v3322 = vmul.f32 %v3290, %v192
      %v3323 = vmul.f32 %v3291, %v193
      %v3324 = vmul.f32 %v3292, %v192
      %v3325 = vmul.f32 %v3293, %v193
      %v3326 = vmul.f32 %v3294, %v192
      %v3327 = vmul.f32 %v3295, %v193
      %v3328 = vmul.f32 %v3296, %v192
      %v3329 = vmul.f32 %v3297, %v193
      %v3330 = vmul.f32 %v3298, %v192
      %v3331 = vmul.f32 %v3299, %v193
      %v3332 = vmul.f32 %v3300, %v192
      %v3333 = vmul.f32 %v3301, %v193
      %v3334 = vmul.f32 %v3302, %v192
      %v3335 = vmul.f32 %v3303, %v193
      %v3336 = vmul.f32 %v3304, %v192
      %v3337 = vmul.f32 %v3305, %v193
      %v3338 = vmul.f32 %v3306, %v192
      %v3339 = vmul.f32 %v3307, %v193
      %v3340 = vmul.f32 %v3308, %v192
      %v3341 = vmul.f32 %v3309, %v193
      %v3342 = vrot.slane %v3310, 4
      %v3343 = vadd.f32 %v3310, %v3342
      %v3344 = vrot.slane %v3343, 2
      %v3345 = vadd.f32 %v3343, %v3344
      %v3346 = vrot.slane %v3345, 1
      %v3347 = vadd.f32 %v3345, %v3346
      %v3348 = vsel %vm154, %v3311, 0.0
      %v3349 = vrot.slane %v3348, 4
      %v3350 = vadd.f32 %v3348, %v3349
      %v3351 = vrot.slane %v3350, 2
      %v3352 = vadd.f32 %v3350, %v3351
      %v3353 = vrot.slane %v3352, 1
      %v3354 = vadd.f32 %v3352, %v3353
      %v3355 = vrot.slane %v3312, 4
      %v3356 = vadd.f32 %v3312, %v3355
      %v3357 = vrot.slane %v3356, 2
      %v3358 = vadd.f32 %v3356, %v3357
      %v3359 = vrot.slane %v3358, 1
      %v3360 = vadd.f32 %v3358, %v3359
      %v3361 = vsel %vm154, %v3313, 0.0
      %v3362 = vrot.slane %v3361, 4
      %v3363 = vadd.f32 %v3361, %v3362
      %v3364 = vrot.slane %v3363, 2
      %v3365 = vadd.f32 %v3363, %v3364
      %v3366 = vrot.slane %v3365, 1
      %v3367 = vadd.f32 %v3365, %v3366
      %v3368 = vrot.slane %v3314, 4
      %v3369 = vadd.f32 %v3314, %v3368
      %v3370 = vrot.slane %v3369, 2
      %v3371 = vadd.f32 %v3369, %v3370
      %v3372 = vrot.slane %v3371, 1
      %v3373 = vadd.f32 %v3371, %v3372
      %v3374 = vsel %vm154, %v3315, 0.0
      %v3375 = vrot.slane %v3374, 4
      %v3376 = vadd.f32 %v3374, %v3375
      %v3377 = vrot.slane %v3376, 2
      %v3378 = vadd.f32 %v3376, %v3377
      %v3379 = vrot.slane %v3378, 1
      %v3380 = vadd.f32 %v3378, %v3379
      %v3381 = vrot.slane %v3316, 4
      %v3382 = vadd.f32 %v3316, %v3381
      %v3383 = vrot.slane %v3382, 2
      %v3384 = vadd.f32 %v3382, %v3383
      %v3385 = vrot.slane %v3384, 1
      %v3386 = vadd.f32 %v3384, %v3385
      %v3387 = vsel %vm154, %v3317, 0.0
      %v3388 = vrot.slane %v3387, 4
      %v3389 = vadd.f32 %v3387, %v3388
      %v3390 = vrot.slane %v3389, 2
      %v3391 = vadd.f32 %v3389, %v3390
      %v3392 = vrot.slane %v3391, 1
      %v3393 = vadd.f32 %v3391, %v3392
      %v3394 = vrot.slane %v3318, 4
      %v3395 = vadd.f32 %v3318, %v3394
      %v3396 = vrot.slane %v3395, 2
      %v3397 = vadd.f32 %v3395, %v3396
      %v3398 = vrot.slane %v3397, 1
      %v3399 = vadd.f32 %v3397, %v3398
      %v3400 = vsel %vm154, %v3319, 0.0
      %v3401 = vrot.slane %v3400, 4
      %v3402 = vadd.f32 %v3400, %v3401
      %v3403 = vrot.slane %v3402, 2
      %v3404 = vadd.f32 %v3402, %v3403
      %v3405 = vrot.slane %v3404, 1
      %v3406 = vadd.f32 %v3404, %v3405
      %v3407 = vrot.slane %v3320, 4
      %v3408 = vadd.f32 %v3320, %v3407
      %v3409 = vrot.slane %v3408, 2
      %v3410 = vadd.f32 %v3408, %v3409
      %v3411 = vrot.slane %v3410, 1
      %v3412 = vadd.f32 %v3410, %v3411
      %v3413 = vsel %vm154, %v3321, 0.0
      %v3414 = vrot.slane %v3413, 4
      %v3415 = vadd.f32 %v3413, %v3414
      %v3416 = vrot.slane %v3415, 2
      %v3417 = vadd.f32 %v3415, %v3416
      %v3418 = vrot.slane %v3417, 1
      %v3419 = vadd.f32 %v3417, %v3418
      %v3420 = vrot.slane %v3322, 4
      %v3421 = vadd.f32 %v3322, %v3420
      %v3422 = vrot.slane %v3421, 2
      %v3423 = vadd.f32 %v3421, %v3422
      %v3424 = vrot.slane %v3423, 1
      %v3425 = vadd.f32 %v3423, %v3424
      %v3426 = vsel %vm154, %v3323, 0.0
      %v3427 = vrot.slane %v3426, 4
      %v3428 = vadd.f32 %v3426, %v3427
      %v3429 = vrot.slane %v3428, 2
      %v3430 = vadd.f32 %v3428, %v3429
      %v3431 = vrot.slane %v3430, 1
      %v3432 = vadd.f32 %v3430, %v3431
      %v3433 = vrot.slane %v3324, 4
      %v3434 = vadd.f32 %v3324, %v3433
      %v3435 = vrot.slane %v3434, 2
      %v3436 = vadd.f32 %v3434, %v3435
      %v3437 = vrot.slane %v3436, 1
      %v3438 = vadd.f32 %v3436, %v3437
      %v3439 = vsel %vm154, %v3325, 0.0
      %v3440 = vrot.slane %v3439, 4
      %v3441 = vadd.f32 %v3439, %v3440
      %v3442 = vrot.slane %v3441, 2
      %v3443 = vadd.f32 %v3441, %v3442
      %v3444 = vrot.slane %v3443, 1
      %v3445 = vadd.f32 %v3443, %v3444
      %v3446 = vrot.slane %v3326, 4
      %v3447 = vadd.f32 %v3326, %v3446
      %v3448 = vrot.slane %v3447, 2
      %v3449 = vadd.f32 %v3447, %v3448
      %v3450 = vrot.slane %v3449, 1
      %v3451 = vadd.f32 %v3449, %v3450
      %v3452 = vsel %vm154, %v3327, 0.0
      %v3453 = vrot.slane %v3452, 4
      %v3454 = vadd.f32 %v3452, %v3453
      %v3455 = vrot.slane %v3454, 2
      %v3456 = vadd.f32 %v3454, %v3455
      %v3457 = vrot.slane %v3456, 1
      %v3458 = vadd.f32 %v3456, %v3457
      %v3459 = vrot.slane %v3328, 4
      %v3460 = vadd.f32 %v3328, %v3459
      %v3461 = vrot.slane %v3460, 2
      %v3462 = vadd.f32 %v3460, %v3461
      %v3463 = vrot.slane %v3462, 1
      %v3464 = vadd.f32 %v3462, %v3463
      %v3465 = vsel %vm154, %v3329, 0.0
      %v3466 = vrot.slane %v3465, 4
      %v3467 = vadd.f32 %v3465, %v3466
      %v3468 = vrot.slane %v3467, 2
      %v3469 = vadd.f32 %v3467, %v3468
      %v3470 = vrot.slane %v3469, 1
      %v3471 = vadd.f32 %v3469, %v3470
      %v3472 = vrot.slane %v3330, 4
      %v3473 = vadd.f32 %v3330, %v3472
      %v3474 = vrot.slane %v3473, 2
      %v3475 = vadd.f32 %v3473, %v3474
      %v3476 = vrot.slane %v3475, 1
      %v3477 = vadd.f32 %v3475, %v3476
      %v3478 = vsel %vm154, %v3331, 0.0
      %v3479 = vrot.slane %v3478, 4
      %v3480 = vadd.f32 %v3478, %v3479
      %v3481 = vrot.slane %v3480, 2
      %v3482 = vadd.f32 %v3480, %v3481
      %v3483 = vrot.slane %v3482, 1
      %v3484 = vadd.f32 %v3482, %v3483
      %v3485 = vrot.slane %v3332, 4
      %v3486 = vadd.f32 %v3332, %v3485
      %v3487 = vrot.slane %v3486, 2
      %v3488 = vadd.f32 %v3486, %v3487
      %v3489 = vrot.slane %v3488, 1
      %v3490 = vadd.f32 %v3488, %v3489
      %v3491 = vsel %vm154, %v3333, 0.0
      %v3492 = vrot.slane %v3491, 4
      %v3493 = vadd.f32 %v3491, %v3492
      %v3494 = vrot.slane %v3493, 2
      %v3495 = vadd.f32 %v3493, %v3494
      %v3496 = vrot.slane %v3495, 1
      %v3497 = vadd.f32 %v3495, %v3496
      %v3498 = vrot.slane %v3334, 4
      %v3499 = vadd.f32 %v3334, %v3498
      %v3500 = vrot.slane %v3499, 2
      %v3501 = vadd.f32 %v3499, %v3500
      %v3502 = vrot.slane %v3501, 1
      %v3503 = vadd.f32 %v3501, %v3502
      %v3504 = vsel %vm154, %v3335, 0.0
      %v3505 = vrot.slane %v3504, 4
      %v3506 = vadd.f32 %v3504, %v3505
      %v3507 = vrot.slane %v3506, 2
      %v3508 = vadd.f32 %v3506, %v3507
      %v3509 = vrot.slane %v3508, 1
      %v3510 = vadd.f32 %v3508, %v3509
      %v3511 = vrot.slane %v3336, 4
      %v3512 = vadd.f32 %v3336, %v3511
      %v3513 = vrot.slane %v3512, 2
      %v3514 = vadd.f32 %v3512, %v3513
      %v3515 = vrot.slane %v3514, 1
      %v3516 = vadd.f32 %v3514, %v3515
      %v3517 = vsel %vm154, %v3337, 0.0
      %v3518 = vrot.slane %v3517, 4
      %v3519 = vadd.f32 %v3517, %v3518
      %v3520 = vrot.slane %v3519, 2
      %v3521 = vadd.f32 %v3519, %v3520
      %v3522 = vrot.slane %v3521, 1
      %v3523 = vadd.f32 %v3521, %v3522
      %v3524 = vrot.slane %v3338, 4
      %v3525 = vadd.f32 %v3338, %v3524
      %v3526 = vrot.slane %v3525, 2
      %v3527 = vadd.f32 %v3525, %v3526
      %v3528 = vrot.slane %v3527, 1
      %v3529 = vadd.f32 %v3527, %v3528
      %v3530 = vsel %vm154, %v3339, 0.0
      %v3531 = vrot.slane %v3530, 4
      %v3532 = vadd.f32 %v3530, %v3531
      %v3533 = vrot.slane %v3532, 2
      %v3534 = vadd.f32 %v3532, %v3533
      %v3535 = vrot.slane %v3534, 1
      %v3536 = vadd.f32 %v3534, %v3535
      %v3537 = vrot.slane %v3340, 4
      %v3538 = vadd.f32 %v3340, %v3537
      %v3539 = vrot.slane %v3538, 2
      %v3540 = vadd.f32 %v3538, %v3539
      %v3541 = vrot.slane %v3540, 1
      %v3542 = vadd.f32 %v3540, %v3541
      %v3543 = vsel %vm154, %v3341, 0.0
      %v3544 = vrot.slane %v3543, 4
      %v3545 = vadd.f32 %v3543, %v3544
      %v3546 = vrot.slane %v3545, 2
      %v3547 = vadd.f32 %v3545, %v3546
      %v3548 = vrot.slane %v3547, 1
      %v3549 = vadd.f32 %v3547, %v3548
      %v3582 = vsel %vm498, %v3360, %v3347
      %v3583 = vsel %vm500, %v3373, %v3582
      %v3584 = vsel %vm502, %v3386, %v3583
      %v3585 = vsel %vm504, %v3399, %v3584
      %v3586 = vsel %vm506, %v3412, %v3585
      %v3587 = vsel %vm508, %v3425, %v3586
      %v3588 = vsel %vm510, %v3438, %v3587
      %v3589 = vsel %vm498, %v3367, %v3354
      %v3590 = vsel %vm500, %v3380, %v3589
      %v3591 = vsel %vm502, %v3393, %v3590
      %v3592 = vsel %vm504, %v3406, %v3591
      %v3593 = vsel %vm506, %v3419, %v3592
      %v3594 = vsel %vm508, %v3432, %v3593
      %v3595 = vsel %vm510, %v3445, %v3594
      %v3596 = vsel %vm498, %v3464, %v3451
      %v3597 = vsel %vm500, %v3477, %v3596
      %v3598 = vsel %vm502, %v3490, %v3597
      %v3599 = vsel %vm504, %v3503, %v3598
      %v3600 = vsel %vm506, %v3516, %v3599
      %v3601 = vsel %vm508, %v3529, %v3600
      %v3602 = vsel %vm510, %v3542, %v3601
      %v3603 = vsel %vm498, %v3471, %v3458
      %v3604 = vsel %vm500, %v3484, %v3603
      %v3605 = vsel %vm502, %v3497, %v3604
      %v3606 = vsel %vm504, %v3510, %v3605
      %v3607 = vsel %vm506, %v3523, %v3606
      %v3608 = vsel %vm508, %v3536, %v3607
      %v3609 = vsel %vm510, %v3549, %v3608
      %s3614 = scalar_lea.vmem [#allocation2], 288
      %3615 = vst [vmem:[%s3614] sm:$0xff] %v3588
      %3616 = vst.msk [vmem:[%s3614 + $0x8] sm:$0xff] %vm154, %v3595
      %3617 = vst [vmem:[%s3614 + $0x10] sm:$0xff] %v3602
      %3618 = vst.msk [vmem:[%s3614 + $0x18] sm:$0xff] %vm154, %v3609
      %v3619 = vld [vmem:[#allocation2] sm:$0xff]
      %v3620 = vld [vmem:[#allocation2 + $0x8] sm:$0xff]
      %v3621 = vld [vmem:[#allocation2 + $0x10] sm:$0xff]
      %v3622 = vld [vmem:[#allocation2 + $0x18] sm:$0xff]
      %v3623 = vld [vmem:[#allocation2 + $0x20] sm:$0xff]
      %v3624 = vld [vmem:[#allocation2 + $0x28] sm:$0xff]
      %v3625 = vld [vmem:[#allocation2 + $0x30] sm:$0xff]
      %v3626 = vld [vmem:[#allocation2 + $0x38] sm:$0xff]
      %v3627 = vld [vmem:[#allocation2 + $0x40] sm:$0xff]
      %v3628 = vld [vmem:[#allocation2 + $0x48] sm:$0xff]
      %v3629 = vld [vmem:[#allocation2 + $0x50] sm:$0xff]
      %v3630 = vld [vmem:[#allocation2 + $0x58] sm:$0xff]
      %v3631 = vld [vmem:[#allocation2 + $0x60] sm:$0xff]
      %v3632 = vld [vmem:[#allocation2 + $0x68] sm:$0xff]
      %v3633 = vld [vmem:[#allocation2 + $0x70] sm:$0xff]
      %v3634 = vld [vmem:[#allocation2 + $0x78] sm:$0xff]
      %v3635 = vld [vmem:[#allocation2 + $0x80] sm:$0xff]
      %v3636 = vld [vmem:[#allocation2 + $0x88] sm:$0xff]
      %v3637 = vld [vmem:[#allocation2 + $0x90] sm:$0xff]
      %v3638 = vld [vmem:[#allocation2 + $0x98] sm:$0xff]
      %v3639 = vld [vmem:[#allocation2 + $0xa0] sm:$0xff]
      %v3640 = vld [vmem:[#allocation2 + $0xa8] sm:$0xff]
      %v3641 = vld [vmem:[#allocation2 + $0xb0] sm:$0xff]
      %v3642 = vld [vmem:[#allocation2 + $0xb8] sm:$0xff]
      %v3643 = vld [vmem:[#allocation2 + $0xc0] sm:$0xff]
      %v3644 = vld [vmem:[#allocation2 + $0xc8] sm:$0xff]
      %v3645 = vld [vmem:[#allocation2 + $0xd0] sm:$0xff]
      %v3646 = vld [vmem:[#allocation2 + $0xd8] sm:$0xff]
      %v3647 = vld [vmem:[#allocation2 + $0xe0] sm:$0xff]
      %v3648 = vld [vmem:[#allocation2 + $0xe8] sm:$0xff]
      %v3649 = vld [vmem:[#allocation2 + $0xf0] sm:$0xff]
      %v3650 = vld [vmem:[#allocation2 + $0xf8] sm:$0xff]
      %v3651 = vld [vmem:[#allocation2 + $0x100] sm:$0xff]
      %v3652 = vld [vmem:[#allocation2 + $0x108] sm:$0xff]
      %v3653 = vld [vmem:[#allocation2 + $0x110] sm:$0xff]
      %v3654 = vld [vmem:[#allocation2 + $0x118] sm:$0xff]
      %v3655 = vld [vmem:[#allocation2 + $0x120] sm:$0xff]
      %v3656 = vld [vmem:[#allocation2 + $0x128] sm:$0xff]
      %v3657 = vld [vmem:[#allocation2 + $0x130] sm:$0xff]
      %v3658 = vld [vmem:[#allocation2 + $0x138] sm:$0xff]
      %vm3659 = vcmask 1041408
      %v3660 = vsel %vm3659, 1.0, 0.0
      %v3661 = vadd.f32 %v3660, 1.0
      %v3662 = vrot.slane %v3661, 4
      %v3663 = vadd.f32 %v3661, %v3662
      %v3664 = vrot.slane %v3663, 2
      %v3665 = vadd.f32 %v3663, %v3664
      %v3666 = vrot.slane %v3665, 1
      %v3667 = vadd.f32 %v3665, %v3666
      %v3668 = vrcp.pop %v3667
      %v3669 = vmul.f32 %v3668, %v3619
      %v3670 = vmul.f32 %v3668, %v3620
      %v3671 = vmul.f32 %v3668, %v3621
      %v3672 = vmul.f32 %v3668, %v3622
      %v3673 = vmul.f32 %v3668, %v3623
      %v3674 = vmul.f32 %v3668, %v3624
      %v3675 = vmul.f32 %v3668, %v3625
      %v3676 = vmul.f32 %v3668, %v3626
      %v3677 = vmul.f32 %v3668, %v3627
      %v3678 = vmul.f32 %v3668, %v3628
      %v3679 = vmul.f32 %v3668, %v3629
      %v3680 = vmul.f32 %v3668, %v3630
      %v3681 = vmul.f32 %v3668, %v3631
      %v3682 = vmul.f32 %v3668, %v3632
      %v3683 = vmul.f32 %v3668, %v3633
      %v3684 = vmul.f32 %v3668, %v3634
      %v3685 = vmul.f32 %v3668, %v3635
      %v3686 = vmul.f32 %v3668, %v3636
      %v3687 = vmul.f32 %v3668, %v3637
      %v3688 = vmul.f32 %v3668, %v3638
      %v3689 = vmul.f32 %v3668, %v3639
      %v3690 = vmul.f32 %v3668, %v3640
      %v3691 = vmul.f32 %v3668, %v3641
      %v3692 = vmul.f32 %v3668, %v3642
      %v3693 = vmul.f32 %v3668, %v3643
      %v3694 = vmul.f32 %v3668, %v3644
      %v3695 = vmul.f32 %v3668, %v3645
      %v3696 = vmul.f32 %v3668, %v3646
      %v3697 = vmul.f32 %v3668, %v3647
      %v3698 = vmul.f32 %v3668, %v3648
      %v3699 = vmul.f32 %v3668, %v3649
      %v3700 = vmul.f32 %v3668, %v3650
      %v3701 = vmul.f32 %v3668, %v3651
      %v3702 = vmul.f32 %v3668, %v3652
      %v3703 = vmul.f32 %v3668, %v3653
      %v3704 = vmul.f32 %v3668, %v3654
      %v3705 = vmul.f32 %v3668, %v3655
      %v3706 = vmul.f32 %v3668, %v3656
      %v3707 = vmul.f32 %v3668, %v3657
      %v3708 = vmul.f32 %v3668, %v3658
      %v3709 = vsel %vm154, %v3670, 0.0
      %v3710 = vadd.f32 %v3669, %v3709
      %3711 = vadd.xlane.f32.xlu0 %v3710
      %v3712 = vpop.xlane.xlu0 %3711
      %v3713 = vsel %vm154, %v3672, 0.0
      %v3714 = vadd.f32 %v3671, %v3713
      %3715 = vadd.xlane.f32.xlu0 %v3714
      %v3716 = vpop.xlane.xlu0 %3715
      %v3717 = vsel %vm154, %v3674, 0.0
      %v3718 = vadd.f32 %v3673, %v3717
      %3719 = vadd.xlane.f32.xlu0 %v3718
      %v3720 = vpop.xlane.xlu0 %3719
      %v3721 = vsel %vm154, %v3676, 0.0
      %v3722 = vadd.f32 %v3675, %v3721
      %3723 = vadd.xlane.f32.xlu0 %v3722
      %v3724 = vpop.xlane.xlu0 %3723
      %v3725 = vsel %vm154, %v3678, 0.0
      %v3726 = vadd.f32 %v3677, %v3725
      %3727 = vadd.xlane.f32.xlu0 %v3726
      %v3728 = vpop.xlane.xlu0 %3727
      %v3729 = vsel %vm154, %v3680, 0.0
      %v3730 = vadd.f32 %v3679, %v3729
      %3731 = vadd.xlane.f32.xlu0 %v3730
      %v3732 = vpop.xlane.xlu0 %3731
      %v3733 = vsel %vm154, %v3682, 0.0
      %v3734 = vadd.f32 %v3681, %v3733
      %3735 = vadd.xlane.f32.xlu0 %v3734
      %v3736 = vpop.xlane.xlu0 %3735
      %v3737 = vsel %vm154, %v3684, 0.0
      %v3738 = vadd.f32 %v3683, %v3737
      %3739 = vadd.xlane.f32.xlu0 %v3738
      %v3740 = vpop.xlane.xlu0 %3739
      %v3741 = vsel %vm154, %v3686, 0.0
      %v3742 = vadd.f32 %v3685, %v3741
      %3743 = vadd.xlane.f32.xlu0 %v3742
      %v3744 = vpop.xlane.xlu0 %3743
      %v3745 = vsel %vm154, %v3688, 0.0
      %v3746 = vadd.f32 %v3687, %v3745
      %3747 = vadd.xlane.f32.xlu0 %v3746
      %v3748 = vpop.xlane.xlu0 %3747
      %v3749 = vsel %vm154, %v3690, 0.0
      %v3750 = vadd.f32 %v3689, %v3749
      %3751 = vadd.xlane.f32.xlu0 %v3750
      %v3752 = vpop.xlane.xlu0 %3751
      %v3753 = vsel %vm154, %v3692, 0.0
      %v3754 = vadd.f32 %v3691, %v3753
      %3755 = vadd.xlane.f32.xlu0 %v3754
      %v3756 = vpop.xlane.xlu0 %3755
      %v3757 = vsel %vm154, %v3694, 0.0
      %v3758 = vadd.f32 %v3693, %v3757
      %3759 = vadd.xlane.f32.xlu0 %v3758
      %v3760 = vpop.xlane.xlu0 %3759
      %v3761 = vsel %vm154, %v3696, 0.0
      %v3762 = vadd.f32 %v3695, %v3761
      %3763 = vadd.xlane.f32.xlu0 %v3762
      %v3764 = vpop.xlane.xlu0 %3763
      %v3765 = vsel %vm154, %v3698, 0.0
      %v3766 = vadd.f32 %v3697, %v3765
      %3767 = vadd.xlane.f32.xlu0 %v3766
      %v3768 = vpop.xlane.xlu0 %3767
      %v3769 = vsel %vm154, %v3700, 0.0
      %v3770 = vadd.f32 %v3699, %v3769
      %3771 = vadd.xlane.f32.xlu0 %v3770
      %v3772 = vpop.xlane.xlu0 %3771
      %v3773 = vsel %vm154, %v3702, 0.0
      %v3774 = vadd.f32 %v3701, %v3773
      %3775 = vadd.xlane.f32.xlu0 %v3774
      %v3776 = vpop.xlane.xlu0 %3775
      %v3777 = vsel %vm154, %v3704, 0.0
      %v3778 = vadd.f32 %v3703, %v3777
      %3779 = vadd.xlane.f32.xlu0 %v3778
      %v3780 = vpop.xlane.xlu0 %3779
      %v3781 = vsel %vm154, %v3706, 0.0
      %v3782 = vadd.f32 %v3705, %v3781
      %3783 = vadd.xlane.f32.xlu0 %v3782
      %v3784 = vpop.xlane.xlu0 %3783
      %v3785 = vsel %vm154, %v3708, 0.0
      %v3786 = vadd.f32 %v3707, %v3785
      %3787 = vadd.xlane.f32.xlu0 %v3786
      %v3788 = vpop.xlane.xlu0 %3787
      %v3789 = vmul.f32 %v3712, %v3712
      %v3790 = vmul.f32 %v3716, %v3716
      %v3791 = vmul.f32 %v3720, %v3720
      %v3792 = vmul.f32 %v3724, %v3724
      %v3793 = vmul.f32 %v3728, %v3728
      %v3794 = vmul.f32 %v3732, %v3732
      %v3795 = vmul.f32 %v3736, %v3736
      %v3796 = vmul.f32 %v3740, %v3740
      %v3797 = vmul.f32 %v3744, %v3744
      %v3798 = vmul.f32 %v3748, %v3748
      %v3799 = vmul.f32 %v3752, %v3752
      %v3800 = vmul.f32 %v3756, %v3756
      %v3801 = vmul.f32 %v3760, %v3760
      %v3802 = vmul.f32 %v3764, %v3764
      %v3803 = vmul.f32 %v3768, %v3768
      %v3804 = vmul.f32 %v3772, %v3772
      %v3805 = vmul.f32 %v3776, %v3776
      %v3806 = vmul.f32 %v3780, %v3780
      %v3807 = vmul.f32 %v3784, %v3784
      %v3808 = vmul.f32 %v3788, %v3788
      %v3829 = vlaneseq
      %v3830 = vand.u32 %v3829, 127
      %v3831 = vperm.slane %v3789, %v3830
      %v3832 = vadd.s32 %v3830, 4294967288
      %v3833 = vperm.slane %v3790, %v3832
      %vm3834 = vcmask 130112
      %v3835 = vsel %vm3834, %v3833, %v3831
      %v3836 = vperm.slane %v3791, %v3830
      %v3837 = vperm.slane %v3792, %v3832
      %v3838 = vsel %vm3834, %v3837, %v3836
      %v3839 = vperm.slane %v3793, %v3830
      %v3840 = vperm.slane %v3794, %v3832
      %v3841 = vsel %vm3834, %v3840, %v3839
      %v3842 = vperm.slane %v3795, %v3830
      %v3843 = vperm.slane %v3796, %v3832
      %v3844 = vsel %vm3834, %v3843, %v3842
      %v3845 = vperm.slane %v3797, %v3830
      %v3846 = vperm.slane %v3798, %v3832
      %v3847 = vsel %vm3834, %v3846, %v3845
      %v3848 = vperm.slane %v3799, %v3830
      %v3849 = vperm.slane %v3800, %v3832
      %v3850 = vsel %vm3834, %v3849, %v3848
      %v3851 = vperm.slane %v3801, %v3830
      %v3852 = vperm.slane %v3802, %v3832
      %v3853 = vsel %vm3834, %v3852, %v3851
      %v3854 = vperm.slane %v3803, %v3830
      %v3855 = vperm.slane %v3804, %v3832
      %v3856 = vsel %vm3834, %v3855, %v3854
      %v3857 = vperm.slane %v3805, %v3830
      %v3858 = vperm.slane %v3806, %v3832
      %v3859 = vsel %vm3834, %v3858, %v3857
      %v3860 = vperm.slane %v3807, %v3830
      %v3861 = vperm.slane %v3808, %v3832
      %v3862 = vsel %vm3834, %v3861, %v3860
      %v3863 = vsel %vm498, %v3838, %v3835
      %v3864 = vsel %vm500, %v3841, %v3863
      %v3865 = vsel %vm502, %v3844, %v3864
      %v3866 = vsel %vm504, %v3847, %v3865
      %v3867 = vsel %vm506, %v3850, %v3866
      %v3868 = vsel %vm508, %v3853, %v3867
      %v3869 = vsel %vm510, %v3856, %v3868
      %v3870 = vsel %vm498, %v3862, %v3859
      %v3873 = vsel %vm154, %v3869, 0.0
      %3874 = vadd.xlane.f32.xlu0 %v3873
      %v3875 = vpop.xlane.xlu0 %3874
      %vm3876 = vcmask 123904
      %v3877 = vsel %vm3876, %v3870, 0.0
      %3878 = vadd.xlane.f32.xlu0 %v3877
      %v3879 = vpop.xlane.xlu0 %3878
      %v3882 = vperm.slane %v3875, 0
      %v3883 = vperm.slane %v3875, 1
      %v3884 = vperm.slane %v3875, 2
      %v3885 = vperm.slane %v3875, 3
      %v3886 = vperm.slane %v3875, 4
      %v3887 = vperm.slane %v3875, 5
      %v3888 = vperm.slane %v3875, 6
      %v3889 = vperm.slane %v3875, 7
      %v3890 = vperm.slane %v3879, 0
      %v3891 = vperm.slane %v3879, 1
      %v3902 = vmul.f32 %v3712, %v3882
      %v3903 = vmul.f32 %v3716, %v3882
      %v3904 = vmul.f32 %v3720, %v3883
      %v3905 = vmul.f32 %v3724, %v3883
      %v3906 = vmul.f32 %v3728, %v3884
      %v3907 = vmul.f32 %v3732, %v3884
      %v3908 = vmul.f32 %v3736, %v3885
      %v3909 = vmul.f32 %v3740, %v3885
      %v3910 = vmul.f32 %v3744, %v3886
      %v3911 = vmul.f32 %v3748, %v3886
      %v3912 = vmul.f32 %v3752, %v3887
      %v3913 = vmul.f32 %v3756, %v3887
      %v3914 = vmul.f32 %v3760, %v3888
      %v3915 = vmul.f32 %v3764, %v3888
      %v3916 = vmul.f32 %v3768, %v3889
      %v3917 = vmul.f32 %v3772, %v3889
      %v3918 = vmul.f32 %v3776, %v3890
      %v3919 = vmul.f32 %v3780, %v3890
      %v3920 = vmul.f32 %v3784, %v3891
      %v3921 = vmul.f32 %v3788, %v3891
      %v3922 = vadd.f32 %v3875, 1.0
      %v3923 = vadd.f32 %v3879, 1.0
      %v3924 = vrcp.pop %v3922
      %v3925 = vrcp.pop %v3923
      %v3928 = vperm.slane %v3924, 0
      %v3929 = vperm.slane %v3924, 1
      %v3930 = vperm.slane %v3924, 2
      %v3931 = vperm.slane %v3924, 3
      %v3932 = vperm.slane %v3924, 4
      %v3933 = vperm.slane %v3924, 5
      %v3934 = vperm.slane %v3924, 6
      %v3935 = vperm.slane %v3924, 7
      %v3936 = vperm.slane %v3925, 0
      %v3937 = vperm.slane %v3925, 1
      %v3948 = vmul.f32 %v3902, %v3928
      %v3949 = vmul.f32 %v3903, %v3928
      %v3950 = vmul.f32 %v3904, %v3929
      %v3951 = vmul.f32 %v3905, %v3929
      %v3952 = vmul.f32 %v3906, %v3930
      %v3953 = vmul.f32 %v3907, %v3930
      %v3954 = vmul.f32 %v3908, %v3931
      %v3955 = vmul.f32 %v3909, %v3931
      %v3956 = vmul.f32 %v3910, %v3932
      %v3957 = vmul.f32 %v3911, %v3932
      %v3958 = vmul.f32 %v3912, %v3933
      %v3959 = vmul.f32 %v3913, %v3933
      %v3960 = vmul.f32 %v3914, %v3934
      %v3961 = vmul.f32 %v3915, %v3934
      %v3962 = vmul.f32 %v3916, %v3935
      %v3963 = vmul.f32 %v3917, %v3935
      %v3964 = vmul.f32 %v3918, %v3936
      %v3965 = vmul.f32 %v3919, %v3936
      %v3966 = vmul.f32 %v3920, %v3937
      %v3967 = vmul.f32 %v3921, %v3937
      %v3968 = vadd.f32 %v3875, 1e-09
      %v3969 = vadd.f32 %v3879, 1e-09
      %v3970 = vrsqrt.pop %v3968
      %v3971 = vmul.f32 %v3970, %v3968
      %v3972 = vmul.f32 %v3971, %v3970
      %v3973 = vmul.f32 0.5, %v3972
      %v3974 = vsub.f32 1.5, %v3973
      %v3975 = vmul.f32 %v3970, %v3974
      %vm3976 = vweird.f32 %v3968
      %vm3977 = vweird.f32 %v3970
      %vm3978 = vmor %vm3976, %vm3977
      %v3979 = vsel %vm3978, %v3970, %v3975
      %v3980 = vrsqrt.pop %v3969
      %v3981 = vmul.f32 %v3980, %v3969
      %v3982 = vmul.f32 %v3981, %v3980
      %v3983 = vmul.f32 0.5, %v3982
      %v3984 = vsub.f32 1.5, %v3983
      %v3985 = vmul.f32 %v3980, %v3984
      %vm3986 = vweird.f32 %v3969
      %vm3987 = vweird.f32 %v3980
      %vm3988 = vmor %vm3986, %vm3987
      %v3989 = vsel %vm3988, %v3980, %v3985
      %v3992 = vperm.slane %v3979, 0
      %v3993 = vperm.slane %v3979, 1
      %v3994 = vperm.slane %v3979, 2
      %v3995 = vperm.slane %v3979, 3
      %v3996 = vperm.slane %v3979, 4
      %v3997 = vperm.slane %v3979, 5
      %v3998 = vperm.slane %v3979, 6
      %v3999 = vperm.slane %v3979, 7
      %v4000 = vperm.slane %v3989, 0
      %v4001 = vperm.slane %v3989, 1
      %v4012 = vmul.f32 %v3948, %v3992
      %v4013 = vmul.f32 %v3949, %v3992
      %v4014 = vmul.f32 %v3950, %v3993
      %v4015 = vmul.f32 %v3951, %v3993
      %v4016 = vmul.f32 %v3952, %v3994
      %v4017 = vmul.f32 %v3953, %v3994
      %v4018 = vmul.f32 %v3954, %v3995
      %v4019 = vmul.f32 %v3955, %v3995
      %v4020 = vmul.f32 %v3956, %v3996
      %v4021 = vmul.f32 %v3957, %v3996
      %v4022 = vmul.f32 %v3958, %v3997
      %v4023 = vmul.f32 %v3959, %v3997
      %v4024 = vmul.f32 %v3960, %v3998
      %v4025 = vmul.f32 %v3961, %v3998
      %v4026 = vmul.f32 %v3962, %v3999
      %v4027 = vmul.f32 %v3963, %v3999
      %v4028 = vmul.f32 %v3964, %v4000
      %v4029 = vmul.f32 %v3965, %v4000
      %v4030 = vmul.f32 %v3966, %v4001
      %v4031 = vmul.f32 %v3967, %v4001
      %4033 = vset.pattern.permute.xlu0 0
      %4034 = vperm.xlu0 %4033, %v4012
      %v4035 = vpop.permute.xlu0 %4034
      %4038 = vset.pattern.permute.xlu0 0
      %4039 = vperm.xlu0 %4038, %v4013
      %v4040 = vpop.permute.xlu0 %4039
      %4043 = vset.pattern.permute.xlu0 0
      %4044 = vperm.xlu0 %4043, %v4014
      %v4045 = vpop.permute.xlu0 %4044
      %4048 = vset.pattern.permute.xlu0 0
      %4049 = vperm.xlu0 %4048, %v4015
      %v4050 = vpop.permute.xlu0 %4049
      %4053 = vset.pattern.permute.xlu0 0
      %4054 = vperm.xlu0 %4053, %v4016
      %v4055 = vpop.permute.xlu0 %4054
      %4058 = vset.pattern.permute.xlu0 0
      %4059 = vperm.xlu0 %4058, %v4017
      %v4060 = vpop.permute.xlu0 %4059
      %4063 = vset.pattern.permute.xlu0 0
      %4064 = vperm.xlu0 %4063, %v4018
      %v4065 = vpop.permute.xlu0 %4064
      %4068 = vset.pattern.permute.xlu0 0
      %4069 = vperm.xlu0 %4068, %v4019
      %v4070 = vpop.permute.xlu0 %4069
      %4073 = vset.pattern.permute.xlu0 0
      %4074 = vperm.xlu0 %4073, %v4020
      %v4075 = vpop.permute.xlu0 %4074
      %4078 = vset.pattern.permute.xlu0 0
      %4079 = vperm.xlu0 %4078, %v4021
      %v4080 = vpop.permute.xlu0 %4079
      %4083 = vset.pattern.permute.xlu0 0
      %4084 = vperm.xlu0 %4083, %v4022
      %v4085 = vpop.permute.xlu0 %4084
      %4088 = vset.pattern.permute.xlu0 0
      %4089 = vperm.xlu0 %4088, %v4023
      %v4090 = vpop.permute.xlu0 %4089
      %4093 = vset.pattern.permute.xlu0 0
      %4094 = vperm.xlu0 %4093, %v4024
      %v4095 = vpop.permute.xlu0 %4094
      %4098 = vset.pattern.permute.xlu0 0
      %4099 = vperm.xlu0 %4098, %v4025
      %v4100 = vpop.permute.xlu0 %4099
      %4103 = vset.pattern.permute.xlu0 0
      %4104 = vperm.xlu0 %4103, %v4026
      %v4105 = vpop.permute.xlu0 %4104
      %4108 = vset.pattern.permute.xlu0 0
      %4109 = vperm.xlu0 %4108, %v4027
      %v4110 = vpop.permute.xlu0 %4109
      %4113 = vset.pattern.permute.xlu0 0
      %4114 = vperm.xlu0 %4113, %v4028
      %v4115 = vpop.permute.xlu0 %4114
      %4118 = vset.pattern.permute.xlu0 0
      %4119 = vperm.xlu0 %4118, %v4029
      %v4120 = vpop.permute.xlu0 %4119
      %4123 = vset.pattern.permute.xlu0 0
      %4124 = vperm.xlu0 %4123, %v4030
      %v4125 = vpop.permute.xlu0 %4124
      %4128 = vset.pattern.permute.xlu0 0
      %4129 = vperm.xlu0 %4128, %v4031
      %v4130 = vpop.permute.xlu0 %4129
      %v4132 = vmul.f32 %v3619, %v4035
      %v4133 = vmul.f32 %v3620, %v4035
      %v4134 = vmul.f32 %v3621, %v4040
      %v4135 = vmul.f32 %v3622, %v4040
      %v4136 = vmul.f32 %v3623, %v4045
      %v4137 = vmul.f32 %v3624, %v4045
      %v4138 = vmul.f32 %v3625, %v4050
      %v4139 = vmul.f32 %v3626, %v4050
      %v4140 = vmul.f32 %v3627, %v4055
      %v4141 = vmul.f32 %v3628, %v4055
      %v4142 = vmul.f32 %v3629, %v4060
      %v4143 = vmul.f32 %v3630, %v4060
      %v4144 = vmul.f32 %v3631, %v4065
      %v4145 = vmul.f32 %v3632, %v4065
      %v4146 = vmul.f32 %v3633, %v4070
      %v4147 = vmul.f32 %v3634, %v4070
      %v4148 = vmul.f32 %v3635, %v4075
      %v4149 = vmul.f32 %v3636, %v4075
      %v4150 = vmul.f32 %v3637, %v4080
      %v4151 = vmul.f32 %v3638, %v4080
      %v4152 = vmul.f32 %v3639, %v4085
      %v4153 = vmul.f32 %v3640, %v4085
      %v4154 = vmul.f32 %v3641, %v4090
      %v4155 = vmul.f32 %v3642, %v4090
      %v4156 = vmul.f32 %v3643, %v4095
      %v4157 = vmul.f32 %v3644, %v4095
      %v4158 = vmul.f32 %v3645, %v4100
      %v4159 = vmul.f32 %v3646, %v4100
      %v4160 = vmul.f32 %v3647, %v4105
      %v4161 = vmul.f32 %v3648, %v4105
      %v4162 = vmul.f32 %v3649, %v4110
      %v4163 = vmul.f32 %v3650, %v4110
      %v4164 = vmul.f32 %v3651, %v4115
      %v4165 = vmul.f32 %v3652, %v4115
      %v4166 = vmul.f32 %v3653, %v4120
      %v4167 = vmul.f32 %v3654, %v4120
      %v4168 = vmul.f32 %v3655, %v4125
      %v4169 = vmul.f32 %v3656, %v4125
      %v4170 = vmul.f32 %v3657, %v4130
      %v4171 = vmul.f32 %v3658, %v4130
      %v4172 = vadd.f32 %v4132, %v4134
      %v4173 = vrot.slane %v4172, 4
      %v4174 = vadd.f32 %v4172, %v4173
      %v4175 = vrot.slane %v4174, 2
      %v4176 = vadd.f32 %v4174, %v4175
      %v4177 = vrot.slane %v4176, 1
      %v4178 = vadd.f32 %v4176, %v4177
      %v4179 = vsel %vm154, %v4133, 0.0
      %v4180 = vsel %vm154, %v4135, 0.0
      %v4181 = vadd.f32 %v4179, %v4180
      %v4182 = vrot.slane %v4181, 4
      %v4183 = vadd.f32 %v4181, %v4182
      %v4184 = vrot.slane %v4183, 2
      %v4185 = vadd.f32 %v4183, %v4184
      %v4186 = vrot.slane %v4185, 1
      %v4187 = vadd.f32 %v4185, %v4186
      %v4188 = vadd.f32 %v4136, %v4138
      %v4189 = vrot.slane %v4188, 4
      %v4190 = vadd.f32 %v4188, %v4189
      %v4191 = vrot.slane %v4190, 2
      %v4192 = vadd.f32 %v4190, %v4191
      %v4193 = vrot.slane %v4192, 1
      %v4194 = vadd.f32 %v4192, %v4193
      %v4195 = vsel %vm154, %v4137, 0.0
      %v4196 = vsel %vm154, %v4139, 0.0
      %v4197 = vadd.f32 %v4195, %v4196
      %v4198 = vrot.slane %v4197, 4
      %v4199 = vadd.f32 %v4197, %v4198
      %v4200 = vrot.slane %v4199, 2
      %v4201 = vadd.f32 %v4199, %v4200
      %v4202 = vrot.slane %v4201, 1
      %v4203 = vadd.f32 %v4201, %v4202
      %v4204 = vadd.f32 %v4140, %v4142
      %v4205 = vrot.slane %v4204, 4
      %v4206 = vadd.f32 %v4204, %v4205
      %v4207 = vrot.slane %v4206, 2
      %v4208 = vadd.f32 %v4206, %v4207
      %v4209 = vrot.slane %v4208, 1
      %v4210 = vadd.f32 %v4208, %v4209
      %v4211 = vsel %vm154, %v4141, 0.0
      %v4212 = vsel %vm154, %v4143, 0.0
      %v4213 = vadd.f32 %v4211, %v4212
      %v4214 = vrot.slane %v4213, 4
      %v4215 = vadd.f32 %v4213, %v4214
      %v4216 = vrot.slane %v4215, 2
      %v4217 = vadd.f32 %v4215, %v4216
      %v4218 = vrot.slane %v4217, 1
      %v4219 = vadd.f32 %v4217, %v4218
      %v4220 = vadd.f32 %v4144, %v4146
      %v4221 = vrot.slane %v4220, 4
      %v4222 = vadd.f32 %v4220, %v4221
      %v4223 = vrot.slane %v4222, 2
      %v4224 = vadd.f32 %v4222, %v4223
      %v4225 = vrot.slane %v4224, 1
      %v4226 = vadd.f32 %v4224, %v4225
      %v4227 = vsel %vm154, %v4145, 0.0
      %v4228 = vsel %vm154, %v4147, 0.0
      %v4229 = vadd.f32 %v4227, %v4228
      %v4230 = vrot.slane %v4229, 4
      %v4231 = vadd.f32 %v4229, %v4230
      %v4232 = vrot.slane %v4231, 2
      %v4233 = vadd.f32 %v4231, %v4232
      %v4234 = vrot.slane %v4233, 1
      %v4235 = vadd.f32 %v4233, %v4234
      %v4236 = vadd.f32 %v4148, %v4150
      %v4237 = vrot.slane %v4236, 4
      %v4238 = vadd.f32 %v4236, %v4237
      %v4239 = vrot.slane %v4238, 2
      %v4240 = vadd.f32 %v4238, %v4239
      %v4241 = vrot.slane %v4240, 1
      %v4242 = vadd.f32 %v4240, %v4241
      %v4243 = vsel %vm154, %v4149, 0.0
      %v4244 = vsel %vm154, %v4151, 0.0
      %v4245 = vadd.f32 %v4243, %v4244
      %v4246 = vrot.slane %v4245, 4
      %v4247 = vadd.f32 %v4245, %v4246
      %v4248 = vrot.slane %v4247, 2
      %v4249 = vadd.f32 %v4247, %v4248
      %v4250 = vrot.slane %v4249, 1
      %v4251 = vadd.f32 %v4249, %v4250
      %v4252 = vadd.f32 %v4152, %v4154
      %v4253 = vrot.slane %v4252, 4
      %v4254 = vadd.f32 %v4252, %v4253
      %v4255 = vrot.slane %v4254, 2
      %v4256 = vadd.f32 %v4254, %v4255
      %v4257 = vrot.slane %v4256, 1
      %v4258 = vadd.f32 %v4256, %v4257
      %v4259 = vsel %vm154, %v4153, 0.0
      %v4260 = vsel %vm154, %v4155, 0.0
      %v4261 = vadd.f32 %v4259, %v4260
      %v4262 = vrot.slane %v4261, 4
      %v4263 = vadd.f32 %v4261, %v4262
      %v4264 = vrot.slane %v4263, 2
      %v4265 = vadd.f32 %v4263, %v4264
      %v4266 = vrot.slane %v4265, 1
      %v4267 = vadd.f32 %v4265, %v4266
      %v4268 = vadd.f32 %v4156, %v4158
      %v4269 = vrot.slane %v4268, 4
      %v4270 = vadd.f32 %v4268, %v4269
      %v4271 = vrot.slane %v4270, 2
      %v4272 = vadd.f32 %v4270, %v4271
      %v4273 = vrot.slane %v4272, 1
      %v4274 = vadd.f32 %v4272, %v4273
      %v4275 = vsel %vm154, %v4157, 0.0
      %v4276 = vsel %vm154, %v4159, 0.0
      %v4277 = vadd.f32 %v4275, %v4276
      %v4278 = vrot.slane %v4277, 4
      %v4279 = vadd.f32 %v4277, %v4278
      %v4280 = vrot.slane %v4279, 2
      %v4281 = vadd.f32 %v4279, %v4280
      %v4282 = vrot.slane %v4281, 1
      %v4283 = vadd.f32 %v4281, %v4282
      %v4284 = vadd.f32 %v4160, %v4162
      %v4285 = vrot.slane %v4284, 4
      %v4286 = vadd.f32 %v4284, %v4285
      %v4287 = vrot.slane %v4286, 2
      %v4288 = vadd.f32 %v4286, %v4287
      %v4289 = vrot.slane %v4288, 1
      %v4290 = vadd.f32 %v4288, %v4289
      %v4291 = vsel %vm154, %v4161, 0.0
      %v4292 = vsel %vm154, %v4163, 0.0
      %v4293 = vadd.f32 %v4291, %v4292
      %v4294 = vrot.slane %v4293, 4
      %v4295 = vadd.f32 %v4293, %v4294
      %v4296 = vrot.slane %v4295, 2
      %v4297 = vadd.f32 %v4295, %v4296
      %v4298 = vrot.slane %v4297, 1
      %v4299 = vadd.f32 %v4297, %v4298
      %v4300 = vadd.f32 %v4164, %v4166
      %v4301 = vrot.slane %v4300, 4
      %v4302 = vadd.f32 %v4300, %v4301
      %v4303 = vrot.slane %v4302, 2
      %v4304 = vadd.f32 %v4302, %v4303
      %v4305 = vrot.slane %v4304, 1
      %v4306 = vadd.f32 %v4304, %v4305
      %v4307 = vsel %vm154, %v4165, 0.0
      %v4308 = vsel %vm154, %v4167, 0.0
      %v4309 = vadd.f32 %v4307, %v4308
      %v4310 = vrot.slane %v4309, 4
      %v4311 = vadd.f32 %v4309, %v4310
      %v4312 = vrot.slane %v4311, 2
      %v4313 = vadd.f32 %v4311, %v4312
      %v4314 = vrot.slane %v4313, 1
      %v4315 = vadd.f32 %v4313, %v4314
      %v4316 = vadd.f32 %v4168, %v4170
      %v4317 = vrot.slane %v4316, 4
      %v4318 = vadd.f32 %v4316, %v4317
      %v4319 = vrot.slane %v4318, 2
      %v4320 = vadd.f32 %v4318, %v4319
      %v4321 = vrot.slane %v4320, 1
      %v4322 = vadd.f32 %v4320, %v4321
      %v4323 = vsel %vm154, %v4169, 0.0
      %v4324 = vsel %vm154, %v4171, 0.0
      %v4325 = vadd.f32 %v4323, %v4324
      %v4326 = vrot.slane %v4325, 4
      %v4327 = vadd.f32 %v4325, %v4326
      %v4328 = vrot.slane %v4327, 2
      %v4329 = vadd.f32 %v4327, %v4328
      %v4330 = vrot.slane %v4329, 1
      %v4331 = vadd.f32 %v4329, %v4330
      %v4332 = vadd.f32 %v4178, 0.0
      %v4333 = vadd.f32 %v4187, 0.0
      %v4334 = vadd.f32 %v4194, 0.0
      %v4335 = vadd.f32 %v4203, 0.0
      %v4336 = vadd.f32 %v4210, 0.0
      %v4337 = vadd.f32 %v4219, 0.0
      %v4338 = vadd.f32 %v4226, 0.0
      %v4339 = vadd.f32 %v4235, 0.0
      %v4340 = vadd.f32 %v4242, 0.0
      %v4341 = vadd.f32 %v4251, 0.0
      %v4342 = vadd.f32 %v4258, 0.0
      %v4343 = vadd.f32 %v4267, 0.0
      %v4344 = vadd.f32 %v4274, 0.0
      %v4345 = vadd.f32 %v4283, 0.0
      %v4346 = vadd.f32 %v4290, 0.0
      %v4347 = vadd.f32 %v4299, 0.0
      %v4348 = vadd.f32 %v4306, 0.0
      %v4349 = vadd.f32 %v4315, 0.0
      %v4350 = vadd.f32 %v4322, 0.0
      %v4351 = vadd.f32 %v4331, 0.0
      %v4352 = vmax.f32 %v4332, %v4336
      %v4353 = vmax.f32 %v4334, %v4338
      %v4354 = vmax.f32 %v4352, %v4340
      %v4355 = vmax.f32 %v4353, %v4342
      %v4356 = vmax.f32 %v4354, %v4344
      %v4357 = vmax.f32 %v4355, %v4346
      %v4358 = vmax.f32 %v4356, %v4348
      %v4359 = vmax.f32 %v4357, %v4350
      %v4360 = vmax.f32 %v4358, %v4359
      %v4361 = vsel %vm154, %v4333, -inf
      %v4362 = vsel %vm154, %v4335, -inf
      %v4363 = vsel %vm154, %v4337, -inf
      %v4364 = vmax.f32 %v4361, %v4363
      %v4365 = vsel %vm154, %v4339, -inf
      %v4366 = vmax.f32 %v4362, %v4365
      %v4367 = vsel %vm154, %v4341, -inf
      %v4368 = vmax.f32 %v4364, %v4367
      %v4369 = vsel %vm154, %v4343, -inf
      %v4370 = vmax.f32 %v4366, %v4369
      %v4371 = vsel %vm154, %v4345, -inf
      %v4372 = vmax.f32 %v4368, %v4371
      %v4373 = vsel %vm154, %v4347, -inf
      %v4374 = vmax.f32 %v4370, %v4373
      %v4375 = vsel %vm154, %v4349, -inf
      %v4376 = vmax.f32 %v4372, %v4375
      %v4377 = vsel %vm154, %v4351, -inf
      %v4378 = vmax.f32 %v4374, %v4377
      %v4379 = vmax.f32 %v4376, %v4378
      %v4380 = vsub.f32 %v4332, %v4360
      %v4381 = vsub.f32 %v4333, %v4379
      %v4382 = vsub.f32 %v4334, %v4360
      %v4383 = vsub.f32 %v4335, %v4379
      %v4384 = vsub.f32 %v4336, %v4360
      %v4385 = vsub.f32 %v4337, %v4379
      %v4386 = vsub.f32 %v4338, %v4360
      %v4387 = vsub.f32 %v4339, %v4379
      %v4388 = vsub.f32 %v4340, %v4360
      %v4389 = vsub.f32 %v4341, %v4379
      %v4390 = vsub.f32 %v4342, %v4360
      %v4391 = vsub.f32 %v4343, %v4379
      %v4392 = vsub.f32 %v4344, %v4360
      %v4393 = vsub.f32 %v4345, %v4379
      %v4394 = vsub.f32 %v4346, %v4360
      %v4395 = vsub.f32 %v4347, %v4379
      %v4396 = vsub.f32 %v4348, %v4360
      %v4397 = vsub.f32 %v4349, %v4379
      %v4398 = vsub.f32 %v4350, %v4360
      %v4399 = vsub.f32 %v4351, %v4379
      %v4400 = vmul.f32 %v4380, 1.442695
      %v4401 = vpow.pop %v4400
      %v4402 = vmul.f32 %v4381, 1.442695
      %v4403 = vpow.pop %v4402
      %v4404 = vmul.f32 %v4382, 1.442695
      %v4405 = vpow.pop %v4404
      %v4406 = vmul.f32 %v4383, 1.442695
      %v4407 = vpow.pop %v4406
      %v4408 = vmul.f32 %v4384, 1.442695
      %v4409 = vpow.pop %v4408
      %v4410 = vmul.f32 %v4385, 1.442695
      %v4411 = vpow.pop %v4410
      %v4412 = vmul.f32 %v4386, 1.442695
      %v4413 = vpow.pop %v4412
      %v4414 = vmul.f32 %v4387, 1.442695
      %v4415 = vpow.pop %v4414
      %v4416 = vmul.f32 %v4388, 1.442695
      %v4417 = vpow.pop %v4416
      %v4418 = vmul.f32 %v4389, 1.442695
      %v4419 = vpow.pop %v4418
      %v4420 = vmul.f32 %v4390, 1.442695
      %v4421 = vpow.pop %v4420
      %v4422 = vmul.f32 %v4391, 1.442695
      %v4423 = vpow.pop %v4422
      %v4424 = vmul.f32 %v4392, 1.442695
      %v4425 = vpow.pop %v4424
      %v4426 = vmul.f32 %v4393, 1.442695
      %v4427 = vpow.pop %v4426
      %v4428 = vmul.f32 %v4394, 1.442695
      %v4429 = vpow.pop %v4428
      %v4430 = vmul.f32 %v4395, 1.442695
      %v4431 = vpow.pop %v4430
      %v4432 = vmul.f32 %v4396, 1.442695
      %v4433 = vpow.pop %v4432
      %v4434 = vmul.f32 %v4397, 1.442695
      %v4435 = vpow.pop %v4434
      %v4436 = vmul.f32 %v4398, 1.442695
      %v4437 = vpow.pop %v4436
      %v4438 = vmul.f32 %v4399, 1.442695
      %v4439 = vpow.pop %v4438
      %v4460 = vrot.slane %v4405, 7
      %v4461 = vsel %vm498, %v4460, %v4401
      %v4462 = vrot.slane %v4409, 6
      %v4463 = vsel %vm500, %v4462, %v4461
      %v4464 = vrot.slane %v4413, 5
      %v4465 = vsel %vm502, %v4464, %v4463
      %v4466 = vrot.slane %v4417, 4
      %v4467 = vsel %vm504, %v4466, %v4465
      %v4468 = vrot.slane %v4421, 3
      %v4469 = vsel %vm506, %v4468, %v4467
      %v4470 = vrot.slane %v4425, 2
      %v4471 = vsel %vm508, %v4470, %v4469
      %v4472 = vrot.slane %v4429, 1
      %v4473 = vsel %vm510, %v4472, %v4471
      %v4474 = vrot.slane %v4407, 7
      %v4475 = vsel %vm498, %v4474, %v4403
      %v4476 = vrot.slane %v4411, 6
      %v4477 = vsel %vm500, %v4476, %v4475
      %v4478 = vrot.slane %v4415, 5
      %v4479 = vsel %vm502, %v4478, %v4477
      %v4480 = vrot.slane %v4419, 4
      %v4481 = vsel %vm504, %v4480, %v4479
      %v4482 = vrot.slane %v4423, 3
      %v4483 = vsel %vm506, %v4482, %v4481
      %v4484 = vrot.slane %v4427, 2
      %v4485 = vsel %vm508, %v4484, %v4483
      %v4486 = vrot.slane %v4431, 1
      %v4487 = vsel %vm510, %v4486, %v4485
      %v4488 = vrot.slane %v4437, 7
      %v4489 = vsel %vm498, %v4488, %v4433
      %v4490 = vrot.slane %v4439, 7
      %v4491 = vsel %vm498, %v4490, %v4435
      %v4496 = vsel %vm3659, %v4489, 0.0
      %v4497 = vadd.f32 %v4473, %v4496
      %v4498 = vrot.slane %v4497, 4
      %v4499 = vadd.f32 %v4497, %v4498
      %v4500 = vrot.slane %v4499, 2
      %v4501 = vadd.f32 %v4499, %v4500
      %v4502 = vrot.slane %v4501, 1
      %v4503 = vadd.f32 %v4501, %v4502
      %v4504 = vsel %vm154, %v4487, 0.0
      %v4505 = vsel %vm3876, %v4491, 0.0
      %v4506 = vadd.f32 %v4504, %v4505
      %v4507 = vrot.slane %v4506, 4
      %v4508 = vadd.f32 %v4506, %v4507
      %v4509 = vrot.slane %v4508, 2
      %v4510 = vadd.f32 %v4508, %v4509
      %v4511 = vrot.slane %v4510, 1
      %v4512 = vadd.f32 %v4510, %v4511
      %v4513 = vrcp.pop %v4503
      %v4514 = vrcp.pop %v4512
      %v4515 = vperm.slane %v4513, 0
      %v4516 = vperm.slane %v4514, 0
      %v4517 = vmul.f32 %v4401, %v4515
      %v4518 = vmul.f32 %v4403, %v4516
      %v4519 = vmul.f32 %v4405, %v4515
      %v4520 = vmul.f32 %v4407, %v4516
      %v4521 = vmul.f32 %v4409, %v4515
      %v4522 = vmul.f32 %v4411, %v4516
      %v4523 = vmul.f32 %v4413, %v4515
      %v4524 = vmul.f32 %v4415, %v4516
      %v4525 = vmul.f32 %v4417, %v4515
      %v4526 = vmul.f32 %v4419, %v4516
      %v4527 = vmul.f32 %v4421, %v4515
      %v4528 = vmul.f32 %v4423, %v4516
      %v4529 = vmul.f32 %v4425, %v4515
      %v4530 = vmul.f32 %v4427, %v4516
      %v4531 = vmul.f32 %v4429, %v4515
      %v4532 = vmul.f32 %v4431, %v4516
      %v4533 = vmul.f32 %v4433, %v4515
      %v4534 = vmul.f32 %v4435, %v4516
      %v4535 = vmul.f32 %v4437, %v4515
      %v4536 = vmul.f32 %v4439, %v4516
      %v4537 = vperm.slane %v4517, 0
      %v4538 = vperm.slane %v4518, 0
      %v4539 = vperm.slane %v4519, 0
      %v4540 = vperm.slane %v4520, 0
      %v4541 = vperm.slane %v4521, 0
      %v4542 = vperm.slane %v4522, 0
      %v4543 = vperm.slane %v4523, 0
      %v4544 = vperm.slane %v4524, 0
      %v4545 = vperm.slane %v4525, 0
      %v4546 = vperm.slane %v4526, 0
      %v4547 = vperm.slane %v4527, 0
      %v4548 = vperm.slane %v4528, 0
      %v4549 = vperm.slane %v4529, 0
      %v4550 = vperm.slane %v4530, 0
      %v4551 = vperm.slane %v4531, 0
      %v4552 = vperm.slane %v4532, 0
      %v4553 = vperm.slane %v4533, 0
      %v4554 = vperm.slane %v4534, 0
      %v4555 = vperm.slane %v4535, 0
      %v4556 = vperm.slane %v4536, 0
      %v4557 = vmul.f32 %v4537, %v3619
      %v4558 = vmul.f32 %v4538, %v3620
      %v4559 = vmul.f32 %v4537, %v3621
      %v4560 = vmul.f32 %v4538, %v3622
      %v4561 = vmul.f32 %v4539, %v3623
      %v4562 = vmul.f32 %v4540, %v3624
      %v4563 = vmul.f32 %v4539, %v3625
      %v4564 = vmul.f32 %v4540, %v3626
      %v4565 = vmul.f32 %v4541, %v3627
      %v4566 = vmul.f32 %v4542, %v3628
      %v4567 = vmul.f32 %v4541, %v3629
      %v4568 = vmul.f32 %v4542, %v3630
      %v4569 = vmul.f32 %v4543, %v3631
      %v4570 = vmul.f32 %v4544, %v3632
      %v4571 = vmul.f32 %v4543, %v3633
      %v4572 = vmul.f32 %v4544, %v3634
      %v4573 = vmul.f32 %v4545, %v3635
      %v4574 = vmul.f32 %v4546, %v3636
      %v4575 = vmul.f32 %v4545, %v3637
      %v4576 = vmul.f32 %v4546, %v3638
      %v4577 = vmul.f32 %v4547, %v3639
      %v4578 = vmul.f32 %v4548, %v3640
      %v4579 = vmul.f32 %v4547, %v3641
      %v4580 = vmul.f32 %v4548, %v3642
      %v4581 = vmul.f32 %v4549, %v3643
      %v4582 = vmul.f32 %v4550, %v3644
      %v4583 = vmul.f32 %v4549, %v3645
      %v4584 = vmul.f32 %v4550, %v3646
      %v4585 = vmul.f32 %v4551, %v3647
      %v4586 = vmul.f32 %v4552, %v3648
      %v4587 = vmul.f32 %v4551, %v3649
      %v4588 = vmul.f32 %v4552, %v3650
      %v4589 = vmul.f32 %v4553, %v3651
      %v4590 = vmul.f32 %v4554, %v3652
      %v4591 = vmul.f32 %v4553, %v3653
      %v4592 = vmul.f32 %v4554, %v3654
      %v4593 = vmul.f32 %v4555, %v3655
      %v4594 = vmul.f32 %v4556, %v3656
      %v4595 = vmul.f32 %v4555, %v3657
      %v4596 = vmul.f32 %v4556, %v3658
      %v4597 = vsel %vm154, %v4558, 0.0
      %v4598 = vadd.f32 %v4557, %v4597
      %4599 = vadd.xlane.f32.xlu0 %v4598
      %v4600 = vpop.xlane.xlu0 %4599
      %v4601 = vsel %vm154, %v4560, 0.0
      %v4602 = vadd.f32 %v4559, %v4601
      %4603 = vadd.xlane.f32.xlu0 %v4602
      %v4604 = vpop.xlane.xlu0 %4603
      %v4605 = vsel %vm154, %v4562, 0.0
      %v4606 = vadd.f32 %v4561, %v4605
      %4607 = vadd.xlane.f32.xlu0 %v4606
      %v4608 = vpop.xlane.xlu0 %4607
      %v4609 = vsel %vm154, %v4564, 0.0
      %v4610 = vadd.f32 %v4563, %v4609
      %4611 = vadd.xlane.f32.xlu0 %v4610
      %v4612 = vpop.xlane.xlu0 %4611
      %v4613 = vsel %vm154, %v4566, 0.0
      %v4614 = vadd.f32 %v4565, %v4613
      %4615 = vadd.xlane.f32.xlu0 %v4614
      %v4616 = vpop.xlane.xlu0 %4615
      %v4617 = vsel %vm154, %v4568, 0.0
      %v4618 = vadd.f32 %v4567, %v4617
      %4619 = vadd.xlane.f32.xlu0 %v4618
      %v4620 = vpop.xlane.xlu0 %4619
      %v4621 = vsel %vm154, %v4570, 0.0
      %v4622 = vadd.f32 %v4569, %v4621
      %4623 = vadd.xlane.f32.xlu0 %v4622
      %v4624 = vpop.xlane.xlu0 %4623
      %v4625 = vsel %vm154, %v4572, 0.0
      %v4626 = vadd.f32 %v4571, %v4625
      %4627 = vadd.xlane.f32.xlu0 %v4626
      %v4628 = vpop.xlane.xlu0 %4627
      %v4629 = vsel %vm154, %v4574, 0.0
      %v4630 = vadd.f32 %v4573, %v4629
      %4631 = vadd.xlane.f32.xlu0 %v4630
      %v4632 = vpop.xlane.xlu0 %4631
      %v4633 = vsel %vm154, %v4576, 0.0
      %v4634 = vadd.f32 %v4575, %v4633
      %4635 = vadd.xlane.f32.xlu0 %v4634
      %v4636 = vpop.xlane.xlu0 %4635
      %v4637 = vsel %vm154, %v4578, 0.0
      %v4638 = vadd.f32 %v4577, %v4637
      %4639 = vadd.xlane.f32.xlu0 %v4638
      %v4640 = vpop.xlane.xlu0 %4639
      %v4641 = vsel %vm154, %v4580, 0.0
      %v4642 = vadd.f32 %v4579, %v4641
      %4643 = vadd.xlane.f32.xlu0 %v4642
      %v4644 = vpop.xlane.xlu0 %4643
      %v4645 = vsel %vm154, %v4582, 0.0
      %v4646 = vadd.f32 %v4581, %v4645
      %4647 = vadd.xlane.f32.xlu0 %v4646
      %v4648 = vpop.xlane.xlu0 %4647
      %v4649 = vsel %vm154, %v4584, 0.0
      %v4650 = vadd.f32 %v4583, %v4649
      %4651 = vadd.xlane.f32.xlu0 %v4650
      %v4652 = vpop.xlane.xlu0 %4651
      %v4653 = vsel %vm154, %v4586, 0.0
      %v4654 = vadd.f32 %v4585, %v4653
      %4655 = vadd.xlane.f32.xlu0 %v4654
      %v4656 = vpop.xlane.xlu0 %4655
      %v4657 = vsel %vm154, %v4588, 0.0
      %v4658 = vadd.f32 %v4587, %v4657
      %4659 = vadd.xlane.f32.xlu0 %v4658
      %v4660 = vpop.xlane.xlu0 %4659
      %v4661 = vsel %vm154, %v4590, 0.0
      %v4662 = vadd.f32 %v4589, %v4661
      %4663 = vadd.xlane.f32.xlu0 %v4662
      %v4664 = vpop.xlane.xlu0 %4663
      %v4665 = vsel %vm154, %v4592, 0.0
      %v4666 = vadd.f32 %v4591, %v4665
      %4667 = vadd.xlane.f32.xlu0 %v4666
      %v4668 = vpop.xlane.xlu0 %4667
      %v4669 = vsel %vm154, %v4594, 0.0
      %v4670 = vadd.f32 %v4593, %v4669
      %4671 = vadd.xlane.f32.xlu0 %v4670
      %v4672 = vpop.xlane.xlu0 %4671
      %v4673 = vsel %vm154, %v4596, 0.0
      %v4674 = vadd.f32 %v4595, %v4673
      %4675 = vadd.xlane.f32.xlu0 %v4674
      %v4676 = vpop.xlane.xlu0 %4675
      %v4677 = vmul.f32 %v4600, %v4600
      %v4678 = vmul.f32 %v4604, %v4604
      %v4679 = vmul.f32 %v4608, %v4608
      %v4680 = vmul.f32 %v4612, %v4612
      %v4681 = vmul.f32 %v4616, %v4616
      %v4682 = vmul.f32 %v4620, %v4620
      %v4683 = vmul.f32 %v4624, %v4624
      %v4684 = vmul.f32 %v4628, %v4628
      %v4685 = vmul.f32 %v4632, %v4632
      %v4686 = vmul.f32 %v4636, %v4636
      %v4687 = vmul.f32 %v4640, %v4640
      %v4688 = vmul.f32 %v4644, %v4644
      %v4689 = vmul.f32 %v4648, %v4648
      %v4690 = vmul.f32 %v4652, %v4652
      %v4691 = vmul.f32 %v4656, %v4656
      %v4692 = vmul.f32 %v4660, %v4660
      %v4693 = vmul.f32 %v4664, %v4664
      %v4694 = vmul.f32 %v4668, %v4668
      %v4695 = vmul.f32 %v4672, %v4672
      %v4696 = vmul.f32 %v4676, %v4676
      %v4717 = vperm.slane %v4677, %v3830
      %v4718 = vperm.slane %v4678, %v3832
      %v4719 = vsel %vm3834, %v4718, %v4717
      %v4720 = vperm.slane %v4679, %v3830
      %v4721 = vperm.slane %v4680, %v3832
      %v4722 = vsel %vm3834, %v4721, %v4720
      %v4723 = vperm.slane %v4681, %v3830
      %v4724 = vperm.slane %v4682, %v3832
      %v4725 = vsel %vm3834, %v4724, %v4723
      %v4726 = vperm.slane %v4683, %v3830
      %v4727 = vperm.slane %v4684, %v3832
      %v4728 = vsel %vm3834, %v4727, %v4726
      %v4729 = vperm.slane %v4685, %v3830
      %v4730 = vperm.slane %v4686, %v3832
      %v4731 = vsel %vm3834, %v4730, %v4729
      %v4732 = vperm.slane %v4687, %v3830
      %v4733 = vperm.slane %v4688, %v3832
      %v4734 = vsel %vm3834, %v4733, %v4732
      %v4735 = vperm.slane %v4689, %v3830
      %v4736 = vperm.slane %v4690, %v3832
      %v4737 = vsel %vm3834, %v4736, %v4735
      %v4738 = vperm.slane %v4691, %v3830
      %v4739 = vperm.slane %v4692, %v3832
      %v4740 = vsel %vm3834, %v4739, %v4738
      %v4741 = vperm.slane %v4693, %v3830
      %v4742 = vperm.slane %v4694, %v3832
      %v4743 = vsel %vm3834, %v4742, %v4741
      %v4744 = vperm.slane %v4695, %v3830
      %v4745 = vperm.slane %v4696, %v3832
      %v4746 = vsel %vm3834, %v4745, %v4744
      %v4747 = vsel %vm498, %v4722, %v4719
      %v4748 = vsel %vm500, %v4725, %v4747
      %v4749 = vsel %vm502, %v4728, %v4748
      %v4750 = vsel %vm504, %v4731, %v4749
      %v4751 = vsel %vm506, %v4734, %v4750
      %v4752 = vsel %vm508, %v4737, %v4751
      %v4753 = vsel %vm510, %v4740, %v4752
      %v4754 = vsel %vm498, %v4746, %v4743
      %v4757 = vsel %vm154, %v4753, 0.0
      %4758 = vadd.xlane.f32.xlu0 %v4757
      %v4759 = vpop.xlane.xlu0 %4758
      %v4760 = vsel %vm3876, %v4754, 0.0
      %4761 = vadd.xlane.f32.xlu0 %v4760
      %v4762 = vpop.xlane.xlu0 %4761
      %v4765 = vperm.slane %v4759, 0
      %v4766 = vperm.slane %v4759, 1
      %v4767 = vperm.slane %v4759, 2
      %v4768 = vperm.slane %v4759, 3
      %v4769 = vperm.slane %v4759, 4
      %v4770 = vperm.slane %v4759, 5
      %v4771 = vperm.slane %v4759, 6
      %v4772 = vperm.slane %v4759, 7
      %v4773 = vperm.slane %v4762, 0
      %v4774 = vperm.slane %v4762, 1
      %v4785 = vmul.f32 %v4600, %v4765
      %v4786 = vmul.f32 %v4604, %v4765
      %v4787 = vmul.f32 %v4608, %v4766
      %v4788 = vmul.f32 %v4612, %v4766
      %v4789 = vmul.f32 %v4616, %v4767
      %v4790 = vmul.f32 %v4620, %v4767
      %v4791 = vmul.f32 %v4624, %v4768
      %v4792 = vmul.f32 %v4628, %v4768
      %v4793 = vmul.f32 %v4632, %v4769
      %v4794 = vmul.f32 %v4636, %v4769
      %v4795 = vmul.f32 %v4640, %v4770
      %v4796 = vmul.f32 %v4644, %v4770
      %v4797 = vmul.f32 %v4648, %v4771
      %v4798 = vmul.f32 %v4652, %v4771
      %v4799 = vmul.f32 %v4656, %v4772
      %v4800 = vmul.f32 %v4660, %v4772
      %v4801 = vmul.f32 %v4664, %v4773
      %v4802 = vmul.f32 %v4668, %v4773
      %v4803 = vmul.f32 %v4672, %v4774
      %v4804 = vmul.f32 %v4676, %v4774
      %v4805 = vadd.f32 %v4759, 1.0
      %v4806 = vadd.f32 %v4762, 1.0
      %v4807 = vrcp.pop %v4805
      %v4808 = vrcp.pop %v4806
      %v4811 = vperm.slane %v4807, 0
      %v4812 = vperm.slane %v4807, 1
      %v4813 = vperm.slane %v4807, 2
      %v4814 = vperm.slane %v4807, 3
      %v4815 = vperm.slane %v4807, 4
      %v4816 = vperm.slane %v4807, 5
      %v4817 = vperm.slane %v4807, 6
      %v4818 = vperm.slane %v4807, 7
      %v4819 = vperm.slane %v4808, 0
      %v4820 = vperm.slane %v4808, 1
      %v4831 = vmul.f32 %v4785, %v4811
      %v4832 = vmul.f32 %v4786, %v4811
      %v4833 = vmul.f32 %v4787, %v4812
      %v4834 = vmul.f32 %v4788, %v4812
      %v4835 = vmul.f32 %v4789, %v4813
      %v4836 = vmul.f32 %v4790, %v4813
      %v4837 = vmul.f32 %v4791, %v4814
      %v4838 = vmul.f32 %v4792, %v4814
      %v4839 = vmul.f32 %v4793, %v4815
      %v4840 = vmul.f32 %v4794, %v4815
      %v4841 = vmul.f32 %v4795, %v4816
      %v4842 = vmul.f32 %v4796, %v4816
      %v4843 = vmul.f32 %v4797, %v4817
      %v4844 = vmul.f32 %v4798, %v4817
      %v4845 = vmul.f32 %v4799, %v4818
      %v4846 = vmul.f32 %v4800, %v4818
      %v4847 = vmul.f32 %v4801, %v4819
      %v4848 = vmul.f32 %v4802, %v4819
      %v4849 = vmul.f32 %v4803, %v4820
      %v4850 = vmul.f32 %v4804, %v4820
      %v4851 = vadd.f32 %v4759, 1e-09
      %v4852 = vadd.f32 %v4762, 1e-09
      %v4853 = vrsqrt.pop %v4851
      %v4854 = vmul.f32 %v4853, %v4851
      %v4855 = vmul.f32 %v4854, %v4853
      %v4856 = vmul.f32 0.5, %v4855
      %v4857 = vsub.f32 1.5, %v4856
      %v4858 = vmul.f32 %v4853, %v4857
      %vm4859 = vweird.f32 %v4851
      %vm4860 = vweird.f32 %v4853
      %vm4861 = vmor %vm4859, %vm4860
      %v4862 = vsel %vm4861, %v4853, %v4858
      %v4863 = vrsqrt.pop %v4852
      %v4864 = vmul.f32 %v4863, %v4852
      %v4865 = vmul.f32 %v4864, %v4863
      %v4866 = vmul.f32 0.5, %v4865
      %v4867 = vsub.f32 1.5, %v4866
      %v4868 = vmul.f32 %v4863, %v4867
      %vm4869 = vweird.f32 %v4852
      %vm4870 = vweird.f32 %v4863
      %vm4871 = vmor %vm4869, %vm4870
      %v4872 = vsel %vm4871, %v4863, %v4868
      %v4875 = vperm.slane %v4862, 0
      %v4876 = vperm.slane %v4862, 1
      %v4877 = vperm.slane %v4862, 2
      %v4878 = vperm.slane %v4862, 3
      %v4879 = vperm.slane %v4862, 4
      %v4880 = vperm.slane %v4862, 5
      %v4881 = vperm.slane %v4862, 6
      %v4882 = vperm.slane %v4862, 7
      %v4883 = vperm.slane %v4872, 0
      %v4884 = vperm.slane %v4872, 1
      %v4895 = vmul.f32 %v4831, %v4875
      %v4896 = vmul.f32 %v4832, %v4875
      %v4897 = vmul.f32 %v4833, %v4876
      %v4898 = vmul.f32 %v4834, %v4876
      %v4899 = vmul.f32 %v4835, %v4877
      %v4900 = vmul.f32 %v4836, %v4877
      %v4901 = vmul.f32 %v4837, %v4878
      %v4902 = vmul.f32 %v4838, %v4878
      %v4903 = vmul.f32 %v4839, %v4879
      %v4904 = vmul.f32 %v4840, %v4879
      %v4905 = vmul.f32 %v4841, %v4880
      %v4906 = vmul.f32 %v4842, %v4880
      %v4907 = vmul.f32 %v4843, %v4881
      %v4908 = vmul.f32 %v4844, %v4881
      %v4909 = vmul.f32 %v4845, %v4882
      %v4910 = vmul.f32 %v4846, %v4882
      %v4911 = vmul.f32 %v4847, %v4883
      %v4912 = vmul.f32 %v4848, %v4883
      %v4913 = vmul.f32 %v4849, %v4884
      %v4914 = vmul.f32 %v4850, %v4884
      %4916 = vset.pattern.permute.xlu0 0
      %4917 = vperm.xlu0 %4916, %v4895
      %v4918 = vpop.permute.xlu0 %4917
      %4921 = vset.pattern.permute.xlu0 0
      %4922 = vperm.xlu0 %4921, %v4896
      %v4923 = vpop.permute.xlu0 %4922
      %4926 = vset.pattern.permute.xlu0 0
      %4927 = vperm.xlu0 %4926, %v4897
      %v4928 = vpop.permute.xlu0 %4927
      %4931 = vset.pattern.permute.xlu0 0
      %4932 = vperm.xlu0 %4931, %v4898
      %v4933 = vpop.permute.xlu0 %4932
      %4936 = vset.pattern.permute.xlu0 0
      %4937 = vperm.xlu0 %4936, %v4899
      %v4938 = vpop.permute.xlu0 %4937
      %4941 = vset.pattern.permute.xlu0 0
      %4942 = vperm.xlu0 %4941, %v4900
      %v4943 = vpop.permute.xlu0 %4942
      %4946 = vset.pattern.permute.xlu0 0
      %4947 = vperm.xlu0 %4946, %v4901
      %v4948 = vpop.permute.xlu0 %4947
      %4951 = vset.pattern.permute.xlu0 0
      %4952 = vperm.xlu0 %4951, %v4902
      %v4953 = vpop.permute.xlu0 %4952
      %4956 = vset.pattern.permute.xlu0 0
      %4957 = vperm.xlu0 %4956, %v4903
      %v4958 = vpop.permute.xlu0 %4957
      %4961 = vset.pattern.permute.xlu0 0
      %4962 = vperm.xlu0 %4961, %v4904
      %v4963 = vpop.permute.xlu0 %4962
      %4966 = vset.pattern.permute.xlu0 0
      %4967 = vperm.xlu0 %4966, %v4905
      %v4968 = vpop.permute.xlu0 %4967
      %4971 = vset.pattern.permute.xlu0 0
      %4972 = vperm.xlu0 %4971, %v4906
      %v4973 = vpop.permute.xlu0 %4972
      %4976 = vset.pattern.permute.xlu0 0
      %4977 = vperm.xlu0 %4976, %v4907
      %v4978 = vpop.permute.xlu0 %4977
      %4981 = vset.pattern.permute.xlu0 0
      %4982 = vperm.xlu0 %4981, %v4908
      %v4983 = vpop.permute.xlu0 %4982
      %4986 = vset.pattern.permute.xlu0 0
      %4987 = vperm.xlu0 %4986, %v4909
      %v4988 = vpop.permute.xlu0 %4987
      %4991 = vset.pattern.permute.xlu0 0
      %4992 = vperm.xlu0 %4991, %v4910
      %v4993 = vpop.permute.xlu0 %4992
      %4996 = vset.pattern.permute.xlu0 0
      %4997 = vperm.xlu0 %4996, %v4911
      %v4998 = vpop.permute.xlu0 %4997
      %5001 = vset.pattern.permute.xlu0 0
      %5002 = vperm.xlu0 %5001, %v4912
      %v5003 = vpop.permute.xlu0 %5002
      %5006 = vset.pattern.permute.xlu0 0
      %5007 = vperm.xlu0 %5006, %v4913
      %v5008 = vpop.permute.xlu0 %5007
      %5011 = vset.pattern.permute.xlu0 0
      %5012 = vperm.xlu0 %5011, %v4914
      %v5013 = vpop.permute.xlu0 %5012
      %v5015 = vmul.f32 %v3619, %v4918
      %v5016 = vmul.f32 %v3620, %v4918
      %v5017 = vmul.f32 %v3621, %v4923
      %v5018 = vmul.f32 %v3622, %v4923
      %v5019 = vmul.f32 %v3623, %v4928
      %v5020 = vmul.f32 %v3624, %v4928
      %v5021 = vmul.f32 %v3625, %v4933
      %v5022 = vmul.f32 %v3626, %v4933
      %v5023 = vmul.f32 %v3627, %v4938
      %v5024 = vmul.f32 %v3628, %v4938
      %v5025 = vmul.f32 %v3629, %v4943
      %v5026 = vmul.f32 %v3630, %v4943
      %v5027 = vmul.f32 %v3631, %v4948
      %v5028 = vmul.f32 %v3632, %v4948
      %v5029 = vmul.f32 %v3633, %v4953
      %v5030 = vmul.f32 %v3634, %v4953
      %v5031 = vmul.f32 %v3635, %v4958
      %v5032 = vmul.f32 %v3636, %v4958
      %v5033 = vmul.f32 %v3637, %v4963
      %v5034 = vmul.f32 %v3638, %v4963
      %v5035 = vmul.f32 %v3639, %v4968
      %v5036 = vmul.f32 %v3640, %v4968
      %v5037 = vmul.f32 %v3641, %v4973
      %v5038 = vmul.f32 %v3642, %v4973
      %v5039 = vmul.f32 %v3643, %v4978
      %v5040 = vmul.f32 %v3644, %v4978
      %v5041 = vmul.f32 %v3645, %v4983
      %v5042 = vmul.f32 %v3646, %v4983
      %v5043 = vmul.f32 %v3647, %v4988
      %v5044 = vmul.f32 %v3648, %v4988
      %v5045 = vmul.f32 %v3649, %v4993
      %v5046 = vmul.f32 %v3650, %v4993
      %v5047 = vmul.f32 %v3651, %v4998
      %v5048 = vmul.f32 %v3652, %v4998
      %v5049 = vmul.f32 %v3653, %v5003
      %v5050 = vmul.f32 %v3654, %v5003
      %v5051 = vmul.f32 %v3655, %v5008
      %v5052 = vmul.f32 %v3656, %v5008
      %v5053 = vmul.f32 %v3657, %v5013
      %v5054 = vmul.f32 %v3658, %v5013
      %v5055 = vadd.f32 %v5015, %v5017
      %v5056 = vrot.slane %v5055, 4
      %v5057 = vadd.f32 %v5055, %v5056
      %v5058 = vrot.slane %v5057, 2
      %v5059 = vadd.f32 %v5057, %v5058
      %v5060 = vrot.slane %v5059, 1
      %v5061 = vadd.f32 %v5059, %v5060
      %v5062 = vsel %vm154, %v5016, 0.0
      %v5063 = vsel %vm154, %v5018, 0.0
      %v5064 = vadd.f32 %v5062, %v5063
      %v5065 = vrot.slane %v5064, 4
      %v5066 = vadd.f32 %v5064, %v5065
      %v5067 = vrot.slane %v5066, 2
      %v5068 = vadd.f32 %v5066, %v5067
      %v5069 = vrot.slane %v5068, 1
      %v5070 = vadd.f32 %v5068, %v5069
      %v5071 = vadd.f32 %v5019, %v5021
      %v5072 = vrot.slane %v5071, 4
      %v5073 = vadd.f32 %v5071, %v5072
      %v5074 = vrot.slane %v5073, 2
      %v5075 = vadd.f32 %v5073, %v5074
      %v5076 = vrot.slane %v5075, 1
      %v5077 = vadd.f32 %v5075, %v5076
      %v5078 = vsel %vm154, %v5020, 0.0
      %v5079 = vsel %vm154, %v5022, 0.0
      %v5080 = vadd.f32 %v5078, %v5079
      %v5081 = vrot.slane %v5080, 4
      %v5082 = vadd.f32 %v5080, %v5081
      %v5083 = vrot.slane %v5082, 2
      %v5084 = vadd.f32 %v5082, %v5083
      %v5085 = vrot.slane %v5084, 1
      %v5086 = vadd.f32 %v5084, %v5085
      %v5087 = vadd.f32 %v5023, %v5025
      %v5088 = vrot.slane %v5087, 4
      %v5089 = vadd.f32 %v5087, %v5088
      %v5090 = vrot.slane %v5089, 2
      %v5091 = vadd.f32 %v5089, %v5090
      %v5092 = vrot.slane %v5091, 1
      %v5093 = vadd.f32 %v5091, %v5092
      %v5094 = vsel %vm154, %v5024, 0.0
      %v5095 = vsel %vm154, %v5026, 0.0
      %v5096 = vadd.f32 %v5094, %v5095
      %v5097 = vrot.slane %v5096, 4
      %v5098 = vadd.f32 %v5096, %v5097
      %v5099 = vrot.slane %v5098, 2
      %v5100 = vadd.f32 %v5098, %v5099
      %v5101 = vrot.slane %v5100, 1
      %v5102 = vadd.f32 %v5100, %v5101
      %v5103 = vadd.f32 %v5027, %v5029
      %v5104 = vrot.slane %v5103, 4
      %v5105 = vadd.f32 %v5103, %v5104
      %v5106 = vrot.slane %v5105, 2
      %v5107 = vadd.f32 %v5105, %v5106
      %v5108 = vrot.slane %v5107, 1
      %v5109 = vadd.f32 %v5107, %v5108
      %v5110 = vsel %vm154, %v5028, 0.0
      %v5111 = vsel %vm154, %v5030, 0.0
      %v5112 = vadd.f32 %v5110, %v5111
      %v5113 = vrot.slane %v5112, 4
      %v5114 = vadd.f32 %v5112, %v5113
      %v5115 = vrot.slane %v5114, 2
      %v5116 = vadd.f32 %v5114, %v5115
      %v5117 = vrot.slane %v5116, 1
      %v5118 = vadd.f32 %v5116, %v5117
      %v5119 = vadd.f32 %v5031, %v5033
      %v5120 = vrot.slane %v5119, 4
      %v5121 = vadd.f32 %v5119, %v5120
      %v5122 = vrot.slane %v5121, 2
      %v5123 = vadd.f32 %v5121, %v5122
      %v5124 = vrot.slane %v5123, 1
      %v5125 = vadd.f32 %v5123, %v5124
      %v5126 = vsel %vm154, %v5032, 0.0
      %v5127 = vsel %vm154, %v5034, 0.0
      %v5128 = vadd.f32 %v5126, %v5127
      %v5129 = vrot.slane %v5128, 4
      %v5130 = vadd.f32 %v5128, %v5129
      %v5131 = vrot.slane %v5130, 2
      %v5132 = vadd.f32 %v5130, %v5131
      %v5133 = vrot.slane %v5132, 1
      %v5134 = vadd.f32 %v5132, %v5133
      %v5135 = vadd.f32 %v5035, %v5037
      %v5136 = vrot.slane %v5135, 4
      %v5137 = vadd.f32 %v5135, %v5136
      %v5138 = vrot.slane %v5137, 2
      %v5139 = vadd.f32 %v5137, %v5138
      %v5140 = vrot.slane %v5139, 1
      %v5141 = vadd.f32 %v5139, %v5140
      %v5142 = vsel %vm154, %v5036, 0.0
      %v5143 = vsel %vm154, %v5038, 0.0
      %v5144 = vadd.f32 %v5142, %v5143
      %v5145 = vrot.slane %v5144, 4
      %v5146 = vadd.f32 %v5144, %v5145
      %v5147 = vrot.slane %v5146, 2
      %v5148 = vadd.f32 %v5146, %v5147
      %v5149 = vrot.slane %v5148, 1
      %v5150 = vadd.f32 %v5148, %v5149
      %v5151 = vadd.f32 %v5039, %v5041
      %v5152 = vrot.slane %v5151, 4
      %v5153 = vadd.f32 %v5151, %v5152
      %v5154 = vrot.slane %v5153, 2
      %v5155 = vadd.f32 %v5153, %v5154
      %v5156 = vrot.slane %v5155, 1
      %v5157 = vadd.f32 %v5155, %v5156
      %v5158 = vsel %vm154, %v5040, 0.0
      %v5159 = vsel %vm154, %v5042, 0.0
      %v5160 = vadd.f32 %v5158, %v5159
      %v5161 = vrot.slane %v5160, 4
      %v5162 = vadd.f32 %v5160, %v5161
      %v5163 = vrot.slane %v5162, 2
      %v5164 = vadd.f32 %v5162, %v5163
      %v5165 = vrot.slane %v5164, 1
      %v5166 = vadd.f32 %v5164, %v5165
      %v5167 = vadd.f32 %v5043, %v5045
      %v5168 = vrot.slane %v5167, 4
      %v5169 = vadd.f32 %v5167, %v5168
      %v5170 = vrot.slane %v5169, 2
      %v5171 = vadd.f32 %v5169, %v5170
      %v5172 = vrot.slane %v5171, 1
      %v5173 = vadd.f32 %v5171, %v5172
      %v5174 = vsel %vm154, %v5044, 0.0
      %v5175 = vsel %vm154, %v5046, 0.0
      %v5176 = vadd.f32 %v5174, %v5175
      %v5177 = vrot.slane %v5176, 4
      %v5178 = vadd.f32 %v5176, %v5177
      %v5179 = vrot.slane %v5178, 2
      %v5180 = vadd.f32 %v5178, %v5179
      %v5181 = vrot.slane %v5180, 1
      %v5182 = vadd.f32 %v5180, %v5181
      %v5183 = vadd.f32 %v5047, %v5049
      %v5184 = vrot.slane %v5183, 4
      %v5185 = vadd.f32 %v5183, %v5184
      %v5186 = vrot.slane %v5185, 2
      %v5187 = vadd.f32 %v5185, %v5186
      %v5188 = vrot.slane %v5187, 1
      %v5189 = vadd.f32 %v5187, %v5188
      %v5190 = vsel %vm154, %v5048, 0.0
      %v5191 = vsel %vm154, %v5050, 0.0
      %v5192 = vadd.f32 %v5190, %v5191
      %v5193 = vrot.slane %v5192, 4
      %v5194 = vadd.f32 %v5192, %v5193
      %v5195 = vrot.slane %v5194, 2
      %v5196 = vadd.f32 %v5194, %v5195
      %v5197 = vrot.slane %v5196, 1
      %v5198 = vadd.f32 %v5196, %v5197
      %v5199 = vadd.f32 %v5051, %v5053
      %v5200 = vrot.slane %v5199, 4
      %v5201 = vadd.f32 %v5199, %v5200
      %v5202 = vrot.slane %v5201, 2
      %v5203 = vadd.f32 %v5201, %v5202
      %v5204 = vrot.slane %v5203, 1
      %v5205 = vadd.f32 %v5203, %v5204
      %v5206 = vsel %vm154, %v5052, 0.0
      %v5207 = vsel %vm154, %v5054, 0.0
      %v5208 = vadd.f32 %v5206, %v5207
      %v5209 = vrot.slane %v5208, 4
      %v5210 = vadd.f32 %v5208, %v5209
      %v5211 = vrot.slane %v5210, 2
      %v5212 = vadd.f32 %v5210, %v5211
      %v5213 = vrot.slane %v5212, 1
      %v5214 = vadd.f32 %v5212, %v5213
      %v5215 = vadd.f32 %v4332, %v5061
      %v5216 = vadd.f32 %v4333, %v5070
      %v5217 = vadd.f32 %v4334, %v5077
      %v5218 = vadd.f32 %v4335, %v5086
      %v5219 = vadd.f32 %v4336, %v5093
      %v5220 = vadd.f32 %v4337, %v5102
      %v5221 = vadd.f32 %v4338, %v5109
      %v5222 = vadd.f32 %v4339, %v5118
      %v5223 = vadd.f32 %v4340, %v5125
      %v5224 = vadd.f32 %v4341, %v5134
      %v5225 = vadd.f32 %v4342, %v5141
      %v5226 = vadd.f32 %v4343, %v5150
      %v5227 = vadd.f32 %v4344, %v5157
      %v5228 = vadd.f32 %v4345, %v5166
      %v5229 = vadd.f32 %v4346, %v5173
      %v5230 = vadd.f32 %v4347, %v5182
      %v5231 = vadd.f32 %v4348, %v5189
      %v5232 = vadd.f32 %v4349, %v5198
      %v5233 = vadd.f32 %v4350, %v5205
      %v5234 = vadd.f32 %v4351, %v5214
      %v5235 = vmax.f32 %v5215, %v5219
      %v5236 = vmax.f32 %v5217, %v5221
      %v5237 = vmax.f32 %v5235, %v5223
      %v5238 = vmax.f32 %v5236, %v5225
      %v5239 = vmax.f32 %v5237, %v5227
      %v5240 = vmax.f32 %v5238, %v5229
      %v5241 = vmax.f32 %v5239, %v5231
      %v5242 = vmax.f32 %v5240, %v5233
      %v5243 = vmax.f32 %v5241, %v5242
      %v5244 = vsel %vm154, %v5216, -inf
      %v5245 = vsel %vm154, %v5218, -inf
      %v5246 = vsel %vm154, %v5220, -inf
      %v5247 = vmax.f32 %v5244, %v5246
      %v5248 = vsel %vm154, %v5222, -inf
      %v5249 = vmax.f32 %v5245, %v5248
      %v5250 = vsel %vm154, %v5224, -inf
      %v5251 = vmax.f32 %v5247, %v5250
      %v5252 = vsel %vm154, %v5226, -inf
      %v5253 = vmax.f32 %v5249, %v5252
      %v5254 = vsel %vm154, %v5228, -inf
      %v5255 = vmax.f32 %v5251, %v5254
      %v5256 = vsel %vm154, %v5230, -inf
      %v5257 = vmax.f32 %v5253, %v5256
      %v5258 = vsel %vm154, %v5232, -inf
      %v5259 = vmax.f32 %v5255, %v5258
      %v5260 = vsel %vm154, %v5234, -inf
      %v5261 = vmax.f32 %v5257, %v5260
      %v5262 = vmax.f32 %v5259, %v5261
      %v5263 = vsub.f32 %v5215, %v5243
      %v5264 = vsub.f32 %v5216, %v5262
      %v5265 = vsub.f32 %v5217, %v5243
      %v5266 = vsub.f32 %v5218, %v5262
      %v5267 = vsub.f32 %v5219, %v5243
      %v5268 = vsub.f32 %v5220, %v5262
      %v5269 = vsub.f32 %v5221, %v5243
      %v5270 = vsub.f32 %v5222, %v5262
      %v5271 = vsub.f32 %v5223, %v5243
      %v5272 = vsub.f32 %v5224, %v5262
      %v5273 = vsub.f32 %v5225, %v5243
      %v5274 = vsub.f32 %v5226, %v5262
      %v5275 = vsub.f32 %v5227, %v5243
      %v5276 = vsub.f32 %v5228, %v5262
      %v5277 = vsub.f32 %v5229, %v5243
      %v5278 = vsub.f32 %v5230, %v5262
      %v5279 = vsub.f32 %v5231, %v5243
      %v5280 = vsub.f32 %v5232, %v5262
      %v5281 = vsub.f32 %v5233, %v5243
      %v5282 = vsub.f32 %v5234, %v5262
      %v5283 = vmul.f32 %v5263, 1.442695
      %v5284 = vpow.pop %v5283
      %v5285 = vmul.f32 %v5264, 1.442695
      %v5286 = vpow.pop %v5285
      %v5287 = vmul.f32 %v5265, 1.442695
      %v5288 = vpow.pop %v5287
      %v5289 = vmul.f32 %v5266, 1.442695
      %v5290 = vpow.pop %v5289
      %v5291 = vmul.f32 %v5267, 1.442695
      %v5292 = vpow.pop %v5291
      %v5293 = vmul.f32 %v5268, 1.442695
      %v5294 = vpow.pop %v5293
      %v5295 = vmul.f32 %v5269, 1.442695
      %v5296 = vpow.pop %v5295
      %v5297 = vmul.f32 %v5270, 1.442695
      %v5298 = vpow.pop %v5297
      %v5299 = vmul.f32 %v5271, 1.442695
      %v5300 = vpow.pop %v5299
      %v5301 = vmul.f32 %v5272, 1.442695
      %v5302 = vpow.pop %v5301
      %v5303 = vmul.f32 %v5273, 1.442695
      %v5304 = vpow.pop %v5303
      %v5305 = vmul.f32 %v5274, 1.442695
      %v5306 = vpow.pop %v5305
      %v5307 = vmul.f32 %v5275, 1.442695
      %v5308 = vpow.pop %v5307
      %v5309 = vmul.f32 %v5276, 1.442695
      %v5310 = vpow.pop %v5309
      %v5311 = vmul.f32 %v5277, 1.442695
      %v5312 = vpow.pop %v5311
      %v5313 = vmul.f32 %v5278, 1.442695
      %v5314 = vpow.pop %v5313
      %v5315 = vmul.f32 %v5279, 1.442695
      %v5316 = vpow.pop %v5315
      %v5317 = vmul.f32 %v5280, 1.442695
      %v5318 = vpow.pop %v5317
      %v5319 = vmul.f32 %v5281, 1.442695
      %v5320 = vpow.pop %v5319
      %v5321 = vmul.f32 %v5282, 1.442695
      %v5322 = vpow.pop %v5321
      %v5343 = vrot.slane %v5288, 7
      %v5344 = vsel %vm498, %v5343, %v5284
      %v5345 = vrot.slane %v5292, 6
      %v5346 = vsel %vm500, %v5345, %v5344
      %v5347 = vrot.slane %v5296, 5
      %v5348 = vsel %vm502, %v5347, %v5346
      %v5349 = vrot.slane %v5300, 4
      %v5350 = vsel %vm504, %v5349, %v5348
      %v5351 = vrot.slane %v5304, 3
      %v5352 = vsel %vm506, %v5351, %v5350
      %v5353 = vrot.slane %v5308, 2
      %v5354 = vsel %vm508, %v5353, %v5352
      %v5355 = vrot.slane %v5312, 1
      %v5356 = vsel %vm510, %v5355, %v5354
      %v5357 = vrot.slane %v5290, 7
      %v5358 = vsel %vm498, %v5357, %v5286
      %v5359 = vrot.slane %v5294, 6
      %v5360 = vsel %vm500, %v5359, %v5358
      %v5361 = vrot.slane %v5298, 5
      %v5362 = vsel %vm502, %v5361, %v5360
      %v5363 = vrot.slane %v5302, 4
      %v5364 = vsel %vm504, %v5363, %v5362
      %v5365 = vrot.slane %v5306, 3
      %v5366 = vsel %vm506, %v5365, %v5364
      %v5367 = vrot.slane %v5310, 2
      %v5368 = vsel %vm508, %v5367, %v5366
      %v5369 = vrot.slane %v5314, 1
      %v5370 = vsel %vm510, %v5369, %v5368
      %v5371 = vrot.slane %v5320, 7
      %v5372 = vsel %vm498, %v5371, %v5316
      %v5373 = vrot.slane %v5322, 7
      %v5374 = vsel %vm498, %v5373, %v5318
      %v5379 = vsel %vm3659, %v5372, 0.0
      %v5380 = vadd.f32 %v5356, %v5379
      %v5381 = vrot.slane %v5380, 4
      %v5382 = vadd.f32 %v5380, %v5381
      %v5383 = vrot.slane %v5382, 2
      %v5384 = vadd.f32 %v5382, %v5383
      %v5385 = vrot.slane %v5384, 1
      %v5386 = vadd.f32 %v5384, %v5385
      %v5387 = vsel %vm154, %v5370, 0.0
      %v5388 = vsel %vm3876, %v5374, 0.0
      %v5389 = vadd.f32 %v5387, %v5388
      %v5390 = vrot.slane %v5389, 4
      %v5391 = vadd.f32 %v5389, %v5390
      %v5392 = vrot.slane %v5391, 2
      %v5393 = vadd.f32 %v5391, %v5392
      %v5394 = vrot.slane %v5393, 1
      %v5395 = vadd.f32 %v5393, %v5394
      %v5396 = vrcp.pop %v5386
      %v5397 = vrcp.pop %v5395
      %v5398 = vperm.slane %v5396, 0
      %v5399 = vperm.slane %v5397, 0
      %v5400 = vmul.f32 %v5284, %v5398
      %v5401 = vmul.f32 %v5286, %v5399
      %v5402 = vmul.f32 %v5288, %v5398
      %v5403 = vmul.f32 %v5290, %v5399
      %v5404 = vmul.f32 %v5292, %v5398
      %v5405 = vmul.f32 %v5294, %v5399
      %v5406 = vmul.f32 %v5296, %v5398
      %v5407 = vmul.f32 %v5298, %v5399
      %v5408 = vmul.f32 %v5300, %v5398
      %v5409 = vmul.f32 %v5302, %v5399
      %v5410 = vmul.f32 %v5304, %v5398
      %v5411 = vmul.f32 %v5306, %v5399
      %v5412 = vmul.f32 %v5308, %v5398
      %v5413 = vmul.f32 %v5310, %v5399
      %v5414 = vmul.f32 %v5312, %v5398
      %v5415 = vmul.f32 %v5314, %v5399
      %v5416 = vmul.f32 %v5316, %v5398
      %v5417 = vmul.f32 %v5318, %v5399
      %v5418 = vmul.f32 %v5320, %v5398
      %v5419 = vmul.f32 %v5322, %v5399
      %v5420 = vperm.slane %v5400, 0
      %v5421 = vperm.slane %v5401, 0
      %v5422 = vperm.slane %v5402, 0
      %v5423 = vperm.slane %v5403, 0
      %v5424 = vperm.slane %v5404, 0
      %v5425 = vperm.slane %v5405, 0
      %v5426 = vperm.slane %v5406, 0
      %v5427 = vperm.slane %v5407, 0
      %v5428 = vperm.slane %v5408, 0
      %v5429 = vperm.slane %v5409, 0
      %v5430 = vperm.slane %v5410, 0
      %v5431 = vperm.slane %v5411, 0
      %v5432 = vperm.slane %v5412, 0
      %v5433 = vperm.slane %v5413, 0
      %v5434 = vperm.slane %v5414, 0
      %v5435 = vperm.slane %v5415, 0
      %v5436 = vperm.slane %v5416, 0
      %v5437 = vperm.slane %v5417, 0
      %v5438 = vperm.slane %v5418, 0
      %v5439 = vperm.slane %v5419, 0
      %v5440 = vmul.f32 %v5420, %v3619
      %v5441 = vmul.f32 %v5421, %v3620
      %v5442 = vmul.f32 %v5420, %v3621
      %v5443 = vmul.f32 %v5421, %v3622
      %v5444 = vmul.f32 %v5422, %v3623
      %v5445 = vmul.f32 %v5423, %v3624
      %v5446 = vmul.f32 %v5422, %v3625
      %v5447 = vmul.f32 %v5423, %v3626
      %v5448 = vmul.f32 %v5424, %v3627
      %v5449 = vmul.f32 %v5425, %v3628
      %v5450 = vmul.f32 %v5424, %v3629
      %v5451 = vmul.f32 %v5425, %v3630
      %v5452 = vmul.f32 %v5426, %v3631
      %v5453 = vmul.f32 %v5427, %v3632
      %v5454 = vmul.f32 %v5426, %v3633
      %v5455 = vmul.f32 %v5427, %v3634
      %v5456 = vmul.f32 %v5428, %v3635
      %v5457 = vmul.f32 %v5429, %v3636
      %v5458 = vmul.f32 %v5428, %v3637
      %v5459 = vmul.f32 %v5429, %v3638
      %v5460 = vmul.f32 %v5430, %v3639
      %v5461 = vmul.f32 %v5431, %v3640
      %v5462 = vmul.f32 %v5430, %v3641
      %v5463 = vmul.f32 %v5431, %v3642
      %v5464 = vmul.f32 %v5432, %v3643
      %v5465 = vmul.f32 %v5433, %v3644
      %v5466 = vmul.f32 %v5432, %v3645
      %v5467 = vmul.f32 %v5433, %v3646
      %v5468 = vmul.f32 %v5434, %v3647
      %v5469 = vmul.f32 %v5435, %v3648
      %v5470 = vmul.f32 %v5434, %v3649
      %v5471 = vmul.f32 %v5435, %v3650
      %v5472 = vmul.f32 %v5436, %v3651
      %v5473 = vmul.f32 %v5437, %v3652
      %v5474 = vmul.f32 %v5436, %v3653
      %v5475 = vmul.f32 %v5437, %v3654
      %v5476 = vmul.f32 %v5438, %v3655
      %v5477 = vmul.f32 %v5439, %v3656
      %v5478 = vmul.f32 %v5438, %v3657
      %v5479 = vmul.f32 %v5439, %v3658
      %v5480 = vsel %vm154, %v5441, 0.0
      %v5481 = vadd.f32 %v5440, %v5480
      %5482 = vadd.xlane.f32.xlu0 %v5481
      %v5483 = vpop.xlane.xlu0 %5482
      %v5484 = vsel %vm154, %v5443, 0.0
      %v5485 = vadd.f32 %v5442, %v5484
      %5486 = vadd.xlane.f32.xlu0 %v5485
      %v5487 = vpop.xlane.xlu0 %5486
      %v5488 = vsel %vm154, %v5445, 0.0
      %v5489 = vadd.f32 %v5444, %v5488
      %5490 = vadd.xlane.f32.xlu0 %v5489
      %v5491 = vpop.xlane.xlu0 %5490
      %v5492 = vsel %vm154, %v5447, 0.0
      %v5493 = vadd.f32 %v5446, %v5492
      %5494 = vadd.xlane.f32.xlu0 %v5493
      %v5495 = vpop.xlane.xlu0 %5494
      %v5496 = vsel %vm154, %v5449, 0.0
      %v5497 = vadd.f32 %v5448, %v5496
      %5498 = vadd.xlane.f32.xlu0 %v5497
      %v5499 = vpop.xlane.xlu0 %5498
      %v5500 = vsel %vm154, %v5451, 0.0
      %v5501 = vadd.f32 %v5450, %v5500
      %5502 = vadd.xlane.f32.xlu0 %v5501
      %v5503 = vpop.xlane.xlu0 %5502
      %v5504 = vsel %vm154, %v5453, 0.0
      %v5505 = vadd.f32 %v5452, %v5504
      %5506 = vadd.xlane.f32.xlu0 %v5505
      %v5507 = vpop.xlane.xlu0 %5506
      %v5508 = vsel %vm154, %v5455, 0.0
      %v5509 = vadd.f32 %v5454, %v5508
      %5510 = vadd.xlane.f32.xlu0 %v5509
      %v5511 = vpop.xlane.xlu0 %5510
      %v5512 = vsel %vm154, %v5457, 0.0
      %v5513 = vadd.f32 %v5456, %v5512
      %5514 = vadd.xlane.f32.xlu0 %v5513
      %v5515 = vpop.xlane.xlu0 %5514
      %v5516 = vsel %vm154, %v5459, 0.0
      %v5517 = vadd.f32 %v5458, %v5516
      %5518 = vadd.xlane.f32.xlu0 %v5517
      %v5519 = vpop.xlane.xlu0 %5518
      %v5520 = vsel %vm154, %v5461, 0.0
      %v5521 = vadd.f32 %v5460, %v5520
      %5522 = vadd.xlane.f32.xlu0 %v5521
      %v5523 = vpop.xlane.xlu0 %5522
      %v5524 = vsel %vm154, %v5463, 0.0
      %v5525 = vadd.f32 %v5462, %v5524
      %5526 = vadd.xlane.f32.xlu0 %v5525
      %v5527 = vpop.xlane.xlu0 %5526
      %v5528 = vsel %vm154, %v5465, 0.0
      %v5529 = vadd.f32 %v5464, %v5528
      %5530 = vadd.xlane.f32.xlu0 %v5529
      %v5531 = vpop.xlane.xlu0 %5530
      %v5532 = vsel %vm154, %v5467, 0.0
      %v5533 = vadd.f32 %v5466, %v5532
      %5534 = vadd.xlane.f32.xlu0 %v5533
      %v5535 = vpop.xlane.xlu0 %5534
      %v5536 = vsel %vm154, %v5469, 0.0
      %v5537 = vadd.f32 %v5468, %v5536
      %5538 = vadd.xlane.f32.xlu0 %v5537
      %v5539 = vpop.xlane.xlu0 %5538
      %v5540 = vsel %vm154, %v5471, 0.0
      %v5541 = vadd.f32 %v5470, %v5540
      %5542 = vadd.xlane.f32.xlu0 %v5541
      %v5543 = vpop.xlane.xlu0 %5542
      %v5544 = vsel %vm154, %v5473, 0.0
      %v5545 = vadd.f32 %v5472, %v5544
      %5546 = vadd.xlane.f32.xlu0 %v5545
      %v5547 = vpop.xlane.xlu0 %5546
      %v5548 = vsel %vm154, %v5475, 0.0
      %v5549 = vadd.f32 %v5474, %v5548
      %5550 = vadd.xlane.f32.xlu0 %v5549
      %v5551 = vpop.xlane.xlu0 %5550
      %v5552 = vsel %vm154, %v5477, 0.0
      %v5553 = vadd.f32 %v5476, %v5552
      %5554 = vadd.xlane.f32.xlu0 %v5553
      %v5555 = vpop.xlane.xlu0 %5554
      %v5556 = vsel %vm154, %v5479, 0.0
      %v5557 = vadd.f32 %v5478, %v5556
      %5558 = vadd.xlane.f32.xlu0 %v5557
      %v5559 = vpop.xlane.xlu0 %5558
      %v5560 = vmul.f32 %v5483, %v5483
      %v5561 = vmul.f32 %v5487, %v5487
      %v5562 = vmul.f32 %v5491, %v5491
      %v5563 = vmul.f32 %v5495, %v5495
      %v5564 = vmul.f32 %v5499, %v5499
      %v5565 = vmul.f32 %v5503, %v5503
      %v5566 = vmul.f32 %v5507, %v5507
      %v5567 = vmul.f32 %v5511, %v5511
      %v5568 = vmul.f32 %v5515, %v5515
      %v5569 = vmul.f32 %v5519, %v5519
      %v5570 = vmul.f32 %v5523, %v5523
      %v5571 = vmul.f32 %v5527, %v5527
      %v5572 = vmul.f32 %v5531, %v5531
      %v5573 = vmul.f32 %v5535, %v5535
      %v5574 = vmul.f32 %v5539, %v5539
      %v5575 = vmul.f32 %v5543, %v5543
      %v5576 = vmul.f32 %v5547, %v5547
      %v5577 = vmul.f32 %v5551, %v5551
      %v5578 = vmul.f32 %v5555, %v5555
      %v5579 = vmul.f32 %v5559, %v5559
      %v5600 = vperm.slane %v5560, %v3830
      %v5601 = vperm.slane %v5561, %v3832
      %v5602 = vsel %vm3834, %v5601, %v5600
      %v5603 = vperm.slane %v5562, %v3830
      %v5604 = vperm.slane %v5563, %v3832
      %v5605 = vsel %vm3834, %v5604, %v5603
      %v5606 = vperm.slane %v5564, %v3830
      %v5607 = vperm.slane %v5565, %v3832
      %v5608 = vsel %vm3834, %v5607, %v5606
      %v5609 = vperm.slane %v5566, %v3830
      %v5610 = vperm.slane %v5567, %v3832
      %v5611 = vsel %vm3834, %v5610, %v5609
      %v5612 = vperm.slane %v5568, %v3830
      %v5613 = vperm.slane %v5569, %v3832
      %v5614 = vsel %vm3834, %v5613, %v5612
      %v5615 = vperm.slane %v5570, %v3830
      %v5616 = vperm.slane %v5571, %v3832
      %v5617 = vsel %vm3834, %v5616, %v5615
      %v5618 = vperm.slane %v5572, %v3830
      %v5619 = vperm.slane %v5573, %v3832
      %v5620 = vsel %vm3834, %v5619, %v5618
      %v5621 = vperm.slane %v5574, %v3830
      %v5622 = vperm.slane %v5575, %v3832
      %v5623 = vsel %vm3834, %v5622, %v5621
      %v5624 = vperm.slane %v5576, %v3830
      %v5625 = vperm.slane %v5577, %v3832
      %v5626 = vsel %vm3834, %v5625, %v5624
      %v5627 = vperm.slane %v5578, %v3830
      %v5628 = vperm.slane %v5579, %v3832
      %v5629 = vsel %vm3834, %v5628, %v5627
      %v5630 = vsel %vm498, %v5605, %v5602
      %v5631 = vsel %vm500, %v5608, %v5630
      %v5632 = vsel %vm502, %v5611, %v5631
      %v5633 = vsel %vm504, %v5614, %v5632
      %v5634 = vsel %vm506, %v5617, %v5633
      %v5635 = vsel %vm508, %v5620, %v5634
      %v5636 = vsel %vm510, %v5623, %v5635
      %v5637 = vsel %vm498, %v5629, %v5626
      %v5640 = vsel %vm154, %v5636, 0.0
      %5641 = vadd.xlane.f32.xlu0 %v5640
      %v5642 = vpop.xlane.xlu0 %5641
      %v5643 = vsel %vm3876, %v5637, 0.0
      %5644 = vadd.xlane.f32.xlu0 %v5643
      %v5645 = vpop.xlane.xlu0 %5644
      %v5648 = vperm.slane %v5642, 0
      %v5649 = vperm.slane %v5642, 1
      %v5650 = vperm.slane %v5642, 2
      %v5651 = vperm.slane %v5642, 3
      %v5652 = vperm.slane %v5642, 4
      %v5653 = vperm.slane %v5642, 5
      %v5654 = vperm.slane %v5642, 6
      %v5655 = vperm.slane %v5642, 7
      %v5656 = vperm.slane %v5645, 0
      %v5657 = vperm.slane %v5645, 1
      %v5668 = vmul.f32 %v5483, %v5648
      %v5669 = vmul.f32 %v5487, %v5648
      %v5670 = vmul.f32 %v5491, %v5649
      %v5671 = vmul.f32 %v5495, %v5649
      %v5672 = vmul.f32 %v5499, %v5650
      %v5673 = vmul.f32 %v5503, %v5650
      %v5674 = vmul.f32 %v5507, %v5651
      %v5675 = vmul.f32 %v5511, %v5651
      %v5676 = vmul.f32 %v5515, %v5652
      %v5677 = vmul.f32 %v5519, %v5652
      %v5678 = vmul.f32 %v5523, %v5653
      %v5679 = vmul.f32 %v5527, %v5653
      %v5680 = vmul.f32 %v5531, %v5654
      %v5681 = vmul.f32 %v5535, %v5654
      %v5682 = vmul.f32 %v5539, %v5655
      %v5683 = vmul.f32 %v5543, %v5655
      %v5684 = vmul.f32 %v5547, %v5656
      %v5685 = vmul.f32 %v5551, %v5656
      %v5686 = vmul.f32 %v5555, %v5657
      %v5687 = vmul.f32 %v5559, %v5657
      %v5688 = vadd.f32 %v5642, 1.0
      %v5689 = vadd.f32 %v5645, 1.0
      %v5690 = vrcp.pop %v5688
      %v5691 = vrcp.pop %v5689
      %v5694 = vperm.slane %v5690, 0
      %v5695 = vperm.slane %v5690, 1
      %v5696 = vperm.slane %v5690, 2
      %v5697 = vperm.slane %v5690, 3
      %v5698 = vperm.slane %v5690, 4
      %v5699 = vperm.slane %v5690, 5
      %v5700 = vperm.slane %v5690, 6
      %v5701 = vperm.slane %v5690, 7
      %v5702 = vperm.slane %v5691, 0
      %v5703 = vperm.slane %v5691, 1
      %v5714 = vmul.f32 %v5668, %v5694
      %v5715 = vmul.f32 %v5669, %v5694
      %v5716 = vmul.f32 %v5670, %v5695
      %v5717 = vmul.f32 %v5671, %v5695
      %v5718 = vmul.f32 %v5672, %v5696
      %v5719 = vmul.f32 %v5673, %v5696
      %v5720 = vmul.f32 %v5674, %v5697
      %v5721 = vmul.f32 %v5675, %v5697
      %v5722 = vmul.f32 %v5676, %v5698
      %v5723 = vmul.f32 %v5677, %v5698
      %v5724 = vmul.f32 %v5678, %v5699
      %v5725 = vmul.f32 %v5679, %v5699
      %v5726 = vmul.f32 %v5680, %v5700
      %v5727 = vmul.f32 %v5681, %v5700
      %v5728 = vmul.f32 %v5682, %v5701
      %v5729 = vmul.f32 %v5683, %v5701
      %v5730 = vmul.f32 %v5684, %v5702
      %v5731 = vmul.f32 %v5685, %v5702
      %v5732 = vmul.f32 %v5686, %v5703
      %v5733 = vmul.f32 %v5687, %v5703
      %v5734 = vadd.f32 %v5642, 1e-09
      %v5735 = vadd.f32 %v5645, 1e-09
      %v5736 = vrsqrt.pop %v5734
      %v5737 = vmul.f32 %v5736, %v5734
      %v5738 = vmul.f32 %v5737, %v5736
      %v5739 = vmul.f32 0.5, %v5738
      %v5740 = vsub.f32 1.5, %v5739
      %v5741 = vmul.f32 %v5736, %v5740
      %vm5742 = vweird.f32 %v5734
      %vm5743 = vweird.f32 %v5736
      %vm5744 = vmor %vm5742, %vm5743
      %v5745 = vsel %vm5744, %v5736, %v5741
      %v5746 = vrsqrt.pop %v5735
      %v5747 = vmul.f32 %v5746, %v5735
      %v5748 = vmul.f32 %v5747, %v5746
      %v5749 = vmul.f32 0.5, %v5748
      %v5750 = vsub.f32 1.5, %v5749
      %v5751 = vmul.f32 %v5746, %v5750
      %vm5752 = vweird.f32 %v5735
      %vm5753 = vweird.f32 %v5746
      %vm5754 = vmor %vm5752, %vm5753
      %v5755 = vsel %vm5754, %v5746, %v5751
      %v5758 = vperm.slane %v5745, 0
      %v5759 = vperm.slane %v5745, 1
      %v5760 = vperm.slane %v5745, 2
      %v5761 = vperm.slane %v5745, 3
      %v5762 = vperm.slane %v5745, 4
      %v5763 = vperm.slane %v5745, 5
      %v5764 = vperm.slane %v5745, 6
      %v5765 = vperm.slane %v5745, 7
      %v5766 = vperm.slane %v5755, 0
      %v5767 = vperm.slane %v5755, 1
      %v5778 = vmul.f32 %v5714, %v5758
      %v5779 = vmul.f32 %v5715, %v5758
      %v5780 = vmul.f32 %v5716, %v5759
      %v5781 = vmul.f32 %v5717, %v5759
      %v5782 = vmul.f32 %v5718, %v5760
      %v5783 = vmul.f32 %v5719, %v5760
      %v5784 = vmul.f32 %v5720, %v5761
      %v5785 = vmul.f32 %v5721, %v5761
      %v5786 = vmul.f32 %v5722, %v5762
      %v5787 = vmul.f32 %v5723, %v5762
      %v5788 = vmul.f32 %v5724, %v5763
      %v5789 = vmul.f32 %v5725, %v5763
      %v5790 = vmul.f32 %v5726, %v5764
      %v5791 = vmul.f32 %v5727, %v5764
      %v5792 = vmul.f32 %v5728, %v5765
      %v5793 = vmul.f32 %v5729, %v5765
      %v5794 = vmul.f32 %v5730, %v5766
      %v5795 = vmul.f32 %v5731, %v5766
      %v5796 = vmul.f32 %v5732, %v5767
      %v5797 = vmul.f32 %v5733, %v5767
      %5818 = vset.pattern.permute.xlu0 0
      %5819 = vperm.xlu0 %5818, %v5778
      %v5820 = vpop.permute.xlu0 %5819
      %5821 = vset.pattern.permute.xlu0 0
      %5822 = vperm.xlu0 %5821, %v5779
      %v5823 = vpop.permute.xlu0 %5822
      %5824 = vset.pattern.permute.xlu0 0
      %5825 = vperm.xlu0 %5824, %v5780
      %v5826 = vpop.permute.xlu0 %5825
      %5827 = vset.pattern.permute.xlu0 0
      %5828 = vperm.xlu0 %5827, %v5781
      %v5829 = vpop.permute.xlu0 %5828
      %5830 = vset.pattern.permute.xlu0 0
      %5831 = vperm.xlu0 %5830, %v5782
      %v5832 = vpop.permute.xlu0 %5831
      %5833 = vset.pattern.permute.xlu0 0
      %5834 = vperm.xlu0 %5833, %v5783
      %v5835 = vpop.permute.xlu0 %5834
      %5836 = vset.pattern.permute.xlu0 0
      %5837 = vperm.xlu0 %5836, %v5784
      %v5838 = vpop.permute.xlu0 %5837
      %5839 = vset.pattern.permute.xlu0 0
      %5840 = vperm.xlu0 %5839, %v5785
      %v5841 = vpop.permute.xlu0 %5840
      %5842 = vset.pattern.permute.xlu0 0
      %5843 = vperm.xlu0 %5842, %v5786
      %v5844 = vpop.permute.xlu0 %5843
      %5845 = vset.pattern.permute.xlu0 0
      %5846 = vperm.xlu0 %5845, %v5787
      %v5847 = vpop.permute.xlu0 %5846
      %5848 = vset.pattern.permute.xlu0 0
      %5849 = vperm.xlu0 %5848, %v5788
      %v5850 = vpop.permute.xlu0 %5849
      %5851 = vset.pattern.permute.xlu0 0
      %5852 = vperm.xlu0 %5851, %v5789
      %v5853 = vpop.permute.xlu0 %5852
      %5854 = vset.pattern.permute.xlu0 0
      %5855 = vperm.xlu0 %5854, %v5790
      %v5856 = vpop.permute.xlu0 %5855
      %5857 = vset.pattern.permute.xlu0 0
      %5858 = vperm.xlu0 %5857, %v5791
      %v5859 = vpop.permute.xlu0 %5858
      %5860 = vset.pattern.permute.xlu0 0
      %5861 = vperm.xlu0 %5860, %v5792
      %v5862 = vpop.permute.xlu0 %5861
      %5863 = vset.pattern.permute.xlu0 0
      %5864 = vperm.xlu0 %5863, %v5793
      %v5865 = vpop.permute.xlu0 %5864
      %5866 = vset.pattern.permute.xlu0 0
      %5867 = vperm.xlu0 %5866, %v5794
      %v5868 = vpop.permute.xlu0 %5867
      %5869 = vset.pattern.permute.xlu0 0
      %5870 = vperm.xlu0 %5869, %v5795
      %v5871 = vpop.permute.xlu0 %5870
      %5872 = vset.pattern.permute.xlu0 0
      %5873 = vperm.xlu0 %5872, %v5796
      %v5874 = vpop.permute.xlu0 %5873
      %5875 = vset.pattern.permute.xlu0 0
      %5876 = vperm.xlu0 %5875, %v5797
      %v5877 = vpop.permute.xlu0 %5876
      %v5878 = vperm.slane %v5820, %v3830
      %v5879 = vperm.slane %v5823, %v3832
      %v5880 = vsel %vm3834, %v5879, %v5878
      %v5881 = vperm.slane %v5826, %v3830
      %v5882 = vperm.slane %v5829, %v3832
      %v5883 = vsel %vm3834, %v5882, %v5881
      %v5884 = vperm.slane %v5832, %v3830
      %v5885 = vperm.slane %v5835, %v3832
      %v5886 = vsel %vm3834, %v5885, %v5884
      %v5887 = vperm.slane %v5838, %v3830
      %v5888 = vperm.slane %v5841, %v3832
      %v5889 = vsel %vm3834, %v5888, %v5887
      %v5890 = vperm.slane %v5844, %v3830
      %v5891 = vperm.slane %v5847, %v3832
      %v5892 = vsel %vm3834, %v5891, %v5890
      %v5893 = vperm.slane %v5850, %v3830
      %v5894 = vperm.slane %v5853, %v3832
      %v5895 = vsel %vm3834, %v5894, %v5893
      %v5896 = vperm.slane %v5856, %v3830
      %v5897 = vperm.slane %v5859, %v3832
      %v5898 = vsel %vm3834, %v5897, %v5896
      %v5899 = vperm.slane %v5862, %v3830
      %v5900 = vperm.slane %v5865, %v3832
      %v5901 = vsel %vm3834, %v5900, %v5899
      %v5902 = vperm.slane %v5868, %v3830
      %v5903 = vperm.slane %v5871, %v3832
      %v5904 = vsel %vm3834, %v5903, %v5902
      %v5905 = vperm.slane %v5874, %v3830
      %v5906 = vperm.slane %v5877, %v3832
      %v5907 = vsel %vm3834, %v5906, %v5905
      %v5908 = vsel %vm498, %v5883, %v5880
      %v5909 = vsel %vm500, %v5886, %v5908
      %v5910 = vsel %vm502, %v5889, %v5909
      %v5911 = vsel %vm504, %v5892, %v5910
      %v5912 = vsel %vm506, %v5895, %v5911
      %v5913 = vsel %vm508, %v5898, %v5912
      %v5914 = vsel %vm510, %v5901, %v5913
      %v5915 = vsel %vm498, %v5907, %v5904
      %5918 = vst.msk [vmem:[%s143] sm:$0xff] %vm154, %v5914
      %5919 = vst.msk [vmem:[%s143 + $0x8] sm:$0x3] %vm3876, %v5915
      %p5920 = scmp.lt.s32.totalorder %s13, 1
      %s5921 = scalar_select %p5920, %s13, 1
      %s5922 = smul.addr %s5921, 2
      %s5923 = smul.addr %s5922, 8
      %s5924 = scalar_lea.vmem %s2, %s5923
      // Predicated region
      $region29: #{capsnet_forward.3} parent=27 // pred_check
        %p5925 = pneg %p78
      $region30: #{capsnet_forward.3} parent=27 // pred_check_branch
        %5927 = sbr.rel (%p5925) target = $region32
      $region31: #{capsnet_forward.3} parent=27 // pred_region
        _
      $region32: #{capsnet_forward.3} parent=27 // pred_fallthru
        _
    $region28: #{capsnet_forward.3} parent=5 // pred_fallthru
      _
    %p5928 = scmp.le.s32.totalorder 2, %s8
    // Predicated region
    $region33: #{capsnet_forward.3} parent=5 // pred_check
      %p5929 = pneg %p5928
    $region34: #{capsnet_forward.3} parent=5 // pred_check_branch
      %5931 = sbr.rel (%p5929) target = $region36
    $region35: #{capsnet_forward.3} parent=5 // pred_region
      %s5932 = ssub.s32 %s8, 2
      // Predicated region
      $region37: #{capsnet_forward.3} parent=35 // pred_check
        %p5933 = pneg %p84
      $region38: #{capsnet_forward.3} parent=35 // pred_check_branch
        %5935 = sbr.rel (%p5933) target = $region40
      $region39: #{capsnet_forward.3} parent=35 // pred_region
        %p5936 = scmp.lt.s32.totalorder %s14, 1
        %s5937 = scalar_select %p5936, %s14, 1
        %s5938 = smul.addr %s5937, 2
        %s5939 = smul.addr %s5938, 8
        %s5940 = scalar_lea.vmem %s2, %s5939
      $region40: #{capsnet_forward.3} parent=35 // pred_fallthru
        _
    $region36: #{capsnet_forward.3} parent=5 // pred_fallthru
      _
  $region6: #{capsnet_forward.3} parent=0 // loop_footer
    %s12 = sadd.s32 1, %s8
  $region7: #{capsnet_forward.3} parent=0 // loop_footer_branch
    %7 = sbr.rel target = $region3
  $region8: #{capsnet_forward.3} parent=0 // loop_exit
    _

</llo_original>
